<compile_context>
chip_gen: v7x
topology: tpu7x:2x2x1
jax: 0.10.0
libtpu: 0.0.40
codegen_flags: <defaults>
</compile_context>

<pallas_src>
import functools

import jax
import jax.numpy as jnp
from jax import lax
from jax.experimental import pallas as pl
from jax.experimental.pallas import tpu as pltpu

IN_EPS = 1e-5   # nn.InstanceNorm2d default eps


def _round_up(x, m):
    return (x + m - 1) // m * m


def _pick_tile(dim, cands=(512, 256, 128)):
    for t in cands:
        if dim % t == 0:
            return t
    return cands[-1]


# ---------------------------------------------------------------------------
# Pallas kernel 1: tiled matmul (bf16 in, f32 acc) + fused bias / activation
# ---------------------------------------------------------------------------
def _matmul_epilogue_kernel(a_ref, b_ref, shift_ref, o_ref, acc_ref, *, nk, act):
    k = pl.program_id(2)

    @pl.when(k == 0)
    def _():
        acc_ref[...] = jnp.zeros_like(acc_ref)

    acc_ref[...] += jnp.dot(a_ref[...], b_ref[...],
                            preferred_element_type=jnp.float32)

    @pl.when(k == nk - 1)
    def _():
        y = acc_ref[...] + shift_ref[...]
        if act == "relu":
            y = jnp.maximum(y, 0.0)
        elif act == "tanh":
            y = jnp.tanh(y)
        o_ref[...] = y.astype(o_ref.dtype)


def fused_matmul(a, b, shift, act="none"):
    """out = act((a @ b) + shift); a:(M,K) b:(K,N) shift:(N,). f32 in/out."""
    M, K = a.shape
    K2, N = b.shape
    assert K == K2

    # Tile selection: big tiles, full-N (single j step), pad only when needed.
    if M >= 128:
        Mp = _round_up(M, 128)
        tm = _pick_tile(Mp)
    else:
        Mp = _round_up(M, 8)
        tm = Mp
    Kp = _round_up(K, 128)
    tk = _pick_tile(Kp)
    Np = N if N % 128 == 0 else _round_up(N, 128)
    tn = _pick_tile(Np)
    nk = Kp // tk

    if Mp != M or Kp != K:
        a = jnp.pad(a, ((0, Mp - M), (0, Kp - K)))
    if Kp != K or Np != N:
        b = jnp.pad(b, ((0, Kp - K), (0, Np - N)))
    shift = shift.reshape(1, N).astype(jnp.float32)
    if Np != N:
        shift = jnp.pad(shift, ((0, 0), (0, Np - N)))

    # bf16 MXU inputs, f32 accumulation (preferred_element_type above).
    a = a.astype(jnp.bfloat16)
    b = b.astype(jnp.bfloat16)

    kernel = functools.partial(_matmul_epilogue_kernel, nk=nk, act=act)
    out = pl.pallas_call(
        kernel,
        out_shape=jax.ShapeDtypeStruct((Mp, Np), jnp.float32),
        grid_spec=pltpu.PrefetchScalarGridSpec(
            num_scalar_prefetch=0,
            grid=(Mp // tm, Np // tn, nk),
            in_specs=[
                pl.BlockSpec((tm, tk), lambda i, j, k: (i, k)),
                pl.BlockSpec((tk, tn), lambda i, j, k: (k, j)),
                pl.BlockSpec((1, tn), lambda i, j, k: (0, j)),
            ],
            out_specs=pl.BlockSpec((tm, tn), lambda i, j, k: (i, j)),
            scratch_shapes=[pltpu.VMEM((tm, tn), jnp.float32)],
        ),
        compiler_params=pltpu.CompilerParams(
            dimension_semantics=("parallel", "parallel", "arbitrary")),
    )(a, b, shift)

    if Mp != M or Np != N:
        out = out[:M, :N]
    return out


# ---------------------------------------------------------------------------
# Pallas kernel 2: InstanceNorm2d (affine=False) + optional ReLU / residual add
# ---------------------------------------------------------------------------
def _instnorm_kernel(x_ref, o_ref, *, relu):
    x = x_ref[...]                                   # (1, HW, C)
    mean = jnp.mean(x, axis=1, keepdims=True)
    xc = x - mean
    var = jnp.mean(xc * xc, axis=1, keepdims=True)   # biased, like PyTorch
    y = xc * lax.rsqrt(var + IN_EPS)
    if relu:
        y = jnp.maximum(y, 0.0)
    o_ref[...] = y.astype(o_ref.dtype)


def _instnorm_residual_kernel(x_ref, skip_ref, o_ref):
    x = x_ref[...]
    mean = jnp.mean(x, axis=1, keepdims=True)
    xc = x - mean
    var = jnp.mean(xc * xc, axis=1, keepdims=True)
    y = xc * lax.rsqrt(var + IN_EPS)
    o_ref[...] = (skip_ref[...] + y).astype(o_ref.dtype)


def instance_norm(x, relu=False, skip=None):
    """x: NHWC f32.  Returns InstanceNorm(x) (+skip / +ReLU)."""
    n, h, w, c = x.shape
    hw = h * w
    x2 = x.reshape(n, hw, c)
    blk = pl.BlockSpec((1, hw, c), lambda b: (b, 0, 0))
    cp = pltpu.CompilerParams(dimension_semantics=("parallel",))
    if skip is None:
        out = pl.pallas_call(
            functools.partial(_instnorm_kernel, relu=relu),
            out_shape=jax.ShapeDtypeStruct((n, hw, c), jnp.float32),
            grid_spec=pltpu.PrefetchScalarGridSpec(
                num_scalar_prefetch=0, grid=(n,),
                in_specs=[blk], out_specs=blk),
            compiler_params=cp,
        )(x2)
    else:
        out = pl.pallas_call(
            _instnorm_residual_kernel,
            out_shape=jax.ShapeDtypeStruct((n, hw, c), jnp.float32),
            grid_spec=pltpu.PrefetchScalarGridSpec(
                num_scalar_prefetch=0, grid=(n,),
                in_specs=[blk, blk], out_specs=blk),
            compiler_params=cp,
        )(x2, skip.reshape(n, hw, c))
    return out.reshape(n, h, w, c)


# ---------------------------------------------------------------------------
# Convolutions via im2col + fused Pallas matmul (NHWC)
# ---------------------------------------------------------------------------
def _im2col(xp, k, oh, ow, stride):
    """xp: padded NHWC input. Returns (N*oh*ow, k*k*C) in (ky, kx, c) order."""
    n, _, _, c = xp.shape
    cols = []
    for ky in range(k):
        for kx in range(k):
            cols.append(xp[:, ky:ky + stride * (oh - 1) + 1:stride,
                              kx:kx + stride * (ow - 1) + 1:stride, :])
    patches = jnp.stack(cols, axis=3)        # (N, OH, OW, k*k, C)
    return patches.reshape(n * oh * ow, k * k * c)


def conv2d(x, w_oihw, bias, k, stride, pad, pad_mode, act="none"):
    """x: NHWC, w: (Cout, Cin, k, k) PyTorch layout."""
    n, h, w, cin = x.shape
    cout = w_oihw.shape[0]
    if pad > 0:
        if pad_mode == "reflect":
            xp = jnp.pad(x, ((0, 0), (pad, pad), (pad, pad), (0, 0)),
                         mode="reflect")
        else:
            xp = jnp.pad(x, ((0, 0), (pad, pad), (pad, pad), (0, 0)))
    else:
        xp = x
    oh = (h + 2 * pad - k) // stride + 1
    ow = (w + 2 * pad - k) // stride + 1
    a = _im2col(xp, k, oh, ow, stride)
    wm = jnp.transpose(w_oihw, (2, 3, 1, 0)).reshape(k * k * cin, cout)
    out = fused_matmul(a, wm, bias, act)
    return out.reshape(n, oh, ow, cout)


def conv_transpose2d_s2(x, w_iohw, bias):
    """ConvTranspose2d(k=3, stride=2, padding=1, output_padding=1) on NHWC x.

    4-phase sub-pixel decomposition: each output-pixel parity class is a small
    stride-1 conv over (shifted) inputs -> no zero-dilation waste.
    """
    n, h, wd, cin = x.shape
    cout = w_iohw.shape[1]
    m = n * h * wd

    # shifted taps (zero beyond the far edge == output_padding handling)
    x_r = jnp.pad(x, ((0, 0), (0, 0), (0, 1), (0, 0)))[:, :, 1:, :]   # x[m, n+1]
    x_d = jnp.pad(x, ((0, 0), (0, 1), (0, 0), (0, 0)))[:, 1:, :, :]   # x[m+1, n]
    x_dr = jnp.pad(x, ((0, 0), (0, 1), (0, 1), (0, 0)))[:, 1:, 1:, :]  # x[m+1, n+1]

    def phase(taps, kidx):
        a = jnp.concatenate([t.reshape(m, cin) for t in taps], axis=1)
        wm = jnp.concatenate([w_iohw[:, :, ky, kx] for (ky, kx) in kidx], axis=0)
        return fused_matmul(a, wm, bias, act="none").reshape(n, h, wd, cout)

    p00 = phase([x], [(1, 1)])
    p01 = phase([x, x_r], [(1, 2), (1, 0)])
    p10 = phase([x, x_d], [(2, 1), (0, 1)])
    p11 = phase([x, x_r, x_d, x_dr], [(2, 2), (2, 0), (0, 2), (0, 0)])

    row_e = jnp.stack([p00, p01], axis=3).reshape(n, h, 2 * wd, cout)
    row_o = jnp.stack([p10, p11], axis=3).reshape(n, h, 2 * wd, cout)
    return jnp.stack([row_e, row_o], axis=2).reshape(n, 2 * h, 2 * wd, cout)


# ---------------------------------------------------------------------------
# Deterministic parameters (same shapes as the PyTorch Generator)
# ---------------------------------------------------------------------------
def make_params(key):
    keys = iter(jax.random.split(key, 64))

    def conv_p(cout, cin, k):
        kw, kb = jax.random.split(next(keys))
        w = 0.05 * jax.random.normal(kw, (cout, cin, k, k), jnp.float32)
        b = 0.05 * jax.random.normal(kb, (cout,), jnp.float32)
        return w, b

    def convT_p(cin, cout, k):
        kw, kb = jax.random.split(next(keys))
        w = 0.05 * jax.random.normal(kw, (cin, cout, k, k), jnp.float32)
        b = 0.05 * jax.random.normal(kb, (cout,), jnp.float32)
        return w, b

    p = {}
    p["c7_in"] = conv_p(64, 3, 7)            # ReflectionPad(3) + Conv(3,64,7)
    p["down1"] = conv_p(128, 64, 3)          # Conv(64,128,3,s2,p1)
    p["down2"] = conv_p(256, 128, 3)         # Conv(128,256,3,s2,p1)
    for i in range(9):                       # 9 ResidualBlock(256)
        p[f"res{i}_1"] = conv_p(256, 256, 3)
        p[f"res{i}_2"] = conv_p(256, 256, 3)
    p["up1"] = convT_p(256, 128, 3)          # ConvT(256,128,3,s2,p1,op1)
    p["up2"] = convT_p(128, 64, 3)           # ConvT(128,64,3,s2,p1,op1)
    p["c7_out"] = conv_p(3, 64, 7)           # ReflectionPad(3) + Conv(64,3,7)
    return p


# ---------------------------------------------------------------------------
# Forward pass (matches Generator.forward, NCHW in / NCHW out)
# ---------------------------------------------------------------------------
@jax.jit
def generator_forward(params, x_nchw):
    x = jnp.transpose(x_nchw, (0, 2, 3, 1))               # NCHW -> NHWC

    # c7s1-64
    w, b = params["c7_in"]
    h = conv2d(x, w, b, k=7, stride=1, pad=3, pad_mode="reflect")
    h = instance_norm(h, relu=True)

    # d128, d256
    w, b = params["down1"]
    h = instance_norm(conv2d(h, w, b, 3, 2, 1, "zero"), relu=True)
    w, b = params["down2"]
    h = instance_norm(conv2d(h, w, b, 3, 2, 1, "zero"), relu=True)

    # 9 residual blocks: x + IN(Conv(ReLU(IN(Conv(x)))))
    for i in range(9):
        w1, b1 = params[f"res{i}_1"]
        w2, b2 = params[f"res{i}_2"]
        r = conv2d(h, w1, b1, 3, 1, 1, "reflect")
        r = instance_norm(r, relu=True)
        r = conv2d(r, w2, b2, 3, 1, 1, "reflect")
        h = instance_norm(r, skip=h)                       # fused residual add

    # u128, u64
    w, b = params["up1"]
    h = instance_norm(conv_transpose2d_s2(h, w, b), relu=True)
    w, b = params["up2"]
    h = instance_norm(conv_transpose2d_s2(h, w, b), relu=True)

    # c7s1-3 + tanh (tanh fused into the matmul epilogue)
    w, b = params["c7_out"]
    out = conv2d(h, w, b, 7, 1, 3, "reflect", act="tanh")
    return jnp.transpose(out, (0, 3, 1, 2))                # NHWC -> NCHW


if __name__ == "__main__":
    key = jax.random.PRNGKey(0)
    kp, kx = jax.random.split(key)
    params = make_params(kp)
    # Small shapes: batch=2, 3x16x16 (two stride-2 downs -> 4x4 residual trunk).
    x = jax.random.normal(kx, (2, 3, 16, 16), jnp.float32)
    y = generator_forward(params, x)
    y = jax.block_until_ready(y)
    assert y.shape == (2, 3, 16, 16), y.shape
    assert bool(jnp.all(jnp.isfinite(y)))
    assert bool(jnp.all(jnp.abs(y) <= 1.0 + 1e-6))   # tanh output range
    print("KERNEL_OK")
</pallas_src>

<mosaic_0001>
module attributes {stable_mosaic.version = 11 : i64} {
  func.func @_matmul_epilogue_kernel(%arg0: i32, %arg1: i32, %arg2: i32, %arg3: memref<512x256xbf16, #tpu.memory_space<vmem>>, %arg4: memref<256x128xbf16, #tpu.memory_space<vmem>>, %arg5: memref<1x128xf32, #tpu.memory_space<vmem>>, %arg6: memref<512x128xf32, #tpu.memory_space<vmem>>, %arg7: memref<512x128xf32, #tpu.memory_space<vmem>>) attributes {dimension_semantics = [#tpu.dimension_semantics<parallel>, #tpu.dimension_semantics<parallel>, #tpu.dimension_semantics<arbitrary>], iteration_bounds = array<i64: 1, 1, 1>, scalar_prefetch = 0 : i64, scratch_operands = 1 : i64, tpu.core_type = #tpu.core_type<tc>, window_params = [{transform_indices = @transform_0, window_bounds = array<i64: 512, 256>}, {transform_indices = @transform_1, window_bounds = array<i64: 256, 128>}, {transform_indices = @transform_2, window_bounds = array<i64: 1, 128>}, {transform_indices = @transform_3, window_bounds = array<i64: 512, 128>}]} {
    %c0_i32 = arith.constant 0 : i32
    %0 = arith.cmpi eq, %arg2, %c0_i32 : i32
    %1 = arith.extui %0 : i1 to i32
    %c0_i32_0 = arith.constant 0 : i32
    %2 = arith.cmpi ne, %1, %c0_i32_0 : i32
    scf.if %2 {
      %cst_10 = arith.constant 0.000000e+00 : f32
      %12 = vector.broadcast %cst_10 : f32 to vector<512x128xf32>
      %c0_11 = arith.constant 0 : index
      %c0_12 = arith.constant 0 : index
      %13 = vector.load %arg7[%c0_11, %c0_12] : memref<512x128xf32, #tpu.memory_space<vmem>>, vector<512x128xf32>
      tpu.vector_store %arg7[%c0_11, %c0_12], %12 {strides = array<i32>} : memref<512x128xf32, #tpu.memory_space<vmem>>, vector<512x128xf32>,
    } else {
    }
    %c0 = arith.constant 0 : index
    %c0_1 = arith.constant 0 : index
    %3 = vector.load %arg7[%c0, %c0_1] : memref<512x128xf32, #tpu.memory_space<vmem>>, vector<512x128xf32>
    %c0_2 = arith.constant 0 : index
    %c0_3 = arith.constant 0 : index
    %4 = vector.load %arg3[%c0_2, %c0_3] : memref<512x256xbf16, #tpu.memory_space<vmem>>, vector<512x256xbf16>
    %c0_4 = arith.constant 0 : index
    %c0_5 = arith.constant 0 : index
    %5 = vector.load %arg4[%c0_4, %c0_5] : memref<256x128xbf16, #tpu.memory_space<vmem>>, vector<256x128xbf16>
    %cst = arith.constant dense<0.000000e+00> : vector<512x128xf32>
    %6 = tpu.matmul %4, %5, %cst {dimension_numbers = #tpu.dot_dimension_numbers<[1], [0], [0], [1], [0, 0, 1, 1], [], []>} : vector<512x256xbf16>, vector<256x128xbf16>, vector<512x128xf32> -> vector<512x128xf32>
    %7 = arith.addf %3, %6 : vector<512x128xf32>
    %c0_6 = arith.constant 0 : index
    %c0_7 = arith.constant 0 : index
    %8 = vector.load %arg7[%c0_6, %c0_7] : memref<512x128xf32, #tpu.memory_space<vmem>>, vector<512x128xf32>
    tpu.vector_store %arg7[%c0_6, %c0_7], %7 {strides = array<i32>} : memref<512x128xf32, #tpu.memory_space<vmem>>, vector<512x128xf32>,
    %c0_i32_8 = arith.constant 0 : i32
    %9 = arith.cmpi eq, %arg2, %c0_i32_8 : i32
    %10 = arith.extui %9 : i1 to i32
    %c0_i32_9 = arith.constant 0 : i32
    %11 = arith.cmpi ne, %10, %c0_i32_9 : i32
    scf.if %11 {
      %c0_10 = arith.constant 0 : index
      %c0_11 = arith.constant 0 : index
      %12 = vector.load %arg7[%c0_10, %c0_11] : memref<512x128xf32, #tpu.memory_space<vmem>>, vector<512x128xf32>
      %c0_12 = arith.constant 0 : index
      %c0_13 = arith.constant 0 : index
      %13 = vector.load %arg5[%c0_12, %c0_13] : memref<1x128xf32, #tpu.memory_space<vmem>>, vector<1x128xf32>
      %14 = vector.broadcast %13 : vector<1x128xf32> to vector<512x128xf32>
      %15 = arith.addf %12, %14 : vector<512x128xf32>
      %c0_14 = arith.constant 0 : index
      %c0_15 = arith.constant 0 : index
      %16 = vector.load %arg6[%c0_14, %c0_15] : memref<512x128xf32, #tpu.memory_space<vmem>>, vector<512x128xf32>
      tpu.vector_store %arg6[%c0_14, %c0_15], %15 {strides = array<i32>} : memref<512x128xf32, #tpu.memory_space<vmem>>, vector<512x128xf32>,
    } else {
    }
    return
  }
  func.func @transform_0(%arg0: i32, %arg1: i32, %arg2: i32) -> (i32, i32) {
    %c0_i32 = arith.constant 0 : i32
    return %arg0, %arg2 : i32, i32
  }
  func.func @transform_1(%arg0: i32, %arg1: i32, %arg2: i32) -> (i32, i32) {
    %c0_i32 = arith.constant 0 : i32
    return %arg2, %arg1 : i32, i32
  }
  func.func @transform_2(%arg0: i32, %arg1: i32, %arg2: i32) -> (i32, i32) {
    %c0_i32 = arith.constant 0 : i32
    %c0_i32_0 = arith.constant 0 : i32
    return %c0_i32, %arg1 : i32, i32
  }
  func.func @transform_3(%arg0: i32, %arg1: i32, %arg2: i32) -> (i32, i32) {
    %c0_i32 = arith.constant 0 : i32
    return %arg0, %arg1 : i32, i32
  }
}

module attributes {stable_mosaic.version = 11 : i64} {
  func.func @_instnorm_kernel(%arg0: i32, %arg1: memref<1x256x64xf32, #tpu.memory_space<vmem>>, %arg2: memref<1x256x64xf32, #tpu.memory_space<vmem>>) attributes {dimension_semantics = [#tpu.dimension_semantics<parallel>], iteration_bounds = array<i64: 2>, scalar_prefetch = 0 : i64, scratch_operands = 0 : i64, tpu.core_type = #tpu.core_type<tc>, window_params = [{transform_indices = @transform_0, window_bounds = array<i64: 1, 256, 64>}, {transform_indices = @transform_1, window_bounds = array<i64: 1, 256, 64>}]} {
    %c0 = arith.constant 0 : index
    %c0_0 = arith.constant 0 : index
    %c0_1 = arith.constant 0 : index
    %0 = vector.load %arg1[%c0, %c0_0, %c0_1] : memref<1x256x64xf32, #tpu.memory_space<vmem>>, vector<1x256x64xf32>
    %cst = arith.constant dense<0.000000e+00> : vector<1x64xf32>
    %1 = vector.multi_reduction <add>, %0, %cst [1] : vector<1x256x64xf32> to vector<1x64xf32>
    %2 = vector.shape_cast %1 : vector<1x64xf32> to vector<1x1x64xf32>
    %cst_2 = arith.constant 2.560000e+02 : f32
    %3 = vector.broadcast %cst_2 : f32 to vector<1x1x64xf32>
    %4 = arith.divf %2, %3 : vector<1x1x64xf32>
    %5 = vector.broadcast %4 : vector<1x1x64xf32> to vector<1x256x64xf32>
    %6 = arith.subf %0, %5 : vector<1x256x64xf32>
    %7 = arith.mulf %6, %6 : vector<1x256x64xf32>
    %cst_3 = arith.constant dense<0.000000e+00> : vector<1x64xf32>
    %8 = vector.multi_reduction <add>, %7, %cst_3 [1] : vector<1x256x64xf32> to vector<1x64xf32>
    %9 = vector.shape_cast %8 : vector<1x64xf32> to vector<1x1x64xf32>
    %cst_4 = arith.constant 2.560000e+02 : f32
    %10 = vector.broadcast %cst_4 : f32 to vector<1x1x64xf32>
    %11 = arith.divf %9, %10 : vector<1x1x64xf32>
    %cst_5 = arith.constant 9.99999974E-6 : f32
    %12 = vector.broadcast %cst_5 : f32 to vector<1x1x64xf32>
    %13 = arith.addf %11, %12 : vector<1x1x64xf32>
    %14 = math.rsqrt %13 : vector<1x1x64xf32>
    %15 = vector.broadcast %14 : vector<1x1x64xf32> to vector<1x256x64xf32>
    %16 = arith.mulf %6, %15 : vector<1x256x64xf32>
    %cst_6 = arith.constant 0.000000e+00 : f32
    %17 = vector.broadcast %cst_6 : f32 to vector<1x256x64xf32>
    %18 = arith.maximumf %16, %17 : vector<1x256x64xf32>
    %c0_7 = arith.constant 0 : index
    %c0_8 = arith.constant 0 : index
    %c0_9 = arith.constant 0 : index
    %19 = vector.load %arg2[%c0_7, %c0_8, %c0_9] : memref<1x256x64xf32, #tpu.memory_space<vmem>>, vector<1x256x64xf32>
    tpu.vector_store %arg2[%c0_7, %c0_8, %c0_9], %18 {strides = array<i32>} : memref<1x256x64xf32, #tpu.memory_space<vmem>>, vector<1x256x64xf32>,
    return
  }
  func.func @transform_0(%arg0: i32) -> (i32, i32, i32) {
    %c0_i32 = arith.constant 0 : i32
    %c0_i32_0 = arith.constant 0 : i32
    %c0_i32_1 = arith.constant 0 : i32
    return %arg0, %c0_i32, %c0_i32_0 : i32, i32, i32
  }
  func.func @transform_1(%arg0: i32) -> (i32, i32, i32) {
    %c0_i32 = arith.constant 0 : i32
    %c0_i32_0 = arith.constant 0 : i32
    %c0_i32_1 = arith.constant 0 : i32
    return %arg0, %c0_i32, %c0_i32_0 : i32, i32, i32
  }
}

module attributes {stable_mosaic.version = 11 : i64} {
  func.func @_matmul_epilogue_kernel(%arg0: i32, %arg1: i32, %arg2: i32, %arg3: memref<128x128xbf16, #tpu.memory_space<vmem>>, %arg4: memref<128x128xbf16, #tpu.memory_space<vmem>>, %arg5: memref<1x128xf32, #tpu.memory_space<vmem>>, %arg6: memref<128x128xf32, #tpu.memory_space<vmem>>, %arg7: memref<128x128xf32, #tpu.memory_space<vmem>>) attributes {dimension_semantics = [#tpu.dimension_semantics<parallel>, #tpu.dimension_semantics<parallel>, #tpu.dimension_semantics<arbitrary>], iteration_bounds = array<i64: 1, 1, 5>, scalar_prefetch = 0 : i64, scratch_operands = 1 : i64, tpu.core_type = #tpu.core_type<tc>, window_params = [{transform_indices = @transform_0, window_bounds = array<i64: 128, 128>}, {transform_indices = @transform_1, window_bounds = array<i64: 128, 128>}, {transform_indices = @transform_2, window_bounds = array<i64: 1, 128>}, {transform_indices = @transform_3, window_bounds = array<i64: 128, 128>}]} {
    %c0_i32 = arith.constant 0 : i32
    %0 = arith.cmpi eq, %arg2, %c0_i32 : i32
    %1 = arith.extui %0 : i1 to i32
    %c0_i32_0 = arith.constant 0 : i32
    %2 = arith.cmpi ne, %1, %c0_i32_0 : i32
    scf.if %2 {
      %cst_9 = arith.constant 0.000000e+00 : f32
      %12 = vector.broadcast %cst_9 : f32 to vector<128x128xf32>
      %c0_10 = arith.constant 0 : index
      %c0_11 = arith.constant 0 : index
      %13 = vector.load %arg7[%c0_10, %c0_11] : memref<128x128xf32, #tpu.memory_space<vmem>>, vector<128x128xf32>
      tpu.vector_store %arg7[%c0_10, %c0_11], %12 {strides = array<i32>} : memref<128x128xf32, #tpu.memory_space<vmem>>, vector<128x128xf32>,
    } else {
    }
    %c0 = arith.constant 0 : index
    %c0_1 = arith.constant 0 : index
    %3 = vector.load %arg7[%c0, %c0_1] : memref<128x128xf32, #tpu.memory_space<vmem>>, vector<128x128xf32>
    %c0_2 = arith.constant 0 : index
    %c0_3 = arith.constant 0 : index
    %4 = vector.load %arg3[%c0_2, %c0_3] : memref<128x128xbf16, #tpu.memory_space<vmem>>, vector<128x128xbf16>
    %c0_4 = arith.constant 0 : index
    %c0_5 = arith.constant 0 : index
    %5 = vector.load %arg4[%c0_4, %c0_5] : memref<128x128xbf16, #tpu.memory_space<vmem>>, vector<128x128xbf16>
    %cst = arith.constant dense<0.000000e+00> : vector<128x128xf32>
    %6 = tpu.matmul %4, %5, %cst {dimension_numbers = #tpu.dot_dimension_numbers<[1], [0], [0], [1], [0, 0, 1, 1], [], []>} : vector<128x128xbf16>, vector<128x128xbf16>, vector<128x128xf32> -> vector<128x128xf32>
    %7 = arith.addf %3, %6 : vector<128x128xf32>
    %c0_6 = arith.constant 0 : index
    %c0_7 = arith.constant 0 : index
    %8 = vector.load %arg7[%c0_6, %c0_7] : memref<128x128xf32, #tpu.memory_space<vmem>>, vector<128x128xf32>
    tpu.vector_store %arg7[%c0_6, %c0_7], %7 {strides = array<i32>} : memref<128x128xf32, #tpu.memory_space<vmem>>, vector<128x128xf32>,
    %c4_i32 = arith.constant 4 : i32
    %9 = arith.cmpi eq, %arg2, %c4_i32 : i32
    %10 = arith.extui %9 : i1 to i32
    %c0_i32_8 = arith.constant 0 : i32
    %11 = arith.cmpi ne, %10, %c0_i32_8 : i32
    scf.if %11 {
      %c0_9 = arith.constant 0 : index
      %c0_10 = arith.constant 0 : index
      %12 = vector.load %arg7[%c0_9, %c0_10] : memref<128x128xf32, #tpu.memory_space<vmem>>, vector<128x128xf32>
      %c0_11 = arith.constant 0 : index
      %c0_12 = arith.constant 0 : index
      %13 = vector.load %arg5[%c0_11, %c0_12] : memref<1x128xf32, #tpu.memory_space<vmem>>, vector<1x128xf32>
      %14 = vector.broadcast %13 : vector<1x128xf32> to vector<128x128xf32>
      %15 = arith.addf %12, %14 : vector<128x128xf32>
      %c0_13 = arith.constant 0 : index
      %c0_14 = arith.constant 0 : index
      %16 = vector.load %arg6[%c0_13, %c0_14] : memref<128x128xf32, #tpu.memory_space<vmem>>, vector<128x128xf32>
      tpu.vector_store %arg6[%c0_13, %c0_14], %15 {strides = array<i32>} : memref<128x128xf32, #tpu.memory_space<vmem>>, vector<128x128xf32>,
    } else {
    }
    return
  }
  func.func @transform_0(%arg0: i32, %arg1: i32, %arg2: i32) -> (i32, i32) {
    %c0_i32 = arith.constant 0 : i32
    return %arg0, %arg2 : i32, i32
  }
  func.func @transform_1(%arg0: i32, %arg1: i32, %arg2: i32) -> (i32, i32) {
    %c0_i32 = arith.constant 0 : i32
    return %arg2, %arg1 : i32, i32
  }
  func.func @transform_2(%arg0: i32, %arg1: i32, %arg2: i32) -> (i32, i32) {
    %c0_i32 = arith.constant 0 : i32
    %c0_i32_0 = arith.constant 0 : i32
    return %c0_i32, %arg1 : i32, i32
  }
  func.func @transform_3(%arg0: i32, %arg1: i32, %arg2: i32) -> (i32, i32) {
    %c0_i32 = arith.constant 0 : i32
    return %arg0, %arg1 : i32, i32
  }
}

module attributes {stable_mosaic.version = 11 : i64} {
  func.func @_instnorm_kernel(%arg0: i32, %arg1: memref<1x64x128xf32, #tpu.memory_space<vmem>>, %arg2: memref<1x64x128xf32, #tpu.memory_space<vmem>>) attributes {dimension_semantics = [#tpu.dimension_semantics<parallel>], iteration_bounds = array<i64: 2>, scalar_prefetch = 0 : i64, scratch_operands = 0 : i64, tpu.core_type = #tpu.core_type<tc>, window_params = [{transform_indices = @transform_0, window_bounds = array<i64: 1, 64, 128>}, {transform_indices = @transform_1, window_bounds = array<i64: 1, 64, 128>}]} {
    %c0 = arith.constant 0 : index
    %c0_0 = arith.constant 0 : index
    %c0_1 = arith.constant 0 : index
    %0 = vector.load %arg1[%c0, %c0_0, %c0_1] : memref<1x64x128xf32, #tpu.memory_space<vmem>>, vector<1x64x128xf32>
    %cst = arith.constant dense<0.000000e+00> : vector<1x128xf32>
    %1 = vector.multi_reduction <add>, %0, %cst [1] : vector<1x64x128xf32> to vector<1x128xf32>
    %2 = vector.shape_cast %1 : vector<1x128xf32> to vector<1x1x128xf32>
    %cst_2 = arith.constant 6.400000e+01 : f32
    %3 = vector.broadcast %cst_2 : f32 to vector<1x1x128xf32>
    %4 = arith.divf %2, %3 : vector<1x1x128xf32>
    %5 = vector.broadcast %4 : vector<1x1x128xf32> to vector<1x64x128xf32>
    %6 = arith.subf %0, %5 : vector<1x64x128xf32>
    %7 = arith.mulf %6, %6 : vector<1x64x128xf32>
    %cst_3 = arith.constant dense<0.000000e+00> : vector<1x128xf32>
    %8 = vector.multi_reduction <add>, %7, %cst_3 [1] : vector<1x64x128xf32> to vector<1x128xf32>
    %9 = vector.shape_cast %8 : vector<1x128xf32> to vector<1x1x128xf32>
    %cst_4 = arith.constant 6.400000e+01 : f32
    %10 = vector.broadcast %cst_4 : f32 to vector<1x1x128xf32>
    %11 = arith.divf %9, %10 : vector<1x1x128xf32>
    %cst_5 = arith.constant 9.99999974E-6 : f32
    %12 = vector.broadcast %cst_5 : f32 to vector<1x1x128xf32>
    %13 = arith.addf %11, %12 : vector<1x1x128xf32>
    %14 = math.rsqrt %13 : vector<1x1x128xf32>
    %15 = vector.broadcast %14 : vector<1x1x128xf32> to vector<1x64x128xf32>
    %16 = arith.mulf %6, %15 : vector<1x64x128xf32>
    %cst_6 = arith.constant 0.000000e+00 : f32
    %17 = vector.broadcast %cst_6 : f32 to vector<1x64x128xf32>
    %18 = arith.maximumf %16, %17 : vector<1x64x128xf32>
    %c0_7 = arith.constant 0 : index
    %c0_8 = arith.constant 0 : index
    %c0_9 = arith.constant 0 : index
    %19 = vector.load %arg2[%c0_7, %c0_8, %c0_9] : memref<1x64x128xf32, #tpu.memory_space<vmem>>, vector<1x64x128xf32>
    tpu.vector_store %arg2[%c0_7, %c0_8, %c0_9], %18 {strides = array<i32>} : memref<1x64x128xf32, #tpu.memory_space<vmem>>, vector<1x64x128xf32>,
    return
  }
  func.func @transform_0(%arg0: i32) -> (i32, i32, i32) {
    %c0_i32 = arith.constant 0 : i32
    %c0_i32_0 = arith.constant 0 : i32
    %c0_i32_1 = arith.constant 0 : i32
    return %arg0, %c0_i32, %c0_i32_0 : i32, i32, i32
  }
  func.func @transform_1(%arg0: i32) -> (i32, i32, i32) {
    %c0_i32 = arith.constant 0 : i32
    %c0_i32_0 = arith.constant 0 : i32
    %c0_i32_1 = arith.constant 0 : i32
    return %arg0, %c0_i32, %c0_i32_0 : i32, i32, i32
  }
}

module attributes {stable_mosaic.version = 11 : i64} {
  func.func @_matmul_epilogue_kernel(%arg0: i32, %arg1: i32, %arg2: i32, %arg3: memref<32x128xbf16, #tpu.memory_space<vmem>>, %arg4: memref<128x256xbf16, #tpu.memory_space<vmem>>, %arg5: memref<1x256xf32, #tpu.memory_space<vmem>>, %arg6: memref<32x256xf32, #tpu.memory_space<vmem>>, %arg7: memref<32x256xf32, #tpu.memory_space<vmem>>) attributes {dimension_semantics = [#tpu.dimension_semantics<parallel>, #tpu.dimension_semantics<parallel>, #tpu.dimension_semantics<arbitrary>], iteration_bounds = array<i64: 1, 1, 9>, scalar_prefetch = 0 : i64, scratch_operands = 1 : i64, tpu.core_type = #tpu.core_type<tc>, window_params = [{transform_indices = @transform_0, window_bounds = array<i64: 32, 128>}, {transform_indices = @transform_1, window_bounds = array<i64: 128, 256>}, {transform_indices = @transform_2, window_bounds = array<i64: 1, 256>}, {transform_indices = @transform_3, window_bounds = array<i64: 32, 256>}]} {
    %c0_i32 = arith.constant 0 : i32
    %0 = arith.cmpi eq, %arg2, %c0_i32 : i32
    %1 = arith.extui %0 : i1 to i32
    %c0_i32_0 = arith.constant 0 : i32
    %2 = arith.cmpi ne, %1, %c0_i32_0 : i32
    scf.if %2 {
      %cst_9 = arith.constant 0.000000e+00 : f32
      %12 = vector.broadcast %cst_9 : f32 to vector<32x256xf32>
      %c0_10 = arith.constant 0 : index
      %c0_11 = arith.constant 0 : index
      %13 = vector.load %arg7[%c0_10, %c0_11] : memref<32x256xf32, #tpu.memory_space<vmem>>, vector<32x256xf32>
      tpu.vector_store %arg7[%c0_10, %c0_11], %12 {strides = array<i32>} : memref<32x256xf32, #tpu.memory_space<vmem>>, vector<32x256xf32>,
    } else {
    }
    %c0 = arith.constant 0 : index
    %c0_1 = arith.constant 0 : index
    %3 = vector.load %arg7[%c0, %c0_1] : memref<32x256xf32, #tpu.memory_space<vmem>>, vector<32x256xf32>
    %c0_2 = arith.constant 0 : index
    %c0_3 = arith.constant 0 : index
    %4 = vector.load %arg3[%c0_2, %c0_3] : memref<32x128xbf16, #tpu.memory_space<vmem>>, vector<32x128xbf16>
    %c0_4 = arith.constant 0 : index
    %c0_5 = arith.constant 0 : index
    %5 = vector.load %arg4[%c0_4, %c0_5] : memref<128x256xbf16, #tpu.memory_space<vmem>>, vector<128x256xbf16>
    %cst = arith.constant dense<0.000000e+00> : vector<32x256xf32>
    %6 = tpu.matmul %4, %5, %cst {dimension_numbers = #tpu.dot_dimension_numbers<[1], [0], [0], [1], [0, 0, 1, 1], [], []>} : vector<32x128xbf16>, vector<128x256xbf16>, vector<32x256xf32> -> vector<32x256xf32>
    %7 = arith.addf %3, %6 : vector<32x256xf32>
    %c0_6 = arith.constant 0 : index
    %c0_7 = arith.constant 0 : index
    %8 = vector.load %arg7[%c0_6, %c0_7] : memref<32x256xf32, #tpu.memory_space<vmem>>, vector<32x256xf32>
    tpu.vector_store %arg7[%c0_6, %c0_7], %7 {strides = array<i32>} : memref<32x256xf32, #tpu.memory_space<vmem>>, vector<32x256xf32>,
    %c8_i32 = arith.constant 8 : i32
    %9 = arith.cmpi eq, %arg2, %c8_i32 : i32
    %10 = arith.extui %9 : i1 to i32
    %c0_i32_8 = arith.constant 0 : i32
    %11 = arith.cmpi ne, %10, %c0_i32_8 : i32
    scf.if %11 {
      %c0_9 = arith.constant 0 : index
      %c0_10 = arith.constant 0 : index
      %12 = vector.load %arg7[%c0_9, %c0_10] : memref<32x256xf32, #tpu.memory_space<vmem>>, vector<32x256xf32>
      %c0_11 = arith.constant 0 : index
      %c0_12 = arith.constant 0 : index
      %13 = vector.load %arg5[%c0_11, %c0_12] : memref<1x256xf32, #tpu.memory_space<vmem>>, vector<1x256xf32>
      %14 = vector.broadcast %13 : vector<1x256xf32> to vector<32x256xf32>
      %15 = arith.addf %12, %14 : vector<32x256xf32>
      %c0_13 = arith.constant 0 : index
      %c0_14 = arith.constant 0 : index
      %16 = vector.load %arg6[%c0_13, %c0_14] : memref<32x256xf32, #tpu.memory_space<vmem>>, vector<32x256xf32>
      tpu.vector_store %arg6[%c0_13, %c0_14], %15 {strides = array<i32>} : memref<32x256xf32, #tpu.memory_space<vmem>>, vector<32x256xf32>,
    } else {
    }
    return
  }
  func.func @transform_0(%arg0: i32, %arg1: i32, %arg2: i32) -> (i32, i32) {
    %c0_i32 = arith.constant 0 : i32
    return %arg0, %arg2 : i32, i32
  }
  func.func @transform_1(%arg0: i32, %arg1: i32, %arg2: i32) -> (i32, i32) {
    %c0_i32 = arith.constant 0 : i32
    return %arg2, %arg1 : i32, i32
  }
  func.func @transform_2(%arg0: i32, %arg1: i32, %arg2: i32) -> (i32, i32) {
    %c0_i32 = arith.constant 0 : i32
    %c0_i32_0 = arith.constant 0 : i32
    return %c0_i32, %arg1 : i32, i32
  }
  func.func @transform_3(%arg0: i32, %arg1: i32, %arg2: i32) -> (i32, i32) {
    %c0_i32 = arith.constant 0 : i32
    return %arg0, %arg1 : i32, i32
  }
}

module attributes {stable_mosaic.version = 11 : i64} {
  func.func @_instnorm_kernel(%arg0: i32, %arg1: memref<1x16x256xf32, #tpu.memory_space<vmem>>, %arg2: memref<1x16x256xf32, #tpu.memory_space<vmem>>) attributes {dimension_semantics = [#tpu.dimension_semantics<parallel>], iteration_bounds = array<i64: 2>, scalar_prefetch = 0 : i64, scratch_operands = 0 : i64, tpu.core_type = #tpu.core_type<tc>, window_params = [{transform_indices = @transform_0, window_bounds = array<i64: 1, 16, 256>}, {transform_indices = @transform_1, window_bounds = array<i64: 1, 16, 256>}]} {
    %c0 = arith.constant 0 : index
    %c0_0 = arith.constant 0 : index
    %c0_1 = arith.constant 0 : index
    %0 = vector.load %arg1[%c0, %c0_0, %c0_1] : memref<1x16x256xf32, #tpu.memory_space<vmem>>, vector<1x16x256xf32>
    %cst = arith.constant dense<0.000000e+00> : vector<1x256xf32>
    %1 = vector.multi_reduction <add>, %0, %cst [1] : vector<1x16x256xf32> to vector<1x256xf32>
    %2 = vector.shape_cast %1 : vector<1x256xf32> to vector<1x1x256xf32>
    %cst_2 = arith.constant 1.600000e+01 : f32
    %3 = vector.broadcast %cst_2 : f32 to vector<1x1x256xf32>
    %4 = arith.divf %2, %3 : vector<1x1x256xf32>
    %5 = vector.broadcast %4 : vector<1x1x256xf32> to vector<1x16x256xf32>
    %6 = arith.subf %0, %5 : vector<1x16x256xf32>
    %7 = arith.mulf %6, %6 : vector<1x16x256xf32>
    %cst_3 = arith.constant dense<0.000000e+00> : vector<1x256xf32>
    %8 = vector.multi_reduction <add>, %7, %cst_3 [1] : vector<1x16x256xf32> to vector<1x256xf32>
    %9 = vector.shape_cast %8 : vector<1x256xf32> to vector<1x1x256xf32>
    %cst_4 = arith.constant 1.600000e+01 : f32
    %10 = vector.broadcast %cst_4 : f32 to vector<1x1x256xf32>
    %11 = arith.divf %9, %10 : vector<1x1x256xf32>
    %cst_5 = arith.constant 9.99999974E-6 : f32
    %12 = vector.broadcast %cst_5 : f32 to vector<1x1x256xf32>
    %13 = arith.addf %11, %12 : vector<1x1x256xf32>
    %14 = math.rsqrt %13 : vector<1x1x256xf32>
    %15 = vector.broadcast %14 : vector<1x1x256xf32> to vector<1x16x256xf32>
    %16 = arith.mulf %6, %15 : vector<1x16x256xf32>
    %cst_6 = arith.constant 0.000000e+00 : f32
    %17 = vector.broadcast %cst_6 : f32 to vector<1x16x256xf32>
    %18 = arith.maximumf %16, %17 : vector<1x16x256xf32>
    %c0_7 = arith.constant 0 : index
    %c0_8 = arith.constant 0 : index
    %c0_9 = arith.constant 0 : index
    %19 = vector.load %arg2[%c0_7, %c0_8, %c0_9] : memref<1x16x256xf32, #tpu.memory_space<vmem>>, vector<1x16x256xf32>
    tpu.vector_store %arg2[%c0_7, %c0_8, %c0_9], %18 {strides = array<i32>} : memref<1x16x256xf32, #tpu.memory_space<vmem>>, vector<1x16x256xf32>,
    return
  }
  func.func @transform_0(%arg0: i32) -> (i32, i32, i32) {
    %c0_i32 = arith.constant 0 : i32
    %c0_i32_0 = arith.constant 0 : i32
    %c0_i32_1 = arith.constant 0 : i32
    return %arg0, %c0_i32, %c0_i32_0 : i32, i32, i32
  }
  func.func @transform_1(%arg0: i32) -> (i32, i32, i32) {
    %c0_i32 = arith.constant 0 : i32
    %c0_i32_0 = arith.constant 0 : i32
    %c0_i32_1 = arith.constant 0 : i32
    return %arg0, %c0_i32, %c0_i32_0 : i32, i32, i32
  }
}

module attributes {stable_mosaic.version = 11 : i64} {
  func.func @_matmul_epilogue_kernel(%arg0: i32, %arg1: i32, %arg2: i32, %arg3: memref<32x256xbf16, #tpu.memory_space<vmem>>, %arg4: memref<256x256xbf16, #tpu.memory_space<vmem>>, %arg5: memref<1x256xf32, #tpu.memory_space<vmem>>, %arg6: memref<32x256xf32, #tpu.memory_space<vmem>>, %arg7: memref<32x256xf32, #tpu.memory_space<vmem>>) attributes {dimension_semantics = [#tpu.dimension_semantics<parallel>, #tpu.dimension_semantics<parallel>, #tpu.dimension_semantics<arbitrary>], iteration_bounds = array<i64: 1, 1, 9>, scalar_prefetch = 0 : i64, scratch_operands = 1 : i64, tpu.core_type = #tpu.core_type<tc>, window_params = [{transform_indices = @transform_0, window_bounds = array<i64: 32, 256>}, {transform_indices = @transform_1, window_bounds = array<i64: 256, 256>}, {transform_indices = @transform_2, window_bounds = array<i64: 1, 256>}, {transform_indices = @transform_3, window_bounds = array<i64: 32, 256>}]} {
    %c0_i32 = arith.constant 0 : i32
    %0 = arith.cmpi eq, %arg2, %c0_i32 : i32
    %1 = arith.extui %0 : i1 to i32
    %c0_i32_0 = arith.constant 0 : i32
    %2 = arith.cmpi ne, %1, %c0_i32_0 : i32
    scf.if %2 {
      %cst_9 = arith.constant 0.000000e+00 : f32
      %12 = vector.broadcast %cst_9 : f32 to vector<32x256xf32>
      %c0_10 = arith.constant 0 : index
      %c0_11 = arith.constant 0 : index
      %13 = vector.load %arg7[%c0_10, %c0_11] : memref<32x256xf32, #tpu.memory_space<vmem>>, vector<32x256xf32>
      tpu.vector_store %arg7[%c0_10, %c0_11], %12 {strides = array<i32>} : memref<32x256xf32, #tpu.memory_space<vmem>>, vector<32x256xf32>,
    } else {
    }
    %c0 = arith.constant 0 : index
    %c0_1 = arith.constant 0 : index
    %3 = vector.load %arg7[%c0, %c0_1] : memref<32x256xf32, #tpu.memory_space<vmem>>, vector<32x256xf32>
    %c0_2 = arith.constant 0 : index
    %c0_3 = arith.constant 0 : index
    %4 = vector.load %arg3[%c0_2, %c0_3] : memref<32x256xbf16, #tpu.memory_space<vmem>>, vector<32x256xbf16>
    %c0_4 = arith.constant 0 : index
    %c0_5 = arith.constant 0 : index
    %5 = vector.load %arg4[%c0_4, %c0_5] : memref<256x256xbf16, #tpu.memory_space<vmem>>, vector<256x256xbf16>
    %cst = arith.constant dense<0.000000e+00> : vector<32x256xf32>
    %6 = tpu.matmul %4, %5, %cst {dimension_numbers = #tpu.dot_dimension_numbers<[1], [0], [0], [1], [0, 0, 1, 1], [], []>} : vector<32x256xbf16>, vector<256x256xbf16>, vector<32x256xf32> -> vector<32x256xf32>
    %7 = arith.addf %3, %6 : vector<32x256xf32>
    %c0_6 = arith.constant 0 : index
    %c0_7 = arith.constant 0 : index
    %8 = vector.load %arg7[%c0_6, %c0_7] : memref<32x256xf32, #tpu.memory_space<vmem>>, vector<32x256xf32>
    tpu.vector_store %arg7[%c0_6, %c0_7], %7 {strides = array<i32>} : memref<32x256xf32, #tpu.memory_space<vmem>>, vector<32x256xf32>,
    %c8_i32 = arith.constant 8 : i32
    %9 = arith.cmpi eq, %arg2, %c8_i32 : i32
    %10 = arith.extui %9 : i1 to i32
    %c0_i32_8 = arith.constant 0 : i32
    %11 = arith.cmpi ne, %10, %c0_i32_8 : i32
    scf.if %11 {
      %c0_9 = arith.constant 0 : index
      %c0_10 = arith.constant 0 : index
      %12 = vector.load %arg7[%c0_9, %c0_10] : memref<32x256xf32, #tpu.memory_space<vmem>>, vector<32x256xf32>
      %c0_11 = arith.constant 0 : index
      %c0_12 = arith.constant 0 : index
      %13 = vector.load %arg5[%c0_11, %c0_12] : memref<1x256xf32, #tpu.memory_space<vmem>>, vector<1x256xf32>
      %14 = vector.broadcast %13 : vector<1x256xf32> to vector<32x256xf32>
      %15 = arith.addf %12, %14 : vector<32x256xf32>
      %c0_13 = arith.constant 0 : index
      %c0_14 = arith.constant 0 : index
      %16 = vector.load %arg6[%c0_13, %c0_14] : memref<32x256xf32, #tpu.memory_space<vmem>>, vector<32x256xf32>
      tpu.vector_store %arg6[%c0_13, %c0_14], %15 {strides = array<i32>} : memref<32x256xf32, #tpu.memory_space<vmem>>, vector<32x256xf32>,
    } else {
    }
    return
  }
  func.func @transform_0(%arg0: i32, %arg1: i32, %arg2: i32) -> (i32, i32) {
    %c0_i32 = arith.constant 0 : i32
    return %arg0, %arg2 : i32, i32
  }
  func.func @transform_1(%arg0: i32, %arg1: i32, %arg2: i32) -> (i32, i32) {
    %c0_i32 = arith.constant 0 : i32
    return %arg2, %arg1 : i32, i32
  }
  func.func @transform_2(%arg0: i32, %arg1: i32, %arg2: i32) -> (i32, i32) {
    %c0_i32 = arith.constant 0 : i32
    %c0_i32_0 = arith.constant 0 : i32
    return %c0_i32, %arg1 : i32, i32
  }
  func.func @transform_3(%arg0: i32, %arg1: i32, %arg2: i32) -> (i32, i32) {
    %c0_i32 = arith.constant 0 : i32
    return %arg0, %arg1 : i32, i32
  }
}

module attributes {stable_mosaic.version = 11 : i64} {
  func.func @_instnorm_residual_kernel(%arg0: i32, %arg1: memref<1x16x256xf32, #tpu.memory_space<vmem>>, %arg2: memref<1x16x256xf32, #tpu.memory_space<vmem>>, %arg3: memref<1x16x256xf32, #tpu.memory_space<vmem>>) attributes {dimension_semantics = [#tpu.dimension_semantics<parallel>], iteration_bounds = array<i64: 2>, scalar_prefetch = 0 : i64, scratch_operands = 0 : i64, tpu.core_type = #tpu.core_type<tc>, window_params = [{transform_indices = @transform_0, window_bounds = array<i64: 1, 16, 256>}, {transform_indices = @transform_1, window_bounds = array<i64: 1, 16, 256>}, {transform_indices = @transform_2, window_bounds = array<i64: 1, 16, 256>}]} {
    %c0 = arith.constant 0 : index
    %c0_0 = arith.constant 0 : index
    %c0_1 = arith.constant 0 : index
    %0 = vector.load %arg1[%c0, %c0_0, %c0_1] : memref<1x16x256xf32, #tpu.memory_space<vmem>>, vector<1x16x256xf32>
    %cst = arith.constant dense<0.000000e+00> : vector<1x256xf32>
    %1 = vector.multi_reduction <add>, %0, %cst [1] : vector<1x16x256xf32> to vector<1x256xf32>
    %2 = vector.shape_cast %1 : vector<1x256xf32> to vector<1x1x256xf32>
    %cst_2 = arith.constant 1.600000e+01 : f32
    %3 = vector.broadcast %cst_2 : f32 to vector<1x1x256xf32>
    %4 = arith.divf %2, %3 : vector<1x1x256xf32>
    %5 = vector.broadcast %4 : vector<1x1x256xf32> to vector<1x16x256xf32>
    %6 = arith.subf %0, %5 : vector<1x16x256xf32>
    %7 = arith.mulf %6, %6 : vector<1x16x256xf32>
    %cst_3 = arith.constant dense<0.000000e+00> : vector<1x256xf32>
    %8 = vector.multi_reduction <add>, %7, %cst_3 [1] : vector<1x16x256xf32> to vector<1x256xf32>
    %9 = vector.shape_cast %8 : vector<1x256xf32> to vector<1x1x256xf32>
    %cst_4 = arith.constant 1.600000e+01 : f32
    %10 = vector.broadcast %cst_4 : f32 to vector<1x1x256xf32>
    %11 = arith.divf %9, %10 : vector<1x1x256xf32>
    %cst_5 = arith.constant 9.99999974E-6 : f32
    %12 = vector.broadcast %cst_5 : f32 to vector<1x1x256xf32>
    %13 = arith.addf %11, %12 : vector<1x1x256xf32>
    %14 = math.rsqrt %13 : vector<1x1x256xf32>
    %15 = vector.broadcast %14 : vector<1x1x256xf32> to vector<1x16x256xf32>
    %16 = arith.mulf %6, %15 : vector<1x16x256xf32>
    %c0_6 = arith.constant 0 : index
    %c0_7 = arith.constant 0 : index
    %c0_8 = arith.constant 0 : index
    %17 = vector.load %arg2[%c0_6, %c0_7, %c0_8] : memref<1x16x256xf32, #tpu.memory_space<vmem>>, vector<1x16x256xf32>
    %18 = arith.addf %17, %16 : vector<1x16x256xf32>
    %c0_9 = arith.constant 0 : index
    %c0_10 = arith.constant 0 : index
    %c0_11 = arith.constant 0 : index
    %19 = vector.load %arg3[%c0_9, %c0_10, %c0_11] : memref<1x16x256xf32, #tpu.memory_space<vmem>>, vector<1x16x256xf32>
    tpu.vector_store %arg3[%c0_9, %c0_10, %c0_11], %18 {strides = array<i32>} : memref<1x16x256xf32, #tpu.memory_space<vmem>>, vector<1x16x256xf32>,
    return
  }
  func.func @transform_0(%arg0: i32) -> (i32, i32, i32) {
    %c0_i32 = arith.constant 0 : i32
    %c0_i32_0 = arith.constant 0 : i32
    %c0_i32_1 = arith.constant 0 : i32
    return %arg0, %c0_i32, %c0_i32_0 : i32, i32, i32
  }
  func.func @transform_1(%arg0: i32) -> (i32, i32, i32) {
    %c0_i32 = arith.constant 0 : i32
    %c0_i32_0 = arith.constant 0 : i32
    %c0_i32_1 = arith.constant 0 : i32
    return %arg0, %c0_i32, %c0_i32_0 : i32, i32, i32
  }
  func.func @transform_2(%arg0: i32) -> (i32, i32, i32) {
    %c0_i32 = arith.constant 0 : i32
    %c0_i32_0 = arith.constant 0 : i32
    %c0_i32_1 = arith.constant 0 : i32
    return %arg0, %c0_i32, %c0_i32_0 : i32, i32, i32
  }
}

module attributes {stable_mosaic.version = 11 : i64} {
  func.func @_matmul_epilogue_kernel(%arg0: i32, %arg1: i32, %arg2: i32, %arg3: memref<32x512xbf16, #tpu.memory_space<vmem>>, %arg4: memref<512x128xbf16, #tpu.memory_space<vmem>>, %arg5: memref<1x128xf32, #tpu.memory_space<vmem>>, %arg6: memref<32x128xf32, #tpu.memory_space<vmem>>, %arg7: memref<32x128xf32, #tpu.memory_space<vmem>>) attributes {dimension_semantics = [#tpu.dimension_semantics<parallel>, #tpu.dimension_semantics<parallel>, #tpu.dimension_semantics<arbitrary>], iteration_bounds = array<i64: 1, 1, 1>, scalar_prefetch = 0 : i64, scratch_operands = 1 : i64, tpu.core_type = #tpu.core_type<tc>, window_params = [{transform_indices = @transform_0, window_bounds = array<i64: 32, 512>}, {transform_indices = @transform_1, window_bounds = array<i64: 512, 128>}, {transform_indices = @transform_2, window_bounds = array<i64: 1, 128>}, {transform_indices = @transform_3, window_bounds = array<i64: 32, 128>}]} {
    %c0_i32 = arith.constant 0 : i32
    %0 = arith.cmpi eq, %arg2, %c0_i32 : i32
    %1 = arith.extui %0 : i1 to i32
    %c0_i32_0 = arith.constant 0 : i32
    %2 = arith.cmpi ne, %1, %c0_i32_0 : i32
    scf.if %2 {
      %cst_10 = arith.constant 0.000000e+00 : f32
      %12 = vector.broadcast %cst_10 : f32 to vector<32x128xf32>
      %c0_11 = arith.constant 0 : index
      %c0_12 = arith.constant 0 : index
      %13 = vector.load %arg7[%c0_11, %c0_12] : memref<32x128xf32, #tpu.memory_space<vmem>>, vector<32x128xf32>
      tpu.vector_store %arg7[%c0_11, %c0_12], %12 {strides = array<i32>} : memref<32x128xf32, #tpu.memory_space<vmem>>, vector<32x128xf32>,
    } else {
    }
    %c0 = arith.constant 0 : index
    %c0_1 = arith.constant 0 : index
    %3 = vector.load %arg7[%c0, %c0_1] : memref<32x128xf32, #tpu.memory_space<vmem>>, vector<32x128xf32>
    %c0_2 = arith.constant 0 : index
    %c0_3 = arith.constant 0 : index
    %4 = vector.load %arg3[%c0_2, %c0_3] : memref<32x512xbf16, #tpu.memory_space<vmem>>, vector<32x512xbf16>
    %c0_4 = arith.constant 0 : index
    %c0_5 = arith.constant 0 : index
    %5 = vector.load %arg4[%c0_4, %c0_5] : memref<512x128xbf16, #tpu.memory_space<vmem>>, vector<512x128xbf16>
    %cst = arith.constant dense<0.000000e+00> : vector<32x128xf32>
    %6 = tpu.matmul %4, %5, %cst {dimension_numbers = #tpu.dot_dimension_numbers<[1], [0], [0], [1], [0, 0, 1, 1], [], []>} : vector<32x512xbf16>, vector<512x128xbf16>, vector<32x128xf32> -> vector<32x128xf32>
    %7 = arith.addf %3, %6 : vector<32x128xf32>
    %c0_6 = arith.constant 0 : index
    %c0_7 = arith.constant 0 : index
    %8 = vector.load %arg7[%c0_6, %c0_7] : memref<32x128xf32, #tpu.memory_space<vmem>>, vector<32x128xf32>
    tpu.vector_store %arg7[%c0_6, %c0_7], %7 {strides = array<i32>} : memref<32x128xf32, #tpu.memory_space<vmem>>, vector<32x128xf32>,
    %c0_i32_8 = arith.constant 0 : i32
    %9 = arith.cmpi eq, %arg2, %c0_i32_8 : i32
    %10 = arith.extui %9 : i1 to i32
    %c0_i32_9 = arith.constant 0 : i32
    %11 = arith.cmpi ne, %10, %c0_i32_9 : i32
    scf.if %11 {
      %c0_10 = arith.constant 0 : index
      %c0_11 = arith.constant 0 : index
      %12 = vector.load %arg7[%c0_10, %c0_11] : memref<32x128xf32, #tpu.memory_space<vmem>>, vector<32x128xf32>
      %c0_12 = arith.constant 0 : index
      %c0_13 = arith.constant 0 : index
      %13 = vector.load %arg5[%c0_12, %c0_13] : memref<1x128xf32, #tpu.memory_space<vmem>>, vector<1x128xf32>
      %14 = vector.broadcast %13 : vector<1x128xf32> to vector<32x128xf32>
      %15 = arith.addf %12, %14 : vector<32x128xf32>
      %c0_14 = arith.constant 0 : index
      %c0_15 = arith.constant 0 : index
      %16 = vector.load %arg6[%c0_14, %c0_15] : memref<32x128xf32, #tpu.memory_space<vmem>>, vector<32x128xf32>
      tpu.vector_store %arg6[%c0_14, %c0_15], %15 {strides = array<i32>} : memref<32x128xf32, #tpu.memory_space<vmem>>, vector<32x128xf32>,
    } else {
    }
    return
  }
  func.func @transform_0(%arg0: i32, %arg1: i32, %arg2: i32) -> (i32, i32) {
    %c0_i32 = arith.constant 0 : i32
    return %arg0, %arg2 : i32, i32
  }
  func.func @transform_1(%arg0: i32, %arg1: i32, %arg2: i32) -> (i32, i32) {
    %c0_i32 = arith.constant 0 : i32
    return %arg2, %arg1 : i32, i32
  }
  func.func @transform_2(%arg0: i32, %arg1: i32, %arg2: i32) -> (i32, i32) {
    %c0_i32 = arith.constant 0 : i32
    %c0_i32_0 = arith.constant 0 : i32
    return %c0_i32, %arg1 : i32, i32
  }
  func.func @transform_3(%arg0: i32, %arg1: i32, %arg2: i32) -> (i32, i32) {
    %c0_i32 = arith.constant 0 : i32
    return %arg0, %arg1 : i32, i32
  }
}

module attributes {stable_mosaic.version = 11 : i64} {
  func.func @_matmul_epilogue_kernel(%arg0: i32, %arg1: i32, %arg2: i32, %arg3: memref<32x256xbf16, #tpu.memory_space<vmem>>, %arg4: memref<256x128xbf16, #tpu.memory_space<vmem>>, %arg5: memref<1x128xf32, #tpu.memory_space<vmem>>, %arg6: memref<32x128xf32, #tpu.memory_space<vmem>>, %arg7: memref<32x128xf32, #tpu.memory_space<vmem>>) attributes {dimension_semantics = [#tpu.dimension_semantics<parallel>, #tpu.dimension_semantics<parallel>, #tpu.dimension_semantics<arbitrary>], iteration_bounds = array<i64: 1, 1, 1>, scalar_prefetch = 0 : i64, scratch_operands = 1 : i64, tpu.core_type = #tpu.core_type<tc>, window_params = [{transform_indices = @transform_0, window_bounds = array<i64: 32, 256>}, {transform_indices = @transform_1, window_bounds = array<i64: 256, 128>}, {transform_indices = @transform_2, window_bounds = array<i64: 1, 128>}, {transform_indices = @transform_3, window_bounds = array<i64: 32, 128>}]} {
    %c0_i32 = arith.constant 0 : i32
    %0 = arith.cmpi eq, %arg2, %c0_i32 : i32
    %1 = arith.extui %0 : i1 to i32
    %c0_i32_0 = arith.constant 0 : i32
    %2 = arith.cmpi ne, %1, %c0_i32_0 : i32
    scf.if %2 {
      %cst_10 = arith.constant 0.000000e+00 : f32
      %12 = vector.broadcast %cst_10 : f32 to vector<32x128xf32>
      %c0_11 = arith.constant 0 : index
      %c0_12 = arith.constant 0 : index
      %13 = vector.load %arg7[%c0_11, %c0_12] : memref<32x128xf32, #tpu.memory_space<vmem>>, vector<32x128xf32>
      tpu.vector_store %arg7[%c0_11, %c0_12], %12 {strides = array<i32>} : memref<32x128xf32, #tpu.memory_space<vmem>>, vector<32x128xf32>,
    } else {
    }
    %c0 = arith.constant 0 : index
    %c0_1 = arith.constant 0 : index
    %3 = vector.load %arg7[%c0, %c0_1] : memref<32x128xf32, #tpu.memory_space<vmem>>, vector<32x128xf32>
    %c0_2 = arith.constant 0 : index
    %c0_3 = arith.constant 0 : index
    %4 = vector.load %arg3[%c0_2, %c0_3] : memref<32x256xbf16, #tpu.memory_space<vmem>>, vector<32x256xbf16>
    %c0_4 = arith.constant 0 : index
    %c0_5 = arith.constant 0 : index
    %5 = vector.load %arg4[%c0_4, %c0_5] : memref<256x128xbf16, #tpu.memory_space<vmem>>, vector<256x128xbf16>
    %cst = arith.constant dense<0.000000e+00> : vector<32x128xf32>
    %6 = tpu.matmul %4, %5, %cst {dimension_numbers = #tpu.dot_dimension_numbers<[1], [0], [0], [1], [0, 0, 1, 1], [], []>} : vector<32x256xbf16>, vector<256x128xbf16>, vector<32x128xf32> -> vector<32x128xf32>
    %7 = arith.addf %3, %6 : vector<32x128xf32>
    %c0_6 = arith.constant 0 : index
    %c0_7 = arith.constant 0 : index
    %8 = vector.load %arg7[%c0_6, %c0_7] : memref<32x128xf32, #tpu.memory_space<vmem>>, vector<32x128xf32>
    tpu.vector_store %arg7[%c0_6, %c0_7], %7 {strides = array<i32>} : memref<32x128xf32, #tpu.memory_space<vmem>>, vector<32x128xf32>,
    %c0_i32_8 = arith.constant 0 : i32
    %9 = arith.cmpi eq, %arg2, %c0_i32_8 : i32
    %10 = arith.extui %9 : i1 to i32
    %c0_i32_9 = arith.constant 0 : i32
    %11 = arith.cmpi ne, %10, %c0_i32_9 : i32
    scf.if %11 {
      %c0_10 = arith.constant 0 : index
      %c0_11 = arith.constant 0 : index
      %12 = vector.load %arg7[%c0_10, %c0_11] : memref<32x128xf32, #tpu.memory_space<vmem>>, vector<32x128xf32>
      %c0_12 = arith.constant 0 : index
      %c0_13 = arith.constant 0 : index
      %13 = vector.load %arg5[%c0_12, %c0_13] : memref<1x128xf32, #tpu.memory_space<vmem>>, vector<1x128xf32>
      %14 = vector.broadcast %13 : vector<1x128xf32> to vector<32x128xf32>
      %15 = arith.addf %12, %14 : vector<32x128xf32>
      %c0_14 = arith.constant 0 : index
      %c0_15 = arith.constant 0 : index
      %16 = vector.load %arg6[%c0_14, %c0_15] : memref<32x128xf32, #tpu.memory_space<vmem>>, vector<32x128xf32>
      tpu.vector_store %arg6[%c0_14, %c0_15], %15 {strides = array<i32>} : memref<32x128xf32, #tpu.memory_space<vmem>>, vector<32x128xf32>,
    } else {
    }
    return
  }
  func.func @transform_0(%arg0: i32, %arg1: i32, %arg2: i32) -> (i32, i32) {
    %c0_i32 = arith.constant 0 : i32
    return %arg0, %arg2 : i32, i32
  }
  func.func @transform_1(%arg0: i32, %arg1: i32, %arg2: i32) -> (i32, i32) {
    %c0_i32 = arith.constant 0 : i32
    return %arg2, %arg1 : i32, i32
  }
  func.func @transform_2(%arg0: i32, %arg1: i32, %arg2: i32) -> (i32, i32) {
    %c0_i32 = arith.constant 0 : i32
    %c0_i32_0 = arith.constant 0 : i32
    return %c0_i32, %arg1 : i32, i32
  }
  func.func @transform_3(%arg0: i32, %arg1: i32, %arg2: i32) -> (i32, i32) {
    %c0_i32 = arith.constant 0 : i32
    return %arg0, %arg1 : i32, i32
  }
}

module attributes {stable_mosaic.version = 11 : i64} {
  func.func @_matmul_epilogue_kernel(%arg0: i32, %arg1: i32, %arg2: i32, %arg3: memref<32x512xbf16, #tpu.memory_space<vmem>>, %arg4: memref<512x128xbf16, #tpu.memory_space<vmem>>, %arg5: memref<1x128xf32, #tpu.memory_space<vmem>>, %arg6: memref<32x128xf32, #tpu.memory_space<vmem>>, %arg7: memref<32x128xf32, #tpu.memory_space<vmem>>) attributes {dimension_semantics = [#tpu.dimension_semantics<parallel>, #tpu.dimension_semantics<parallel>, #tpu.dimension_semantics<arbitrary>], iteration_bounds = array<i64: 1, 1, 2>, scalar_prefetch = 0 : i64, scratch_operands = 1 : i64, tpu.core_type = #tpu.core_type<tc>, window_params = [{transform_indices = @transform_0, window_bounds = array<i64: 32, 512>}, {transform_indices = @transform_1, window_bounds = array<i64: 512, 128>}, {transform_indices = @transform_2, window_bounds = array<i64: 1, 128>}, {transform_indices = @transform_3, window_bounds = array<i64: 32, 128>}]} {
    %c0_i32 = arith.constant 0 : i32
    %0 = arith.cmpi eq, %arg2, %c0_i32 : i32
    %1 = arith.extui %0 : i1 to i32
    %c0_i32_0 = arith.constant 0 : i32
    %2 = arith.cmpi ne, %1, %c0_i32_0 : i32
    scf.if %2 {
      %cst_9 = arith.constant 0.000000e+00 : f32
      %12 = vector.broadcast %cst_9 : f32 to vector<32x128xf32>
      %c0_10 = arith.constant 0 : index
      %c0_11 = arith.constant 0 : index
      %13 = vector.load %arg7[%c0_10, %c0_11] : memref<32x128xf32, #tpu.memory_space<vmem>>, vector<32x128xf32>
      tpu.vector_store %arg7[%c0_10, %c0_11], %12 {strides = array<i32>} : memref<32x128xf32, #tpu.memory_space<vmem>>, vector<32x128xf32>,
    } else {
    }
    %c0 = arith.constant 0 : index
    %c0_1 = arith.constant 0 : index
    %3 = vector.load %arg7[%c0, %c0_1] : memref<32x128xf32, #tpu.memory_space<vmem>>, vector<32x128xf32>
    %c0_2 = arith.constant 0 : index
    %c0_3 = arith.constant 0 : index
    %4 = vector.load %arg3[%c0_2, %c0_3] : memref<32x512xbf16, #tpu.memory_space<vmem>>, vector<32x512xbf16>
    %c0_4 = arith.constant 0 : index
    %c0_5 = arith.constant 0 : index
    %5 = vector.load %arg4[%c0_4, %c0_5] : memref<512x128xbf16, #tpu.memory_space<vmem>>, vector<512x128xbf16>
    %cst = arith.constant dense<0.000000e+00> : vector<32x128xf32>
    %6 = tpu.matmul %4, %5, %cst {dimension_numbers = #tpu.dot_dimension_numbers<[1], [0], [0], [1], [0, 0, 1, 1], [], []>} : vector<32x512xbf16>, vector<512x128xbf16>, vector<32x128xf32> -> vector<32x128xf32>
    %7 = arith.addf %3, %6 : vector<32x128xf32>
    %c0_6 = arith.constant 0 : index
    %c0_7 = arith.constant 0 : index
    %8 = vector.load %arg7[%c0_6, %c0_7] : memref<32x128xf32, #tpu.memory_space<vmem>>, vector<32x128xf32>
    tpu.vector_store %arg7[%c0_6, %c0_7], %7 {strides = array<i32>} : memref<32x128xf32, #tpu.memory_space<vmem>>, vector<32x128xf32>,
    %c1_i32 = arith.constant 1 : i32
    %9 = arith.cmpi eq, %arg2, %c1_i32 : i32
    %10 = arith.extui %9 : i1 to i32
    %c0_i32_8 = arith.constant 0 : i32
    %11 = arith.cmpi ne, %10, %c0_i32_8 : i32
    scf.if %11 {
      %c0_9 = arith.constant 0 : index
      %c0_10 = arith.constant 0 : index
      %12 = vector.load %arg7[%c0_9, %c0_10] : memref<32x128xf32, #tpu.memory_space<vmem>>, vector<32x128xf32>
      %c0_11 = arith.constant 0 : index
      %c0_12 = arith.constant 0 : index
      %13 = vector.load %arg5[%c0_11, %c0_12] : memref<1x128xf32, #tpu.memory_space<vmem>>, vector<1x128xf32>
      %14 = vector.broadcast %13 : vector<1x128xf32> to vector<32x128xf32>
      %15 = arith.addf %12, %14 : vector<32x128xf32>
      %c0_13 = arith.constant 0 : index
      %c0_14 = arith.constant 0 : index
      %16 = vector.load %arg6[%c0_13, %c0_14] : memref<32x128xf32, #tpu.memory_space<vmem>>, vector<32x128xf32>
      tpu.vector_store %arg6[%c0_13, %c0_14], %15 {strides = array<i32>} : memref<32x128xf32, #tpu.memory_space<vmem>>, vector<32x128xf32>,
    } else {
    }
    return
  }
  func.func @transform_0(%arg0: i32, %arg1: i32, %arg2: i32) -> (i32, i32) {
    %c0_i32 = arith.constant 0 : i32
    return %arg0, %arg2 : i32, i32
  }
  func.func @transform_1(%arg0: i32, %arg1: i32, %arg2: i32) -> (i32, i32) {
    %c0_i32 = arith.constant 0 : i32
    return %arg2, %arg1 : i32, i32
  }
  func.func @transform_2(%arg0: i32, %arg1: i32, %arg2: i32) -> (i32, i32) {
    %c0_i32 = arith.constant 0 : i32
    %c0_i32_0 = arith.constant 0 : i32
    return %c0_i32, %arg1 : i32, i32
  }
  func.func @transform_3(%arg0: i32, %arg1: i32, %arg2: i32) -> (i32, i32) {
    %c0_i32 = arith.constant 0 : i32
    return %arg0, %arg1 : i32, i32
  }
}

module attributes {stable_mosaic.version = 11 : i64} {
  func.func @_matmul_epilogue_kernel(%arg0: i32, %arg1: i32, %arg2: i32, %arg3: memref<128x256xbf16, #tpu.memory_space<vmem>>, %arg4: memref<256x128xbf16, #tpu.memory_space<vmem>>, %arg5: memref<1x128xf32, #tpu.memory_space<vmem>>, %arg6: memref<128x128xf32, #tpu.memory_space<vmem>>, %arg7: memref<128x128xf32, #tpu.memory_space<vmem>>) attributes {dimension_semantics = [#tpu.dimension_semantics<parallel>, #tpu.dimension_semantics<parallel>, #tpu.dimension_semantics<arbitrary>], iteration_bounds = array<i64: 1, 1, 1>, scalar_prefetch = 0 : i64, scratch_operands = 1 : i64, tpu.core_type = #tpu.core_type<tc>, window_params = [{transform_indices = @transform_0, window_bounds = array<i64: 128, 256>}, {transform_indices = @transform_1, window_bounds = array<i64: 256, 128>}, {transform_indices = @transform_2, window_bounds = array<i64: 1, 128>}, {transform_indices = @transform_3, window_bounds = array<i64: 128, 128>}]} {
    %c0_i32 = arith.constant 0 : i32
    %0 = arith.cmpi eq, %arg2, %c0_i32 : i32
    %1 = arith.extui %0 : i1 to i32
    %c0_i32_0 = arith.constant 0 : i32
    %2 = arith.cmpi ne, %1, %c0_i32_0 : i32
    scf.if %2 {
      %cst_10 = arith.constant 0.000000e+00 : f32
      %12 = vector.broadcast %cst_10 : f32 to vector<128x128xf32>
      %c0_11 = arith.constant 0 : index
      %c0_12 = arith.constant 0 : index
      %13 = vector.load %arg7[%c0_11, %c0_12] : memref<128x128xf32, #tpu.memory_space<vmem>>, vector<128x128xf32>
      tpu.vector_store %arg7[%c0_11, %c0_12], %12 {strides = array<i32>} : memref<128x128xf32, #tpu.memory_space<vmem>>, vector<128x128xf32>,
    } else {
    }
    %c0 = arith.constant 0 : index
    %c0_1 = arith.constant 0 : index
    %3 = vector.load %arg7[%c0, %c0_1] : memref<128x128xf32, #tpu.memory_space<vmem>>, vector<128x128xf32>
    %c0_2 = arith.constant 0 : index
    %c0_3 = arith.constant 0 : index
    %4 = vector.load %arg3[%c0_2, %c0_3] : memref<128x256xbf16, #tpu.memory_space<vmem>>, vector<128x256xbf16>
    %c0_4 = arith.constant 0 : index
    %c0_5 = arith.constant 0 : index
    %5 = vector.load %arg4[%c0_4, %c0_5] : memref<256x128xbf16, #tpu.memory_space<vmem>>, vector<256x128xbf16>
    %cst = arith.constant dense<0.000000e+00> : vector<128x128xf32>
    %6 = tpu.matmul %4, %5, %cst {dimension_numbers = #tpu.dot_dimension_numbers<[1], [0], [0], [1], [0, 0, 1, 1], [], []>} : vector<128x256xbf16>, vector<256x128xbf16>, vector<128x128xf32> -> vector<128x128xf32>
    %7 = arith.addf %3, %6 : vector<128x128xf32>
    %c0_6 = arith.constant 0 : index
    %c0_7 = arith.constant 0 : index
    %8 = vector.load %arg7[%c0_6, %c0_7] : memref<128x128xf32, #tpu.memory_space<vmem>>, vector<128x128xf32>
    tpu.vector_store %arg7[%c0_6, %c0_7], %7 {strides = array<i32>} : memref<128x128xf32, #tpu.memory_space<vmem>>, vector<128x128xf32>,
    %c0_i32_8 = arith.constant 0 : i32
    %9 = arith.cmpi eq, %arg2, %c0_i32_8 : i32
    %10 = arith.extui %9 : i1 to i32
    %c0_i32_9 = arith.constant 0 : i32
    %11 = arith.cmpi ne, %10, %c0_i32_9 : i32
    scf.if %11 {
      %c0_10 = arith.constant 0 : index
      %c0_11 = arith.constant 0 : index
      %12 = vector.load %arg7[%c0_10, %c0_11] : memref<128x128xf32, #tpu.memory_space<vmem>>, vector<128x128xf32>
      %c0_12 = arith.constant 0 : index
      %c0_13 = arith.constant 0 : index
      %13 = vector.load %arg5[%c0_12, %c0_13] : memref<1x128xf32, #tpu.memory_space<vmem>>, vector<1x128xf32>
      %14 = vector.broadcast %13 : vector<1x128xf32> to vector<128x128xf32>
      %15 = arith.addf %12, %14 : vector<128x128xf32>
      %c0_14 = arith.constant 0 : index
      %c0_15 = arith.constant 0 : index
      %16 = vector.load %arg6[%c0_14, %c0_15] : memref<128x128xf32, #tpu.memory_space<vmem>>, vector<128x128xf32>
      tpu.vector_store %arg6[%c0_14, %c0_15], %15 {strides = array<i32>} : memref<128x128xf32, #tpu.memory_space<vmem>>, vector<128x128xf32>,
    } else {
    }
    return
  }
  func.func @transform_0(%arg0: i32, %arg1: i32, %arg2: i32) -> (i32, i32) {
    %c0_i32 = arith.constant 0 : i32
    return %arg0, %arg2 : i32, i32
  }
  func.func @transform_1(%arg0: i32, %arg1: i32, %arg2: i32) -> (i32, i32) {
    %c0_i32 = arith.constant 0 : i32
    return %arg2, %arg1 : i32, i32
  }
  func.func @transform_2(%arg0: i32, %arg1: i32, %arg2: i32) -> (i32, i32) {
    %c0_i32 = arith.constant 0 : i32
    %c0_i32_0 = arith.constant 0 : i32
    return %c0_i32, %arg1 : i32, i32
  }
  func.func @transform_3(%arg0: i32, %arg1: i32, %arg2: i32) -> (i32, i32) {
    %c0_i32 = arith.constant 0 : i32
    return %arg0, %arg1 : i32, i32
  }
}

module attributes {stable_mosaic.version = 11 : i64} {
  func.func @_matmul_epilogue_kernel(%arg0: i32, %arg1: i32, %arg2: i32, %arg3: memref<128x128xbf16, #tpu.memory_space<vmem>>, %arg4: memref<128x128xbf16, #tpu.memory_space<vmem>>, %arg5: memref<1x128xf32, #tpu.memory_space<vmem>>, %arg6: memref<128x128xf32, #tpu.memory_space<vmem>>, %arg7: memref<128x128xf32, #tpu.memory_space<vmem>>) attributes {dimension_semantics = [#tpu.dimension_semantics<parallel>, #tpu.dimension_semantics<parallel>, #tpu.dimension_semantics<arbitrary>], iteration_bounds = array<i64: 1, 1, 1>, scalar_prefetch = 0 : i64, scratch_operands = 1 : i64, tpu.core_type = #tpu.core_type<tc>, window_params = [{transform_indices = @transform_0, window_bounds = array<i64: 128, 128>}, {transform_indices = @transform_1, window_bounds = array<i64: 128, 128>}, {transform_indices = @transform_2, window_bounds = array<i64: 1, 128>}, {transform_indices = @transform_3, window_bounds = array<i64: 128, 128>}]} {
    %c0_i32 = arith.constant 0 : i32
    %0 = arith.cmpi eq, %arg2, %c0_i32 : i32
    %1 = arith.extui %0 : i1 to i32
    %c0_i32_0 = arith.constant 0 : i32
    %2 = arith.cmpi ne, %1, %c0_i32_0 : i32
    scf.if %2 {
      %cst_10 = arith.constant 0.000000e+00 : f32
      %12 = vector.broadcast %cst_10 : f32 to vector<128x128xf32>
      %c0_11 = arith.constant 0 : index
      %c0_12 = arith.constant 0 : index
      %13 = vector.load %arg7[%c0_11, %c0_12] : memref<128x128xf32, #tpu.memory_space<vmem>>, vector<128x128xf32>
      tpu.vector_store %arg7[%c0_11, %c0_12], %12 {strides = array<i32>} : memref<128x128xf32, #tpu.memory_space<vmem>>, vector<128x128xf32>,
    } else {
    }
    %c0 = arith.constant 0 : index
    %c0_1 = arith.constant 0 : index
    %3 = vector.load %arg7[%c0, %c0_1] : memref<128x128xf32, #tpu.memory_space<vmem>>, vector<128x128xf32>
    %c0_2 = arith.constant 0 : index
    %c0_3 = arith.constant 0 : index
    %4 = vector.load %arg3[%c0_2, %c0_3] : memref<128x128xbf16, #tpu.memory_space<vmem>>, vector<128x128xbf16>
    %c0_4 = arith.constant 0 : index
    %c0_5 = arith.constant 0 : index
    %5 = vector.load %arg4[%c0_4, %c0_5] : memref<128x128xbf16, #tpu.memory_space<vmem>>, vector<128x128xbf16>
    %cst = arith.constant dense<0.000000e+00> : vector<128x128xf32>
    %6 = tpu.matmul %4, %5, %cst {dimension_numbers = #tpu.dot_dimension_numbers<[1], [0], [0], [1], [0, 0, 1, 1], [], []>} : vector<128x128xbf16>, vector<128x128xbf16>, vector<128x128xf32> -> vector<128x128xf32>
    %7 = arith.addf %3, %6 : vector<128x128xf32>
    %c0_6 = arith.constant 0 : index
    %c0_7 = arith.constant 0 : index
    %8 = vector.load %arg7[%c0_6, %c0_7] : memref<128x128xf32, #tpu.memory_space<vmem>>, vector<128x128xf32>
    tpu.vector_store %arg7[%c0_6, %c0_7], %7 {strides = array<i32>} : memref<128x128xf32, #tpu.memory_space<vmem>>, vector<128x128xf32>,
    %c0_i32_8 = arith.constant 0 : i32
    %9 = arith.cmpi eq, %arg2, %c0_i32_8 : i32
    %10 = arith.extui %9 : i1 to i32
    %c0_i32_9 = arith.constant 0 : i32
    %11 = arith.cmpi ne, %10, %c0_i32_9 : i32
    scf.if %11 {
      %c0_10 = arith.constant 0 : index
      %c0_11 = arith.constant 0 : index
      %12 = vector.load %arg7[%c0_10, %c0_11] : memref<128x128xf32, #tpu.memory_space<vmem>>, vector<128x128xf32>
      %c0_12 = arith.constant 0 : index
      %c0_13 = arith.constant 0 : index
      %13 = vector.load %arg5[%c0_12, %c0_13] : memref<1x128xf32, #tpu.memory_space<vmem>>, vector<1x128xf32>
      %14 = vector.broadcast %13 : vector<1x128xf32> to vector<128x128xf32>
      %15 = arith.addf %12, %14 : vector<128x128xf32>
      %c0_14 = arith.constant 0 : index
      %c0_15 = arith.constant 0 : index
      %16 = vector.load %arg6[%c0_14, %c0_15] : memref<128x128xf32, #tpu.memory_space<vmem>>, vector<128x128xf32>
      tpu.vector_store %arg6[%c0_14, %c0_15], %15 {strides = array<i32>} : memref<128x128xf32, #tpu.memory_space<vmem>>, vector<128x128xf32>,
    } else {
    }
    return
  }
  func.func @transform_0(%arg0: i32, %arg1: i32, %arg2: i32) -> (i32, i32) {
    %c0_i32 = arith.constant 0 : i32
    return %arg0, %arg2 : i32, i32
  }
  func.func @transform_1(%arg0: i32, %arg1: i32, %arg2: i32) -> (i32, i32) {
    %c0_i32 = arith.constant 0 : i32
    return %arg2, %arg1 : i32, i32
  }
  func.func @transform_2(%arg0: i32, %arg1: i32, %arg2: i32) -> (i32, i32) {
    %c0_i32 = arith.constant 0 : i32
    %c0_i32_0 = arith.constant 0 : i32
    return %c0_i32, %arg1 : i32, i32
  }
  func.func @transform_3(%arg0: i32, %arg1: i32, %arg2: i32) -> (i32, i32) {
    %c0_i32 = arith.constant 0 : i32
    return %arg0, %arg1 : i32, i32
  }
}

module attributes {stable_mosaic.version = 11 : i64} {
  func.func @_matmul_epilogue_kernel(%arg0: i32, %arg1: i32, %arg2: i32, %arg3: memref<128x512xbf16, #tpu.memory_space<vmem>>, %arg4: memref<512x128xbf16, #tpu.memory_space<vmem>>, %arg5: memref<1x128xf32, #tpu.memory_space<vmem>>, %arg6: memref<128x128xf32, #tpu.memory_space<vmem>>, %arg7: memref<128x128xf32, #tpu.memory_space<vmem>>) attributes {dimension_semantics = [#tpu.dimension_semantics<parallel>, #tpu.dimension_semantics<parallel>, #tpu.dimension_semantics<arbitrary>], iteration_bounds = array<i64: 1, 1, 1>, scalar_prefetch = 0 : i64, scratch_operands = 1 : i64, tpu.core_type = #tpu.core_type<tc>, window_params = [{transform_indices = @transform_0, window_bounds = array<i64: 128, 512>}, {transform_indices = @transform_1, window_bounds = array<i64: 512, 128>}, {transform_indices = @transform_2, window_bounds = array<i64: 1, 128>}, {transform_indices = @transform_3, window_bounds = array<i64: 128, 128>}]} {
    %c0_i32 = arith.constant 0 : i32
    %0 = arith.cmpi eq, %arg2, %c0_i32 : i32
    %1 = arith.extui %0 : i1 to i32
    %c0_i32_0 = arith.constant 0 : i32
    %2 = arith.cmpi ne, %1, %c0_i32_0 : i32
    scf.if %2 {
      %cst_10 = arith.constant 0.000000e+00 : f32
      %12 = vector.broadcast %cst_10 : f32 to vector<128x128xf32>
      %c0_11 = arith.constant 0 : index
      %c0_12 = arith.constant 0 : index
      %13 = vector.load %arg7[%c0_11, %c0_12] : memref<128x128xf32, #tpu.memory_space<vmem>>, vector<128x128xf32>
      tpu.vector_store %arg7[%c0_11, %c0_12], %12 {strides = array<i32>} : memref<128x128xf32, #tpu.memory_space<vmem>>, vector<128x128xf32>,
    } else {
    }
    %c0 = arith.constant 0 : index
    %c0_1 = arith.constant 0 : index
    %3 = vector.load %arg7[%c0, %c0_1] : memref<128x128xf32, #tpu.memory_space<vmem>>, vector<128x128xf32>
    %c0_2 = arith.constant 0 : index
    %c0_3 = arith.constant 0 : index
    %4 = vector.load %arg3[%c0_2, %c0_3] : memref<128x512xbf16, #tpu.memory_space<vmem>>, vector<128x512xbf16>
    %c0_4 = arith.constant 0 : index
    %c0_5 = arith.constant 0 : index
    %5 = vector.load %arg4[%c0_4, %c0_5] : memref<512x128xbf16, #tpu.memory_space<vmem>>, vector<512x128xbf16>
    %cst = arith.constant dense<0.000000e+00> : vector<128x128xf32>
    %6 = tpu.matmul %4, %5, %cst {dimension_numbers = #tpu.dot_dimension_numbers<[1], [0], [0], [1], [0, 0, 1, 1], [], []>} : vector<128x512xbf16>, vector<512x128xbf16>, vector<128x128xf32> -> vector<128x128xf32>
    %7 = arith.addf %3, %6 : vector<128x128xf32>
    %c0_6 = arith.constant 0 : index
    %c0_7 = arith.constant 0 : index
    %8 = vector.load %arg7[%c0_6, %c0_7] : memref<128x128xf32, #tpu.memory_space<vmem>>, vector<128x128xf32>
    tpu.vector_store %arg7[%c0_6, %c0_7], %7 {strides = array<i32>} : memref<128x128xf32, #tpu.memory_space<vmem>>, vector<128x128xf32>,
    %c0_i32_8 = arith.constant 0 : i32
    %9 = arith.cmpi eq, %arg2, %c0_i32_8 : i32
    %10 = arith.extui %9 : i1 to i32
    %c0_i32_9 = arith.constant 0 : i32
    %11 = arith.cmpi ne, %10, %c0_i32_9 : i32
    scf.if %11 {
      %c0_10 = arith.constant 0 : index
      %c0_11 = arith.constant 0 : index
      %12 = vector.load %arg7[%c0_10, %c0_11] : memref<128x128xf32, #tpu.memory_space<vmem>>, vector<128x128xf32>
      %c0_12 = arith.constant 0 : index
      %c0_13 = arith.constant 0 : index
      %13 = vector.load %arg5[%c0_12, %c0_13] : memref<1x128xf32, #tpu.memory_space<vmem>>, vector<1x128xf32>
      %14 = vector.broadcast %13 : vector<1x128xf32> to vector<128x128xf32>
      %15 = arith.addf %12, %14 : vector<128x128xf32>
      %c0_14 = arith.constant 0 : index
      %c0_15 = arith.constant 0 : index
      %16 = vector.load %arg6[%c0_14, %c0_15] : memref<128x128xf32, #tpu.memory_space<vmem>>, vector<128x128xf32>
      tpu.vector_store %arg6[%c0_14, %c0_15], %15 {strides = array<i32>} : memref<128x128xf32, #tpu.memory_space<vmem>>, vector<128x128xf32>,
    } else {
    }
    return
  }
  func.func @transform_0(%arg0: i32, %arg1: i32, %arg2: i32) -> (i32, i32) {
    %c0_i32 = arith.constant 0 : i32
    return %arg0, %arg2 : i32, i32
  }
  func.func @transform_1(%arg0: i32, %arg1: i32, %arg2: i32) -> (i32, i32) {
    %c0_i32 = arith.constant 0 : i32
    return %arg2, %arg1 : i32, i32
  }
  func.func @transform_2(%arg0: i32, %arg1: i32, %arg2: i32) -> (i32, i32) {
    %c0_i32 = arith.constant 0 : i32
    %c0_i32_0 = arith.constant 0 : i32
    return %c0_i32, %arg1 : i32, i32
  }
  func.func @transform_3(%arg0: i32, %arg1: i32, %arg2: i32) -> (i32, i32) {
    %c0_i32 = arith.constant 0 : i32
    return %arg0, %arg1 : i32, i32
  }
}

module attributes {stable_mosaic.version = 11 : i64} {
  func.func @_matmul_epilogue_kernel(%arg0: i32, %arg1: i32, %arg2: i32, %arg3: memref<512x128xbf16, #tpu.memory_space<vmem>>, %arg4: memref<128x128xbf16, #tpu.memory_space<vmem>>, %arg5: memref<1x128xf32, #tpu.memory_space<vmem>>, %arg6: memref<512x128xf32, #tpu.memory_space<vmem>>, %arg7: memref<512x128xf32, #tpu.memory_space<vmem>>) attributes {dimension_semantics = [#tpu.dimension_semantics<parallel>, #tpu.dimension_semantics<parallel>, #tpu.dimension_semantics<arbitrary>], iteration_bounds = array<i64: 1, 1, 25>, scalar_prefetch = 0 : i64, scratch_operands = 1 : i64, tpu.core_type = #tpu.core_type<tc>, window_params = [{transform_indices = @transform_0, window_bounds = array<i64: 512, 128>}, {transform_indices = @transform_1, window_bounds = array<i64: 128, 128>}, {transform_indices = @transform_2, window_bounds = array<i64: 1, 128>}, {transform_indices = @transform_3, window_bounds = array<i64: 512, 128>}]} {
    %c0_i32 = arith.constant 0 : i32
    %0 = arith.cmpi eq, %arg2, %c0_i32 : i32
    %1 = arith.extui %0 : i1 to i32
    %c0_i32_0 = arith.constant 0 : i32
    %2 = arith.cmpi ne, %1, %c0_i32_0 : i32
    scf.if %2 {
      %cst_9 = arith.constant 0.000000e+00 : f32
      %12 = vector.broadcast %cst_9 : f32 to vector<512x128xf32>
      %c0_10 = arith.constant 0 : index
      %c0_11 = arith.constant 0 : index
      %13 = vector.load %arg7[%c0_10, %c0_11] : memref<512x128xf32, #tpu.memory_space<vmem>>, vector<512x128xf32>
      tpu.vector_store %arg7[%c0_10, %c0_11], %12 {strides = array<i32>} : memref<512x128xf32, #tpu.memory_space<vmem>>, vector<512x128xf32>,
    } else {
    }
    %c0 = arith.constant 0 : index
    %c0_1 = arith.constant 0 : index
    %3 = vector.load %arg7[%c0, %c0_1] : memref<512x128xf32, #tpu.memory_space<vmem>>, vector<512x128xf32>
    %c0_2 = arith.constant 0 : index
    %c0_3 = arith.constant 0 : index
    %4 = vector.load %arg3[%c0_2, %c0_3] : memref<512x128xbf16, #tpu.memory_space<vmem>>, vector<512x128xbf16>
    %c0_4 = arith.constant 0 : index
    %c0_5 = arith.constant 0 : index
    %5 = vector.load %arg4[%c0_4, %c0_5] : memref<128x128xbf16, #tpu.memory_space<vmem>>, vector<128x128xbf16>
    %cst = arith.constant dense<0.000000e+00> : vector<512x128xf32>
    %6 = tpu.matmul %4, %5, %cst {dimension_numbers = #tpu.dot_dimension_numbers<[1], [0], [0], [1], [0, 0, 1, 1], [], []>} : vector<512x128xbf16>, vector<128x128xbf16>, vector<512x128xf32> -> vector<512x128xf32>
    %7 = arith.addf %3, %6 : vector<512x128xf32>
    %c0_6 = arith.constant 0 : index
    %c0_7 = arith.constant 0 : index
    %8 = vector.load %arg7[%c0_6, %c0_7] : memref<512x128xf32, #tpu.memory_space<vmem>>, vector<512x128xf32>
    tpu.vector_store %arg7[%c0_6, %c0_7], %7 {strides = array<i32>} : memref<512x128xf32, #tpu.memory_space<vmem>>, vector<512x128xf32>,
    %c24_i32 = arith.constant 24 : i32
    %9 = arith.cmpi eq, %arg2, %c24_i32 : i32
    %10 = arith.extui %9 : i1 to i32
    %c0_i32_8 = arith.constant 0 : i32
    %11 = arith.cmpi ne, %10, %c0_i32_8 : i32
    scf.if %11 {
      %c0_9 = arith.constant 0 : index
      %c0_10 = arith.constant 0 : index
      %12 = vector.load %arg7[%c0_9, %c0_10] : memref<512x128xf32, #tpu.memory_space<vmem>>, vector<512x128xf32>
      %c0_11 = arith.constant 0 : index
      %c0_12 = arith.constant 0 : index
      %13 = vector.load %arg5[%c0_11, %c0_12] : memref<1x128xf32, #tpu.memory_space<vmem>>, vector<1x128xf32>
      %14 = vector.broadcast %13 : vector<1x128xf32> to vector<512x128xf32>
      %15 = arith.addf %12, %14 : vector<512x128xf32>
      %16 = math.tanh %15 : vector<512x128xf32>
      %c0_13 = arith.constant 0 : index
      %c0_14 = arith.constant 0 : index
      %17 = vector.load %arg6[%c0_13, %c0_14] : memref<512x128xf32, #tpu.memory_space<vmem>>, vector<512x128xf32>
      tpu.vector_store %arg6[%c0_13, %c0_14], %16 {strides = array<i32>} : memref<512x128xf32, #tpu.memory_space<vmem>>, vector<512x128xf32>,
    } else {
    }
    return
  }
  func.func @transform_0(%arg0: i32, %arg1: i32, %arg2: i32) -> (i32, i32) {
    %c0_i32 = arith.constant 0 : i32
    return %arg0, %arg2 : i32, i32
  }
  func.func @transform_1(%arg0: i32, %arg1: i32, %arg2: i32) -> (i32, i32) {
    %c0_i32 = arith.constant 0 : i32
    return %arg2, %arg1 : i32, i32
  }
  func.func @transform_2(%arg0: i32, %arg1: i32, %arg2: i32) -> (i32, i32) {
    %c0_i32 = arith.constant 0 : i32
    %c0_i32_0 = arith.constant 0 : i32
    return %c0_i32, %arg1 : i32, i32
  }
  func.func @transform_3(%arg0: i32, %arg1: i32, %arg2: i32) -> (i32, i32) {
    %c0_i32 = arith.constant 0 : i32
    return %arg0, %arg1 : i32, i32
  }
}

</mosaic_0001>

<llo_original>
// kernel: generator_forward.54
$region0: #{generator_forward.54}
  #allocation0 [shape = 'u32[]', space=smem, size = 0x4, offset = 0x4, fixed_abs, tag = 'smem constant byte address 0x4 - core index']
  #allocation1 [shape = 'u32[144,128]{1,0:T(1,128)}', space=vmem, size = 0x12000, scoped, tag = 'internal scratch']
  %s0 = inlined_call_operand.vmem [shape: f32[2,256,64], index: 0, kind: input, shape index: {}]
  %s1 = inlined_call_operand.vmem [shape: f32[2,256,64], index: 1, kind: output, shape index: {}]
  %s2 = sld [smem:[#allocation0]]
  $region37: #{generator_forward.54} parent=0
    _
  %s4 = ssub.s32 1, %s2
  %s5 = scalar_select 0, %s4, %s2
  loop: start=0, step=1, limit=4
  $region2: #{generator_forward.54} parent=0 // loop_pre_header
    _
  $region3: #{generator_forward.54} parent=0 // loop_header
    %s7 = sphi 0, %s11
    %p8 = scmp.ge.s32.totalorder %s7, 4
    %s17 = sphi 0, %s19
    %s20 = sphi 0, %s17
    %s21 = sphi 0, %s20
    %s37 = sphi 0, %s21
    %s43 = sphi 0, %s45
    %s46 = sphi 0, %s43
    %s47 = sphi 0, %s46
    %s63 = sphi 0, %s47
  $region4: #{generator_forward.54} parent=0 // loop_header_branch
    %10 = sbr.rel (%p8) target = $region8
  $region5: #{generator_forward.54} parent=0 // loop_body
    %s12 = ssub.s32 %s7, 1
    %s13 = ssub.s32 %s7, 2
    %s14 = sadd.s32 %s7, 1
    %s15 = ssub.s32 %s7, %s14
    %p16 = scmp.eq.s32.totalorder %s15, 0
    %s18 = sadd.s32 %s17, 1
    %s19 = scalar_select %p16, %s17, %s18
    %p22 = pneg %p16
    %p23 = scmp.eq.s32.totalorder %s7, 1
    %p24 = por %p22, %p23
    %p25 = scmp.ne.s32.totalorder %s17, %s20
    %p26 = scmp.eq.s32.totalorder %s7, 0
    %p27 = por %p25, %p26
    %p28 = scmp.ne.s32.totalorder %s17, %s20
    %p29 = scmp.eq.s32.totalorder %s12, 1
    %p30 = por %p28, %p29
    %p31 = scmp.ne.s32.totalorder %s20, %s21
    %p32 = scmp.eq.s32.totalorder %s12, 0
    %p33 = por %p31, %p32
    %p34 = scmp.ne.s32.totalorder %s20, %s21
    %p35 = scmp.eq.s32.totalorder %s13, 1
    %p36 = por %p34, %p35
    %p38 = scmp.ne.s32.totalorder %s21, %s37
    %p39 = scmp.eq.s32.totalorder %s13, 0
    %p40 = por %p38, %p39
    %s41 = ssub.s32 %s7, %s14
    %p42 = scmp.eq.s32.totalorder %s41, 0
    %s44 = sadd.s32 %s43, 1
    %s45 = scalar_select %p42, %s43, %s44
    %p48 = pneg %p42
    %p49 = scmp.eq.s32.totalorder %s7, 1
    %p50 = por %p48, %p49
    %p51 = scmp.ne.s32.totalorder %s43, %s46
    %p52 = scmp.eq.s32.totalorder %s7, 0
    %p53 = por %p51, %p52
    %p54 = scmp.ne.s32.totalorder %s43, %s46
    %p55 = scmp.eq.s32.totalorder %s12, 1
    %p56 = por %p54, %p55
    %p57 = scmp.ne.s32.totalorder %s46, %s47
    %p58 = scmp.eq.s32.totalorder %s12, 0
    %p59 = por %p57, %p58
    %p60 = scmp.ne.s32.totalorder %s46, %s47
    %p61 = scmp.eq.s32.totalorder %s13, 1
    %p62 = por %p60, %p61
    %p64 = scmp.ne.s32.totalorder %s47, %s63
    %p65 = scmp.eq.s32.totalorder %s13, 0
    %p66 = por %p64, %p65
    %p67 = scmp.le.s32.totalorder 1, %s7
    %p68 = scmp.lt.s32.totalorder %s7, 3
    %p69 = pnand %p67, %p68
    %p70 = pneg %p69
    // Predicated region
    $region9: #{generator_forward.54} parent=5 // pred_check
      _
    $region10: #{generator_forward.54} parent=5 // pred_check_branch
      %72 = sbr.rel (%p69) target = $region12
    $region11: #{generator_forward.54} parent=5 // pred_region
      %s73 = ssub.s32 %s7, 1
    $region12: #{generator_forward.54} parent=5 // pred_fallthru
      _
    %p74 = scmp.lt.s32.totalorder %s7, 2
    // Predicated region
    $region13: #{generator_forward.54} parent=5 // pred_check
      %p75 = pneg %p74
    $region14: #{generator_forward.54} parent=5 // pred_check_branch
      %77 = sbr.rel (%p75) target = $region16
    $region15: #{generator_forward.54} parent=5 // pred_region
      // Predicated region
      $region17: #{generator_forward.54} parent=15 // pred_check
        %p78 = pneg %p27
      $region18: #{generator_forward.54} parent=15 // pred_check_branch
        %80 = sbr.rel (%p78) target = $region20
      $region19: #{generator_forward.54} parent=15 // pred_region
        %p81 = scmp.lt.s32.totalorder %s7, 1
        %s82 = scalar_select %p81, %s7, 1
        %s83 = smul.addr %s82, 32
        %s84 = smul.addr %s83, 8
        %s85 = scalar_lea.vmem %s0, %s84
      $region20: #{generator_forward.54} parent=15 // pred_fallthru
        _
    $region16: #{generator_forward.54} parent=5 // pred_fallthru
      _
    %p86 = scmp.le.s32.totalorder 1, %s7
    %p87 = scmp.lt.s32.totalorder %s7, 3
    %p88 = pnand %p86, %p87
    %p89 = pneg %p88
    // Predicated region
    $region21: #{generator_forward.54} parent=5 // pred_check
      _
    $region22: #{generator_forward.54} parent=5 // pred_check_branch
      %91 = sbr.rel (%p88) target = $region24
    $region23: #{generator_forward.54} parent=5 // pred_region
      %s92 = ssub.s32 %s7, 1
      %p93 = scmp.lt.s32.totalorder %s12, 1
      %s94 = scalar_select %p93, %s12, 1
      %s95 = smul.addr %s94, 32
      %s96 = smul.addr %s95, 8
      %s97 = scalar_lea.vmem %s0, %s96
      %p98 = pneg %p33
      %p99 = pneg %p30
      %p100 = pneg %p59
      %p101 = pneg %p56
      %p102 = scmp.lt.s32.totalorder %s12, 1
      %s103 = scalar_select %p102, %s12, 1
      %s104 = smul.addr %s103, 32
      %s105 = smul.addr %s104, 8
      %s106 = scalar_lea.vmem %s1, %s105
      %p107 = scmp.lt.s32.totalorder %s12, 1
      %s108 = scalar_select %p107, %s12, 1
      %s109 = smul.addr %s108, 32
      %s110 = smul.addr %s109, 8
      %s111 = scalar_lea.vmem %s0, %s110
      %p112 = scmp.lt.s32.totalorder %s12, 1
      %s113 = scalar_select %p112, %s12, 1
      %s114 = smul.addr %s113, 32
      %s115 = smul.addr %s114, 8
      %s116 = scalar_lea.vmem %s1, %s115
      %v117 = vld [vmem:[%s111] sm:$0xff]
      %v118 = vld [vmem:[%s111 + $0x8] sm:$0xff]
      %v119 = vld [vmem:[%s111 + $0x10] sm:$0xff]
      %v120 = vld [vmem:[%s111 + $0x18] sm:$0xff]
      %v121 = vld [vmem:[%s111 + $0x20] sm:$0xff]
      %v122 = vld [vmem:[%s111 + $0x28] sm:$0xff]
      %v123 = vld [vmem:[%s111 + $0x30] sm:$0xff]
      %v124 = vld [vmem:[%s111 + $0x38] sm:$0xff]
      %v125 = vld [vmem:[%s111 + $0x40] sm:$0xff]
      %v126 = vld [vmem:[%s111 + $0x48] sm:$0xff]
      %v127 = vld [vmem:[%s111 + $0x50] sm:$0xff]
      %v128 = vld [vmem:[%s111 + $0x58] sm:$0xff]
      %v129 = vld [vmem:[%s111 + $0x60] sm:$0xff]
      %v130 = vld [vmem:[%s111 + $0x68] sm:$0xff]
      %v131 = vld [vmem:[%s111 + $0x70] sm:$0xff]
      %v132 = vld [vmem:[%s111 + $0x78] sm:$0xff]
      %v133 = vld [vmem:[%s111 + $0x80] sm:$0xff]
      %v134 = vld [vmem:[%s111 + $0x88] sm:$0xff]
      %v135 = vld [vmem:[%s111 + $0x90] sm:$0xff]
      %v136 = vld [vmem:[%s111 + $0x98] sm:$0xff]
      %v137 = vld [vmem:[%s111 + $0xa0] sm:$0xff]
      %v138 = vld [vmem:[%s111 + $0xa8] sm:$0xff]
      %v139 = vld [vmem:[%s111 + $0xb0] sm:$0xff]
      %v140 = vld [vmem:[%s111 + $0xb8] sm:$0xff]
      %v141 = vld [vmem:[%s111 + $0xc0] sm:$0xff]
      %v142 = vld [vmem:[%s111 + $0xc8] sm:$0xff]
      %v143 = vld [vmem:[%s111 + $0xd0] sm:$0xff]
      %v144 = vld [vmem:[%s111 + $0xd8] sm:$0xff]
      %v145 = vld [vmem:[%s111 + $0xe0] sm:$0xff]
      %v146 = vld [vmem:[%s111 + $0xe8] sm:$0xff]
      %v147 = vld [vmem:[%s111 + $0xf0] sm:$0xff]
      %v148 = vld [vmem:[%s111 + $0xf8] sm:$0xff]
      %vm149 = vcmask 523264
      %v150 = vsel %vm149, %v117, 0.0
      %v151 = vsel %vm149, %v118, 0.0
      %v152 = vadd.f32 %v150, %v151
      %v153 = vsel %vm149, %v119, 0.0
      %v154 = vadd.f32 %v152, %v153
      %v155 = vsel %vm149, %v120, 0.0
      %v156 = vadd.f32 %v154, %v155
      %v157 = vsel %vm149, %v121, 0.0
      %v158 = vadd.f32 %v156, %v157
      %v159 = vsel %vm149, %v122, 0.0
      %v160 = vadd.f32 %v158, %v159
      %v161 = vsel %vm149, %v123, 0.0
      %v162 = vadd.f32 %v160, %v161
      %v163 = vsel %vm149, %v124, 0.0
      %v164 = vadd.f32 %v162, %v163
      %v165 = vsel %vm149, %v125, 0.0
      %v166 = vadd.f32 %v164, %v165
      %v167 = vsel %vm149, %v126, 0.0
      %v168 = vadd.f32 %v166, %v167
      %v169 = vsel %vm149, %v127, 0.0
      %v170 = vadd.f32 %v168, %v169
      %v171 = vsel %vm149, %v128, 0.0
      %v172 = vadd.f32 %v170, %v171
      %v173 = vsel %vm149, %v129, 0.0
      %v174 = vadd.f32 %v172, %v173
      %v175 = vsel %vm149, %v130, 0.0
      %v176 = vadd.f32 %v174, %v175
      %v177 = vsel %vm149, %v131, 0.0
      %v178 = vadd.f32 %v176, %v177
      %v179 = vsel %vm149, %v132, 0.0
      %v180 = vadd.f32 %v178, %v179
      %v181 = vsel %vm149, %v133, 0.0
      %v182 = vadd.f32 %v180, %v181
      %v183 = vsel %vm149, %v134, 0.0
      %v184 = vadd.f32 %v182, %v183
      %v185 = vsel %vm149, %v135, 0.0
      %v186 = vadd.f32 %v184, %v185
      %v187 = vsel %vm149, %v136, 0.0
      %v188 = vadd.f32 %v186, %v187
      %v189 = vsel %vm149, %v137, 0.0
      %v190 = vadd.f32 %v188, %v189
      %v191 = vsel %vm149, %v138, 0.0
      %v192 = vadd.f32 %v190, %v191
      %v193 = vsel %vm149, %v139, 0.0
      %v194 = vadd.f32 %v192, %v193
      %v195 = vsel %vm149, %v140, 0.0
      %v196 = vadd.f32 %v194, %v195
      %v197 = vsel %vm149, %v141, 0.0
      %v198 = vadd.f32 %v196, %v197
      %v199 = vsel %vm149, %v142, 0.0
      %v200 = vadd.f32 %v198, %v199
      %v201 = vsel %vm149, %v143, 0.0
      %v202 = vadd.f32 %v200, %v201
      %v203 = vsel %vm149, %v144, 0.0
      %v204 = vadd.f32 %v202, %v203
      %v205 = vsel %vm149, %v145, 0.0
      %v206 = vadd.f32 %v204, %v205
      %v207 = vsel %vm149, %v146, 0.0
      %v208 = vadd.f32 %v206, %v207
      %v209 = vsel %vm149, %v147, 0.0
      %v210 = vadd.f32 %v208, %v209
      %v211 = vsel %vm149, %v148, 0.0
      %v212 = vadd.f32 %v210, %v211
      %v213 = vrot.slane %v212, 4
      %v214 = vadd.f32 %v212, %v213
      %v215 = vrot.slane %v214, 2
      %v216 = vadd.f32 %v214, %v215
      %v217 = vrot.slane %v216, 1
      %v218 = vadd.f32 %v216, %v217
      %v219 = vrcp.pop 256.0
      %v220 = vmul.f32 %v218, %v219
      %v221 = vsub.f32 %v117, %v220
      %v222 = vsub.f32 %v118, %v220
      %v223 = vsub.f32 %v119, %v220
      %v224 = vsub.f32 %v120, %v220
      %v225 = vsub.f32 %v121, %v220
      %v226 = vsub.f32 %v122, %v220
      %v227 = vsub.f32 %v123, %v220
      %v228 = vsub.f32 %v124, %v220
      %v229 = vsub.f32 %v125, %v220
      %v230 = vsub.f32 %v126, %v220
      %v231 = vsub.f32 %v127, %v220
      %v232 = vsub.f32 %v128, %v220
      %v233 = vsub.f32 %v129, %v220
      %v234 = vsub.f32 %v130, %v220
      %v235 = vsub.f32 %v131, %v220
      %v236 = vsub.f32 %v132, %v220
      %v237 = vsub.f32 %v133, %v220
      %v238 = vsub.f32 %v134, %v220
      %v239 = vsub.f32 %v135, %v220
      %v240 = vsub.f32 %v136, %v220
      %v241 = vsub.f32 %v137, %v220
      %v242 = vsub.f32 %v138, %v220
      %v243 = vsub.f32 %v139, %v220
      %v244 = vsub.f32 %v140, %v220
      %v245 = vsub.f32 %v141, %v220
      %v246 = vsub.f32 %v142, %v220
      %v247 = vsub.f32 %v143, %v220
      %v248 = vsub.f32 %v144, %v220
      %v249 = vsub.f32 %v145, %v220
      %v250 = vsub.f32 %v146, %v220
      %v251 = vsub.f32 %v147, %v220
      %v252 = vsub.f32 %v148, %v220
      %v253 = vmul.f32 %v221, %v221
      %v254 = vmul.f32 %v222, %v222
      %v255 = vmul.f32 %v223, %v223
      %v256 = vmul.f32 %v224, %v224
      %v257 = vmul.f32 %v225, %v225
      %v258 = vmul.f32 %v226, %v226
      %v259 = vmul.f32 %v227, %v227
      %v260 = vmul.f32 %v228, %v228
      %v261 = vmul.f32 %v229, %v229
      %v262 = vmul.f32 %v230, %v230
      %v263 = vmul.f32 %v231, %v231
      %v264 = vmul.f32 %v232, %v232
      %v265 = vmul.f32 %v233, %v233
      %v266 = vmul.f32 %v234, %v234
      %v267 = vmul.f32 %v235, %v235
      %v268 = vmul.f32 %v236, %v236
      %v269 = vmul.f32 %v237, %v237
      %v270 = vmul.f32 %v238, %v238
      %v271 = vmul.f32 %v239, %v239
      %v272 = vmul.f32 %v240, %v240
      %v273 = vmul.f32 %v241, %v241
      %v274 = vmul.f32 %v242, %v242
      %v275 = vmul.f32 %v243, %v243
      %v276 = vmul.f32 %v244, %v244
      %v277 = vmul.f32 %v245, %v245
      %v278 = vmul.f32 %v246, %v246
      %v279 = vmul.f32 %v247, %v247
      %v280 = vmul.f32 %v248, %v248
      %v281 = vmul.f32 %v249, %v249
      %v282 = vmul.f32 %v250, %v250
      %v283 = vmul.f32 %v251, %v251
      %v284 = vmul.f32 %v252, %v252
      %v285 = vsel %vm149, %v253, 0.0
      %v286 = vsel %vm149, %v254, 0.0
      %v287 = vadd.f32 %v285, %v286
      %v288 = vsel %vm149, %v255, 0.0
      %v289 = vadd.f32 %v287, %v288
      %v290 = vsel %vm149, %v256, 0.0
      %v291 = vadd.f32 %v289, %v290
      %v292 = vsel %vm149, %v257, 0.0
      %v293 = vadd.f32 %v291, %v292
      %v294 = vsel %vm149, %v258, 0.0
      %v295 = vadd.f32 %v293, %v294
      %v296 = vsel %vm149, %v259, 0.0
      %v297 = vadd.f32 %v295, %v296
      %v298 = vsel %vm149, %v260, 0.0
      %v299 = vadd.f32 %v297, %v298
      %v300 = vsel %vm149, %v261, 0.0
      %v301 = vadd.f32 %v299, %v300
      %v302 = vsel %vm149, %v262, 0.0
      %v303 = vadd.f32 %v301, %v302
      %v304 = vsel %vm149, %v263, 0.0
      %v305 = vadd.f32 %v303, %v304
      %v306 = vsel %vm149, %v264, 0.0
      %v307 = vadd.f32 %v305, %v306
      %v308 = vsel %vm149, %v265, 0.0
      %v309 = vadd.f32 %v307, %v308
      %v310 = vsel %vm149, %v266, 0.0
      %v311 = vadd.f32 %v309, %v310
      %v312 = vsel %vm149, %v267, 0.0
      %v313 = vadd.f32 %v311, %v312
      %v314 = vsel %vm149, %v268, 0.0
      %v315 = vadd.f32 %v313, %v314
      %v316 = vsel %vm149, %v269, 0.0
      %v317 = vadd.f32 %v315, %v316
      %v318 = vsel %vm149, %v270, 0.0
      %v319 = vadd.f32 %v317, %v318
      %v320 = vsel %vm149, %v271, 0.0
      %v321 = vadd.f32 %v319, %v320
      %v322 = vsel %vm149, %v272, 0.0
      %v323 = vadd.f32 %v321, %v322
      %v324 = vsel %vm149, %v273, 0.0
      %v325 = vadd.f32 %v323, %v324
      %v326 = vsel %vm149, %v274, 0.0
      %v327 = vadd.f32 %v325, %v326
      %v328 = vsel %vm149, %v275, 0.0
      %v329 = vadd.f32 %v327, %v328
      %v330 = vsel %vm149, %v276, 0.0
      %v331 = vadd.f32 %v329, %v330
      %v332 = vsel %vm149, %v277, 0.0
      %v333 = vadd.f32 %v331, %v332
      %v334 = vsel %vm149, %v278, 0.0
      %v335 = vadd.f32 %v333, %v334
      %v336 = vsel %vm149, %v279, 0.0
      %v337 = vadd.f32 %v335, %v336
      %v338 = vsel %vm149, %v280, 0.0
      %v339 = vadd.f32 %v337, %v338
      %v340 = vsel %vm149, %v281, 0.0
      %v341 = vadd.f32 %v339, %v340
      %v342 = vsel %vm149, %v282, 0.0
      %v343 = vadd.f32 %v341, %v342
      %v344 = vsel %vm149, %v283, 0.0
      %v345 = vadd.f32 %v343, %v344
      %v346 = vsel %vm149, %v284, 0.0
      %v347 = vadd.f32 %v345, %v346
      %v348 = vrot.slane %v347, 4
      %v349 = vadd.f32 %v347, %v348
      %v350 = vrot.slane %v349, 2
      %v351 = vadd.f32 %v349, %v350
      %v352 = vrot.slane %v351, 1
      %v353 = vadd.f32 %v351, %v352
      %v354 = vmul.f32 %v353, %v219
      %v355 = vadd.f32 %v354, 1e-05
      %v356 = vrsqrt.pop %v355
      %v357 = vmul.f32 %v221, %v356
      %v358 = vmul.f32 %v222, %v356
      %v359 = vmul.f32 %v223, %v356
      %v360 = vmul.f32 %v224, %v356
      %v361 = vmul.f32 %v225, %v356
      %v362 = vmul.f32 %v226, %v356
      %v363 = vmul.f32 %v227, %v356
      %v364 = vmul.f32 %v228, %v356
      %v365 = vmul.f32 %v229, %v356
      %v366 = vmul.f32 %v230, %v356
      %v367 = vmul.f32 %v231, %v356
      %v368 = vmul.f32 %v232, %v356
      %v369 = vmul.f32 %v233, %v356
      %v370 = vmul.f32 %v234, %v356
      %v371 = vmul.f32 %v235, %v356
      %v372 = vmul.f32 %v236, %v356
      %v373 = vmul.f32 %v237, %v356
      %v374 = vmul.f32 %v238, %v356
      %v375 = vmul.f32 %v239, %v356
      %v376 = vmul.f32 %v240, %v356
      %v377 = vmul.f32 %v241, %v356
      %v378 = vmul.f32 %v242, %v356
      %v379 = vmul.f32 %v243, %v356
      %v380 = vmul.f32 %v244, %v356
      %v381 = vmul.f32 %v245, %v356
      %v382 = vmul.f32 %v246, %v356
      %v383 = vmul.f32 %v247, %v356
      %v384 = vmul.f32 %v248, %v356
      %v385 = vmul.f32 %v249, %v356
      %v386 = vmul.f32 %v250, %v356
      %v387 = vmul.f32 %v251, %v356
      %v388 = vmul.f32 %v252, %v356
      %v389 = vmax.f32 %v357, 0.0
      %v390 = vmax.f32 %v358, 0.0
      %v391 = vmax.f32 %v359, 0.0
      %v392 = vmax.f32 %v360, 0.0
      %v393 = vmax.f32 %v361, 0.0
      %v394 = vmax.f32 %v362, 0.0
      %v395 = vmax.f32 %v363, 0.0
      %v396 = vmax.f32 %v364, 0.0
      %v397 = vmax.f32 %v365, 0.0
      %v398 = vmax.f32 %v366, 0.0
      %v399 = vmax.f32 %v367, 0.0
      %v400 = vmax.f32 %v368, 0.0
      %v401 = vmax.f32 %v369, 0.0
      %v402 = vmax.f32 %v370, 0.0
      %v403 = vmax.f32 %v371, 0.0
      %v404 = vmax.f32 %v372, 0.0
      %v405 = vmax.f32 %v373, 0.0
      %v406 = vmax.f32 %v374, 0.0
      %v407 = vmax.f32 %v375, 0.0
      %v408 = vmax.f32 %v376, 0.0
      %v409 = vmax.f32 %v377, 0.0
      %v410 = vmax.f32 %v378, 0.0
      %v411 = vmax.f32 %v379, 0.0
      %v412 = vmax.f32 %v380, 0.0
      %v413 = vmax.f32 %v381, 0.0
      %v414 = vmax.f32 %v382, 0.0
      %v415 = vmax.f32 %v383, 0.0
      %v416 = vmax.f32 %v384, 0.0
      %v417 = vmax.f32 %v385, 0.0
      %v418 = vmax.f32 %v386, 0.0
      %v419 = vmax.f32 %v387, 0.0
      %v420 = vmax.f32 %v388, 0.0
      %421 = vst.msk [vmem:[%s116] sm:$0xff] %vm149, %v389
      %422 = vst.msk [vmem:[%s116 + $0x8] sm:$0xff] %vm149, %v390
      %423 = vst.msk [vmem:[%s116 + $0x10] sm:$0xff] %vm149, %v391
      %424 = vst.msk [vmem:[%s116 + $0x18] sm:$0xff] %vm149, %v392
      %425 = vst.msk [vmem:[%s116 + $0x20] sm:$0xff] %vm149, %v393
      %426 = vst.msk [vmem:[%s116 + $0x28] sm:$0xff] %vm149, %v394
      %427 = vst.msk [vmem:[%s116 + $0x30] sm:$0xff] %vm149, %v395
      %428 = vst.msk [vmem:[%s116 + $0x38] sm:$0xff] %vm149, %v396
      %429 = vst.msk [vmem:[%s116 + $0x40] sm:$0xff] %vm149, %v397
      %430 = vst.msk [vmem:[%s116 + $0x48] sm:$0xff] %vm149, %v398
      %431 = vst.msk [vmem:[%s116 + $0x50] sm:$0xff] %vm149, %v399
      %432 = vst.msk [vmem:[%s116 + $0x58] sm:$0xff] %vm149, %v400
      %433 = vst.msk [vmem:[%s116 + $0x60] sm:$0xff] %vm149, %v401
      %434 = vst.msk [vmem:[%s116 + $0x68] sm:$0xff] %vm149, %v402
      %435 = vst.msk [vmem:[%s116 + $0x70] sm:$0xff] %vm149, %v403
      %436 = vst.msk [vmem:[%s116 + $0x78] sm:$0xff] %vm149, %v404
      %437 = vst.msk [vmem:[%s116 + $0x80] sm:$0xff] %vm149, %v405
      %438 = vst.msk [vmem:[%s116 + $0x88] sm:$0xff] %vm149, %v406
      %439 = vst.msk [vmem:[%s116 + $0x90] sm:$0xff] %vm149, %v407
      %440 = vst.msk [vmem:[%s116 + $0x98] sm:$0xff] %vm149, %v408
      %441 = vst.msk [vmem:[%s116 + $0xa0] sm:$0xff] %vm149, %v409
      %442 = vst.msk [vmem:[%s116 + $0xa8] sm:$0xff] %vm149, %v410
      %443 = vst.msk [vmem:[%s116 + $0xb0] sm:$0xff] %vm149, %v411
      %444 = vst.msk [vmem:[%s116 + $0xb8] sm:$0xff] %vm149, %v412
      %445 = vst.msk [vmem:[%s116 + $0xc0] sm:$0xff] %vm149, %v413
      %446 = vst.msk [vmem:[%s116 + $0xc8] sm:$0xff] %vm149, %v414
      %447 = vst.msk [vmem:[%s116 + $0xd0] sm:$0xff] %vm149, %v415
      %448 = vst.msk [vmem:[%s116 + $0xd8] sm:$0xff] %vm149, %v416
      %449 = vst.msk [vmem:[%s116 + $0xe0] sm:$0xff] %vm149, %v417
      %450 = vst.msk [vmem:[%s116 + $0xe8] sm:$0xff] %vm149, %v418
      %451 = vst.msk [vmem:[%s116 + $0xf0] sm:$0xff] %vm149, %v419
      %452 = vst.msk [vmem:[%s116 + $0xf8] sm:$0xff] %vm149, %v420
      %p453 = scmp.lt.s32.totalorder %s12, 1
      %s454 = scalar_select %p453, %s12, 1
      %s455 = smul.addr %s454, 32
      %s456 = smul.addr %s455, 8
      %s457 = scalar_lea.vmem %s1, %s456
      // Predicated region
      $region25: #{generator_forward.54} parent=23 // pred_check
        %p458 = pneg %p56
      $region26: #{generator_forward.54} parent=23 // pred_check_branch
        %460 = sbr.rel (%p458) target = $region28
      $region27: #{generator_forward.54} parent=23 // pred_region
        _
      $region28: #{generator_forward.54} parent=23 // pred_fallthru
        _
    $region24: #{generator_forward.54} parent=5 // pred_fallthru
      _
    %p461 = scmp.le.s32.totalorder 2, %s7
    // Predicated region
    $region29: #{generator_forward.54} parent=5 // pred_check
      %p462 = pneg %p461
    $region30: #{generator_forward.54} parent=5 // pred_check_branch
      %464 = sbr.rel (%p462) target = $region32
    $region31: #{generator_forward.54} parent=5 // pred_region
      %s465 = ssub.s32 %s7, 2
      // Predicated region
      $region33: #{generator_forward.54} parent=31 // pred_check
        %p466 = pneg %p62
      $region34: #{generator_forward.54} parent=31 // pred_check_branch
        %468 = sbr.rel (%p466) target = $region36
      $region35: #{generator_forward.54} parent=31 // pred_region
        %p469 = scmp.lt.s32.totalorder %s13, 1
        %s470 = scalar_select %p469, %s13, 1
        %s471 = smul.addr %s470, 32
        %s472 = smul.addr %s471, 8
        %s473 = scalar_lea.vmem %s1, %s472
      $region36: #{generator_forward.54} parent=31 // pred_fallthru
        _
    $region32: #{generator_forward.54} parent=5 // pred_fallthru
      _
  $region6: #{generator_forward.54} parent=0 // loop_footer
    %s11 = sadd.s32 1, %s7
  $region7: #{generator_forward.54} parent=0 // loop_footer_branch
    %6 = sbr.rel target = $region3
  $region8: #{generator_forward.54} parent=0 // loop_exit
    _

// kernel: generator_forward.53
$region0: #{generator_forward.53}
  #allocation0 [shape = 'u32[]', space=smem, size = 0x4, offset = 0x4, fixed_abs, tag = 'smem constant byte address 0x4 - core index']
  #allocation1 [shape = 'u32[144,128]{1,0:T(1,128)}', space=vmem, size = 0x12000, scoped, tag = 'internal scratch']
  #allocation2 [shape = 'f32[512,128]{1,0:T(8,128)}', space=vmem, size = 0x40000, scoped, tag = 'scratch operand']
  %s0 = inlined_call_operand.vmem [shape: bf16[512,256], index: 0, kind: input, shape index: {}]
  %s1 = inlined_call_operand.vmem [shape: bf16[256,128], index: 1, kind: input, shape index: {}]
  %s2 = inlined_call_operand.vmem [shape: f32[1,128], index: 2, kind: input, shape index: {}]
  %s3 = inlined_call_operand.vmem [shape: f32[512,128], index: 3, kind: output, shape index: {}]
  %s4 = sld [smem:[#allocation0]]
  $region30: #{generator_forward.53} parent=0
    _
  %s6 = ssub.s32 1, %s4
  %s7 = scalar_select 0, %s6, %s4
  // Predicated region
  $region2: #{generator_forward.53} parent=0 // pred_check
    _
  $region3: #{generator_forward.53} parent=0 // pred_check_branch
    %9 = sbr.rel (0) target = $region5
  $region4: #{generator_forward.53} parent=0 // pred_region
    _
  $region5: #{generator_forward.53} parent=0 // pred_fallthru
    _
  // Predicated region
  $region6: #{generator_forward.53} parent=0 // pred_check
    _
  $region7: #{generator_forward.53} parent=0 // pred_check_branch
    %11 = sbr.rel (0) target = $region9
  $region8: #{generator_forward.53} parent=0 // pred_region
    _
  $region9: #{generator_forward.53} parent=0 // pred_fallthru
    _
  // Predicated region
  $region10: #{generator_forward.53} parent=0 // pred_check
    _
  $region11: #{generator_forward.53} parent=0 // pred_check_branch
    %13 = sbr.rel (0) target = $region13
  $region12: #{generator_forward.53} parent=0 // pred_region
    _
  $region13: #{generator_forward.53} parent=0 // pred_fallthru
    _
  %p15 = scmp.eq.s32.totalorder 0, 0
  // Predicated region
  $region14: #{generator_forward.53} parent=0 // pred_check
    %p16 = pneg %p15
  $region15: #{generator_forward.53} parent=0 // pred_check_branch
    %18 = sbr.rel (%p16) target = $region17
  $region16: #{generator_forward.53} parent=0 // pred_region
    %19 = vst [vmem:[#allocation2] sm:$0xff] 0.0
    %20 = vst [vmem:[#allocation2 + $0x8] sm:$0xff] 0.0
    %21 = vst [vmem:[#allocation2 + $0x10] sm:$0xff] 0.0
    %22 = vst [vmem:[#allocation2 + $0x18] sm:$0xff] 0.0
    %23 = vst [vmem:[#allocation2 + $0x20] sm:$0xff] 0.0
    %24 = vst [vmem:[#allocation2 + $0x28] sm:$0xff] 0.0
    %25 = vst [vmem:[#allocation2 + $0x30] sm:$0xff] 0.0
    %26 = vst [vmem:[#allocation2 + $0x38] sm:$0xff] 0.0
    %27 = vst [vmem:[#allocation2 + $0x40] sm:$0xff] 0.0
    %28 = vst [vmem:[#allocation2 + $0x48] sm:$0xff] 0.0
    %29 = vst [vmem:[#allocation2 + $0x50] sm:$0xff] 0.0
    %30 = vst [vmem:[#allocation2 + $0x58] sm:$0xff] 0.0
    %31 = vst [vmem:[#allocation2 + $0x60] sm:$0xff] 0.0
    %32 = vst [vmem:[#allocation2 + $0x68] sm:$0xff] 0.0
    %33 = vst [vmem:[#allocation2 + $0x70] sm:$0xff] 0.0
    %34 = vst [vmem:[#allocation2 + $0x78] sm:$0xff] 0.0
    %35 = vst [vmem:[#allocation2 + $0x80] sm:$0xff] 0.0
    %36 = vst [vmem:[#allocation2 + $0x88] sm:$0xff] 0.0
    %37 = vst [vmem:[#allocation2 + $0x90] sm:$0xff] 0.0
    %38 = vst [vmem:[#allocation2 + $0x98] sm:$0xff] 0.0
    %39 = vst [vmem:[#allocation2 + $0xa0] sm:$0xff] 0.0
    %40 = vst [vmem:[#allocation2 + $0xa8] sm:$0xff] 0.0
    %41 = vst [vmem:[#allocation2 + $0xb0] sm:$0xff] 0.0
    %42 = vst [vmem:[#allocation2 + $0xb8] sm:$0xff] 0.0
    %43 = vst [vmem:[#allocation2 + $0xc0] sm:$0xff] 0.0
    %44 = vst [vmem:[#allocation2 + $0xc8] sm:$0xff] 0.0
    %45 = vst [vmem:[#allocation2 + $0xd0] sm:$0xff] 0.0
    %46 = vst [vmem:[#allocation2 + $0xd8] sm:$0xff] 0.0
    %47 = vst [vmem:[#allocation2 + $0xe0] sm:$0xff] 0.0
    %48 = vst [vmem:[#allocation2 + $0xe8] sm:$0xff] 0.0
    %49 = vst [vmem:[#allocation2 + $0xf0] sm:$0xff] 0.0
    %50 = vst [vmem:[#allocation2 + $0xf8] sm:$0xff] 0.0
    %51 = vst [vmem:[#allocation2 + $0x100] sm:$0xff] 0.0
    %52 = vst [vmem:[#allocation2 + $0x108] sm:$0xff] 0.0
    %53 = vst [vmem:[#allocation2 + $0x110] sm:$0xff] 0.0
    %54 = vst [vmem:[#allocation2 + $0x118] sm:$0xff] 0.0
    %55 = vst [vmem:[#allocation2 + $0x120] sm:$0xff] 0.0
    %56 = vst [vmem:[#allocation2 + $0x128] sm:$0xff] 0.0
    %57 = vst [vmem:[#allocation2 + $0x130] sm:$0xff] 0.0
    %58 = vst [vmem:[#allocation2 + $0x138] sm:$0xff] 0.0
    %59 = vst [vmem:[#allocation2 + $0x140] sm:$0xff] 0.0
    %60 = vst [vmem:[#allocation2 + $0x148] sm:$0xff] 0.0
    %61 = vst [vmem:[#allocation2 + $0x150] sm:$0xff] 0.0
    %62 = vst [vmem:[#allocation2 + $0x158] sm:$0xff] 0.0
    %63 = vst [vmem:[#allocation2 + $0x160] sm:$0xff] 0.0
    %64 = vst [vmem:[#allocation2 + $0x168] sm:$0xff] 0.0
    %65 = vst [vmem:[#allocation2 + $0x170] sm:$0xff] 0.0
    %66 = vst [vmem:[#allocation2 + $0x178] sm:$0xff] 0.0
    %67 = vst [vmem:[#allocation2 + $0x180] sm:$0xff] 0.0
    %68 = vst [vmem:[#allocation2 + $0x188] sm:$0xff] 0.0
    %69 = vst [vmem:[#allocation2 + $0x190] sm:$0xff] 0.0
    %70 = vst [vmem:[#allocation2 + $0x198] sm:$0xff] 0.0
    %71 = vst [vmem:[#allocation2 + $0x1a0] sm:$0xff] 0.0
    %72 = vst [vmem:[#allocation2 + $0x1a8] sm:$0xff] 0.0
    %73 = vst [vmem:[#allocation2 + $0x1b0] sm:$0xff] 0.0
    %74 = vst [vmem:[#allocation2 + $0x1b8] sm:$0xff] 0.0
    %75 = vst [vmem:[#allocation2 + $0x1c0] sm:$0xff] 0.0
    %76 = vst [vmem:[#allocation2 + $0x1c8] sm:$0xff] 0.0
    %77 = vst [vmem:[#allocation2 + $0x1d0] sm:$0xff] 0.0
    %78 = vst [vmem:[#allocation2 + $0x1d8] sm:$0xff] 0.0
    %79 = vst [vmem:[#allocation2 + $0x1e0] sm:$0xff] 0.0
    %80 = vst [vmem:[#allocation2 + $0x1e8] sm:$0xff] 0.0
    %81 = vst [vmem:[#allocation2 + $0x1f0] sm:$0xff] 0.0
    %82 = vst [vmem:[#allocation2 + $0x1f8] sm:$0xff] 0.0
  $region17: #{generator_forward.53} parent=0 // pred_fallthru
    _
  %v83 = vld [vmem:[#allocation2] sm:$0xff]
  %v84 = vld [vmem:[#allocation2 + $0x8] sm:$0xff]
  %v85 = vld [vmem:[#allocation2 + $0x10] sm:$0xff]
  %v86 = vld [vmem:[#allocation2 + $0x18] sm:$0xff]
  %v87 = vld [vmem:[#allocation2 + $0x20] sm:$0xff]
  %v88 = vld [vmem:[#allocation2 + $0x28] sm:$0xff]
  %v89 = vld [vmem:[#allocation2 + $0x30] sm:$0xff]
  %v90 = vld [vmem:[#allocation2 + $0x38] sm:$0xff]
  %v91 = vld [vmem:[#allocation2 + $0x40] sm:$0xff]
  %v92 = vld [vmem:[#allocation2 + $0x48] sm:$0xff]
  %v93 = vld [vmem:[#allocation2 + $0x50] sm:$0xff]
  %v94 = vld [vmem:[#allocation2 + $0x58] sm:$0xff]
  %v95 = vld [vmem:[#allocation2 + $0x60] sm:$0xff]
  %v96 = vld [vmem:[#allocation2 + $0x68] sm:$0xff]
  %v97 = vld [vmem:[#allocation2 + $0x70] sm:$0xff]
  %v98 = vld [vmem:[#allocation2 + $0x78] sm:$0xff]
  %v99 = vld [vmem:[#allocation2 + $0x80] sm:$0xff]
  %v100 = vld [vmem:[#allocation2 + $0x88] sm:$0xff]
  %v101 = vld [vmem:[#allocation2 + $0x90] sm:$0xff]
  %v102 = vld [vmem:[#allocation2 + $0x98] sm:$0xff]
  %v103 = vld [vmem:[#allocation2 + $0xa0] sm:$0xff]
  %v104 = vld [vmem:[#allocation2 + $0xa8] sm:$0xff]
  %v105 = vld [vmem:[#allocation2 + $0xb0] sm:$0xff]
  %v106 = vld [vmem:[#allocation2 + $0xb8] sm:$0xff]
  %v107 = vld [vmem:[#allocation2 + $0xc0] sm:$0xff]
  %v108 = vld [vmem:[#allocation2 + $0xc8] sm:$0xff]
  %v109 = vld [vmem:[#allocation2 + $0xd0] sm:$0xff]
  %v110 = vld [vmem:[#allocation2 + $0xd8] sm:$0xff]
  %v111 = vld [vmem:[#allocation2 + $0xe0] sm:$0xff]
  %v112 = vld [vmem:[#allocation2 + $0xe8] sm:$0xff]
  %v113 = vld [vmem:[#allocation2 + $0xf0] sm:$0xff]
  %v114 = vld [vmem:[#allocation2 + $0xf8] sm:$0xff]
  %v115 = vld [vmem:[#allocation2 + $0x100] sm:$0xff]
  %v116 = vld [vmem:[#allocation2 + $0x108] sm:$0xff]
  %v117 = vld [vmem:[#allocation2 + $0x110] sm:$0xff]
  %v118 = vld [vmem:[#allocation2 + $0x118] sm:$0xff]
  %v119 = vld [vmem:[#allocation2 + $0x120] sm:$0xff]
  %v120 = vld [vmem:[#allocation2 + $0x128] sm:$0xff]
  %v121 = vld [vmem:[#allocation2 + $0x130] sm:$0xff]
  %v122 = vld [vmem:[#allocation2 + $0x138] sm:$0xff]
  %v123 = vld [vmem:[#allocation2 + $0x140] sm:$0xff]
  %v124 = vld [vmem:[#allocation2 + $0x148] sm:$0xff]
  %v125 = vld [vmem:[#allocation2 + $0x150] sm:$0xff]
  %v126 = vld [vmem:[#allocation2 + $0x158] sm:$0xff]
  %v127 = vld [vmem:[#allocation2 + $0x160] sm:$0xff]
  %v128 = vld [vmem:[#allocation2 + $0x168] sm:$0xff]
  %v129 = vld [vmem:[#allocation2 + $0x170] sm:$0xff]
  %v130 = vld [vmem:[#allocation2 + $0x178] sm:$0xff]
  %v131 = vld [vmem:[#allocation2 + $0x180] sm:$0xff]
  %v132 = vld [vmem:[#allocation2 + $0x188] sm:$0xff]
  %v133 = vld [vmem:[#allocation2 + $0x190] sm:$0xff]
  %v134 = vld [vmem:[#allocation2 + $0x198] sm:$0xff]
  %v135 = vld [vmem:[#allocation2 + $0x1a0] sm:$0xff]
  %v136 = vld [vmem:[#allocation2 + $0x1a8] sm:$0xff]
  %v137 = vld [vmem:[#allocation2 + $0x1b0] sm:$0xff]
  %v138 = vld [vmem:[#allocation2 + $0x1b8] sm:$0xff]
  %v139 = vld [vmem:[#allocation2 + $0x1c0] sm:$0xff]
  %v140 = vld [vmem:[#allocation2 + $0x1c8] sm:$0xff]
  %v141 = vld [vmem:[#allocation2 + $0x1d0] sm:$0xff]
  %v142 = vld [vmem:[#allocation2 + $0x1d8] sm:$0xff]
  %v143 = vld [vmem:[#allocation2 + $0x1e0] sm:$0xff]
  %v144 = vld [vmem:[#allocation2 + $0x1e8] sm:$0xff]
  %v145 = vld [vmem:[#allocation2 + $0x1f0] sm:$0xff]
  %v146 = vld [vmem:[#allocation2 + $0x1f8] sm:$0xff]
  %v147 = vld [vmem:[%s0] sm:$0xff]
  %v148 = vld [vmem:[%s0 + $0x8] sm:$0xff]
  %v149 = vld [vmem:[%s0 + $0x10] sm:$0xff]
  %v150 = vld [vmem:[%s0 + $0x18] sm:$0xff]
  %v151 = vld [vmem:[%s0 + $0x20] sm:$0xff]
  %v152 = vld [vmem:[%s0 + $0x28] sm:$0xff]
  %v153 = vld [vmem:[%s0 + $0x30] sm:$0xff]
  %v154 = vld [vmem:[%s0 + $0x38] sm:$0xff]
  %v155 = vld [vmem:[%s0 + $0x40] sm:$0xff]
  %v156 = vld [vmem:[%s0 + $0x48] sm:$0xff]
  %v157 = vld [vmem:[%s0 + $0x50] sm:$0xff]
  %v158 = vld [vmem:[%s0 + $0x58] sm:$0xff]
  %v159 = vld [vmem:[%s0 + $0x60] sm:$0xff]
  %v160 = vld [vmem:[%s0 + $0x68] sm:$0xff]
  %v161 = vld [vmem:[%s0 + $0x70] sm:$0xff]
  %v162 = vld [vmem:[%s0 + $0x78] sm:$0xff]
  %v163 = vld [vmem:[%s0 + $0x80] sm:$0xff]
  %v164 = vld [vmem:[%s0 + $0x88] sm:$0xff]
  %v165 = vld [vmem:[%s0 + $0x90] sm:$0xff]
  %v166 = vld [vmem:[%s0 + $0x98] sm:$0xff]
  %v167 = vld [vmem:[%s0 + $0xa0] sm:$0xff]
  %v168 = vld [vmem:[%s0 + $0xa8] sm:$0xff]
  %v169 = vld [vmem:[%s0 + $0xb0] sm:$0xff]
  %v170 = vld [vmem:[%s0 + $0xb8] sm:$0xff]
  %v171 = vld [vmem:[%s0 + $0xc0] sm:$0xff]
  %v172 = vld [vmem:[%s0 + $0xc8] sm:$0xff]
  %v173 = vld [vmem:[%s0 + $0xd0] sm:$0xff]
  %v174 = vld [vmem:[%s0 + $0xd8] sm:$0xff]
  %v175 = vld [vmem:[%s0 + $0xe0] sm:$0xff]
  %v176 = vld [vmem:[%s0 + $0xe8] sm:$0xff]
  %v177 = vld [vmem:[%s0 + $0xf0] sm:$0xff]
  %v178 = vld [vmem:[%s0 + $0xf8] sm:$0xff]
  %v179 = vld [vmem:[%s0 + $0x100] sm:$0xff]
  %v180 = vld [vmem:[%s0 + $0x108] sm:$0xff]
  %v181 = vld [vmem:[%s0 + $0x110] sm:$0xff]
  %v182 = vld [vmem:[%s0 + $0x118] sm:$0xff]
  %v183 = vld [vmem:[%s0 + $0x120] sm:$0xff]
  %v184 = vld [vmem:[%s0 + $0x128] sm:$0xff]
  %v185 = vld [vmem:[%s0 + $0x130] sm:$0xff]
  %v186 = vld [vmem:[%s0 + $0x138] sm:$0xff]
  %v187 = vld [vmem:[%s0 + $0x140] sm:$0xff]
  %v188 = vld [vmem:[%s0 + $0x148] sm:$0xff]
  %v189 = vld [vmem:[%s0 + $0x150] sm:$0xff]
  %v190 = vld [vmem:[%s0 + $0x158] sm:$0xff]
  %v191 = vld [vmem:[%s0 + $0x160] sm:$0xff]
  %v192 = vld [vmem:[%s0 + $0x168] sm:$0xff]
  %v193 = vld [vmem:[%s0 + $0x170] sm:$0xff]
  %v194 = vld [vmem:[%s0 + $0x178] sm:$0xff]
  %v195 = vld [vmem:[%s0 + $0x180] sm:$0xff]
  %v196 = vld [vmem:[%s0 + $0x188] sm:$0xff]
  %v197 = vld [vmem:[%s0 + $0x190] sm:$0xff]
  %v198 = vld [vmem:[%s0 + $0x198] sm:$0xff]
  %v199 = vld [vmem:[%s0 + $0x1a0] sm:$0xff]
  %v200 = vld [vmem:[%s0 + $0x1a8] sm:$0xff]
  %v201 = vld [vmem:[%s0 + $0x1b0] sm:$0xff]
  %v202 = vld [vmem:[%s0 + $0x1b8] sm:$0xff]
  %v203 = vld [vmem:[%s0 + $0x1c0] sm:$0xff]
  %v204 = vld [vmem:[%s0 + $0x1c8] sm:$0xff]
  %v205 = vld [vmem:[%s0 + $0x1d0] sm:$0xff]
  %v206 = vld [vmem:[%s0 + $0x1d8] sm:$0xff]
  %v207 = vld [vmem:[%s0 + $0x1e0] sm:$0xff]
  %v208 = vld [vmem:[%s0 + $0x1e8] sm:$0xff]
  %v209 = vld [vmem:[%s0 + $0x1f0] sm:$0xff]
  %v210 = vld [vmem:[%s0 + $0x1f8] sm:$0xff]
  %v211 = vld [vmem:[%s1] sm:$0xf]
  %v212 = vld [vmem:[%s1 + $0x4] sm:$0xf]
  %v213 = vld [vmem:[%s1 + $0x8] sm:$0xf]
  %v214 = vld [vmem:[%s1 + $0xc] sm:$0xf]
  %v215 = vld [vmem:[%s1 + $0x10] sm:$0xf]
  %v216 = vld [vmem:[%s1 + $0x14] sm:$0xf]
  %v217 = vld [vmem:[%s1 + $0x18] sm:$0xf]
  %v218 = vld [vmem:[%s1 + $0x1c] sm:$0xf]
  %v219 = vld [vmem:[%s1 + $0x20] sm:$0xf]
  %v220 = vld [vmem:[%s1 + $0x24] sm:$0xf]
  %v221 = vld [vmem:[%s1 + $0x28] sm:$0xf]
  %v222 = vld [vmem:[%s1 + $0x2c] sm:$0xf]
  %v223 = vld [vmem:[%s1 + $0x30] sm:$0xf]
  %v224 = vld [vmem:[%s1 + $0x34] sm:$0xf]
  %v225 = vld [vmem:[%s1 + $0x38] sm:$0xf]
  %v226 = vld [vmem:[%s1 + $0x3c] sm:$0xf]
  %v227 = vld [vmem:[%s1 + $0x40] sm:$0xf]
  %v228 = vld [vmem:[%s1 + $0x44] sm:$0xf]
  %v229 = vld [vmem:[%s1 + $0x48] sm:$0xf]
  %v230 = vld [vmem:[%s1 + $0x4c] sm:$0xf]
  %v231 = vld [vmem:[%s1 + $0x50] sm:$0xf]
  %v232 = vld [vmem:[%s1 + $0x54] sm:$0xf]
  %v233 = vld [vmem:[%s1 + $0x58] sm:$0xf]
  %v234 = vld [vmem:[%s1 + $0x5c] sm:$0xf]
  %v235 = vld [vmem:[%s1 + $0x60] sm:$0xf]
  %v236 = vld [vmem:[%s1 + $0x64] sm:$0xf]
  %v237 = vld [vmem:[%s1 + $0x68] sm:$0xf]
  %v238 = vld [vmem:[%s1 + $0x6c] sm:$0xf]
  %v239 = vld [vmem:[%s1 + $0x70] sm:$0xf]
  %v240 = vld [vmem:[%s1 + $0x74] sm:$0xf]
  %v241 = vld [vmem:[%s1 + $0x78] sm:$0xf]
  %v242 = vld [vmem:[%s1 + $0x7c] sm:$0xf]
  %v307 = vunpack.c.l.b16 %v147
  %v308 = vunpack.c.h.b16 %v147
  %v309 = vunpack.c.l.b16 %v148
  %v310 = vunpack.c.h.b16 %v148
  %v311 = vunpack.c.l.b16 %v149
  %v312 = vunpack.c.h.b16 %v149
  %v313 = vunpack.c.l.b16 %v150
  %v314 = vunpack.c.h.b16 %v150
  %v315 = vunpack.c.l.b16 %v151
  %v316 = vunpack.c.h.b16 %v151
  %v317 = vunpack.c.l.b16 %v152
  %v318 = vunpack.c.h.b16 %v152
  %v319 = vunpack.c.l.b16 %v153
  %v320 = vunpack.c.h.b16 %v153
  %v321 = vunpack.c.l.b16 %v154
  %v322 = vunpack.c.h.b16 %v154
  %v323 = vunpack.c.l.b16 %v155
  %v324 = vunpack.c.h.b16 %v155
  %v325 = vunpack.c.l.b16 %v156
  %v326 = vunpack.c.h.b16 %v156
  %v327 = vunpack.c.l.b16 %v157
  %v328 = vunpack.c.h.b16 %v157
  %v329 = vunpack.c.l.b16 %v158
  %v330 = vunpack.c.h.b16 %v158
  %v331 = vunpack.c.l.b16 %v159
  %v332 = vunpack.c.h.b16 %v159
  %v333 = vunpack.c.l.b16 %v160
  %v334 = vunpack.c.h.b16 %v160
  %v335 = vunpack.c.l.b16 %v161
  %v336 = vunpack.c.h.b16 %v161
  %v337 = vunpack.c.l.b16 %v162
  %v338 = vunpack.c.h.b16 %v162
  %v339 = vunpack.c.l.b16 %v163
  %v340 = vunpack.c.h.b16 %v163
  %v341 = vunpack.c.l.b16 %v164
  %v342 = vunpack.c.h.b16 %v164
  %v343 = vunpack.c.l.b16 %v165
  %v344 = vunpack.c.h.b16 %v165
  %v345 = vunpack.c.l.b16 %v166
  %v346 = vunpack.c.h.b16 %v166
  %v347 = vunpack.c.l.b16 %v167
  %v348 = vunpack.c.h.b16 %v167
  %v349 = vunpack.c.l.b16 %v168
  %v350 = vunpack.c.h.b16 %v168
  %v351 = vunpack.c.l.b16 %v169
  %v352 = vunpack.c.h.b16 %v169
  %v353 = vunpack.c.l.b16 %v170
  %v354 = vunpack.c.h.b16 %v170
  %v355 = vunpack.c.l.b16 %v171
  %v356 = vunpack.c.h.b16 %v171
  %v357 = vunpack.c.l.b16 %v172
  %v358 = vunpack.c.h.b16 %v172
  %v359 = vunpack.c.l.b16 %v173
  %v360 = vunpack.c.h.b16 %v173
  %v361 = vunpack.c.l.b16 %v174
  %v362 = vunpack.c.h.b16 %v174
  %v363 = vunpack.c.l.b16 %v175
  %v364 = vunpack.c.h.b16 %v175
  %v365 = vunpack.c.l.b16 %v176
  %v366 = vunpack.c.h.b16 %v176
  %v367 = vunpack.c.l.b16 %v177
  %v368 = vunpack.c.h.b16 %v177
  %v369 = vunpack.c.l.b16 %v178
  %v370 = vunpack.c.h.b16 %v178
  %v371 = vunpack.c.l.b16 %v179
  %v372 = vunpack.c.h.b16 %v179
  %v373 = vunpack.c.l.b16 %v180
  %v374 = vunpack.c.h.b16 %v180
  %v375 = vunpack.c.l.b16 %v181
  %v376 = vunpack.c.h.b16 %v181
  %v377 = vunpack.c.l.b16 %v182
  %v378 = vunpack.c.h.b16 %v182
  %v379 = vunpack.c.l.b16 %v183
  %v380 = vunpack.c.h.b16 %v183
  %v381 = vunpack.c.l.b16 %v184
  %v382 = vunpack.c.h.b16 %v184
  %v383 = vunpack.c.l.b16 %v185
  %v384 = vunpack.c.h.b16 %v185
  %v385 = vunpack.c.l.b16 %v186
  %v386 = vunpack.c.h.b16 %v186
  %v387 = vunpack.c.l.b16 %v187
  %v388 = vunpack.c.h.b16 %v187
  %v389 = vunpack.c.l.b16 %v188
  %v390 = vunpack.c.h.b16 %v188
  %v391 = vunpack.c.l.b16 %v189
  %v392 = vunpack.c.h.b16 %v189
  %v393 = vunpack.c.l.b16 %v190
  %v394 = vunpack.c.h.b16 %v190
  %v395 = vunpack.c.l.b16 %v191
  %v396 = vunpack.c.h.b16 %v191
  %v397 = vunpack.c.l.b16 %v192
  %v398 = vunpack.c.h.b16 %v192
  %v399 = vunpack.c.l.b16 %v193
  %v400 = vunpack.c.h.b16 %v193
  %v401 = vunpack.c.l.b16 %v194
  %v402 = vunpack.c.h.b16 %v194
  %v403 = vunpack.c.l.b16 %v195
  %v404 = vunpack.c.h.b16 %v195
  %v405 = vunpack.c.l.b16 %v196
  %v406 = vunpack.c.h.b16 %v196
  %v407 = vunpack.c.l.b16 %v197
  %v408 = vunpack.c.h.b16 %v197
  %v409 = vunpack.c.l.b16 %v198
  %v410 = vunpack.c.h.b16 %v198
  %v411 = vunpack.c.l.b16 %v199
  %v412 = vunpack.c.h.b16 %v199
  %v413 = vunpack.c.l.b16 %v200
  %v414 = vunpack.c.h.b16 %v200
  %v415 = vunpack.c.l.b16 %v201
  %v416 = vunpack.c.h.b16 %v201
  %v417 = vunpack.c.l.b16 %v202
  %v418 = vunpack.c.h.b16 %v202
  %v419 = vunpack.c.l.b16 %v203
  %v420 = vunpack.c.h.b16 %v203
  %v421 = vunpack.c.l.b16 %v204
  %v422 = vunpack.c.h.b16 %v204
  %v423 = vunpack.c.l.b16 %v205
  %v424 = vunpack.c.h.b16 %v205
  %v425 = vunpack.c.l.b16 %v206
  %v426 = vunpack.c.h.b16 %v206
  %v427 = vunpack.c.l.b16 %v207
  %v428 = vunpack.c.h.b16 %v207
  %v429 = vunpack.c.l.b16 %v208
  %v430 = vunpack.c.h.b16 %v208
  %v431 = vunpack.c.l.b16 %v209
  %v432 = vunpack.c.h.b16 %v209
  %v433 = vunpack.c.l.b16 %v210
  %v434 = vunpack.c.h.b16 %v210
  %v435 = vpack.c.b16 %v309, %v307
  %v436 = vpack.c.b16 %v310, %v308
  %v437 = vpack.c.b16 %v313, %v311
  %v438 = vpack.c.b16 %v314, %v312
  %v439 = vpack.c.b16 %v317, %v315
  %v440 = vpack.c.b16 %v318, %v316
  %v441 = vpack.c.b16 %v321, %v319
  %v442 = vpack.c.b16 %v322, %v320
  %v443 = vpack.c.b16 %v325, %v323
  %v444 = vpack.c.b16 %v326, %v324
  %v445 = vpack.c.b16 %v329, %v327
  %v446 = vpack.c.b16 %v330, %v328
  %v447 = vpack.c.b16 %v333, %v331
  %v448 = vpack.c.b16 %v334, %v332
  %v449 = vpack.c.b16 %v337, %v335
  %v450 = vpack.c.b16 %v338, %v336
  %v451 = vpack.c.b16 %v341, %v339
  %v452 = vpack.c.b16 %v342, %v340
  %v453 = vpack.c.b16 %v345, %v343
  %v454 = vpack.c.b16 %v346, %v344
  %v455 = vpack.c.b16 %v349, %v347
  %v456 = vpack.c.b16 %v350, %v348
  %v457 = vpack.c.b16 %v353, %v351
  %v458 = vpack.c.b16 %v354, %v352
  %v459 = vpack.c.b16 %v357, %v355
  %v460 = vpack.c.b16 %v358, %v356
  %v461 = vpack.c.b16 %v361, %v359
  %v462 = vpack.c.b16 %v362, %v360
  %v463 = vpack.c.b16 %v365, %v363
  %v464 = vpack.c.b16 %v366, %v364
  %v465 = vpack.c.b16 %v369, %v367
  %v466 = vpack.c.b16 %v370, %v368
  %v467 = vpack.c.b16 %v373, %v371
  %v468 = vpack.c.b16 %v374, %v372
  %v469 = vpack.c.b16 %v377, %v375
  %v470 = vpack.c.b16 %v378, %v376
  %v471 = vpack.c.b16 %v381, %v379
  %v472 = vpack.c.b16 %v382, %v380
  %v473 = vpack.c.b16 %v385, %v383
  %v474 = vpack.c.b16 %v386, %v384
  %v475 = vpack.c.b16 %v389, %v387
  %v476 = vpack.c.b16 %v390, %v388
  %v477 = vpack.c.b16 %v393, %v391
  %v478 = vpack.c.b16 %v394, %v392
  %v479 = vpack.c.b16 %v397, %v395
  %v480 = vpack.c.b16 %v398, %v396
  %v481 = vpack.c.b16 %v401, %v399
  %v482 = vpack.c.b16 %v402, %v400
  %v483 = vpack.c.b16 %v405, %v403
  %v484 = vpack.c.b16 %v406, %v404
  %v485 = vpack.c.b16 %v409, %v407
  %v486 = vpack.c.b16 %v410, %v408
  %v487 = vpack.c.b16 %v413, %v411
  %v488 = vpack.c.b16 %v414, %v412
  %v489 = vpack.c.b16 %v417, %v415
  %v490 = vpack.c.b16 %v418, %v416
  %v491 = vpack.c.b16 %v421, %v419
  %v492 = vpack.c.b16 %v422, %v420
  %v493 = vpack.c.b16 %v425, %v423
  %v494 = vpack.c.b16 %v426, %v424
  %v495 = vpack.c.b16 %v429, %v427
  %v496 = vpack.c.b16 %v430, %v428
  %v497 = vpack.c.b16 %v433, %v431
  %v498 = vpack.c.b16 %v434, %v432
  %v595 = vunpack.c.l.b16 %v211
  %v596 = vunpack.c.l.b16 %v212
  %v597 = vunpack.c.l.b16 %v213
  %v598 = vunpack.c.l.b16 %v214
  %v599 = vunpack.c.l.b16 %v215
  %v600 = vunpack.c.l.b16 %v216
  %v601 = vunpack.c.l.b16 %v217
  %v602 = vunpack.c.l.b16 %v218
  %v603 = vunpack.c.l.b16 %v219
  %v604 = vunpack.c.l.b16 %v220
  %v605 = vunpack.c.l.b16 %v221
  %v606 = vunpack.c.l.b16 %v222
  %v607 = vunpack.c.l.b16 %v223
  %v608 = vunpack.c.l.b16 %v224
  %v609 = vunpack.c.l.b16 %v225
  %v610 = vunpack.c.l.b16 %v226
  %v611 = vunpack.c.l.b16 %v227
  %v612 = vunpack.c.l.b16 %v228
  %v613 = vunpack.c.l.b16 %v229
  %v614 = vunpack.c.l.b16 %v230
  %v615 = vunpack.c.l.b16 %v231
  %v616 = vunpack.c.l.b16 %v232
  %v617 = vunpack.c.l.b16 %v233
  %v618 = vunpack.c.l.b16 %v234
  %v619 = vunpack.c.l.b16 %v235
  %v620 = vunpack.c.l.b16 %v236
  %v621 = vunpack.c.l.b16 %v237
  %v622 = vunpack.c.l.b16 %v238
  %v623 = vunpack.c.l.b16 %v239
  %v624 = vunpack.c.l.b16 %v240
  %v625 = vunpack.c.l.b16 %v241
  %v626 = vunpack.c.l.b16 %v242
  %v627 = vpack.c.b16 %v596, %v595
  %v628 = vpack.c.b16 %v598, %v597
  %v629 = vpack.c.b16 %v600, %v599
  %v630 = vpack.c.b16 %v602, %v601
  %v631 = vpack.c.b16 %v604, %v603
  %v632 = vpack.c.b16 %v606, %v605
  %v633 = vpack.c.b16 %v608, %v607
  %v634 = vpack.c.b16 %v610, %v609
  %v635 = vpack.c.b16 %v612, %v611
  %v636 = vpack.c.b16 %v614, %v613
  %v637 = vpack.c.b16 %v616, %v615
  %v638 = vpack.c.b16 %v618, %v617
  %v639 = vpack.c.b16 %v620, %v619
  %v640 = vpack.c.b16 %v622, %v621
  %v641 = vpack.c.b16 %v624, %v623
  %v642 = vpack.c.b16 %v626, %v625
  %659 = vmatprep.subr.bf16.mxu0 0
  %660 = vmatpush1.bf16.msra.mxu0 %v627
  %661 = vmatprep.subr.bf16.mxu0 0
  %662 = vmatpush1.bf16.msra.mxu0 %v628
  %663 = vmatprep.subr.bf16.mxu0 0
  %664 = vmatpush1.bf16.msra.mxu0 %v629
  %665 = vmatprep.subr.bf16.mxu0 0
  %666 = vmatpush1.bf16.msra.mxu0 %v630
  %667 = vmatprep.subr.bf16.mxu0 0
  %668 = vmatpush1.bf16.msra.mxu0 %v631
  %669 = vmatprep.subr.bf16.mxu0 0
  %670 = vmatpush1.bf16.msra.mxu0 %v632
  %671 = vmatprep.subr.bf16.mxu0 0
  %672 = vmatpush1.bf16.msra.mxu0 %v633
  %673 = vmatprep.subr.bf16.mxu0 0
  %674 = vmatpush1.bf16.msra.mxu0 %v634
  %675 = vmatprep.subr.bf16.mxu0 0
  %676 = vmatpush1.bf16.msra.mxu0 %v635
  %677 = vmatprep.subr.bf16.mxu0 0
  %678 = vmatpush1.bf16.msra.mxu0 %v636
  %679 = vmatprep.subr.bf16.mxu0 0
  %680 = vmatpush1.bf16.msra.mxu0 %v637
  %681 = vmatprep.subr.bf16.mxu0 0
  %682 = vmatpush1.bf16.msra.mxu0 %v638
  %683 = vmatprep.subr.bf16.mxu0 0
  %684 = vmatpush1.bf16.msra.mxu0 %v639
  %685 = vmatprep.subr.bf16.mxu0 0
  %686 = vmatpush1.bf16.msra.mxu0 %v640
  %687 = vmatprep.subr.bf16.mxu0 0
  %688 = vmatpush1.bf16.msra.mxu0 %v641
  %689 = vmatprep.subr.bf16.mxu0 0
  %690 = vmatpush1.bf16.msra.mxu0 %v642
  %691 = vmatprep.mubr.bf16.mxu0 %v436
  %692 = vmatmul.mubr.bf16.gmra.mrb[0].mxu0 %v435
  %v693 = vpop.f32.mrb[0].mxu0
  %v694 = vadd.f32 0.0, %v693
  %v695 = vpop.f32.mrb[0].mxu0
  %v696 = vpop.f32.mrb[0].mxu0
  %v697 = vadd.f32 0.0, %v696
  %v698 = vpop.f32.mrb[0].mxu0
  %699 = vmatprep.mubr.bf16.mxu0 %v438
  %700 = vmatmul.mubr.bf16.gmra.mrb[0].mxu0 %v437
  %v701 = vpop.f32.mrb[0].mxu0
  %v702 = vadd.f32 0.0, %v701
  %v703 = vpop.f32.mrb[0].mxu0
  %v704 = vpop.f32.mrb[0].mxu0
  %v705 = vadd.f32 0.0, %v704
  %v706 = vpop.f32.mrb[0].mxu0
  %707 = vmatprep.mubr.bf16.mxu0 %v440
  %708 = vmatmul.mubr.bf16.gmra.mrb[0].mxu0 %v439
  %v709 = vpop.f32.mrb[0].mxu0
  %v710 = vadd.f32 0.0, %v709
  %v711 = vpop.f32.mrb[0].mxu0
  %v712 = vpop.f32.mrb[0].mxu0
  %v713 = vadd.f32 0.0, %v712
  %v714 = vpop.f32.mrb[0].mxu0
  %715 = vmatprep.mubr.bf16.mxu0 %v442
  %716 = vmatmul.mubr.bf16.gmra.mrb[0].mxu0 %v441
  %v717 = vpop.f32.mrb[0].mxu0
  %v718 = vadd.f32 0.0, %v717
  %v719 = vpop.f32.mrb[0].mxu0
  %v720 = vpop.f32.mrb[0].mxu0
  %v721 = vadd.f32 0.0, %v720
  %v722 = vpop.f32.mrb[0].mxu0
  %723 = vmatprep.mubr.bf16.mxu0 %v444
  %724 = vmatmul.mubr.bf16.gmra.mrb[0].mxu0 %v443
  %v725 = vpop.f32.mrb[0].mxu0
  %v726 = vadd.f32 0.0, %v725
  %v727 = vpop.f32.mrb[0].mxu0
  %v728 = vpop.f32.mrb[0].mxu0
  %v729 = vadd.f32 0.0, %v728
  %v730 = vpop.f32.mrb[0].mxu0
  %731 = vmatprep.mubr.bf16.mxu0 %v446
  %732 = vmatmul.mubr.bf16.gmra.mrb[0].mxu0 %v445
  %v733 = vpop.f32.mrb[0].mxu0
  %v734 = vadd.f32 0.0, %v733
  %v735 = vpop.f32.mrb[0].mxu0
  %v736 = vpop.f32.mrb[0].mxu0
  %v737 = vadd.f32 0.0, %v736
  %v738 = vpop.f32.mrb[0].mxu0
  %739 = vmatprep.mubr.bf16.mxu0 %v448
  %740 = vmatmul.mubr.bf16.gmra.mrb[0].mxu0 %v447
  %v741 = vpop.f32.mrb[0].mxu0
  %v742 = vadd.f32 0.0, %v741
  %v743 = vpop.f32.mrb[0].mxu0
  %v744 = vpop.f32.mrb[0].mxu0
  %v745 = vadd.f32 0.0, %v744
  %v746 = vpop.f32.mrb[0].mxu0
  %747 = vmatprep.mubr.bf16.mxu0 %v450
  %748 = vmatmul.mubr.bf16.gmra.mrb[0].mxu0 %v449
  %v749 = vpop.f32.mrb[0].mxu0
  %v750 = vadd.f32 0.0, %v749
  %v751 = vpop.f32.mrb[0].mxu0
  %v752 = vpop.f32.mrb[0].mxu0
  %v753 = vadd.f32 0.0, %v752
  %v754 = vpop.f32.mrb[0].mxu0
  %755 = vmatprep.mubr.bf16.mxu0 %v452
  %756 = vmatmul.mubr.bf16.gmra.mrb[0].mxu0 %v451
  %v757 = vpop.f32.mrb[0].mxu0
  %v758 = vadd.f32 0.0, %v757
  %v759 = vpop.f32.mrb[0].mxu0
  %v760 = vpop.f32.mrb[0].mxu0
  %v761 = vadd.f32 0.0, %v760
  %v762 = vpop.f32.mrb[0].mxu0
  %763 = vmatprep.mubr.bf16.mxu0 %v454
  %764 = vmatmul.mubr.bf16.gmra.mrb[0].mxu0 %v453
  %v765 = vpop.f32.mrb[0].mxu0
  %v766 = vadd.f32 0.0, %v765
  %v767 = vpop.f32.mrb[0].mxu0
  %v768 = vpop.f32.mrb[0].mxu0
  %v769 = vadd.f32 0.0, %v768
  %v770 = vpop.f32.mrb[0].mxu0
  %771 = vmatprep.mubr.bf16.mxu0 %v456
  %772 = vmatmul.mubr.bf16.gmra.mrb[0].mxu0 %v455
  %v773 = vpop.f32.mrb[0].mxu0
  %v774 = vadd.f32 0.0, %v773
  %v775 = vpop.f32.mrb[0].mxu0
  %v776 = vpop.f32.mrb[0].mxu0
  %v777 = vadd.f32 0.0, %v776
  %v778 = vpop.f32.mrb[0].mxu0
  %779 = vmatprep.mubr.bf16.mxu0 %v458
  %780 = vmatmul.mubr.bf16.gmra.mrb[0].mxu0 %v457
  %v781 = vpop.f32.mrb[0].mxu0
  %v782 = vadd.f32 0.0, %v781
  %v783 = vpop.f32.mrb[0].mxu0
  %v784 = vpop.f32.mrb[0].mxu0
  %v785 = vadd.f32 0.0, %v784
  %v786 = vpop.f32.mrb[0].mxu0
  %787 = vmatprep.mubr.bf16.mxu0 %v460
  %788 = vmatmul.mubr.bf16.gmra.mrb[0].mxu0 %v459
  %v789 = vpop.f32.mrb[0].mxu0
  %v790 = vadd.f32 0.0, %v789
  %v791 = vpop.f32.mrb[0].mxu0
  %v792 = vpop.f32.mrb[0].mxu0
  %v793 = vadd.f32 0.0, %v792
  %v794 = vpop.f32.mrb[0].mxu0
  %795 = vmatprep.mubr.bf16.mxu0 %v462
  %796 = vmatmul.mubr.bf16.gmra.mrb[0].mxu0 %v461
  %v797 = vpop.f32.mrb[0].mxu0
  %v798 = vadd.f32 0.0, %v797
  %v799 = vpop.f32.mrb[0].mxu0
  %v800 = vpop.f32.mrb[0].mxu0
  %v801 = vadd.f32 0.0, %v800
  %v802 = vpop.f32.mrb[0].mxu0
  %803 = vmatprep.mubr.bf16.mxu0 %v464
  %804 = vmatmul.mubr.bf16.gmra.mrb[0].mxu0 %v463
  %v805 = vpop.f32.mrb[0].mxu0
  %v806 = vadd.f32 0.0, %v805
  %v807 = vpop.f32.mrb[0].mxu0
  %v808 = vpop.f32.mrb[0].mxu0
  %v809 = vadd.f32 0.0, %v808
  %v810 = vpop.f32.mrb[0].mxu0
  %811 = vmatprep.mubr.bf16.mxu0 %v466
  %812 = vmatmul.mubr.bf16.gmra.mrb[0].mxu0 %v465
  %v813 = vpop.f32.mrb[0].mxu0
  %v814 = vadd.f32 0.0, %v813
  %v815 = vpop.f32.mrb[0].mxu0
  %v816 = vpop.f32.mrb[0].mxu0
  %v817 = vadd.f32 0.0, %v816
  %v818 = vpop.f32.mrb[0].mxu0
  %819 = vmatprep.mubr.bf16.mxu0 %v468
  %820 = vmatmul.mubr.bf16.gmra.mrb[0].mxu0 %v467
  %v821 = vpop.f32.mrb[0].mxu0
  %v822 = vadd.f32 0.0, %v821
  %v823 = vpop.f32.mrb[0].mxu0
  %v824 = vpop.f32.mrb[0].mxu0
  %v825 = vadd.f32 0.0, %v824
  %v826 = vpop.f32.mrb[0].mxu0
  %827 = vmatprep.mubr.bf16.mxu0 %v470
  %828 = vmatmul.mubr.bf16.gmra.mrb[0].mxu0 %v469
  %v829 = vpop.f32.mrb[0].mxu0
  %v830 = vadd.f32 0.0, %v829
  %v831 = vpop.f32.mrb[0].mxu0
  %v832 = vpop.f32.mrb[0].mxu0
  %v833 = vadd.f32 0.0, %v832
  %v834 = vpop.f32.mrb[0].mxu0
  %835 = vmatprep.mubr.bf16.mxu0 %v472
  %836 = vmatmul.mubr.bf16.gmra.mrb[0].mxu0 %v471
  %v837 = vpop.f32.mrb[0].mxu0
  %v838 = vadd.f32 0.0, %v837
  %v839 = vpop.f32.mrb[0].mxu0
  %v840 = vpop.f32.mrb[0].mxu0
  %v841 = vadd.f32 0.0, %v840
  %v842 = vpop.f32.mrb[0].mxu0
  %843 = vmatprep.mubr.bf16.mxu0 %v474
  %844 = vmatmul.mubr.bf16.gmra.mrb[0].mxu0 %v473
  %v845 = vpop.f32.mrb[0].mxu0
  %v846 = vadd.f32 0.0, %v845
  %v847 = vpop.f32.mrb[0].mxu0
  %v848 = vpop.f32.mrb[0].mxu0
  %v849 = vadd.f32 0.0, %v848
  %v850 = vpop.f32.mrb[0].mxu0
  %851 = vmatprep.mubr.bf16.mxu0 %v476
  %852 = vmatmul.mubr.bf16.gmra.mrb[0].mxu0 %v475
  %v853 = vpop.f32.mrb[0].mxu0
  %v854 = vadd.f32 0.0, %v853
  %v855 = vpop.f32.mrb[0].mxu0
  %v856 = vpop.f32.mrb[0].mxu0
  %v857 = vadd.f32 0.0, %v856
  %v858 = vpop.f32.mrb[0].mxu0
  %859 = vmatprep.mubr.bf16.mxu0 %v478
  %860 = vmatmul.mubr.bf16.gmra.mrb[0].mxu0 %v477
  %v861 = vpop.f32.mrb[0].mxu0
  %v862 = vadd.f32 0.0, %v861
  %v863 = vpop.f32.mrb[0].mxu0
  %v864 = vpop.f32.mrb[0].mxu0
  %v865 = vadd.f32 0.0, %v864
  %v866 = vpop.f32.mrb[0].mxu0
  %867 = vmatprep.mubr.bf16.mxu0 %v480
  %868 = vmatmul.mubr.bf16.gmra.mrb[0].mxu0 %v479
  %v869 = vpop.f32.mrb[0].mxu0
  %v870 = vadd.f32 0.0, %v869
  %v871 = vpop.f32.mrb[0].mxu0
  %v872 = vpop.f32.mrb[0].mxu0
  %v873 = vadd.f32 0.0, %v872
  %v874 = vpop.f32.mrb[0].mxu0
  %875 = vmatprep.mubr.bf16.mxu0 %v482
  %876 = vmatmul.mubr.bf16.gmra.mrb[0].mxu0 %v481
  %v877 = vpop.f32.mrb[0].mxu0
  %v878 = vadd.f32 0.0, %v877
  %v879 = vpop.f32.mrb[0].mxu0
  %v880 = vpop.f32.mrb[0].mxu0
  %v881 = vadd.f32 0.0, %v880
  %v882 = vpop.f32.mrb[0].mxu0
  %883 = vmatprep.mubr.bf16.mxu0 %v484
  %884 = vmatmul.mubr.bf16.gmra.mrb[0].mxu0 %v483
  %v885 = vpop.f32.mrb[0].mxu0
  %v886 = vadd.f32 0.0, %v885
  %v887 = vpop.f32.mrb[0].mxu0
  %v888 = vpop.f32.mrb[0].mxu0
  %v889 = vadd.f32 0.0, %v888
  %v890 = vpop.f32.mrb[0].mxu0
  %891 = vmatprep.mubr.bf16.mxu0 %v486
  %892 = vmatmul.mubr.bf16.gmra.mrb[0].mxu0 %v485
  %v893 = vpop.f32.mrb[0].mxu0
  %v894 = vadd.f32 0.0, %v893
  %v895 = vpop.f32.mrb[0].mxu0
  %v896 = vpop.f32.mrb[0].mxu0
  %v897 = vadd.f32 0.0, %v896
  %v898 = vpop.f32.mrb[0].mxu0
  %899 = vmatprep.mubr.bf16.mxu0 %v488
  %900 = vmatmul.mubr.bf16.gmra.mrb[0].mxu0 %v487
  %v901 = vpop.f32.mrb[0].mxu0
  %v902 = vadd.f32 0.0, %v901
  %v903 = vpop.f32.mrb[0].mxu0
  %v904 = vpop.f32.mrb[0].mxu0
  %v905 = vadd.f32 0.0, %v904
  %v906 = vpop.f32.mrb[0].mxu0
  %907 = vmatprep.mubr.bf16.mxu0 %v490
  %908 = vmatmul.mubr.bf16.gmra.mrb[0].mxu0 %v489
  %v909 = vpop.f32.mrb[0].mxu0
  %v910 = vadd.f32 0.0, %v909
  %v911 = vpop.f32.mrb[0].mxu0
  %v912 = vpop.f32.mrb[0].mxu0
  %v913 = vadd.f32 0.0, %v912
  %v914 = vpop.f32.mrb[0].mxu0
  %915 = vmatprep.mubr.bf16.mxu0 %v492
  %916 = vmatmul.mubr.bf16.gmra.mrb[0].mxu0 %v491
  %v917 = vpop.f32.mrb[0].mxu0
  %v918 = vadd.f32 0.0, %v917
  %v919 = vpop.f32.mrb[0].mxu0
  %v920 = vpop.f32.mrb[0].mxu0
  %v921 = vadd.f32 0.0, %v920
  %v922 = vpop.f32.mrb[0].mxu0
  %923 = vmatprep.mubr.bf16.mxu0 %v494
  %924 = vmatmul.mubr.bf16.gmra.mrb[0].mxu0 %v493
  %v925 = vpop.f32.mrb[0].mxu0
  %v926 = vadd.f32 0.0, %v925
  %v927 = vpop.f32.mrb[0].mxu0
  %v928 = vpop.f32.mrb[0].mxu0
  %v929 = vadd.f32 0.0, %v928
  %v930 = vpop.f32.mrb[0].mxu0
  %931 = vmatprep.mubr.bf16.mxu0 %v496
  %932 = vmatmul.mubr.bf16.gmra.mrb[0].mxu0 %v495
  %v933 = vpop.f32.mrb[0].mxu0
  %v934 = vadd.f32 0.0, %v933
  %v935 = vpop.f32.mrb[0].mxu0
  %v936 = vpop.f32.mrb[0].mxu0
  %v937 = vadd.f32 0.0, %v936
  %v938 = vpop.f32.mrb[0].mxu0
  %939 = vmatprep.mubr.bf16.mxu0 %v498
  %940 = vmatmul.mubr.bf16.gmra.mrb[0].mxu0 %v497
  %v941 = vpop.f32.mrb[0].mxu0
  %v942 = vadd.f32 0.0, %v941
  %v943 = vpop.f32.mrb[0].mxu0
  %v944 = vpop.f32.mrb[0].mxu0
  %v945 = vadd.f32 0.0, %v944
  %v946 = vpop.f32.mrb[0].mxu0
  %947 = vdwg.mxu0
  %v948 = vadd.f32 %v83, %v694
  %v949 = vadd.f32 %v84, %v697
  %v950 = vadd.f32 %v85, %v702
  %v951 = vadd.f32 %v86, %v705
  %v952 = vadd.f32 %v87, %v710
  %v953 = vadd.f32 %v88, %v713
  %v954 = vadd.f32 %v89, %v718
  %v955 = vadd.f32 %v90, %v721
  %v956 = vadd.f32 %v91, %v726
  %v957 = vadd.f32 %v92, %v729
  %v958 = vadd.f32 %v93, %v734
  %v959 = vadd.f32 %v94, %v737
  %v960 = vadd.f32 %v95, %v742
  %v961 = vadd.f32 %v96, %v745
  %v962 = vadd.f32 %v97, %v750
  %v963 = vadd.f32 %v98, %v753
  %v964 = vadd.f32 %v99, %v758
  %v965 = vadd.f32 %v100, %v761
  %v966 = vadd.f32 %v101, %v766
  %v967 = vadd.f32 %v102, %v769
  %v968 = vadd.f32 %v103, %v774
  %v969 = vadd.f32 %v104, %v777
  %v970 = vadd.f32 %v105, %v782
  %v971 = vadd.f32 %v106, %v785
  %v972 = vadd.f32 %v107, %v790
  %v973 = vadd.f32 %v108, %v793
  %v974 = vadd.f32 %v109, %v798
  %v975 = vadd.f32 %v110, %v801
  %v976 = vadd.f32 %v111, %v806
  %v977 = vadd.f32 %v112, %v809
  %v978 = vadd.f32 %v113, %v814
  %v979 = vadd.f32 %v114, %v817
  %v980 = vadd.f32 %v115, %v822
  %v981 = vadd.f32 %v116, %v825
  %v982 = vadd.f32 %v117, %v830
  %v983 = vadd.f32 %v118, %v833
  %v984 = vadd.f32 %v119, %v838
  %v985 = vadd.f32 %v120, %v841
  %v986 = vadd.f32 %v121, %v846
  %v987 = vadd.f32 %v122, %v849
  %v988 = vadd.f32 %v123, %v854
  %v989 = vadd.f32 %v124, %v857
  %v990 = vadd.f32 %v125, %v862
  %v991 = vadd.f32 %v126, %v865
  %v992 = vadd.f32 %v127, %v870
  %v993 = vadd.f32 %v128, %v873
  %v994 = vadd.f32 %v129, %v878
  %v995 = vadd.f32 %v130, %v881
  %v996 = vadd.f32 %v131, %v886
  %v997 = vadd.f32 %v132, %v889
  %v998 = vadd.f32 %v133, %v894
  %v999 = vadd.f32 %v134, %v897
  %v1000 = vadd.f32 %v135, %v902
  %v1001 = vadd.f32 %v136, %v905
  %v1002 = vadd.f32 %v137, %v910
  %v1003 = vadd.f32 %v138, %v913
  %v1004 = vadd.f32 %v139, %v918
  %v1005 = vadd.f32 %v140, %v921
  %v1006 = vadd.f32 %v141, %v926
  %v1007 = vadd.f32 %v142, %v929
  %v1008 = vadd.f32 %v143, %v934
  %v1009 = vadd.f32 %v144, %v937
  %v1010 = vadd.f32 %v145, %v942
  %v1011 = vadd.f32 %v146, %v945
  %1012 = vst [vmem:[#allocation2] sm:$0xff] %v948
  %1013 = vst [vmem:[#allocation2 + $0x8] sm:$0xff] %v949
  %1014 = vst [vmem:[#allocation2 + $0x10] sm:$0xff] %v950
  %1015 = vst [vmem:[#allocation2 + $0x18] sm:$0xff] %v951
  %1016 = vst [vmem:[#allocation2 + $0x20] sm:$0xff] %v952
  %1017 = vst [vmem:[#allocation2 + $0x28] sm:$0xff] %v953
  %1018 = vst [vmem:[#allocation2 + $0x30] sm:$0xff] %v954
  %1019 = vst [vmem:[#allocation2 + $0x38] sm:$0xff] %v955
  %1020 = vst [vmem:[#allocation2 + $0x40] sm:$0xff] %v956
  %1021 = vst [vmem:[#allocation2 + $0x48] sm:$0xff] %v957
  %1022 = vst [vmem:[#allocation2 + $0x50] sm:$0xff] %v958
  %1023 = vst [vmem:[#allocation2 + $0x58] sm:$0xff] %v959
  %1024 = vst [vmem:[#allocation2 + $0x60] sm:$0xff] %v960
  %1025 = vst [vmem:[#allocation2 + $0x68] sm:$0xff] %v961
  %1026 = vst [vmem:[#allocation2 + $0x70] sm:$0xff] %v962
  %1027 = vst [vmem:[#allocation2 + $0x78] sm:$0xff] %v963
  %1028 = vst [vmem:[#allocation2 + $0x80] sm:$0xff] %v964
  %1029 = vst [vmem:[#allocation2 + $0x88] sm:$0xff] %v965
  %1030 = vst [vmem:[#allocation2 + $0x90] sm:$0xff] %v966
  %1031 = vst [vmem:[#allocation2 + $0x98] sm:$0xff] %v967
  %1032 = vst [vmem:[#allocation2 + $0xa0] sm:$0xff] %v968
  %1033 = vst [vmem:[#allocation2 + $0xa8] sm:$0xff] %v969
  %1034 = vst [vmem:[#allocation2 + $0xb0] sm:$0xff] %v970
  %1035 = vst [vmem:[#allocation2 + $0xb8] sm:$0xff] %v971
  %1036 = vst [vmem:[#allocation2 + $0xc0] sm:$0xff] %v972
  %1037 = vst [vmem:[#allocation2 + $0xc8] sm:$0xff] %v973
  %1038 = vst [vmem:[#allocation2 + $0xd0] sm:$0xff] %v974
  %1039 = vst [vmem:[#allocation2 + $0xd8] sm:$0xff] %v975
  %1040 = vst [vmem:[#allocation2 + $0xe0] sm:$0xff] %v976
  %1041 = vst [vmem:[#allocation2 + $0xe8] sm:$0xff] %v977
  %1042 = vst [vmem:[#allocation2 + $0xf0] sm:$0xff] %v978
  %1043 = vst [vmem:[#allocation2 + $0xf8] sm:$0xff] %v979
  %1044 = vst [vmem:[#allocation2 + $0x100] sm:$0xff] %v980
  %1045 = vst [vmem:[#allocation2 + $0x108] sm:$0xff] %v981
  %1046 = vst [vmem:[#allocation2 + $0x110] sm:$0xff] %v982
  %1047 = vst [vmem:[#allocation2 + $0x118] sm:$0xff] %v983
  %1048 = vst [vmem:[#allocation2 + $0x120] sm:$0xff] %v984
  %1049 = vst [vmem:[#allocation2 + $0x128] sm:$0xff] %v985
  %1050 = vst [vmem:[#allocation2 + $0x130] sm:$0xff] %v986
  %1051 = vst [vmem:[#allocation2 + $0x138] sm:$0xff] %v987
  %1052 = vst [vmem:[#allocation2 + $0x140] sm:$0xff] %v988
  %1053 = vst [vmem:[#allocation2 + $0x148] sm:$0xff] %v989
  %1054 = vst [vmem:[#allocation2 + $0x150] sm:$0xff] %v990
  %1055 = vst [vmem:[#allocation2 + $0x158] sm:$0xff] %v991
  %1056 = vst [vmem:[#allocation2 + $0x160] sm:$0xff] %v992
  %1057 = vst [vmem:[#allocation2 + $0x168] sm:$0xff] %v993
  %1058 = vst [vmem:[#allocation2 + $0x170] sm:$0xff] %v994
  %1059 = vst [vmem:[#allocation2 + $0x178] sm:$0xff] %v995
  %1060 = vst [vmem:[#allocation2 + $0x180] sm:$0xff] %v996
  %1061 = vst [vmem:[#allocation2 + $0x188] sm:$0xff] %v997
  %1062 = vst [vmem:[#allocation2 + $0x190] sm:$0xff] %v998
  %1063 = vst [vmem:[#allocation2 + $0x198] sm:$0xff] %v999
  %1064 = vst [vmem:[#allocation2 + $0x1a0] sm:$0xff] %v1000
  %1065 = vst [vmem:[#allocation2 + $0x1a8] sm:$0xff] %v1001
  %1066 = vst [vmem:[#allocation2 + $0x1b0] sm:$0xff] %v1002
  %1067 = vst [vmem:[#allocation2 + $0x1b8] sm:$0xff] %v1003
  %1068 = vst [vmem:[#allocation2 + $0x1c0] sm:$0xff] %v1004
  %1069 = vst [vmem:[#allocation2 + $0x1c8] sm:$0xff] %v1005
  %1070 = vst [vmem:[#allocation2 + $0x1d0] sm:$0xff] %v1006
  %1071 = vst [vmem:[#allocation2 + $0x1d8] sm:$0xff] %v1007
  %1072 = vst [vmem:[#allocation2 + $0x1e0] sm:$0xff] %v1008
  %1073 = vst [vmem:[#allocation2 + $0x1e8] sm:$0xff] %v1009
  %1074 = vst [vmem:[#allocation2 + $0x1f0] sm:$0xff] %v1010
  %1075 = vst [vmem:[#allocation2 + $0x1f8] sm:$0xff] %v1011
  // Predicated region
  $region18: #{generator_forward.53} parent=0 // pred_check
    %p1076 = pneg %p15
  $region19: #{generator_forward.53} parent=0 // pred_check_branch
    %1078 = sbr.rel (%p1076) target = $region21
  $region20: #{generator_forward.53} parent=0 // pred_region
    %v1079 = vld [vmem:[#allocation2] sm:$0xff]
    %v1080 = vld [vmem:[#allocation2 + $0x8] sm:$0xff]
    %v1081 = vld [vmem:[#allocation2 + $0x10] sm:$0xff]
    %v1082 = vld [vmem:[#allocation2 + $0x18] sm:$0xff]
    %v1083 = vld [vmem:[#allocation2 + $0x20] sm:$0xff]
    %v1084 = vld [vmem:[#allocation2 + $0x28] sm:$0xff]
    %v1085 = vld [vmem:[#allocation2 + $0x30] sm:$0xff]
    %v1086 = vld [vmem:[#allocation2 + $0x38] sm:$0xff]
    %v1087 = vld [vmem:[#allocation2 + $0x40] sm:$0xff]
    %v1088 = vld [vmem:[#allocation2 + $0x48] sm:$0xff]
    %v1089 = vld [vmem:[#allocation2 + $0x50] sm:$0xff]
    %v1090 = vld [vmem:[#allocation2 + $0x58] sm:$0xff]
    %v1091 = vld [vmem:[#allocation2 + $0x60] sm:$0xff]
    %v1092 = vld [vmem:[#allocation2 + $0x68] sm:$0xff]
    %v1093 = vld [vmem:[#allocation2 + $0x70] sm:$0xff]
    %v1094 = vld [vmem:[#allocation2 + $0x78] sm:$0xff]
    %v1095 = vld [vmem:[#allocation2 + $0x80] sm:$0xff]
    %v1096 = vld [vmem:[#allocation2 + $0x88] sm:$0xff]
    %v1097 = vld [vmem:[#allocation2 + $0x90] sm:$0xff]
    %v1098 = vld [vmem:[#allocation2 + $0x98] sm:$0xff]
    %v1099 = vld [vmem:[#allocation2 + $0xa0] sm:$0xff]
    %v1100 = vld [vmem:[#allocation2 + $0xa8] sm:$0xff]
    %v1101 = vld [vmem:[#allocation2 + $0xb0] sm:$0xff]
    %v1102 = vld [vmem:[#allocation2 + $0xb8] sm:$0xff]
    %v1103 = vld [vmem:[#allocation2 + $0xc0] sm:$0xff]
    %v1104 = vld [vmem:[#allocation2 + $0xc8] sm:$0xff]
    %v1105 = vld [vmem:[#allocation2 + $0xd0] sm:$0xff]
    %v1106 = vld [vmem:[#allocation2 + $0xd8] sm:$0xff]
    %v1107 = vld [vmem:[#allocation2 + $0xe0] sm:$0xff]
    %v1108 = vld [vmem:[#allocation2 + $0xe8] sm:$0xff]
    %v1109 = vld [vmem:[#allocation2 + $0xf0] sm:$0xff]
    %v1110 = vld [vmem:[#allocation2 + $0xf8] sm:$0xff]
    %v1111 = vld [vmem:[#allocation2 + $0x100] sm:$0xff]
    %v1112 = vld [vmem:[#allocation2 + $0x108] sm:$0xff]
    %v1113 = vld [vmem:[#allocation2 + $0x110] sm:$0xff]
    %v1114 = vld [vmem:[#allocation2 + $0x118] sm:$0xff]
    %v1115 = vld [vmem:[#allocation2 + $0x120] sm:$0xff]
    %v1116 = vld [vmem:[#allocation2 + $0x128] sm:$0xff]
    %v1117 = vld [vmem:[#allocation2 + $0x130] sm:$0xff]
    %v1118 = vld [vmem:[#allocation2 + $0x138] sm:$0xff]
    %v1119 = vld [vmem:[#allocation2 + $0x140] sm:$0xff]
    %v1120 = vld [vmem:[#allocation2 + $0x148] sm:$0xff]
    %v1121 = vld [vmem:[#allocation2 + $0x150] sm:$0xff]
    %v1122 = vld [vmem:[#allocation2 + $0x158] sm:$0xff]
    %v1123 = vld [vmem:[#allocation2 + $0x160] sm:$0xff]
    %v1124 = vld [vmem:[#allocation2 + $0x168] sm:$0xff]
    %v1125 = vld [vmem:[#allocation2 + $0x170] sm:$0xff]
    %v1126 = vld [vmem:[#allocation2 + $0x178] sm:$0xff]
    %v1127 = vld [vmem:[#allocation2 + $0x180] sm:$0xff]
    %v1128 = vld [vmem:[#allocation2 + $0x188] sm:$0xff]
    %v1129 = vld [vmem:[#allocation2 + $0x190] sm:$0xff]
    %v1130 = vld [vmem:[#allocation2 + $0x198] sm:$0xff]
    %v1131 = vld [vmem:[#allocation2 + $0x1a0] sm:$0xff]
    %v1132 = vld [vmem:[#allocation2 + $0x1a8] sm:$0xff]
    %v1133 = vld [vmem:[#allocation2 + $0x1b0] sm:$0xff]
    %v1134 = vld [vmem:[#allocation2 + $0x1b8] sm:$0xff]
    %v1135 = vld [vmem:[#allocation2 + $0x1c0] sm:$0xff]
    %v1136 = vld [vmem:[#allocation2 + $0x1c8] sm:$0xff]
    %v1137 = vld [vmem:[#allocation2 + $0x1d0] sm:$0xff]
    %v1138 = vld [vmem:[#allocation2 + $0x1d8] sm:$0xff]
    %v1139 = vld [vmem:[#allocation2 + $0x1e0] sm:$0xff]
    %v1140 = vld [vmem:[#allocation2 + $0x1e8] sm:$0xff]
    %v1141 = vld [vmem:[#allocation2 + $0x1f0] sm:$0xff]
    %v1142 = vld [vmem:[#allocation2 + $0x1f8] sm:$0xff]
    %v1143 = vld [vmem:[%s2] sm:$0x1]
    %v1145 = vlaneseq
    %v1146 = vshrl.u32 %v1145, 7
    %v1147 = vsub.s32 0, %v1146
    %v1148 = vrot.slane %v1143, %v1147
    %v1150 = vadd.f32 %v1079, %v1148
    %v1151 = vadd.f32 %v1080, %v1148
    %v1152 = vadd.f32 %v1081, %v1148
    %v1153 = vadd.f32 %v1082, %v1148
    %v1154 = vadd.f32 %v1083, %v1148
    %v1155 = vadd.f32 %v1084, %v1148
    %v1156 = vadd.f32 %v1085, %v1148
    %v1157 = vadd.f32 %v1086, %v1148
    %v1158 = vadd.f32 %v1087, %v1148
    %v1159 = vadd.f32 %v1088, %v1148
    %v1160 = vadd.f32 %v1089, %v1148
    %v1161 = vadd.f32 %v1090, %v1148
    %v1162 = vadd.f32 %v1091, %v1148
    %v1163 = vadd.f32 %v1092, %v1148
    %v1164 = vadd.f32 %v1093, %v1148
    %v1165 = vadd.f32 %v1094, %v1148
    %v1166 = vadd.f32 %v1095, %v1148
    %v1167 = vadd.f32 %v1096, %v1148
    %v1168 = vadd.f32 %v1097, %v1148
    %v1169 = vadd.f32 %v1098, %v1148
    %v1170 = vadd.f32 %v1099, %v1148
    %v1171 = vadd.f32 %v1100, %v1148
    %v1172 = vadd.f32 %v1101, %v1148
    %v1173 = vadd.f32 %v1102, %v1148
    %v1174 = vadd.f32 %v1103, %v1148
    %v1175 = vadd.f32 %v1104, %v1148
    %v1176 = vadd.f32 %v1105, %v1148
    %v1177 = vadd.f32 %v1106, %v1148
    %v1178 = vadd.f32 %v1107, %v1148
    %v1179 = vadd.f32 %v1108, %v1148
    %v1180 = vadd.f32 %v1109, %v1148
    %v1181 = vadd.f32 %v1110, %v1148
    %v1182 = vadd.f32 %v1111, %v1148
    %v1183 = vadd.f32 %v1112, %v1148
    %v1184 = vadd.f32 %v1113, %v1148
    %v1185 = vadd.f32 %v1114, %v1148
    %v1186 = vadd.f32 %v1115, %v1148
    %v1187 = vadd.f32 %v1116, %v1148
    %v1188 = vadd.f32 %v1117, %v1148
    %v1189 = vadd.f32 %v1118, %v1148
    %v1190 = vadd.f32 %v1119, %v1148
    %v1191 = vadd.f32 %v1120, %v1148
    %v1192 = vadd.f32 %v1121, %v1148
    %v1193 = vadd.f32 %v1122, %v1148
    %v1194 = vadd.f32 %v1123, %v1148
    %v1195 = vadd.f32 %v1124, %v1148
    %v1196 = vadd.f32 %v1125, %v1148
    %v1197 = vadd.f32 %v1126, %v1148
    %v1198 = vadd.f32 %v1127, %v1148
    %v1199 = vadd.f32 %v1128, %v1148
    %v1200 = vadd.f32 %v1129, %v1148
    %v1201 = vadd.f32 %v1130, %v1148
    %v1202 = vadd.f32 %v1131, %v1148
    %v1203 = vadd.f32 %v1132, %v1148
    %v1204 = vadd.f32 %v1133, %v1148
    %v1205 = vadd.f32 %v1134, %v1148
    %v1206 = vadd.f32 %v1135, %v1148
    %v1207 = vadd.f32 %v1136, %v1148
    %v1208 = vadd.f32 %v1137, %v1148
    %v1209 = vadd.f32 %v1138, %v1148
    %v1210 = vadd.f32 %v1139, %v1148
    %v1211 = vadd.f32 %v1140, %v1148
    %v1212 = vadd.f32 %v1141, %v1148
    %v1213 = vadd.f32 %v1142, %v1148
    %1214 = vst [vmem:[%s3] sm:$0xff] %v1150
    %1215 = vst [vmem:[%s3 + $0x8] sm:$0xff] %v1151
    %1216 = vst [vmem:[%s3 + $0x10] sm:$0xff] %v1152
    %1217 = vst [vmem:[%s3 + $0x18] sm:$0xff] %v1153
    %1218 = vst [vmem:[%s3 + $0x20] sm:$0xff] %v1154
    %1219 = vst [vmem:[%s3 + $0x28] sm:$0xff] %v1155
    %1220 = vst [vmem:[%s3 + $0x30] sm:$0xff] %v1156
    %1221 = vst [vmem:[%s3 + $0x38] sm:$0xff] %v1157
    %1222 = vst [vmem:[%s3 + $0x40] sm:$0xff] %v1158
    %1223 = vst [vmem:[%s3 + $0x48] sm:$0xff] %v1159
    %1224 = vst [vmem:[%s3 + $0x50] sm:$0xff] %v1160
    %1225 = vst [vmem:[%s3 + $0x58] sm:$0xff] %v1161
    %1226 = vst [vmem:[%s3 + $0x60] sm:$0xff] %v1162
    %1227 = vst [vmem:[%s3 + $0x68] sm:$0xff] %v1163
    %1228 = vst [vmem:[%s3 + $0x70] sm:$0xff] %v1164
    %1229 = vst [vmem:[%s3 + $0x78] sm:$0xff] %v1165
    %1230 = vst [vmem:[%s3 + $0x80] sm:$0xff] %v1166
    %1231 = vst [vmem:[%s3 + $0x88] sm:$0xff] %v1167
    %1232 = vst [vmem:[%s3 + $0x90] sm:$0xff] %v1168
    %1233 = vst [vmem:[%s3 + $0x98] sm:$0xff] %v1169
    %1234 = vst [vmem:[%s3 + $0xa0] sm:$0xff] %v1170
    %1235 = vst [vmem:[%s3 + $0xa8] sm:$0xff] %v1171
    %1236 = vst [vmem:[%s3 + $0xb0] sm:$0xff] %v1172
    %1237 = vst [vmem:[%s3 + $0xb8] sm:$0xff] %v1173
    %1238 = vst [vmem:[%s3 + $0xc0] sm:$0xff] %v1174
    %1239 = vst [vmem:[%s3 + $0xc8] sm:$0xff] %v1175
    %1240 = vst [vmem:[%s3 + $0xd0] sm:$0xff] %v1176
    %1241 = vst [vmem:[%s3 + $0xd8] sm:$0xff] %v1177
    %1242 = vst [vmem:[%s3 + $0xe0] sm:$0xff] %v1178
    %1243 = vst [vmem:[%s3 + $0xe8] sm:$0xff] %v1179
    %1244 = vst [vmem:[%s3 + $0xf0] sm:$0xff] %v1180
    %1245 = vst [vmem:[%s3 + $0xf8] sm:$0xff] %v1181
    %1246 = vst [vmem:[%s3 + $0x100] sm:$0xff] %v1182
    %1247 = vst [vmem:[%s3 + $0x108] sm:$0xff] %v1183
    %1248 = vst [vmem:[%s3 + $0x110] sm:$0xff] %v1184
    %1249 = vst [vmem:[%s3 + $0x118] sm:$0xff] %v1185
    %1250 = vst [vmem:[%s3 + $0x120] sm:$0xff] %v1186
    %1251 = vst [vmem:[%s3 + $0x128] sm:$0xff] %v1187
    %1252 = vst [vmem:[%s3 + $0x130] sm:$0xff] %v1188
    %1253 = vst [vmem:[%s3 + $0x138] sm:$0xff] %v1189
    %1254 = vst [vmem:[%s3 + $0x140] sm:$0xff] %v1190
    %1255 = vst [vmem:[%s3 + $0x148] sm:$0xff] %v1191
    %1256 = vst [vmem:[%s3 + $0x150] sm:$0xff] %v1192
    %1257 = vst [vmem:[%s3 + $0x158] sm:$0xff] %v1193
    %1258 = vst [vmem:[%s3 + $0x160] sm:$0xff] %v1194
    %1259 = vst [vmem:[%s3 + $0x168] sm:$0xff] %v1195
    %1260 = vst [vmem:[%s3 + $0x170] sm:$0xff] %v1196
    %1261 = vst [vmem:[%s3 + $0x178] sm:$0xff] %v1197
    %1262 = vst [vmem:[%s3 + $0x180] sm:$0xff] %v1198
    %1263 = vst [vmem:[%s3 + $0x188] sm:$0xff] %v1199
    %1264 = vst [vmem:[%s3 + $0x190] sm:$0xff] %v1200
    %1265 = vst [vmem:[%s3 + $0x198] sm:$0xff] %v1201
    %1266 = vst [vmem:[%s3 + $0x1a0] sm:$0xff] %v1202
    %1267 = vst [vmem:[%s3 + $0x1a8] sm:$0xff] %v1203
    %1268 = vst [vmem:[%s3 + $0x1b0] sm:$0xff] %v1204
    %1269 = vst [vmem:[%s3 + $0x1b8] sm:$0xff] %v1205
    %1270 = vst [vmem:[%s3 + $0x1c0] sm:$0xff] %v1206
    %1271 = vst [vmem:[%s3 + $0x1c8] sm:$0xff] %v1207
    %1272 = vst [vmem:[%s3 + $0x1d0] sm:$0xff] %v1208
    %1273 = vst [vmem:[%s3 + $0x1d8] sm:$0xff] %v1209
    %1274 = vst [vmem:[%s3 + $0x1e0] sm:$0xff] %v1210
    %1275 = vst [vmem:[%s3 + $0x1e8] sm:$0xff] %v1211
    %1276 = vst [vmem:[%s3 + $0x1f0] sm:$0xff] %v1212
    %1277 = vst [vmem:[%s3 + $0x1f8] sm:$0xff] %v1213
  $region21: #{generator_forward.53} parent=0 // pred_fallthru
    _
  // Predicated region
  $region22: #{generator_forward.53} parent=0 // pred_check
    _
  $region23: #{generator_forward.53} parent=0 // pred_check_branch
    %1279 = sbr.rel (0) target = $region25
  $region24: #{generator_forward.53} parent=0 // pred_region
    _
  $region25: #{generator_forward.53} parent=0 // pred_fallthru
    _
  // Predicated region
  $region26: #{generator_forward.53} parent=0 // pred_check
    _
  $region27: #{generator_forward.53} parent=0 // pred_check_branch
    %1281 = sbr.rel (0) target = $region29
  $region28: #{generator_forward.53} parent=0 // pred_region
    _
  $region29: #{generator_forward.53} parent=0 // pred_fallthru
    _

// kernel: generator_forward.55
$region0: #{generator_forward.55}
  #allocation0 [shape = 'u32[]', space=smem, size = 0x4, offset = 0x4, fixed_abs, tag = 'smem constant byte address 0x4 - core index']
  #allocation1 [shape = 'u32[144,128]{1,0:T(1,128)}', space=vmem, size = 0x12000, scoped, tag = 'internal scratch']
  #allocation2 [shape = 'f32[128,128]{1,0:T(8,128)}', space=vmem, size = 0x10000, scoped, tag = 'scratch operand']
  %s0 = inlined_call_operand.vmem [shape: bf16[128,640], index: 0, kind: input, shape index: {}]
  %s1 = inlined_call_operand.vmem [shape: bf16[640,128], index: 1, kind: input, shape index: {}]
  %s2 = inlined_call_operand.vmem [shape: f32[1,128], index: 2, kind: input, shape index: {}]
  %s3 = inlined_call_operand.vmem [shape: f32[128,128], index: 3, kind: output, shape index: {}]
  %s4 = sld [smem:[#allocation0]]
  $region94: #{generator_forward.55} parent=0
    _
  %s6 = ssub.s32 1, %s4
  %s7 = scalar_select 0, %s6, %s4
  $region1: #{generator_forward.55} parent=0
    #allocation3 [shape = 'u8[65536]{0}', space=vmem, size = 0x10000, scoped, tag = 'input window, operand 0']
    loop: start=0, step=1, limit=7
    $region2: #{generator_forward.55} parent=1 // loop_pre_header
      _
    $region3: #{generator_forward.55} parent=1 // loop_header
      %s9 = sphi 0, %s13
      %p10 = scmp.ge.s32.totalorder %s9, 7
      %s16 = sphi 0, %s35
      %s17 = sphi 0, %s31
      %s18 = sphi 0, %s27
      %s19 = sphi 0, %s16
      %s20 = sphi 0, %s17
      %s21 = sphi 0, %s18
      %s22 = sphi 0, %s19
      %s23 = sphi 0, %s20
      %s24 = sphi 0, %s21
      %s40 = sphi 0, %s42
      %s43 = sphi 0, %s40
      %s44 = sphi 0, %s43
      %s60 = sphi 0, %s44
      %s68 = sphi 0, %s70
      %s71 = sphi 0, %s68
      %s72 = sphi 0, %s71
      %s88 = sphi 0, %s72
      %s94 = sphi 0, %s96
      %s97 = sphi 0, %s94
      %s98 = sphi 0, %s97
      %s114 = sphi 0, %s98
      %s122 = sphi 0, %s124
      %s125 = sphi 0, %s122
      %s126 = sphi 0, %s125
      %s142 = sphi 0, %s126
    $region4: #{generator_forward.55} parent=1 // loop_header_branch
      %12 = sbr.rel (%p10) target = $region8
    $region5: #{generator_forward.55} parent=1 // loop_body
      %s14 = ssub.s32 %s9, 1
      %s15 = ssub.s32 %s9, 2
      %s25 = sadd.s32 1, %s18
      %p26 = scmp.ge.s32.totalorder %s25, 5
      %s27 = scalar_select %p26, 0, %s25
      %s28 = sadd.s32 1, %s17
      %s29 = scalar_select %p26, %s28, %s17
      %p30 = scmp.ge.s32.totalorder %s29, 1
      %s31 = scalar_select %p30, 0, %s29
      %s32 = sadd.s32 1, %s16
      %s33 = scalar_select %p30, %s32, %s16
      %p34 = scmp.ge.s32.totalorder %s33, 1
      %s35 = scalar_select %p34, 0, %s33
      %s36 = ssub.s32 %s16, %s35
      %s37 = ssub.s32 %s18, %s27
      %s38 = sor.u32 %s36, %s37
      %p39 = scmp.eq.s32.totalorder %s38, 0
      %s41 = sadd.s32 %s40, 1
      %s42 = scalar_select %p39, %s40, %s41
      %p45 = pneg %p39
      %p46 = scmp.eq.s32.totalorder %s9, 4
      %p47 = por %p45, %p46
      %p48 = scmp.ne.s32.totalorder %s40, %s43
      %p49 = scmp.eq.s32.totalorder %s9, 0
      %p50 = por %p48, %p49
      %p51 = scmp.ne.s32.totalorder %s40, %s43
      %p52 = scmp.eq.s32.totalorder %s14, 4
      %p53 = por %p51, %p52
      %p54 = scmp.ne.s32.totalorder %s43, %s44
      %p55 = scmp.eq.s32.totalorder %s14, 0
      %p56 = por %p54, %p55
      %p57 = scmp.ne.s32.totalorder %s43, %s44
      %p58 = scmp.eq.s32.totalorder %s15, 4
      %p59 = por %p57, %p58
      %p61 = scmp.ne.s32.totalorder %s44, %s60
      %p62 = scmp.eq.s32.totalorder %s15, 0
      %p63 = por %p61, %p62
      %s64 = ssub.s32 %s18, %s27
      %s65 = ssub.s32 %s17, %s31
      %s66 = sor.u32 %s64, %s65
      %p67 = scmp.eq.s32.totalorder %s66, 0
      %s69 = sadd.s32 %s68, 1
      %s70 = scalar_select %p67, %s68, %s69
      %p73 = pneg %p67
      %p74 = scmp.eq.s32.totalorder %s9, 4
      %p75 = por %p73, %p74
      %p76 = scmp.ne.s32.totalorder %s68, %s71
      %p77 = scmp.eq.s32.totalorder %s9, 0
      %p78 = por %p76, %p77
      %p79 = scmp.ne.s32.totalorder %s68, %s71
      %p80 = scmp.eq.s32.totalorder %s14, 4
      %p81 = por %p79, %p80
      %p82 = scmp.ne.s32.totalorder %s71, %s72
      %p83 = scmp.eq.s32.totalorder %s14, 0
      %p84 = por %p82, %p83
      %p85 = scmp.ne.s32.totalorder %s71, %s72
      %p86 = scmp.eq.s32.totalorder %s15, 4
      %p87 = por %p85, %p86
      %p89 = scmp.ne.s32.totalorder %s72, %s88
      %p90 = scmp.eq.s32.totalorder %s15, 0
      %p91 = por %p89, %p90
      %s92 = ssub.s32 %s17, %s31
      %p93 = scmp.eq.s32.totalorder %s92, 0
      %s95 = sadd.s32 %s94, 1
      %s96 = scalar_select %p93, %s94, %s95
      %p99 = pneg %p93
      %p100 = scmp.eq.s32.totalorder %s9, 4
      %p101 = por %p99, %p100
      %p102 = scmp.ne.s32.totalorder %s94, %s97
      %p103 = scmp.eq.s32.totalorder %s9, 0
      %p104 = por %p102, %p103
      %p105 = scmp.ne.s32.totalorder %s94, %s97
      %p106 = scmp.eq.s32.totalorder %s14, 4
      %p107 = por %p105, %p106
      %p108 = scmp.ne.s32.totalorder %s97, %s98
      %p109 = scmp.eq.s32.totalorder %s14, 0
      %p110 = por %p108, %p109
      %p111 = scmp.ne.s32.totalorder %s97, %s98
      %p112 = scmp.eq.s32.totalorder %s15, 4
      %p113 = por %p111, %p112
      %p115 = scmp.ne.s32.totalorder %s98, %s114
      %p116 = scmp.eq.s32.totalorder %s15, 0
      %p117 = por %p115, %p116
      %s118 = ssub.s32 %s16, %s35
      %s119 = ssub.s32 %s17, %s31
      %s120 = sor.u32 %s118, %s119
      %p121 = scmp.eq.s32.totalorder %s120, 0
      %s123 = sadd.s32 %s122, 1
      %s124 = scalar_select %p121, %s122, %s123
      %p127 = pneg %p121
      %p128 = scmp.eq.s32.totalorder %s9, 4
      %p129 = por %p127, %p128
      %p130 = scmp.ne.s32.totalorder %s122, %s125
      %p131 = scmp.eq.s32.totalorder %s9, 0
      %p132 = por %p130, %p131
      %p133 = scmp.ne.s32.totalorder %s122, %s125
      %p134 = scmp.eq.s32.totalorder %s14, 4
      %p135 = por %p133, %p134
      %p136 = scmp.ne.s32.totalorder %s125, %s126
      %p137 = scmp.eq.s32.totalorder %s14, 0
      %p138 = por %p136, %p137
      %p139 = scmp.ne.s32.totalorder %s125, %s126
      %p140 = scmp.eq.s32.totalorder %s15, 4
      %p141 = por %p139, %p140
      %p143 = scmp.ne.s32.totalorder %s126, %s142
      %p144 = scmp.eq.s32.totalorder %s15, 0
      %p145 = por %p143, %p144
      %p146 = scmp.le.s32.totalorder 1, %s9
      %p147 = scmp.lt.s32.totalorder %s9, 6
      %p148 = pnand %p146, %p147
      %p149 = pneg %p148
      // Predicated region
      $region9: #{generator_forward.55} parent=5 // pred_check
        _
      $region10: #{generator_forward.55} parent=5 // pred_check_branch
        %151 = sbr.rel (%p148) target = $region12
      $region11: #{generator_forward.55} parent=5 // pred_region
        %s152 = ssub.s32 %s9, 1
        // Predicated region
        $region13: #{generator_forward.55} parent=11 // pred_check
          %p153 = pneg %p110
        $region14: #{generator_forward.55} parent=11 // pred_check_branch
          %155 = sbr.rel (%p153) target = $region16
        $region15: #{generator_forward.55} parent=11 // pred_region
          %p156 = scmp.lt.s32.totalorder %s20, 0
          %s157 = scalar_select %p156, %s20, 0
          %s158 = scalar_lea.vmem %s2, %s157
        $region16: #{generator_forward.55} parent=11 // pred_fallthru
          _
      $region12: #{generator_forward.55} parent=5 // pred_fallthru
        _
      %p159 = scmp.lt.s32.totalorder %s9, 5
      // Predicated region
      $region17: #{generator_forward.55} parent=5 // pred_check
        %p160 = pneg %p159
      $region18: #{generator_forward.55} parent=5 // pred_check_branch
        %162 = sbr.rel (%p160) target = $region20
      $region19: #{generator_forward.55} parent=5 // pred_region
        // Predicated region
        $region21: #{generator_forward.55} parent=19 // pred_check
          %p163 = pneg %p50
        $region22: #{generator_forward.55} parent=19 // pred_check_branch
          %165 = sbr.rel (%p163) target = $region24
        $region23: #{generator_forward.55} parent=19 // pred_region
          %s166 = sand.u32 %s40, 1
          %s167 = sand.u32 %s40, 1
          %s168 = smul.addr %s167, 64
          %s169 = scalar_lea.vmem [#allocation3], %s168
          %s170 = smul.u32 16, %s16
          %s171 = smul.addr %s170, 5
          %s172 = sadd.s32 %s18, %s171
          %s173 = smul.addr %s172, 4
          %s174 = scalar_lea.vmem %s0, %s173
          // Predicated region
          $region25: #{generator_forward.55} parent=23 // pred_check
            _
          $region26: #{generator_forward.55} parent=23 // pred_check_branch
            %176 = sbr.rel (0) target = $region28
          $region27: #{generator_forward.55} parent=23 // pred_region
            // Predicated region
            $region29: #{generator_forward.55} parent=27 // pred_check
              _
            $region30: #{generator_forward.55} parent=27 // pred_check_branch
              %178 = sbr.rel target = $region32
            $region31: #{generator_forward.55} parent=27 // pred_region
              // Predicated region
              $region44: #{generator_forward.55} parent=31 // pred_check
                _
              $region45: #{generator_forward.55} parent=31 // pred_check_branch
                %223 = sbr.rel (0) target = $region47
              $region46: #{generator_forward.55} parent=31 // pred_region
                loop: start=0, step=1, limit=1
                $region48: #{generator_forward.55} parent=46 // loop_pre_header
                  _
                $region49: #{generator_forward.55} parent=46 // loop_header
                  %s225 = sphi 0, %s229
                  %p226 = scmp.ge.s32.totalorder %s225, 1
                  %s230 = sphi %s174, %s174
                  %s231 = sphi %s169, %s169
                $region50: #{generator_forward.55} parent=46 // loop_header_branch
                  %228 = sbr.rel (%p226) target = $region54
                $region51: #{generator_forward.55} parent=46 // loop_body
                  _
                $region52: #{generator_forward.55} parent=46 // loop_footer
                  %s229 = sadd.s32 1, %s225
                $region53: #{generator_forward.55} parent=46 // loop_footer_branch
                  %224 = sbr.rel target = $region49
                $region54: #{generator_forward.55} parent=46 // loop_exit
                  _
                loop: start=0, step=1, limit=1
                $region55: #{generator_forward.55} parent=46 // loop_pre_header
                  _
                $region56: #{generator_forward.55} parent=46 // loop_header
                  %s234 = sphi 0, %s238
                  %p235 = scmp.ge.s32.totalorder %s234, 1
                  %s239 = sphi %s174, %s174
                  %s240 = sphi %s169, %s169
                $region57: #{generator_forward.55} parent=46 // loop_header_branch
                  %237 = sbr.rel (%p235) target = $region61
                $region58: #{generator_forward.55} parent=46 // loop_body
                  %v241 = vld [vmem:[%s239] sm:$0xf]
                  %242 = vst [vmem:[%s240] sm:$0xf] %v241
                  %v243 = vld [vmem:[%s239 + $0x14] sm:$0xf]
                  %244 = vst [vmem:[%s240 + $0x4] sm:$0xf] %v243
                  %v245 = vld [vmem:[%s239 + $0x28] sm:$0xf]
                  %246 = vst [vmem:[%s240 + $0x8] sm:$0xf] %v245
                  %v247 = vld [vmem:[%s239 + $0x3c] sm:$0xf]
                  %248 = vst [vmem:[%s240 + $0xc] sm:$0xf] %v247
                  %v249 = vld [vmem:[%s239 + $0x50] sm:$0xf]
                  %250 = vst [vmem:[%s240 + $0x10] sm:$0xf] %v249
                  %v251 = vld [vmem:[%s239 + $0x64] sm:$0xf]
                  %252 = vst [vmem:[%s240 + $0x14] sm:$0xf] %v251
                  %v253 = vld [vmem:[%s239 + $0x78] sm:$0xf]
                  %254 = vst [vmem:[%s240 + $0x18] sm:$0xf] %v253
                  %v255 = vld [vmem:[%s239 + $0x8c] sm:$0xf]
                  %256 = vst [vmem:[%s240 + $0x1c] sm:$0xf] %v255
                  %v257 = vld [vmem:[%s239 + $0xa0] sm:$0xf]
                  %258 = vst [vmem:[%s240 + $0x20] sm:$0xf] %v257
                  %v259 = vld [vmem:[%s239 + $0xb4] sm:$0xf]
                  %260 = vst [vmem:[%s240 + $0x24] sm:$0xf] %v259
                  %v261 = vld [vmem:[%s239 + $0xc8] sm:$0xf]
                  %262 = vst [vmem:[%s240 + $0x28] sm:$0xf] %v261
                  %v263 = vld [vmem:[%s239 + $0xdc] sm:$0xf]
                  %264 = vst [vmem:[%s240 + $0x2c] sm:$0xf] %v263
                  %v265 = vld [vmem:[%s239 + $0xf0] sm:$0xf]
                  %266 = vst [vmem:[%s240 + $0x30] sm:$0xf] %v265
                  %v267 = vld [vmem:[%s239 + $0x104] sm:$0xf]
                  %268 = vst [vmem:[%s240 + $0x34] sm:$0xf] %v267
                  %v269 = vld [vmem:[%s239 + $0x118] sm:$0xf]
                  %270 = vst [vmem:[%s240 + $0x38] sm:$0xf] %v269
                  %v271 = vld [vmem:[%s239 + $0x12c] sm:$0xf]
                  %272 = vst [vmem:[%s240 + $0x3c] sm:$0xf] %v271
                $region59: #{generator_forward.55} parent=46 // loop_footer
                  %s238 = sadd.s32 1, %s234
                $region60: #{generator_forward.55} parent=46 // loop_footer_branch
                  %233 = sbr.rel target = $region56
                $region61: #{generator_forward.55} parent=46 // loop_exit
                  _
              $region47: #{generator_forward.55} parent=31 // pred_fallthru
                _
            $region32: #{generator_forward.55} parent=27 // pred_fallthru
              _
            // Predicated region
            $region33: #{generator_forward.55} parent=27 // pred_check
              _
            $region34: #{generator_forward.55} parent=27 // pred_check_branch
              %180 = sbr.rel (0) target = $region36
            $region35: #{generator_forward.55} parent=27 // pred_region
              loop: start=0, step=1, limit=1
              $region37: #{generator_forward.55} parent=35 // loop_pre_header
                _
              $region38: #{generator_forward.55} parent=35 // loop_header
                %s183 = sphi 0, %s187
                %p184 = scmp.ge.s32.totalorder %s183, 1
                %s188 = sphi %s174, %s174
                %s189 = sphi %s169, %s169
              $region39: #{generator_forward.55} parent=35 // loop_header_branch
                %186 = sbr.rel (%p184) target = $region43
              $region40: #{generator_forward.55} parent=35 // loop_body
                %v190 = vld [vmem:[%s188] sm:$0xf]
                %191 = vst [vmem:[%s189] sm:$0xf] %v190
                %v192 = vld [vmem:[%s188 + $0x14] sm:$0xf]
                %193 = vst [vmem:[%s189 + $0x4] sm:$0xf] %v192
                %v194 = vld [vmem:[%s188 + $0x28] sm:$0xf]
                %195 = vst [vmem:[%s189 + $0x8] sm:$0xf] %v194
                %v196 = vld [vmem:[%s188 + $0x3c] sm:$0xf]
                %197 = vst [vmem:[%s189 + $0xc] sm:$0xf] %v196
                %v198 = vld [vmem:[%s188 + $0x50] sm:$0xf]
                %199 = vst [vmem:[%s189 + $0x10] sm:$0xf] %v198
                %v200 = vld [vmem:[%s188 + $0x64] sm:$0xf]
                %201 = vst [vmem:[%s189 + $0x14] sm:$0xf] %v200
                %v202 = vld [vmem:[%s188 + $0x78] sm:$0xf]
                %203 = vst [vmem:[%s189 + $0x18] sm:$0xf] %v202
                %v204 = vld [vmem:[%s188 + $0x8c] sm:$0xf]
                %205 = vst [vmem:[%s189 + $0x1c] sm:$0xf] %v204
                %v206 = vld [vmem:[%s188 + $0xa0] sm:$0xf]
                %207 = vst [vmem:[%s189 + $0x20] sm:$0xf] %v206
                %v208 = vld [vmem:[%s188 + $0xb4] sm:$0xf]
                %209 = vst [vmem:[%s189 + $0x24] sm:$0xf] %v208
                %v210 = vld [vmem:[%s188 + $0xc8] sm:$0xf]
                %211 = vst [vmem:[%s189 + $0x28] sm:$0xf] %v210
                %v212 = vld [vmem:[%s188 + $0xdc] sm:$0xf]
                %213 = vst [vmem:[%s189 + $0x2c] sm:$0xf] %v212
                %v214 = vld [vmem:[%s188 + $0xf0] sm:$0xf]
                %215 = vst [vmem:[%s189 + $0x30] sm:$0xf] %v214
                %v216 = vld [vmem:[%s188 + $0x104] sm:$0xf]
                %217 = vst [vmem:[%s189 + $0x34] sm:$0xf] %v216
                %v218 = vld [vmem:[%s188 + $0x118] sm:$0xf]
                %219 = vst [vmem:[%s189 + $0x38] sm:$0xf] %v218
                %v220 = vld [vmem:[%s188 + $0x12c] sm:$0xf]
                %221 = vst [vmem:[%s189 + $0x3c] sm:$0xf] %v220
              $region41: #{generator_forward.55} parent=35 // loop_footer
                %s187 = sadd.s32 1, %s183
              $region42: #{generator_forward.55} parent=35 // loop_footer_branch
                %182 = sbr.rel target = $region38
              $region43: #{generator_forward.55} parent=35 // loop_exit
                _
            $region36: #{generator_forward.55} parent=27 // pred_fallthru
              _
          $region28: #{generator_forward.55} parent=23 // pred_fallthru
            _
          %273 = vnop
        $region24: #{generator_forward.55} parent=19 // pred_fallthru
          _
        // Predicated region
        $region62: #{generator_forward.55} parent=19 // pred_check
          %p274 = pneg %p78
        $region63: #{generator_forward.55} parent=19 // pred_check_branch
          %276 = sbr.rel (%p274) target = $region65
        $region64: #{generator_forward.55} parent=19 // pred_region
          %s277 = smul.u32 16, %s18
          %p278 = scmp.lt.s32.totalorder %s277, 79
          %s279 = scalar_select %p278, %s277, 79
          %p280 = scmp.lt.s32.totalorder %s17, 0
          %s281 = scalar_select %p280, %s17, 0
          %s282 = sadd.s32 %s281, %s279
          %s283 = smul.addr %s282, 4
          %s284 = scalar_lea.vmem %s1, %s283
          %s285 = smul.u32 16, %s18
        $region65: #{generator_forward.55} parent=19 // pred_fallthru
          _
      $region20: #{generator_forward.55} parent=5 // pred_fallthru
        _
      %p286 = scmp.le.s32.totalorder 1, %s9
      %p287 = scmp.lt.s32.totalorder %s9, 6
      %p288 = pnand %p286, %p287
      %p289 = pneg %p288
      // Predicated region
      $region66: #{generator_forward.55} parent=5 // pred_check
        _
      $region67: #{generator_forward.55} parent=5 // pred_check_branch
        %291 = sbr.rel (%p288) target = $region69
      $region68: #{generator_forward.55} parent=5 // pred_region
        %s292 = ssub.s32 %s9, 1
        %s293 = sand.u32 %s43, 1
        %s294 = sand.u32 %s43, 1
        %s295 = smul.addr %s294, 64
        %s296 = scalar_lea.vmem [#allocation3], %s295
        // Predicated region
        $region70: #{generator_forward.55} parent=68 // pred_check
          %p297 = pneg %p56
        $region71: #{generator_forward.55} parent=68 // pred_check_branch
          %299 = sbr.rel (%p297) target = $region73
        $region72: #{generator_forward.55} parent=68 // pred_region
          _
        $region73: #{generator_forward.55} parent=68 // pred_fallthru
          _
        %s300 = sand.u32 %s43, 1
        %s301 = sand.u32 %s43, 1
        %s302 = smul.addr %s301, 64
        %s303 = scalar_lea.vmem [#allocation3], %s302
        %p304 = pneg %p56
        %p305 = pneg %p53
        %s306 = smul.u32 16, %s21
        %p307 = scmp.lt.s32.totalorder %s306, 79
        %s308 = scalar_select %p307, %s306, 79
        %p309 = scmp.lt.s32.totalorder %s20, 0
        %s310 = scalar_select %p309, %s20, 0
        %s311 = sadd.s32 %s310, %s308
        %s312 = smul.addr %s311, 4
        %s313 = scalar_lea.vmem %s1, %s312
        %p314 = pneg %p84
        %p315 = pneg %p81
        %p316 = scmp.lt.s32.totalorder %s20, 0
        %s317 = scalar_select %p316, %s20, 0
        %s318 = scalar_lea.vmem %s2, %s317
        %p319 = pneg %p110
        %p320 = pneg %p107
        %p321 = pneg %p138
        %p322 = pneg %p135
        %s323 = smul.u32 16, %s19
        %p324 = scmp.lt.s32.totalorder %s323, 15
        %s325 = scalar_select %p324, %s323, 15
        %p326 = scmp.lt.s32.totalorder %s20, 0
        %s327 = scalar_select %p326, %s20, 0
        %s328 = sadd.s32 %s327, %s325
        %s329 = smul.addr %s328, 8
        %s330 = scalar_lea.vmem %s3, %s329
        %s331 = smul.u32 16, %s19
        %s332 = smul.u32 16, %s21
        %p333 = scmp.lt.s32.totalorder %s332, 79
        %s334 = scalar_select %p333, %s332, 79
        %p335 = scmp.lt.s32.totalorder %s20, 0
        %s336 = scalar_select %p335, %s20, 0
        %s337 = sadd.s32 %s336, %s334
        %s338 = smul.addr %s337, 4
        %s339 = scalar_lea.vmem %s1, %s338
        %s340 = smul.u32 16, %s21
        %p341 = scmp.lt.s32.totalorder %s20, 0
        %s342 = scalar_select %p341, %s20, 0
        %s343 = scalar_lea.vmem %s2, %s342
        %s344 = smul.u32 16, %s19
        %p345 = scmp.lt.s32.totalorder %s344, 15
        %s346 = scalar_select %p345, %s344, 15
        %p347 = scmp.lt.s32.totalorder %s20, 0
        %s348 = scalar_select %p347, %s20, 0
        %s349 = sadd.s32 %s348, %s346
        %s350 = smul.addr %s349, 8
        %s351 = scalar_lea.vmem %s3, %s350
        %s352 = smul.u32 16, %s19
        %p354 = scmp.eq.s32.totalorder %s21, 0
        // Predicated region
        $region74: #{generator_forward.55} parent=68 // pred_check
          %p355 = pneg %p354
        $region75: #{generator_forward.55} parent=68 // pred_check_branch
          %357 = sbr.rel (%p355) target = $region77
        $region76: #{generator_forward.55} parent=68 // pred_region
          %358 = vst [vmem:[#allocation2] sm:$0xff] 0.0
          %359 = vst [vmem:[#allocation2 + $0x8] sm:$0xff] 0.0
          %360 = vst [vmem:[#allocation2 + $0x10] sm:$0xff] 0.0
          %361 = vst [vmem:[#allocation2 + $0x18] sm:$0xff] 0.0
          %362 = vst [vmem:[#allocation2 + $0x20] sm:$0xff] 0.0
          %363 = vst [vmem:[#allocation2 + $0x28] sm:$0xff] 0.0
          %364 = vst [vmem:[#allocation2 + $0x30] sm:$0xff] 0.0
          %365 = vst [vmem:[#allocation2 + $0x38] sm:$0xff] 0.0
          %366 = vst [vmem:[#allocation2 + $0x40] sm:$0xff] 0.0
          %367 = vst [vmem:[#allocation2 + $0x48] sm:$0xff] 0.0
          %368 = vst [vmem:[#allocation2 + $0x50] sm:$0xff] 0.0
          %369 = vst [vmem:[#allocation2 + $0x58] sm:$0xff] 0.0
          %370 = vst [vmem:[#allocation2 + $0x60] sm:$0xff] 0.0
          %371 = vst [vmem:[#allocation2 + $0x68] sm:$0xff] 0.0
          %372 = vst [vmem:[#allocation2 + $0x70] sm:$0xff] 0.0
          %373 = vst [vmem:[#allocation2 + $0x78] sm:$0xff] 0.0
        $region77: #{generator_forward.55} parent=68 // pred_fallthru
          _
        %v374 = vld [vmem:[#allocation2] sm:$0xff]
        %v375 = vld [vmem:[#allocation2 + $0x8] sm:$0xff]
        %v376 = vld [vmem:[#allocation2 + $0x10] sm:$0xff]
        %v377 = vld [vmem:[#allocation2 + $0x18] sm:$0xff]
        %v378 = vld [vmem:[#allocation2 + $0x20] sm:$0xff]
        %v379 = vld [vmem:[#allocation2 + $0x28] sm:$0xff]
        %v380 = vld [vmem:[#allocation2 + $0x30] sm:$0xff]
        %v381 = vld [vmem:[#allocation2 + $0x38] sm:$0xff]
        %v382 = vld [vmem:[#allocation2 + $0x40] sm:$0xff]
        %v383 = vld [vmem:[#allocation2 + $0x48] sm:$0xff]
        %v384 = vld [vmem:[#allocation2 + $0x50] sm:$0xff]
        %v385 = vld [vmem:[#allocation2 + $0x58] sm:$0xff]
        %v386 = vld [vmem:[#allocation2 + $0x60] sm:$0xff]
        %v387 = vld [vmem:[#allocation2 + $0x68] sm:$0xff]
        %v388 = vld [vmem:[#allocation2 + $0x70] sm:$0xff]
        %v389 = vld [vmem:[#allocation2 + $0x78] sm:$0xff]
        %v390 = vld [vmem:[%s296] sm:$0xf]
        %v391 = vld [vmem:[%s296 + $0x4] sm:$0xf]
        %v392 = vld [vmem:[%s296 + $0x8] sm:$0xf]
        %v393 = vld [vmem:[%s296 + $0xc] sm:$0xf]
        %v394 = vld [vmem:[%s296 + $0x10] sm:$0xf]
        %v395 = vld [vmem:[%s296 + $0x14] sm:$0xf]
        %v396 = vld [vmem:[%s296 + $0x18] sm:$0xf]
        %v397 = vld [vmem:[%s296 + $0x1c] sm:$0xf]
        %v398 = vld [vmem:[%s296 + $0x20] sm:$0xf]
        %v399 = vld [vmem:[%s296 + $0x24] sm:$0xf]
        %v400 = vld [vmem:[%s296 + $0x28] sm:$0xf]
        %v401 = vld [vmem:[%s296 + $0x2c] sm:$0xf]
        %v402 = vld [vmem:[%s296 + $0x30] sm:$0xf]
        %v403 = vld [vmem:[%s296 + $0x34] sm:$0xf]
        %v404 = vld [vmem:[%s296 + $0x38] sm:$0xf]
        %v405 = vld [vmem:[%s296 + $0x3c] sm:$0xf]
        %v406 = vld [vmem:[%s339] sm:$0xf]
        %v407 = vld [vmem:[%s339 + $0x4] sm:$0xf]
        %v408 = vld [vmem:[%s339 + $0x8] sm:$0xf]
        %v409 = vld [vmem:[%s339 + $0xc] sm:$0xf]
        %v410 = vld [vmem:[%s339 + $0x10] sm:$0xf]
        %v411 = vld [vmem:[%s339 + $0x14] sm:$0xf]
        %v412 = vld [vmem:[%s339 + $0x18] sm:$0xf]
        %v413 = vld [vmem:[%s339 + $0x1c] sm:$0xf]
        %v414 = vld [vmem:[%s339 + $0x20] sm:$0xf]
        %v415 = vld [vmem:[%s339 + $0x24] sm:$0xf]
        %v416 = vld [vmem:[%s339 + $0x28] sm:$0xf]
        %v417 = vld [vmem:[%s339 + $0x2c] sm:$0xf]
        %v418 = vld [vmem:[%s339 + $0x30] sm:$0xf]
        %v419 = vld [vmem:[%s339 + $0x34] sm:$0xf]
        %v420 = vld [vmem:[%s339 + $0x38] sm:$0xf]
        %v421 = vld [vmem:[%s339 + $0x3c] sm:$0xf]
        %v438 = vunpack.c.l.b16 %v390
        %v439 = vunpack.c.l.b16 %v391
        %v440 = vunpack.c.l.b16 %v392
        %v441 = vunpack.c.l.b16 %v393
        %v442 = vunpack.c.l.b16 %v394
        %v443 = vunpack.c.l.b16 %v395
        %v444 = vunpack.c.l.b16 %v396
        %v445 = vunpack.c.l.b16 %v397
        %v446 = vunpack.c.l.b16 %v398
        %v447 = vunpack.c.l.b16 %v399
        %v448 = vunpack.c.l.b16 %v400
        %v449 = vunpack.c.l.b16 %v401
        %v450 = vunpack.c.l.b16 %v402
        %v451 = vunpack.c.l.b16 %v403
        %v452 = vunpack.c.l.b16 %v404
        %v453 = vunpack.c.l.b16 %v405
        %v454 = vpack.c.b16 %v439, %v438
        %v455 = vpack.c.b16 %v441, %v440
        %v456 = vpack.c.b16 %v443, %v442
        %v457 = vpack.c.b16 %v445, %v444
        %v458 = vpack.c.b16 %v447, %v446
        %v459 = vpack.c.b16 %v449, %v448
        %v460 = vpack.c.b16 %v451, %v450
        %v461 = vpack.c.b16 %v453, %v452
        %v486 = vunpack.c.l.b16 %v406
        %v487 = vunpack.c.l.b16 %v407
        %v488 = vunpack.c.l.b16 %v408
        %v489 = vunpack.c.l.b16 %v409
        %v490 = vunpack.c.l.b16 %v410
        %v491 = vunpack.c.l.b16 %v411
        %v492 = vunpack.c.l.b16 %v412
        %v493 = vunpack.c.l.b16 %v413
        %v494 = vunpack.c.l.b16 %v414
        %v495 = vunpack.c.l.b16 %v415
        %v496 = vunpack.c.l.b16 %v416
        %v497 = vunpack.c.l.b16 %v417
        %v498 = vunpack.c.l.b16 %v418
        %v499 = vunpack.c.l.b16 %v419
        %v500 = vunpack.c.l.b16 %v420
        %v501 = vunpack.c.l.b16 %v421
        %v502 = vpack.c.b16 %v487, %v486
        %v503 = vpack.c.b16 %v489, %v488
        %v504 = vpack.c.b16 %v491, %v490
        %v505 = vpack.c.b16 %v493, %v492
        %v506 = vpack.c.b16 %v495, %v494
        %v507 = vpack.c.b16 %v497, %v496
        %v508 = vpack.c.b16 %v499, %v498
        %v509 = vpack.c.b16 %v501, %v500
        %518 = vmatprep.subr.bf16.mxu0 0
        %519 = vmatpush1.bf16.msra.mxu0 %v502
        %520 = vmatprep.subr.bf16.mxu0 0
        %521 = vmatpush1.bf16.msra.mxu0 %v503
        %522 = vmatprep.subr.bf16.mxu0 0
        %523 = vmatpush1.bf16.msra.mxu0 %v504
        %524 = vmatprep.subr.bf16.mxu0 0
        %525 = vmatpush1.bf16.msra.mxu0 %v505
        %526 = vmatprep.subr.bf16.mxu0 0
        %527 = vmatpush1.bf16.msra.mxu0 %v506
        %528 = vmatprep.subr.bf16.mxu0 0
        %529 = vmatpush1.bf16.msra.mxu0 %v507
        %530 = vmatprep.subr.bf16.mxu0 0
        %531 = vmatpush1.bf16.msra.mxu0 %v508
        %532 = vmatprep.subr.bf16.mxu0 0
        %533 = vmatpush1.bf16.msra.mxu0 %v509
        %534 = vmatprep.subr.bf16.mxu0 0
        %535 = vmatpush1.bf16.msra.mxu0 0
        %536 = vmatprep.subr.bf16.mxu0 0
        %537 = vmatpush1.bf16.msra.mxu0 0
        %538 = vmatprep.subr.bf16.mxu0 0
        %539 = vmatpush1.bf16.msra.mxu0 0
        %540 = vmatprep.subr.bf16.mxu0 0
        %541 = vmatpush1.bf16.msra.mxu0 0
        %542 = vmatprep.subr.bf16.mxu0 0
        %543 = vmatpush1.bf16.msra.mxu0 0
        %544 = vmatprep.subr.bf16.mxu0 0
        %545 = vmatpush1.bf16.msra.mxu0 0
        %546 = vmatprep.subr.bf16.mxu0 0
        %547 = vmatpush1.bf16.msra.mxu0 0
        %548 = vmatprep.subr.bf16.mxu0 0
        %549 = vmatpush1.bf16.msra.mxu0 0
        %550 = vmatprep.mubr.bf16.mxu0 0
        %551 = vmatmul.mubr.bf16.gmra.mrb[0].mxu0 %v454
        %v552 = vpop.f32.mrb[0].mxu0
        %v553 = vadd.f32 0.0, %v552
        %v554 = vpop.f32.mrb[0].mxu0
        %v555 = vpop.f32.mrb[0].mxu0
        %v556 = vadd.f32 0.0, %v555
        %v557 = vpop.f32.mrb[0].mxu0
        %558 = vmatprep.mubr.bf16.mxu0 0
        %559 = vmatmul.mubr.bf16.gmra.mrb[0].mxu0 %v455
        %v560 = vpop.f32.mrb[0].mxu0
        %v561 = vadd.f32 0.0, %v560
        %v562 = vpop.f32.mrb[0].mxu0
        %v563 = vpop.f32.mrb[0].mxu0
        %v564 = vadd.f32 0.0, %v563
        %v565 = vpop.f32.mrb[0].mxu0
        %566 = vmatprep.mubr.bf16.mxu0 0
        %567 = vmatmul.mubr.bf16.gmra.mrb[0].mxu0 %v456
        %v568 = vpop.f32.mrb[0].mxu0
        %v569 = vadd.f32 0.0, %v568
        %v570 = vpop.f32.mrb[0].mxu0
        %v571 = vpop.f32.mrb[0].mxu0
        %v572 = vadd.f32 0.0, %v571
        %v573 = vpop.f32.mrb[0].mxu0
        %574 = vmatprep.mubr.bf16.mxu0 0
        %575 = vmatmul.mubr.bf16.gmra.mrb[0].mxu0 %v457
        %v576 = vpop.f32.mrb[0].mxu0
        %v577 = vadd.f32 0.0, %v576
        %v578 = vpop.f32.mrb[0].mxu0
        %v579 = vpop.f32.mrb[0].mxu0
        %v580 = vadd.f32 0.0, %v579
        %v581 = vpop.f32.mrb[0].mxu0
        %582 = vmatprep.mubr.bf16.mxu0 0
        %583 = vmatmul.mubr.bf16.gmra.mrb[0].mxu0 %v458
        %v584 = vpop.f32.mrb[0].mxu0
        %v585 = vadd.f32 0.0, %v584
        %v586 = vpop.f32.mrb[0].mxu0
        %v587 = vpop.f32.mrb[0].mxu0
        %v588 = vadd.f32 0.0, %v587
        %v589 = vpop.f32.mrb[0].mxu0
        %590 = vmatprep.mubr.bf16.mxu0 0
        %591 = vmatmul.mubr.bf16.gmra.mrb[0].mxu0 %v459
        %v592 = vpop.f32.mrb[0].mxu0
        %v593 = vadd.f32 0.0, %v592
        %v594 = vpop.f32.mrb[0].mxu0
        %v595 = vpop.f32.mrb[0].mxu0
        %v596 = vadd.f32 0.0, %v595
        %v597 = vpop.f32.mrb[0].mxu0
        %598 = vmatprep.mubr.bf16.mxu0 0
        %599 = vmatmul.mubr.bf16.gmra.mrb[0].mxu0 %v460
        %v600 = vpop.f32.mrb[0].mxu0
        %v601 = vadd.f32 0.0, %v600
        %v602 = vpop.f32.mrb[0].mxu0
        %v603 = vpop.f32.mrb[0].mxu0
        %v604 = vadd.f32 0.0, %v603
        %v605 = vpop.f32.mrb[0].mxu0
        %606 = vmatprep.mubr.bf16.mxu0 0
        %607 = vmatmul.mubr.bf16.gmra.mrb[0].mxu0 %v461
        %v608 = vpop.f32.mrb[0].mxu0
        %v609 = vadd.f32 0.0, %v608
        %v610 = vpop.f32.mrb[0].mxu0
        %v611 = vpop.f32.mrb[0].mxu0
        %v612 = vadd.f32 0.0, %v611
        %v613 = vpop.f32.mrb[0].mxu0
        %614 = vdwg.mxu0
        %v615 = vadd.f32 %v374, %v553
        %v616 = vadd.f32 %v375, %v556
        %v617 = vadd.f32 %v376, %v561
        %v618 = vadd.f32 %v377, %v564
        %v619 = vadd.f32 %v378, %v569
        %v620 = vadd.f32 %v379, %v572
        %v621 = vadd.f32 %v380, %v577
        %v622 = vadd.f32 %v381, %v580
        %v623 = vadd.f32 %v382, %v585
        %v624 = vadd.f32 %v383, %v588
        %v625 = vadd.f32 %v384, %v593
        %v626 = vadd.f32 %v385, %v596
        %v627 = vadd.f32 %v386, %v601
        %v628 = vadd.f32 %v387, %v604
        %v629 = vadd.f32 %v388, %v609
        %v630 = vadd.f32 %v389, %v612
        %631 = vst [vmem:[#allocation2] sm:$0xff] %v615
        %632 = vst [vmem:[#allocation2 + $0x8] sm:$0xff] %v616
        %633 = vst [vmem:[#allocation2 + $0x10] sm:$0xff] %v617
        %634 = vst [vmem:[#allocation2 + $0x18] sm:$0xff] %v618
        %635 = vst [vmem:[#allocation2 + $0x20] sm:$0xff] %v619
        %636 = vst [vmem:[#allocation2 + $0x28] sm:$0xff] %v620
        %637 = vst [vmem:[#allocation2 + $0x30] sm:$0xff] %v621
        %638 = vst [vmem:[#allocation2 + $0x38] sm:$0xff] %v622
        %639 = vst [vmem:[#allocation2 + $0x40] sm:$0xff] %v623
        %640 = vst [vmem:[#allocation2 + $0x48] sm:$0xff] %v624
        %641 = vst [vmem:[#allocation2 + $0x50] sm:$0xff] %v625
        %642 = vst [vmem:[#allocation2 + $0x58] sm:$0xff] %v626
        %643 = vst [vmem:[#allocation2 + $0x60] sm:$0xff] %v627
        %644 = vst [vmem:[#allocation2 + $0x68] sm:$0xff] %v628
        %645 = vst [vmem:[#allocation2 + $0x70] sm:$0xff] %v629
        %646 = vst [vmem:[#allocation2 + $0x78] sm:$0xff] %v630
        %p647 = scmp.eq.s32.totalorder %s21, 4
        // Predicated region
        $region78: #{generator_forward.55} parent=68 // pred_check
          %p648 = pneg %p647
        $region79: #{generator_forward.55} parent=68 // pred_check_branch
          %650 = sbr.rel (%p648) target = $region81
        $region80: #{generator_forward.55} parent=68 // pred_region
          %v651 = vld [vmem:[#allocation2] sm:$0xff]
          %v652 = vld [vmem:[#allocation2 + $0x8] sm:$0xff]
          %v653 = vld [vmem:[#allocation2 + $0x10] sm:$0xff]
          %v654 = vld [vmem:[#allocation2 + $0x18] sm:$0xff]
          %v655 = vld [vmem:[#allocation2 + $0x20] sm:$0xff]
          %v656 = vld [vmem:[#allocation2 + $0x28] sm:$0xff]
          %v657 = vld [vmem:[#allocation2 + $0x30] sm:$0xff]
          %v658 = vld [vmem:[#allocation2 + $0x38] sm:$0xff]
          %v659 = vld [vmem:[#allocation2 + $0x40] sm:$0xff]
          %v660 = vld [vmem:[#allocation2 + $0x48] sm:$0xff]
          %v661 = vld [vmem:[#allocation2 + $0x50] sm:$0xff]
          %v662 = vld [vmem:[#allocation2 + $0x58] sm:$0xff]
          %v663 = vld [vmem:[#allocation2 + $0x60] sm:$0xff]
          %v664 = vld [vmem:[#allocation2 + $0x68] sm:$0xff]
          %v665 = vld [vmem:[#allocation2 + $0x70] sm:$0xff]
          %v666 = vld [vmem:[#allocation2 + $0x78] sm:$0xff]
          %v667 = vld [vmem:[%s343] sm:$0x1]
          %v669 = vlaneseq
          %v670 = vshrl.u32 %v669, 7
          %v671 = vsub.s32 0, %v670
          %v672 = vrot.slane %v667, %v671
          %v674 = vadd.f32 %v651, %v672
          %v675 = vadd.f32 %v652, %v672
          %v676 = vadd.f32 %v653, %v672
          %v677 = vadd.f32 %v654, %v672
          %v678 = vadd.f32 %v655, %v672
          %v679 = vadd.f32 %v656, %v672
          %v680 = vadd.f32 %v657, %v672
          %v681 = vadd.f32 %v658, %v672
          %v682 = vadd.f32 %v659, %v672
          %v683 = vadd.f32 %v660, %v672
          %v684 = vadd.f32 %v661, %v672
          %v685 = vadd.f32 %v662, %v672
          %v686 = vadd.f32 %v663, %v672
          %v687 = vadd.f32 %v664, %v672
          %v688 = vadd.f32 %v665, %v672
          %v689 = vadd.f32 %v666, %v672
          %690 = vst [vmem:[%s351] sm:$0xff] %v674
          %691 = vst [vmem:[%s351 + $0x8] sm:$0xff] %v675
          %692 = vst [vmem:[%s351 + $0x10] sm:$0xff] %v676
          %693 = vst [vmem:[%s351 + $0x18] sm:$0xff] %v677
          %694 = vst [vmem:[%s351 + $0x20] sm:$0xff] %v678
          %695 = vst [vmem:[%s351 + $0x28] sm:$0xff] %v679
          %696 = vst [vmem:[%s351 + $0x30] sm:$0xff] %v680
          %697 = vst [vmem:[%s351 + $0x38] sm:$0xff] %v681
          %698 = vst [vmem:[%s351 + $0x40] sm:$0xff] %v682
          %699 = vst [vmem:[%s351 + $0x48] sm:$0xff] %v683
          %700 = vst [vmem:[%s351 + $0x50] sm:$0xff] %v684
          %701 = vst [vmem:[%s351 + $0x58] sm:$0xff] %v685
          %702 = vst [vmem:[%s351 + $0x60] sm:$0xff] %v686
          %703 = vst [vmem:[%s351 + $0x68] sm:$0xff] %v687
          %704 = vst [vmem:[%s351 + $0x70] sm:$0xff] %v688
          %705 = vst [vmem:[%s351 + $0x78] sm:$0xff] %v689
        $region81: #{generator_forward.55} parent=68 // pred_fallthru
          _
        %s706 = smul.u32 16, %s19
        %p707 = scmp.lt.s32.totalorder %s706, 15
        %s708 = scalar_select %p707, %s706, 15
        %p709 = scmp.lt.s32.totalorder %s20, 0
        %s710 = scalar_select %p709, %s20, 0
        %s711 = sadd.s32 %s710, %s708
        %s712 = smul.addr %s711, 8
        %s713 = scalar_lea.vmem %s3, %s712
        // Predicated region
        $region82: #{generator_forward.55} parent=68 // pred_check
          %p714 = pneg %p135
        $region83: #{generator_forward.55} parent=68 // pred_check_branch
          %716 = sbr.rel (%p714) target = $region85
        $region84: #{generator_forward.55} parent=68 // pred_region
          %s717 = smul.u32 16, %s19
        $region85: #{generator_forward.55} parent=68 // pred_fallthru
          _
        // Predicated region
        $region86: #{generator_forward.55} parent=68 // pred_check
          %p718 = pneg %p135
        $region87: #{generator_forward.55} parent=68 // pred_check_branch
          %720 = sbr.rel (%p718) target = $region89
        $region88: #{generator_forward.55} parent=68 // pred_region
          %s721 = smul.u32 16, %s19
          %p722 = scmp.lt.s32.totalorder %s721, 15
          %s723 = scalar_select %p722, %s721, 15
          %p724 = scmp.lt.s32.totalorder %s20, 0
          %s725 = scalar_select %p724, %s20, 0
          %s726 = sadd.s32 %s725, %s723
          %s727 = smul.addr %s726, 8
          %s728 = scalar_lea.vmem %s3, %s727
        $region89: #{generator_forward.55} parent=68 // pred_fallthru
          _
      $region69: #{generator_forward.55} parent=5 // pred_fallthru
        _
      %p729 = scmp.le.s32.totalorder 2, %s9
      // Predicated region
      $region90: #{generator_forward.55} parent=5 // pred_check
        %p730 = pneg %p729
      $region91: #{generator_forward.55} parent=5 // pred_check_branch
        %732 = sbr.rel (%p730) target = $region93
      $region92: #{generator_forward.55} parent=5 // pred_region
        %s733 = ssub.s32 %s9, 2
      $region93: #{generator_forward.55} parent=5 // pred_fallthru
        _
    $region6: #{generator_forward.55} parent=1 // loop_footer
      %s13 = sadd.s32 1, %s9
    $region7: #{generator_forward.55} parent=1 // loop_footer_branch
      %8 = sbr.rel target = $region3
    $region8: #{generator_forward.55} parent=1 // loop_exit
      _

// kernel: generator_forward.56
$region0: #{generator_forward.56}
  #allocation0 [shape = 'u32[]', space=smem, size = 0x4, offset = 0x4, fixed_abs, tag = 'smem constant byte address 0x4 - core index']
  #allocation1 [shape = 'u32[144,128]{1,0:T(1,128)}', space=vmem, size = 0x12000, scoped, tag = 'internal scratch']
  %s0 = inlined_call_operand.vmem [shape: f32[2,64,128], index: 0, kind: input, shape index: {}]
  %s1 = inlined_call_operand.vmem [shape: f32[2,64,128], index: 1, kind: output, shape index: {}]
  %s2 = sld [smem:[#allocation0]]
  $region37: #{generator_forward.56} parent=0
    _
  %s4 = ssub.s32 1, %s2
  %s5 = scalar_select 0, %s4, %s2
  loop: start=0, step=1, limit=4
  $region2: #{generator_forward.56} parent=0 // loop_pre_header
    _
  $region3: #{generator_forward.56} parent=0 // loop_header
    %s7 = sphi 0, %s11
    %p8 = scmp.ge.s32.totalorder %s7, 4
    %s17 = sphi 0, %s19
    %s20 = sphi 0, %s17
    %s21 = sphi 0, %s20
    %s37 = sphi 0, %s21
    %s43 = sphi 0, %s45
    %s46 = sphi 0, %s43
    %s47 = sphi 0, %s46
    %s63 = sphi 0, %s47
  $region4: #{generator_forward.56} parent=0 // loop_header_branch
    %10 = sbr.rel (%p8) target = $region8
  $region5: #{generator_forward.56} parent=0 // loop_body
    %s12 = ssub.s32 %s7, 1
    %s13 = ssub.s32 %s7, 2
    %s14 = sadd.s32 %s7, 1
    %s15 = ssub.s32 %s7, %s14
    %p16 = scmp.eq.s32.totalorder %s15, 0
    %s18 = sadd.s32 %s17, 1
    %s19 = scalar_select %p16, %s17, %s18
    %p22 = pneg %p16
    %p23 = scmp.eq.s32.totalorder %s7, 1
    %p24 = por %p22, %p23
    %p25 = scmp.ne.s32.totalorder %s17, %s20
    %p26 = scmp.eq.s32.totalorder %s7, 0
    %p27 = por %p25, %p26
    %p28 = scmp.ne.s32.totalorder %s17, %s20
    %p29 = scmp.eq.s32.totalorder %s12, 1
    %p30 = por %p28, %p29
    %p31 = scmp.ne.s32.totalorder %s20, %s21
    %p32 = scmp.eq.s32.totalorder %s12, 0
    %p33 = por %p31, %p32
    %p34 = scmp.ne.s32.totalorder %s20, %s21
    %p35 = scmp.eq.s32.totalorder %s13, 1
    %p36 = por %p34, %p35
    %p38 = scmp.ne.s32.totalorder %s21, %s37
    %p39 = scmp.eq.s32.totalorder %s13, 0
    %p40 = por %p38, %p39
    %s41 = ssub.s32 %s7, %s14
    %p42 = scmp.eq.s32.totalorder %s41, 0
    %s44 = sadd.s32 %s43, 1
    %s45 = scalar_select %p42, %s43, %s44
    %p48 = pneg %p42
    %p49 = scmp.eq.s32.totalorder %s7, 1
    %p50 = por %p48, %p49
    %p51 = scmp.ne.s32.totalorder %s43, %s46
    %p52 = scmp.eq.s32.totalorder %s7, 0
    %p53 = por %p51, %p52
    %p54 = scmp.ne.s32.totalorder %s43, %s46
    %p55 = scmp.eq.s32.totalorder %s12, 1
    %p56 = por %p54, %p55
    %p57 = scmp.ne.s32.totalorder %s46, %s47
    %p58 = scmp.eq.s32.totalorder %s12, 0
    %p59 = por %p57, %p58
    %p60 = scmp.ne.s32.totalorder %s46, %s47
    %p61 = scmp.eq.s32.totalorder %s13, 1
    %p62 = por %p60, %p61
    %p64 = scmp.ne.s32.totalorder %s47, %s63
    %p65 = scmp.eq.s32.totalorder %s13, 0
    %p66 = por %p64, %p65
    %p67 = scmp.le.s32.totalorder 1, %s7
    %p68 = scmp.lt.s32.totalorder %s7, 3
    %p69 = pnand %p67, %p68
    %p70 = pneg %p69
    // Predicated region
    $region9: #{generator_forward.56} parent=5 // pred_check
      _
    $region10: #{generator_forward.56} parent=5 // pred_check_branch
      %72 = sbr.rel (%p69) target = $region12
    $region11: #{generator_forward.56} parent=5 // pred_region
      %s73 = ssub.s32 %s7, 1
    $region12: #{generator_forward.56} parent=5 // pred_fallthru
      _
    %p74 = scmp.lt.s32.totalorder %s7, 2
    // Predicated region
    $region13: #{generator_forward.56} parent=5 // pred_check
      %p75 = pneg %p74
    $region14: #{generator_forward.56} parent=5 // pred_check_branch
      %77 = sbr.rel (%p75) target = $region16
    $region15: #{generator_forward.56} parent=5 // pred_region
      // Predicated region
      $region17: #{generator_forward.56} parent=15 // pred_check
        %p78 = pneg %p27
      $region18: #{generator_forward.56} parent=15 // pred_check_branch
        %80 = sbr.rel (%p78) target = $region20
      $region19: #{generator_forward.56} parent=15 // pred_region
        %p81 = scmp.lt.s32.totalorder %s7, 1
        %s82 = scalar_select %p81, %s7, 1
        %s83 = smul.addr %s82, 8
        %s84 = smul.addr %s83, 8
        %s85 = scalar_lea.vmem %s0, %s84
      $region20: #{generator_forward.56} parent=15 // pred_fallthru
        _
    $region16: #{generator_forward.56} parent=5 // pred_fallthru
      _
    %p86 = scmp.le.s32.totalorder 1, %s7
    %p87 = scmp.lt.s32.totalorder %s7, 3
    %p88 = pnand %p86, %p87
    %p89 = pneg %p88
    // Predicated region
    $region21: #{generator_forward.56} parent=5 // pred_check
      _
    $region22: #{generator_forward.56} parent=5 // pred_check_branch
      %91 = sbr.rel (%p88) target = $region24
    $region23: #{generator_forward.56} parent=5 // pred_region
      %s92 = ssub.s32 %s7, 1
      %p93 = scmp.lt.s32.totalorder %s12, 1
      %s94 = scalar_select %p93, %s12, 1
      %s95 = smul.addr %s94, 8
      %s96 = smul.addr %s95, 8
      %s97 = scalar_lea.vmem %s0, %s96
      %p98 = pneg %p33
      %p99 = pneg %p30
      %p100 = pneg %p59
      %p101 = pneg %p56
      %p102 = scmp.lt.s32.totalorder %s12, 1
      %s103 = scalar_select %p102, %s12, 1
      %s104 = smul.addr %s103, 8
      %s105 = smul.addr %s104, 8
      %s106 = scalar_lea.vmem %s1, %s105
      %p107 = scmp.lt.s32.totalorder %s12, 1
      %s108 = scalar_select %p107, %s12, 1
      %s109 = smul.addr %s108, 8
      %s110 = smul.addr %s109, 8
      %s111 = scalar_lea.vmem %s0, %s110
      %p112 = scmp.lt.s32.totalorder %s12, 1
      %s113 = scalar_select %p112, %s12, 1
      %s114 = smul.addr %s113, 8
      %s115 = smul.addr %s114, 8
      %s116 = scalar_lea.vmem %s1, %s115
      %v117 = vld [vmem:[%s111] sm:$0xff]
      %v118 = vld [vmem:[%s111 + $0x8] sm:$0xff]
      %v119 = vld [vmem:[%s111 + $0x10] sm:$0xff]
      %v120 = vld [vmem:[%s111 + $0x18] sm:$0xff]
      %v121 = vld [vmem:[%s111 + $0x20] sm:$0xff]
      %v122 = vld [vmem:[%s111 + $0x28] sm:$0xff]
      %v123 = vld [vmem:[%s111 + $0x30] sm:$0xff]
      %v124 = vld [vmem:[%s111 + $0x38] sm:$0xff]
      %v125 = vadd.f32 %v117, %v118
      %v126 = vadd.f32 %v125, %v119
      %v127 = vadd.f32 %v126, %v120
      %v128 = vadd.f32 %v127, %v121
      %v129 = vadd.f32 %v128, %v122
      %v130 = vadd.f32 %v129, %v123
      %v131 = vadd.f32 %v130, %v124
      %v132 = vrot.slane %v131, 4
      %v133 = vadd.f32 %v131, %v132
      %v134 = vrot.slane %v133, 2
      %v135 = vadd.f32 %v133, %v134
      %v136 = vrot.slane %v135, 1
      %v137 = vadd.f32 %v135, %v136
      %v138 = vrcp.pop 64.0
      %v139 = vmul.f32 %v137, %v138
      %v140 = vsub.f32 %v117, %v139
      %v141 = vsub.f32 %v118, %v139
      %v142 = vsub.f32 %v119, %v139
      %v143 = vsub.f32 %v120, %v139
      %v144 = vsub.f32 %v121, %v139
      %v145 = vsub.f32 %v122, %v139
      %v146 = vsub.f32 %v123, %v139
      %v147 = vsub.f32 %v124, %v139
      %v148 = vmul.f32 %v140, %v140
      %v149 = vmul.f32 %v141, %v141
      %v150 = vmul.f32 %v142, %v142
      %v151 = vmul.f32 %v143, %v143
      %v152 = vmul.f32 %v144, %v144
      %v153 = vmul.f32 %v145, %v145
      %v154 = vmul.f32 %v146, %v146
      %v155 = vmul.f32 %v147, %v147
      %v156 = vadd.f32 %v148, %v149
      %v157 = vadd.f32 %v156, %v150
      %v158 = vadd.f32 %v157, %v151
      %v159 = vadd.f32 %v158, %v152
      %v160 = vadd.f32 %v159, %v153
      %v161 = vadd.f32 %v160, %v154
      %v162 = vadd.f32 %v161, %v155
      %v163 = vrot.slane %v162, 4
      %v164 = vadd.f32 %v162, %v163
      %v165 = vrot.slane %v164, 2
      %v166 = vadd.f32 %v164, %v165
      %v167 = vrot.slane %v166, 1
      %v168 = vadd.f32 %v166, %v167
      %v169 = vmul.f32 %v168, %v138
      %v170 = vadd.f32 %v169, 1e-05
      %v171 = vrsqrt.pop %v170
      %v172 = vmul.f32 %v140, %v171
      %v173 = vmul.f32 %v141, %v171
      %v174 = vmul.f32 %v142, %v171
      %v175 = vmul.f32 %v143, %v171
      %v176 = vmul.f32 %v144, %v171
      %v177 = vmul.f32 %v145, %v171
      %v178 = vmul.f32 %v146, %v171
      %v179 = vmul.f32 %v147, %v171
      %v180 = vmax.f32 %v172, 0.0
      %v181 = vmax.f32 %v173, 0.0
      %v182 = vmax.f32 %v174, 0.0
      %v183 = vmax.f32 %v175, 0.0
      %v184 = vmax.f32 %v176, 0.0
      %v185 = vmax.f32 %v177, 0.0
      %v186 = vmax.f32 %v178, 0.0
      %v187 = vmax.f32 %v179, 0.0
      %188 = vst [vmem:[%s116] sm:$0xff] %v180
      %189 = vst [vmem:[%s116 + $0x8] sm:$0xff] %v181
      %190 = vst [vmem:[%s116 + $0x10] sm:$0xff] %v182
      %191 = vst [vmem:[%s116 + $0x18] sm:$0xff] %v183
      %192 = vst [vmem:[%s116 + $0x20] sm:$0xff] %v184
      %193 = vst [vmem:[%s116 + $0x28] sm:$0xff] %v185
      %194 = vst [vmem:[%s116 + $0x30] sm:$0xff] %v186
      %195 = vst [vmem:[%s116 + $0x38] sm:$0xff] %v187
      %p196 = scmp.lt.s32.totalorder %s12, 1
      %s197 = scalar_select %p196, %s12, 1
      %s198 = smul.addr %s197, 8
      %s199 = smul.addr %s198, 8
      %s200 = scalar_lea.vmem %s1, %s199
      // Predicated region
      $region25: #{generator_forward.56} parent=23 // pred_check
        %p201 = pneg %p56
      $region26: #{generator_forward.56} parent=23 // pred_check_branch
        %203 = sbr.rel (%p201) target = $region28
      $region27: #{generator_forward.56} parent=23 // pred_region
        _
      $region28: #{generator_forward.56} parent=23 // pred_fallthru
        _
    $region24: #{generator_forward.56} parent=5 // pred_fallthru
      _
    %p204 = scmp.le.s32.totalorder 2, %s7
    // Predicated region
    $region29: #{generator_forward.56} parent=5 // pred_check
      %p205 = pneg %p204
    $region30: #{generator_forward.56} parent=5 // pred_check_branch
      %207 = sbr.rel (%p205) target = $region32
    $region31: #{generator_forward.56} parent=5 // pred_region
      %s208 = ssub.s32 %s7, 2
      // Predicated region
      $region33: #{generator_forward.56} parent=31 // pred_check
        %p209 = pneg %p62
      $region34: #{generator_forward.56} parent=31 // pred_check_branch
        %211 = sbr.rel (%p209) target = $region36
      $region35: #{generator_forward.56} parent=31 // pred_region
        %p212 = scmp.lt.s32.totalorder %s13, 1
        %s213 = scalar_select %p212, %s13, 1
        %s214 = smul.addr %s213, 8
        %s215 = smul.addr %s214, 8
        %s216 = scalar_lea.vmem %s1, %s215
      $region36: #{generator_forward.56} parent=31 // pred_fallthru
        _
    $region32: #{generator_forward.56} parent=5 // pred_fallthru
      _
  $region6: #{generator_forward.56} parent=0 // loop_footer
    %s11 = sadd.s32 1, %s7
  $region7: #{generator_forward.56} parent=0 // loop_footer_branch
    %6 = sbr.rel target = $region3
  $region8: #{generator_forward.56} parent=0 // loop_exit
    _

// kernel: generator_forward.57
$region0: #{generator_forward.57}
  #allocation0 [shape = 'u32[]', space=smem, size = 0x4, offset = 0x4, fixed_abs, tag = 'smem constant byte address 0x4 - core index']
  #allocation1 [shape = 'u32[144,128]{1,0:T(1,128)}', space=vmem, size = 0x12000, scoped, tag = 'internal scratch']
  #allocation2 [shape = 'f32[32,256]{1,0:T(8,128)}', space=vmem, size = 0x8000, scoped, tag = 'scratch operand']
  %s0 = inlined_call_operand.vmem [shape: bf16[32,1152], index: 0, kind: input, shape index: {}]
  %s1 = inlined_call_operand.vmem [shape: bf16[1152,256], index: 1, kind: input, shape index: {}]
  %s2 = inlined_call_operand.vmem [shape: f32[1,256], index: 2, kind: input, shape index: {}]
  %s3 = inlined_call_operand.vmem [shape: f32[32,256], index: 3, kind: output, shape index: {}]
  %s4 = sld [smem:[#allocation0]]
  $region94: #{generator_forward.57} parent=0
    _
  %s6 = ssub.s32 1, %s4
  %s7 = scalar_select 0, %s6, %s4
  $region1: #{generator_forward.57} parent=0
    #allocation3 [shape = 'u8[16384]{0}', space=vmem, size = 0x4000, scoped, tag = 'input window, operand 0']
    loop: start=0, step=1, limit=11
    $region2: #{generator_forward.57} parent=1 // loop_pre_header
      _
    $region3: #{generator_forward.57} parent=1 // loop_header
      %s9 = sphi 0, %s13
      %p10 = scmp.ge.s32.totalorder %s9, 11
      %s16 = sphi 0, %s35
      %s17 = sphi 0, %s31
      %s18 = sphi 0, %s27
      %s19 = sphi 0, %s16
      %s20 = sphi 0, %s17
      %s21 = sphi 0, %s18
      %s22 = sphi 0, %s19
      %s23 = sphi 0, %s20
      %s24 = sphi 0, %s21
      %s40 = sphi 0, %s42
      %s43 = sphi 0, %s40
      %s44 = sphi 0, %s43
      %s60 = sphi 0, %s44
      %s68 = sphi 0, %s70
      %s71 = sphi 0, %s68
      %s72 = sphi 0, %s71
      %s88 = sphi 0, %s72
      %s94 = sphi 0, %s96
      %s97 = sphi 0, %s94
      %s98 = sphi 0, %s97
      %s114 = sphi 0, %s98
      %s122 = sphi 0, %s124
      %s125 = sphi 0, %s122
      %s126 = sphi 0, %s125
      %s142 = sphi 0, %s126
    $region4: #{generator_forward.57} parent=1 // loop_header_branch
      %12 = sbr.rel (%p10) target = $region8
    $region5: #{generator_forward.57} parent=1 // loop_body
      %s14 = ssub.s32 %s9, 1
      %s15 = ssub.s32 %s9, 2
      %s25 = sadd.s32 1, %s18
      %p26 = scmp.ge.s32.totalorder %s25, 9
      %s27 = scalar_select %p26, 0, %s25
      %s28 = sadd.s32 1, %s17
      %s29 = scalar_select %p26, %s28, %s17
      %p30 = scmp.ge.s32.totalorder %s29, 1
      %s31 = scalar_select %p30, 0, %s29
      %s32 = sadd.s32 1, %s16
      %s33 = scalar_select %p30, %s32, %s16
      %p34 = scmp.ge.s32.totalorder %s33, 1
      %s35 = scalar_select %p34, 0, %s33
      %s36 = ssub.s32 %s16, %s35
      %s37 = ssub.s32 %s18, %s27
      %s38 = sor.u32 %s36, %s37
      %p39 = scmp.eq.s32.totalorder %s38, 0
      %s41 = sadd.s32 %s40, 1
      %s42 = scalar_select %p39, %s40, %s41
      %p45 = pneg %p39
      %p46 = scmp.eq.s32.totalorder %s9, 8
      %p47 = por %p45, %p46
      %p48 = scmp.ne.s32.totalorder %s40, %s43
      %p49 = scmp.eq.s32.totalorder %s9, 0
      %p50 = por %p48, %p49
      %p51 = scmp.ne.s32.totalorder %s40, %s43
      %p52 = scmp.eq.s32.totalorder %s14, 8
      %p53 = por %p51, %p52
      %p54 = scmp.ne.s32.totalorder %s43, %s44
      %p55 = scmp.eq.s32.totalorder %s14, 0
      %p56 = por %p54, %p55
      %p57 = scmp.ne.s32.totalorder %s43, %s44
      %p58 = scmp.eq.s32.totalorder %s15, 8
      %p59 = por %p57, %p58
      %p61 = scmp.ne.s32.totalorder %s44, %s60
      %p62 = scmp.eq.s32.totalorder %s15, 0
      %p63 = por %p61, %p62
      %s64 = ssub.s32 %s18, %s27
      %s65 = ssub.s32 %s17, %s31
      %s66 = sor.u32 %s64, %s65
      %p67 = scmp.eq.s32.totalorder %s66, 0
      %s69 = sadd.s32 %s68, 1
      %s70 = scalar_select %p67, %s68, %s69
      %p73 = pneg %p67
      %p74 = scmp.eq.s32.totalorder %s9, 8
      %p75 = por %p73, %p74
      %p76 = scmp.ne.s32.totalorder %s68, %s71
      %p77 = scmp.eq.s32.totalorder %s9, 0
      %p78 = por %p76, %p77
      %p79 = scmp.ne.s32.totalorder %s68, %s71
      %p80 = scmp.eq.s32.totalorder %s14, 8
      %p81 = por %p79, %p80
      %p82 = scmp.ne.s32.totalorder %s71, %s72
      %p83 = scmp.eq.s32.totalorder %s14, 0
      %p84 = por %p82, %p83
      %p85 = scmp.ne.s32.totalorder %s71, %s72
      %p86 = scmp.eq.s32.totalorder %s15, 8
      %p87 = por %p85, %p86
      %p89 = scmp.ne.s32.totalorder %s72, %s88
      %p90 = scmp.eq.s32.totalorder %s15, 0
      %p91 = por %p89, %p90
      %s92 = ssub.s32 %s17, %s31
      %p93 = scmp.eq.s32.totalorder %s92, 0
      %s95 = sadd.s32 %s94, 1
      %s96 = scalar_select %p93, %s94, %s95
      %p99 = pneg %p93
      %p100 = scmp.eq.s32.totalorder %s9, 8
      %p101 = por %p99, %p100
      %p102 = scmp.ne.s32.totalorder %s94, %s97
      %p103 = scmp.eq.s32.totalorder %s9, 0
      %p104 = por %p102, %p103
      %p105 = scmp.ne.s32.totalorder %s94, %s97
      %p106 = scmp.eq.s32.totalorder %s14, 8
      %p107 = por %p105, %p106
      %p108 = scmp.ne.s32.totalorder %s97, %s98
      %p109 = scmp.eq.s32.totalorder %s14, 0
      %p110 = por %p108, %p109
      %p111 = scmp.ne.s32.totalorder %s97, %s98
      %p112 = scmp.eq.s32.totalorder %s15, 8
      %p113 = por %p111, %p112
      %p115 = scmp.ne.s32.totalorder %s98, %s114
      %p116 = scmp.eq.s32.totalorder %s15, 0
      %p117 = por %p115, %p116
      %s118 = ssub.s32 %s16, %s35
      %s119 = ssub.s32 %s17, %s31
      %s120 = sor.u32 %s118, %s119
      %p121 = scmp.eq.s32.totalorder %s120, 0
      %s123 = sadd.s32 %s122, 1
      %s124 = scalar_select %p121, %s122, %s123
      %p127 = pneg %p121
      %p128 = scmp.eq.s32.totalorder %s9, 8
      %p129 = por %p127, %p128
      %p130 = scmp.ne.s32.totalorder %s122, %s125
      %p131 = scmp.eq.s32.totalorder %s9, 0
      %p132 = por %p130, %p131
      %p133 = scmp.ne.s32.totalorder %s122, %s125
      %p134 = scmp.eq.s32.totalorder %s14, 8
      %p135 = por %p133, %p134
      %p136 = scmp.ne.s32.totalorder %s125, %s126
      %p137 = scmp.eq.s32.totalorder %s14, 0
      %p138 = por %p136, %p137
      %p139 = scmp.ne.s32.totalorder %s125, %s126
      %p140 = scmp.eq.s32.totalorder %s15, 8
      %p141 = por %p139, %p140
      %p143 = scmp.ne.s32.totalorder %s126, %s142
      %p144 = scmp.eq.s32.totalorder %s15, 0
      %p145 = por %p143, %p144
      %p146 = scmp.le.s32.totalorder 1, %s9
      %p147 = scmp.lt.s32.totalorder %s9, 10
      %p148 = pnand %p146, %p147
      %p149 = pneg %p148
      // Predicated region
      $region9: #{generator_forward.57} parent=5 // pred_check
        _
      $region10: #{generator_forward.57} parent=5 // pred_check_branch
        %151 = sbr.rel (%p148) target = $region12
      $region11: #{generator_forward.57} parent=5 // pred_region
        %s152 = ssub.s32 %s9, 1
        // Predicated region
        $region13: #{generator_forward.57} parent=11 // pred_check
          %p153 = pneg %p110
        $region14: #{generator_forward.57} parent=11 // pred_check_branch
          %155 = sbr.rel (%p153) target = $region16
        $region15: #{generator_forward.57} parent=11 // pred_region
          %s156 = smul.u32 2, %s20
          %p157 = scmp.lt.s32.totalorder %s156, 1
          %s158 = scalar_select %p157, %s156, 1
          %s159 = scalar_lea.vmem %s2, %s158
          %s160 = smul.u32 2, %s20
        $region16: #{generator_forward.57} parent=11 // pred_fallthru
          _
      $region12: #{generator_forward.57} parent=5 // pred_fallthru
        _
      %p161 = scmp.lt.s32.totalorder %s9, 9
      // Predicated region
      $region17: #{generator_forward.57} parent=5 // pred_check
        %p162 = pneg %p161
      $region18: #{generator_forward.57} parent=5 // pred_check_branch
        %164 = sbr.rel (%p162) target = $region20
      $region19: #{generator_forward.57} parent=5 // pred_region
        // Predicated region
        $region21: #{generator_forward.57} parent=19 // pred_check
          %p165 = pneg %p50
        $region22: #{generator_forward.57} parent=19 // pred_check_branch
          %167 = sbr.rel (%p165) target = $region24
        $region23: #{generator_forward.57} parent=19 // pred_region
          %s168 = sand.u32 %s40, 1
          %s169 = sand.u32 %s40, 1
          %s170 = smul.addr %s169, 16
          %s171 = scalar_lea.vmem [#allocation3], %s170
          %s172 = smul.u32 4, %s16
          %s173 = smul.addr %s172, 9
          %s174 = sadd.s32 %s18, %s173
          %s175 = smul.addr %s174, 4
          %s176 = scalar_lea.vmem %s0, %s175
          // Predicated region
          $region25: #{generator_forward.57} parent=23 // pred_check
            _
          $region26: #{generator_forward.57} parent=23 // pred_check_branch
            %178 = sbr.rel (0) target = $region28
          $region27: #{generator_forward.57} parent=23 // pred_region
            // Predicated region
            $region29: #{generator_forward.57} parent=27 // pred_check
              _
            $region30: #{generator_forward.57} parent=27 // pred_check_branch
              %180 = sbr.rel target = $region32
            $region31: #{generator_forward.57} parent=27 // pred_region
              // Predicated region
              $region44: #{generator_forward.57} parent=31 // pred_check
                _
              $region45: #{generator_forward.57} parent=31 // pred_check_branch
                %201 = sbr.rel (0) target = $region47
              $region46: #{generator_forward.57} parent=31 // pred_region
                loop: start=0, step=1, limit=1
                $region48: #{generator_forward.57} parent=46 // loop_pre_header
                  _
                $region49: #{generator_forward.57} parent=46 // loop_header
                  %s203 = sphi 0, %s207
                  %p204 = scmp.ge.s32.totalorder %s203, 1
                  %s208 = sphi %s176, %s176
                  %s209 = sphi %s171, %s171
                $region50: #{generator_forward.57} parent=46 // loop_header_branch
                  %206 = sbr.rel (%p204) target = $region54
                $region51: #{generator_forward.57} parent=46 // loop_body
                  _
                $region52: #{generator_forward.57} parent=46 // loop_footer
                  %s207 = sadd.s32 1, %s203
                $region53: #{generator_forward.57} parent=46 // loop_footer_branch
                  %202 = sbr.rel target = $region49
                $region54: #{generator_forward.57} parent=46 // loop_exit
                  _
                loop: start=0, step=1, limit=1
                $region55: #{generator_forward.57} parent=46 // loop_pre_header
                  _
                $region56: #{generator_forward.57} parent=46 // loop_header
                  %s212 = sphi 0, %s216
                  %p213 = scmp.ge.s32.totalorder %s212, 1
                  %s217 = sphi %s176, %s176
                  %s218 = sphi %s171, %s171
                $region57: #{generator_forward.57} parent=46 // loop_header_branch
                  %215 = sbr.rel (%p213) target = $region61
                $region58: #{generator_forward.57} parent=46 // loop_body
                  %v219 = vld [vmem:[%s217] sm:$0xf]
                  %220 = vst [vmem:[%s218] sm:$0xf] %v219
                  %v221 = vld [vmem:[%s217 + $0x24] sm:$0xf]
                  %222 = vst [vmem:[%s218 + $0x4] sm:$0xf] %v221
                  %v223 = vld [vmem:[%s217 + $0x48] sm:$0xf]
                  %224 = vst [vmem:[%s218 + $0x8] sm:$0xf] %v223
                  %v225 = vld [vmem:[%s217 + $0x6c] sm:$0xf]
                  %226 = vst [vmem:[%s218 + $0xc] sm:$0xf] %v225
                $region59: #{generator_forward.57} parent=46 // loop_footer
                  %s216 = sadd.s32 1, %s212
                $region60: #{generator_forward.57} parent=46 // loop_footer_branch
                  %211 = sbr.rel target = $region56
                $region61: #{generator_forward.57} parent=46 // loop_exit
                  _
              $region47: #{generator_forward.57} parent=31 // pred_fallthru
                _
            $region32: #{generator_forward.57} parent=27 // pred_fallthru
              _
            // Predicated region
            $region33: #{generator_forward.57} parent=27 // pred_check
              _
            $region34: #{generator_forward.57} parent=27 // pred_check_branch
              %182 = sbr.rel (0) target = $region36
            $region35: #{generator_forward.57} parent=27 // pred_region
              loop: start=0, step=1, limit=1
              $region37: #{generator_forward.57} parent=35 // loop_pre_header
                _
              $region38: #{generator_forward.57} parent=35 // loop_header
                %s185 = sphi 0, %s189
                %p186 = scmp.ge.s32.totalorder %s185, 1
                %s190 = sphi %s176, %s176
                %s191 = sphi %s171, %s171
              $region39: #{generator_forward.57} parent=35 // loop_header_branch
                %188 = sbr.rel (%p186) target = $region43
              $region40: #{generator_forward.57} parent=35 // loop_body
                %v192 = vld [vmem:[%s190] sm:$0xf]
                %193 = vst [vmem:[%s191] sm:$0xf] %v192
                %v194 = vld [vmem:[%s190 + $0x24] sm:$0xf]
                %195 = vst [vmem:[%s191 + $0x4] sm:$0xf] %v194
                %v196 = vld [vmem:[%s190 + $0x48] sm:$0xf]
                %197 = vst [vmem:[%s191 + $0x8] sm:$0xf] %v196
                %v198 = vld [vmem:[%s190 + $0x6c] sm:$0xf]
                %199 = vst [vmem:[%s191 + $0xc] sm:$0xf] %v198
              $region41: #{generator_forward.57} parent=35 // loop_footer
                %s189 = sadd.s32 1, %s185
              $region42: #{generator_forward.57} parent=35 // loop_footer_branch
                %184 = sbr.rel target = $region38
              $region43: #{generator_forward.57} parent=35 // loop_exit
                _
            $region36: #{generator_forward.57} parent=27 // pred_fallthru
              _
          $region28: #{generator_forward.57} parent=23 // pred_fallthru
            _
          %227 = vnop
        $region24: #{generator_forward.57} parent=19 // pred_fallthru
          _
        // Predicated region
        $region62: #{generator_forward.57} parent=19 // pred_check
          %p228 = pneg %p78
        $region63: #{generator_forward.57} parent=19 // pred_check_branch
          %230 = sbr.rel (%p228) target = $region65
        $region64: #{generator_forward.57} parent=19 // pred_region
          %s231 = smul.u32 16, %s18
          %s232 = smul.u32 2, %s17
          %p233 = scmp.lt.s32.totalorder %s231, 143
          %s234 = scalar_select %p233, %s231, 143
          %p235 = scmp.lt.s32.totalorder %s232, 1
          %s236 = scalar_select %p235, %s232, 1
          %s237 = smul.addr %s234, 2
          %s238 = sadd.s32 %s236, %s237
          %s239 = smul.addr %s238, 4
          %s240 = scalar_lea.vmem %s1, %s239
          %s241 = smul.u32 16, %s18
          %s242 = smul.u32 2, %s17
        $region65: #{generator_forward.57} parent=19 // pred_fallthru
          _
      $region20: #{generator_forward.57} parent=5 // pred_fallthru
        _
      %p243 = scmp.le.s32.totalorder 1, %s9
      %p244 = scmp.lt.s32.totalorder %s9, 10
      %p245 = pnand %p243, %p244
      %p246 = pneg %p245
      // Predicated region
      $region66: #{generator_forward.57} parent=5 // pred_check
        _
      $region67: #{generator_forward.57} parent=5 // pred_check_branch
        %248 = sbr.rel (%p245) target = $region69
      $region68: #{generator_forward.57} parent=5 // pred_region
        %s249 = ssub.s32 %s9, 1
        %s250 = sand.u32 %s43, 1
        %s251 = sand.u32 %s43, 1
        %s252 = smul.addr %s251, 16
        %s253 = scalar_lea.vmem [#allocation3], %s252
        // Predicated region
        $region70: #{generator_forward.57} parent=68 // pred_check
          %p254 = pneg %p56
        $region71: #{generator_forward.57} parent=68 // pred_check_branch
          %256 = sbr.rel (%p254) target = $region73
        $region72: #{generator_forward.57} parent=68 // pred_region
          _
        $region73: #{generator_forward.57} parent=68 // pred_fallthru
          _
        %s257 = sand.u32 %s43, 1
        %s258 = sand.u32 %s43, 1
        %s259 = smul.addr %s258, 16
        %s260 = scalar_lea.vmem [#allocation3], %s259
        %p261 = pneg %p56
        %p262 = pneg %p53
        %s263 = smul.u32 16, %s21
        %s264 = smul.u32 2, %s20
        %p265 = scmp.lt.s32.totalorder %s263, 143
        %s266 = scalar_select %p265, %s263, 143
        %p267 = scmp.lt.s32.totalorder %s264, 1
        %s268 = scalar_select %p267, %s264, 1
        %s269 = smul.addr %s266, 2
        %s270 = sadd.s32 %s268, %s269
        %s271 = smul.addr %s270, 4
        %s272 = scalar_lea.vmem %s1, %s271
        %p273 = pneg %p84
        %p274 = pneg %p81
        %s275 = smul.u32 2, %s20
        %p276 = scmp.lt.s32.totalorder %s275, 1
        %s277 = scalar_select %p276, %s275, 1
        %s278 = scalar_lea.vmem %s2, %s277
        %p279 = pneg %p110
        %p280 = pneg %p107
        %p281 = pneg %p138
        %p282 = pneg %p135
        %s283 = smul.u32 4, %s19
        %s284 = smul.u32 2, %s20
        %p285 = scmp.lt.s32.totalorder %s283, 3
        %s286 = scalar_select %p285, %s283, 3
        %p287 = scmp.lt.s32.totalorder %s284, 1
        %s288 = scalar_select %p287, %s284, 1
        %s289 = smul.addr %s286, 2
        %s290 = sadd.s32 %s288, %s289
        %s291 = smul.addr %s290, 8
        %s292 = scalar_lea.vmem %s3, %s291
        %s293 = smul.u32 4, %s19
        %s294 = smul.u32 16, %s21
        %s295 = smul.u32 2, %s20
        %p296 = scmp.lt.s32.totalorder %s294, 143
        %s297 = scalar_select %p296, %s294, 143
        %p298 = scmp.lt.s32.totalorder %s295, 1
        %s299 = scalar_select %p298, %s295, 1
        %s300 = smul.addr %s297, 2
        %s301 = sadd.s32 %s299, %s300
        %s302 = smul.addr %s301, 4
        %s303 = scalar_lea.vmem %s1, %s302
        %s304 = smul.u32 16, %s21
        %s305 = smul.u32 2, %s20
        %s306 = smul.u32 2, %s20
        %p307 = scmp.lt.s32.totalorder %s306, 1
        %s308 = scalar_select %p307, %s306, 1
        %s309 = scalar_lea.vmem %s2, %s308
        %s310 = smul.u32 2, %s20
        %s311 = smul.u32 4, %s19
        %s312 = smul.u32 2, %s20
        %p313 = scmp.lt.s32.totalorder %s311, 3
        %s314 = scalar_select %p313, %s311, 3
        %p315 = scmp.lt.s32.totalorder %s312, 1
        %s316 = scalar_select %p315, %s312, 1
        %s317 = smul.addr %s314, 2
        %s318 = sadd.s32 %s316, %s317
        %s319 = smul.addr %s318, 8
        %s320 = scalar_lea.vmem %s3, %s319
        %s321 = smul.u32 4, %s19
        %s322 = smul.u32 2, %s20
        %p324 = scmp.eq.s32.totalorder %s21, 0
        // Predicated region
        $region74: #{generator_forward.57} parent=68 // pred_check
          %p325 = pneg %p324
        $region75: #{generator_forward.57} parent=68 // pred_check_branch
          %327 = sbr.rel (%p325) target = $region77
        $region76: #{generator_forward.57} parent=68 // pred_region
          %328 = vst [vmem:[#allocation2] sm:$0xff] 0.0
          %329 = vst [vmem:[#allocation2 + $0x8] sm:$0xff] 0.0
          %330 = vst [vmem:[#allocation2 + $0x10] sm:$0xff] 0.0
          %331 = vst [vmem:[#allocation2 + $0x18] sm:$0xff] 0.0
          %332 = vst [vmem:[#allocation2 + $0x20] sm:$0xff] 0.0
          %333 = vst [vmem:[#allocation2 + $0x28] sm:$0xff] 0.0
          %334 = vst [vmem:[#allocation2 + $0x30] sm:$0xff] 0.0
          %335 = vst [vmem:[#allocation2 + $0x38] sm:$0xff] 0.0
        $region77: #{generator_forward.57} parent=68 // pred_fallthru
          _
        %v336 = vld [vmem:[#allocation2] sm:$0xff]
        %v337 = vld [vmem:[#allocation2 + $0x8] sm:$0xff]
        %v338 = vld [vmem:[#allocation2 + $0x10] sm:$0xff]
        %v339 = vld [vmem:[#allocation2 + $0x18] sm:$0xff]
        %v340 = vld [vmem:[#allocation2 + $0x20] sm:$0xff]
        %v341 = vld [vmem:[#allocation2 + $0x28] sm:$0xff]
        %v342 = vld [vmem:[#allocation2 + $0x30] sm:$0xff]
        %v343 = vld [vmem:[#allocation2 + $0x38] sm:$0xff]
        %v344 = vld [vmem:[%s253] sm:$0xf]
        %v345 = vld [vmem:[%s253 + $0x4] sm:$0xf]
        %v346 = vld [vmem:[%s253 + $0x8] sm:$0xf]
        %v347 = vld [vmem:[%s253 + $0xc] sm:$0xf]
        %v348 = vld [vmem:[%s303] sm:$0xff]
        %v349 = vld [vmem:[%s303 + $0x8] sm:$0xff]
        %v350 = vld [vmem:[%s303 + $0x10] sm:$0xff]
        %v351 = vld [vmem:[%s303 + $0x18] sm:$0xff]
        %v352 = vld [vmem:[%s303 + $0x20] sm:$0xff]
        %v353 = vld [vmem:[%s303 + $0x28] sm:$0xff]
        %v354 = vld [vmem:[%s303 + $0x30] sm:$0xff]
        %v355 = vld [vmem:[%s303 + $0x38] sm:$0xff]
        %v356 = vld [vmem:[%s303 + $0x40] sm:$0xff]
        %v357 = vld [vmem:[%s303 + $0x48] sm:$0xff]
        %v358 = vld [vmem:[%s303 + $0x50] sm:$0xff]
        %v359 = vld [vmem:[%s303 + $0x58] sm:$0xff]
        %v360 = vld [vmem:[%s303 + $0x60] sm:$0xff]
        %v361 = vld [vmem:[%s303 + $0x68] sm:$0xff]
        %v362 = vld [vmem:[%s303 + $0x70] sm:$0xff]
        %v363 = vld [vmem:[%s303 + $0x78] sm:$0xff]
        %v368 = vunpack.c.l.b16 %v344
        %v369 = vunpack.c.l.b16 %v345
        %v370 = vunpack.c.l.b16 %v346
        %v371 = vunpack.c.l.b16 %v347
        %v372 = vpack.c.b16 %v369, %v368
        %v373 = vpack.c.b16 %v371, %v370
        %v392 = vunpack.c.l.b16 %v348
        %v393 = vunpack.c.h.b16 %v348
        %v394 = vunpack.c.l.b16 %v349
        %v395 = vunpack.c.h.b16 %v349
        %v396 = vunpack.c.l.b16 %v350
        %v397 = vunpack.c.h.b16 %v350
        %v398 = vunpack.c.l.b16 %v351
        %v399 = vunpack.c.h.b16 %v351
        %v400 = vunpack.c.l.b16 %v352
        %v401 = vunpack.c.h.b16 %v352
        %v402 = vunpack.c.l.b16 %v353
        %v403 = vunpack.c.h.b16 %v353
        %v404 = vunpack.c.l.b16 %v354
        %v405 = vunpack.c.h.b16 %v354
        %v406 = vunpack.c.l.b16 %v355
        %v407 = vunpack.c.h.b16 %v355
        %v408 = vunpack.c.l.b16 %v356
        %v409 = vunpack.c.h.b16 %v356
        %v410 = vunpack.c.l.b16 %v357
        %v411 = vunpack.c.h.b16 %v357
        %v412 = vunpack.c.l.b16 %v358
        %v413 = vunpack.c.h.b16 %v358
        %v414 = vunpack.c.l.b16 %v359
        %v415 = vunpack.c.h.b16 %v359
        %v416 = vunpack.c.l.b16 %v360
        %v417 = vunpack.c.h.b16 %v360
        %v418 = vunpack.c.l.b16 %v361
        %v419 = vunpack.c.h.b16 %v361
        %v420 = vunpack.c.l.b16 %v362
        %v421 = vunpack.c.h.b16 %v362
        %v422 = vunpack.c.l.b16 %v363
        %v423 = vunpack.c.h.b16 %v363
        %v424 = vpack.c.b16 %v394, %v392
        %v425 = vpack.c.b16 %v395, %v393
        %v426 = vpack.c.b16 %v398, %v396
        %v427 = vpack.c.b16 %v399, %v397
        %v428 = vpack.c.b16 %v402, %v400
        %v429 = vpack.c.b16 %v403, %v401
        %v430 = vpack.c.b16 %v406, %v404
        %v431 = vpack.c.b16 %v407, %v405
        %v432 = vpack.c.b16 %v410, %v408
        %v433 = vpack.c.b16 %v411, %v409
        %v434 = vpack.c.b16 %v414, %v412
        %v435 = vpack.c.b16 %v415, %v413
        %v436 = vpack.c.b16 %v418, %v416
        %v437 = vpack.c.b16 %v419, %v417
        %v438 = vpack.c.b16 %v422, %v420
        %v439 = vpack.c.b16 %v423, %v421
        %456 = vmatprep.subr.bf16.mxu0 %v425
        %457 = vmatpush1.bf16.msra.mxu0 %v424
        %458 = vmatprep.subr.bf16.mxu0 %v427
        %459 = vmatpush1.bf16.msra.mxu0 %v426
        %460 = vmatprep.subr.bf16.mxu0 %v429
        %461 = vmatpush1.bf16.msra.mxu0 %v428
        %462 = vmatprep.subr.bf16.mxu0 %v431
        %463 = vmatpush1.bf16.msra.mxu0 %v430
        %464 = vmatprep.subr.bf16.mxu0 %v433
        %465 = vmatpush1.bf16.msra.mxu0 %v432
        %466 = vmatprep.subr.bf16.mxu0 %v435
        %467 = vmatpush1.bf16.msra.mxu0 %v434
        %468 = vmatprep.subr.bf16.mxu0 %v437
        %469 = vmatpush1.bf16.msra.mxu0 %v436
        %470 = vmatprep.subr.bf16.mxu0 %v439
        %471 = vmatpush1.bf16.msra.mxu0 %v438
        %472 = vmatprep.subr.bf16.mxu0 0
        %473 = vmatpush1.bf16.msra.mxu0 0
        %474 = vmatprep.subr.bf16.mxu0 0
        %475 = vmatpush1.bf16.msra.mxu0 0
        %476 = vmatprep.subr.bf16.mxu0 0
        %477 = vmatpush1.bf16.msra.mxu0 0
        %478 = vmatprep.subr.bf16.mxu0 0
        %479 = vmatpush1.bf16.msra.mxu0 0
        %480 = vmatprep.subr.bf16.mxu0 0
        %481 = vmatpush1.bf16.msra.mxu0 0
        %482 = vmatprep.subr.bf16.mxu0 0
        %483 = vmatpush1.bf16.msra.mxu0 0
        %484 = vmatprep.subr.bf16.mxu0 0
        %485 = vmatpush1.bf16.msra.mxu0 0
        %486 = vmatprep.subr.bf16.mxu0 0
        %487 = vmatpush1.bf16.msra.mxu0 0
        %488 = vmatprep.mubr.bf16.mxu0 0
        %489 = vmatmul.mubr.bf16.gmra.mrb[0].mxu0 %v372
        %v490 = vpop.f32.mrb[0].mxu0
        %v491 = vadd.f32 0.0, %v490
        %v492 = vpop.f32.mrb[0].mxu0
        %v493 = vadd.f32 0.0, %v492
        %v494 = vpop.f32.mrb[0].mxu0
        %v495 = vadd.f32 0.0, %v494
        %v496 = vpop.f32.mrb[0].mxu0
        %v497 = vadd.f32 0.0, %v496
        %498 = vmatprep.mubr.bf16.mxu0 0
        %499 = vmatmul.mubr.bf16.gmra.mrb[0].mxu0 %v373
        %v500 = vpop.f32.mrb[0].mxu0
        %v501 = vadd.f32 0.0, %v500
        %v502 = vpop.f32.mrb[0].mxu0
        %v503 = vadd.f32 0.0, %v502
        %v504 = vpop.f32.mrb[0].mxu0
        %v505 = vadd.f32 0.0, %v504
        %v506 = vpop.f32.mrb[0].mxu0
        %v507 = vadd.f32 0.0, %v506
        %508 = vdwg.mxu0
        %v509 = vadd.f32 %v336, %v491
        %v510 = vadd.f32 %v337, %v493
        %v511 = vadd.f32 %v338, %v495
        %v512 = vadd.f32 %v339, %v497
        %v513 = vadd.f32 %v340, %v501
        %v514 = vadd.f32 %v341, %v503
        %v515 = vadd.f32 %v342, %v505
        %v516 = vadd.f32 %v343, %v507
        %517 = vst [vmem:[#allocation2] sm:$0xff] %v509
        %518 = vst [vmem:[#allocation2 + $0x8] sm:$0xff] %v510
        %519 = vst [vmem:[#allocation2 + $0x10] sm:$0xff] %v511
        %520 = vst [vmem:[#allocation2 + $0x18] sm:$0xff] %v512
        %521 = vst [vmem:[#allocation2 + $0x20] sm:$0xff] %v513
        %522 = vst [vmem:[#allocation2 + $0x28] sm:$0xff] %v514
        %523 = vst [vmem:[#allocation2 + $0x30] sm:$0xff] %v515
        %524 = vst [vmem:[#allocation2 + $0x38] sm:$0xff] %v516
        %p525 = scmp.eq.s32.totalorder %s21, 8
        // Predicated region
        $region78: #{generator_forward.57} parent=68 // pred_check
          %p526 = pneg %p525
        $region79: #{generator_forward.57} parent=68 // pred_check_branch
          %528 = sbr.rel (%p526) target = $region81
        $region80: #{generator_forward.57} parent=68 // pred_region
          %v529 = vld [vmem:[#allocation2] sm:$0xff]
          %v530 = vld [vmem:[#allocation2 + $0x8] sm:$0xff]
          %v531 = vld [vmem:[#allocation2 + $0x10] sm:$0xff]
          %v532 = vld [vmem:[#allocation2 + $0x18] sm:$0xff]
          %v533 = vld [vmem:[#allocation2 + $0x20] sm:$0xff]
          %v534 = vld [vmem:[#allocation2 + $0x28] sm:$0xff]
          %v535 = vld [vmem:[#allocation2 + $0x30] sm:$0xff]
          %v536 = vld [vmem:[#allocation2 + $0x38] sm:$0xff]
          %v537 = vld [vmem:[%s309] sm:$0x3]
          %v539 = vlaneseq
          %v540 = vshrl.u32 %v539, 7
          %v541 = vsub.s32 0, %v540
          %v542 = vrot.slane %v537, %v541
          %v543 = vlaneseq
          %v544 = vshrl.u32 %v543, 7
          %v545 = vsub.s32 1, %v544
          %v546 = vrot.slane %v537, %v545
          %v549 = vadd.f32 %v529, %v542
          %v550 = vadd.f32 %v530, %v546
          %v551 = vadd.f32 %v531, %v542
          %v552 = vadd.f32 %v532, %v546
          %v553 = vadd.f32 %v533, %v542
          %v554 = vadd.f32 %v534, %v546
          %v555 = vadd.f32 %v535, %v542
          %v556 = vadd.f32 %v536, %v546
          %557 = vst [vmem:[%s320] sm:$0xff] %v549
          %558 = vst [vmem:[%s320 + $0x8] sm:$0xff] %v550
          %559 = vst [vmem:[%s320 + $0x10] sm:$0xff] %v551
          %560 = vst [vmem:[%s320 + $0x18] sm:$0xff] %v552
          %561 = vst [vmem:[%s320 + $0x20] sm:$0xff] %v553
          %562 = vst [vmem:[%s320 + $0x28] sm:$0xff] %v554
          %563 = vst [vmem:[%s320 + $0x30] sm:$0xff] %v555
          %564 = vst [vmem:[%s320 + $0x38] sm:$0xff] %v556
        $region81: #{generator_forward.57} parent=68 // pred_fallthru
          _
        %s565 = smul.u32 4, %s19
        %s566 = smul.u32 2, %s20
        %p567 = scmp.lt.s32.totalorder %s565, 3
        %s568 = scalar_select %p567, %s565, 3
        %p569 = scmp.lt.s32.totalorder %s566, 1
        %s570 = scalar_select %p569, %s566, 1
        %s571 = smul.addr %s568, 2
        %s572 = sadd.s32 %s570, %s571
        %s573 = smul.addr %s572, 8
        %s574 = scalar_lea.vmem %s3, %s573
        // Predicated region
        $region82: #{generator_forward.57} parent=68 // pred_check
          %p575 = pneg %p135
        $region83: #{generator_forward.57} parent=68 // pred_check_branch
          %577 = sbr.rel (%p575) target = $region85
        $region84: #{generator_forward.57} parent=68 // pred_region
          %s578 = smul.u32 4, %s19
          %s579 = smul.u32 2, %s20
        $region85: #{generator_forward.57} parent=68 // pred_fallthru
          _
        // Predicated region
        $region86: #{generator_forward.57} parent=68 // pred_check
          %p580 = pneg %p135
        $region87: #{generator_forward.57} parent=68 // pred_check_branch
          %582 = sbr.rel (%p580) target = $region89
        $region88: #{generator_forward.57} parent=68 // pred_region
          %s583 = smul.u32 4, %s19
          %s584 = smul.u32 2, %s20
          %p585 = scmp.lt.s32.totalorder %s583, 3
          %s586 = scalar_select %p585, %s583, 3
          %p587 = scmp.lt.s32.totalorder %s584, 1
          %s588 = scalar_select %p587, %s584, 1
          %s589 = smul.addr %s586, 2
          %s590 = sadd.s32 %s588, %s589
          %s591 = smul.addr %s590, 8
          %s592 = scalar_lea.vmem %s3, %s591
        $region89: #{generator_forward.57} parent=68 // pred_fallthru
          _
      $region69: #{generator_forward.57} parent=5 // pred_fallthru
        _
      %p593 = scmp.le.s32.totalorder 2, %s9
      // Predicated region
      $region90: #{generator_forward.57} parent=5 // pred_check
        %p594 = pneg %p593
      $region91: #{generator_forward.57} parent=5 // pred_check_branch
        %596 = sbr.rel (%p594) target = $region93
      $region92: #{generator_forward.57} parent=5 // pred_region
        %s597 = ssub.s32 %s9, 2
      $region93: #{generator_forward.57} parent=5 // pred_fallthru
        _
    $region6: #{generator_forward.57} parent=1 // loop_footer
      %s13 = sadd.s32 1, %s9
    $region7: #{generator_forward.57} parent=1 // loop_footer_branch
      %8 = sbr.rel target = $region3
    $region8: #{generator_forward.57} parent=1 // loop_exit
      _

// kernel: generator_forward.58
$region0: #{generator_forward.58}
  #allocation0 [shape = 'u32[]', space=smem, size = 0x4, offset = 0x4, fixed_abs, tag = 'smem constant byte address 0x4 - core index']
  #allocation1 [shape = 'u32[144,128]{1,0:T(1,128)}', space=vmem, size = 0x12000, scoped, tag = 'internal scratch']
  %s0 = inlined_call_operand.vmem [shape: f32[2,16,256], index: 0, kind: input, shape index: {}]
  %s1 = inlined_call_operand.vmem [shape: f32[2,16,256], index: 1, kind: output, shape index: {}]
  %s2 = sld [smem:[#allocation0]]
  $region37: #{generator_forward.58} parent=0
    _
  %s4 = ssub.s32 1, %s2
  %s5 = scalar_select 0, %s4, %s2
  loop: start=0, step=1, limit=4
  $region2: #{generator_forward.58} parent=0 // loop_pre_header
    _
  $region3: #{generator_forward.58} parent=0 // loop_header
    %s7 = sphi 0, %s11
    %p8 = scmp.ge.s32.totalorder %s7, 4
    %s17 = sphi 0, %s19
    %s20 = sphi 0, %s17
    %s21 = sphi 0, %s20
    %s37 = sphi 0, %s21
    %s43 = sphi 0, %s45
    %s46 = sphi 0, %s43
    %s47 = sphi 0, %s46
    %s63 = sphi 0, %s47
  $region4: #{generator_forward.58} parent=0 // loop_header_branch
    %10 = sbr.rel (%p8) target = $region8
  $region5: #{generator_forward.58} parent=0 // loop_body
    %s12 = ssub.s32 %s7, 1
    %s13 = ssub.s32 %s7, 2
    %s14 = sadd.s32 %s7, 1
    %s15 = ssub.s32 %s7, %s14
    %p16 = scmp.eq.s32.totalorder %s15, 0
    %s18 = sadd.s32 %s17, 1
    %s19 = scalar_select %p16, %s17, %s18
    %p22 = pneg %p16
    %p23 = scmp.eq.s32.totalorder %s7, 1
    %p24 = por %p22, %p23
    %p25 = scmp.ne.s32.totalorder %s17, %s20
    %p26 = scmp.eq.s32.totalorder %s7, 0
    %p27 = por %p25, %p26
    %p28 = scmp.ne.s32.totalorder %s17, %s20
    %p29 = scmp.eq.s32.totalorder %s12, 1
    %p30 = por %p28, %p29
    %p31 = scmp.ne.s32.totalorder %s20, %s21
    %p32 = scmp.eq.s32.totalorder %s12, 0
    %p33 = por %p31, %p32
    %p34 = scmp.ne.s32.totalorder %s20, %s21
    %p35 = scmp.eq.s32.totalorder %s13, 1
    %p36 = por %p34, %p35
    %p38 = scmp.ne.s32.totalorder %s21, %s37
    %p39 = scmp.eq.s32.totalorder %s13, 0
    %p40 = por %p38, %p39
    %s41 = ssub.s32 %s7, %s14
    %p42 = scmp.eq.s32.totalorder %s41, 0
    %s44 = sadd.s32 %s43, 1
    %s45 = scalar_select %p42, %s43, %s44
    %p48 = pneg %p42
    %p49 = scmp.eq.s32.totalorder %s7, 1
    %p50 = por %p48, %p49
    %p51 = scmp.ne.s32.totalorder %s43, %s46
    %p52 = scmp.eq.s32.totalorder %s7, 0
    %p53 = por %p51, %p52
    %p54 = scmp.ne.s32.totalorder %s43, %s46
    %p55 = scmp.eq.s32.totalorder %s12, 1
    %p56 = por %p54, %p55
    %p57 = scmp.ne.s32.totalorder %s46, %s47
    %p58 = scmp.eq.s32.totalorder %s12, 0
    %p59 = por %p57, %p58
    %p60 = scmp.ne.s32.totalorder %s46, %s47
    %p61 = scmp.eq.s32.totalorder %s13, 1
    %p62 = por %p60, %p61
    %p64 = scmp.ne.s32.totalorder %s47, %s63
    %p65 = scmp.eq.s32.totalorder %s13, 0
    %p66 = por %p64, %p65
    %p67 = scmp.le.s32.totalorder 1, %s7
    %p68 = scmp.lt.s32.totalorder %s7, 3
    %p69 = pnand %p67, %p68
    %p70 = pneg %p69
    // Predicated region
    $region9: #{generator_forward.58} parent=5 // pred_check
      _
    $region10: #{generator_forward.58} parent=5 // pred_check_branch
      %72 = sbr.rel (%p69) target = $region12
    $region11: #{generator_forward.58} parent=5 // pred_region
      %s73 = ssub.s32 %s7, 1
    $region12: #{generator_forward.58} parent=5 // pred_fallthru
      _
    %p74 = scmp.lt.s32.totalorder %s7, 2
    // Predicated region
    $region13: #{generator_forward.58} parent=5 // pred_check
      %p75 = pneg %p74
    $region14: #{generator_forward.58} parent=5 // pred_check_branch
      %77 = sbr.rel (%p75) target = $region16
    $region15: #{generator_forward.58} parent=5 // pred_region
      // Predicated region
      $region17: #{generator_forward.58} parent=15 // pred_check
        %p78 = pneg %p27
      $region18: #{generator_forward.58} parent=15 // pred_check_branch
        %80 = sbr.rel (%p78) target = $region20
      $region19: #{generator_forward.58} parent=15 // pred_region
        %p81 = scmp.lt.s32.totalorder %s7, 1
        %s82 = scalar_select %p81, %s7, 1
        %s83 = smul.addr %s82, 4
        %s84 = smul.addr %s83, 8
        %s85 = scalar_lea.vmem %s0, %s84
      $region20: #{generator_forward.58} parent=15 // pred_fallthru
        _
    $region16: #{generator_forward.58} parent=5 // pred_fallthru
      _
    %p86 = scmp.le.s32.totalorder 1, %s7
    %p87 = scmp.lt.s32.totalorder %s7, 3
    %p88 = pnand %p86, %p87
    %p89 = pneg %p88
    // Predicated region
    $region21: #{generator_forward.58} parent=5 // pred_check
      _
    $region22: #{generator_forward.58} parent=5 // pred_check_branch
      %91 = sbr.rel (%p88) target = $region24
    $region23: #{generator_forward.58} parent=5 // pred_region
      %s92 = ssub.s32 %s7, 1
      %p93 = scmp.lt.s32.totalorder %s12, 1
      %s94 = scalar_select %p93, %s12, 1
      %s95 = smul.addr %s94, 4
      %s96 = smul.addr %s95, 8
      %s97 = scalar_lea.vmem %s0, %s96
      %p98 = pneg %p33
      %p99 = pneg %p30
      %p100 = pneg %p59
      %p101 = pneg %p56
      %p102 = scmp.lt.s32.totalorder %s12, 1
      %s103 = scalar_select %p102, %s12, 1
      %s104 = smul.addr %s103, 4
      %s105 = smul.addr %s104, 8
      %s106 = scalar_lea.vmem %s1, %s105
      %p107 = scmp.lt.s32.totalorder %s12, 1
      %s108 = scalar_select %p107, %s12, 1
      %s109 = smul.addr %s108, 4
      %s110 = smul.addr %s109, 8
      %s111 = scalar_lea.vmem %s0, %s110
      %p112 = scmp.lt.s32.totalorder %s12, 1
      %s113 = scalar_select %p112, %s12, 1
      %s114 = smul.addr %s113, 4
      %s115 = smul.addr %s114, 8
      %s116 = scalar_lea.vmem %s1, %s115
      %v117 = vld [vmem:[%s111] sm:$0xff]
      %v118 = vld [vmem:[%s111 + $0x8] sm:$0xff]
      %v119 = vld [vmem:[%s111 + $0x10] sm:$0xff]
      %v120 = vld [vmem:[%s111 + $0x18] sm:$0xff]
      %v121 = vadd.f32 %v117, %v119
      %v122 = vrot.slane %v121, 4
      %v123 = vadd.f32 %v121, %v122
      %v124 = vrot.slane %v123, 2
      %v125 = vadd.f32 %v123, %v124
      %v126 = vrot.slane %v125, 1
      %v127 = vadd.f32 %v125, %v126
      %v128 = vadd.f32 %v118, %v120
      %v129 = vrot.slane %v128, 4
      %v130 = vadd.f32 %v128, %v129
      %v131 = vrot.slane %v130, 2
      %v132 = vadd.f32 %v130, %v131
      %v133 = vrot.slane %v132, 1
      %v134 = vadd.f32 %v132, %v133
      %v135 = vrcp.pop 16.0
      %v136 = vmul.f32 %v127, %v135
      %v137 = vmul.f32 %v134, %v135
      %v138 = vsub.f32 %v117, %v136
      %v139 = vsub.f32 %v118, %v137
      %v140 = vsub.f32 %v119, %v136
      %v141 = vsub.f32 %v120, %v137
      %v142 = vmul.f32 %v138, %v138
      %v143 = vmul.f32 %v139, %v139
      %v144 = vmul.f32 %v140, %v140
      %v145 = vmul.f32 %v141, %v141
      %v146 = vadd.f32 %v142, %v144
      %v147 = vrot.slane %v146, 4
      %v148 = vadd.f32 %v146, %v147
      %v149 = vrot.slane %v148, 2
      %v150 = vadd.f32 %v148, %v149
      %v151 = vrot.slane %v150, 1
      %v152 = vadd.f32 %v150, %v151
      %v153 = vadd.f32 %v143, %v145
      %v154 = vrot.slane %v153, 4
      %v155 = vadd.f32 %v153, %v154
      %v156 = vrot.slane %v155, 2
      %v157 = vadd.f32 %v155, %v156
      %v158 = vrot.slane %v157, 1
      %v159 = vadd.f32 %v157, %v158
      %v160 = vmul.f32 %v152, %v135
      %v161 = vmul.f32 %v159, %v135
      %v162 = vadd.f32 %v160, 1e-05
      %v163 = vadd.f32 %v161, 1e-05
      %v164 = vrsqrt.pop %v162
      %v165 = vrsqrt.pop %v163
      %v166 = vmul.f32 %v138, %v164
      %v167 = vmul.f32 %v139, %v165
      %v168 = vmul.f32 %v140, %v164
      %v169 = vmul.f32 %v141, %v165
      %v170 = vmax.f32 %v166, 0.0
      %v171 = vmax.f32 %v167, 0.0
      %v172 = vmax.f32 %v168, 0.0
      %v173 = vmax.f32 %v169, 0.0
      %174 = vst [vmem:[%s116] sm:$0xff] %v170
      %175 = vst [vmem:[%s116 + $0x8] sm:$0xff] %v171
      %176 = vst [vmem:[%s116 + $0x10] sm:$0xff] %v172
      %177 = vst [vmem:[%s116 + $0x18] sm:$0xff] %v173
      %p178 = scmp.lt.s32.totalorder %s12, 1
      %s179 = scalar_select %p178, %s12, 1
      %s180 = smul.addr %s179, 4
      %s181 = smul.addr %s180, 8
      %s182 = scalar_lea.vmem %s1, %s181
      // Predicated region
      $region25: #{generator_forward.58} parent=23 // pred_check
        %p183 = pneg %p56
      $region26: #{generator_forward.58} parent=23 // pred_check_branch
        %185 = sbr.rel (%p183) target = $region28
      $region27: #{generator_forward.58} parent=23 // pred_region
        _
      $region28: #{generator_forward.58} parent=23 // pred_fallthru
        _
    $region24: #{generator_forward.58} parent=5 // pred_fallthru
      _
    %p186 = scmp.le.s32.totalorder 2, %s7
    // Predicated region
    $region29: #{generator_forward.58} parent=5 // pred_check
      %p187 = pneg %p186
    $region30: #{generator_forward.58} parent=5 // pred_check_branch
      %189 = sbr.rel (%p187) target = $region32
    $region31: #{generator_forward.58} parent=5 // pred_region
      %s190 = ssub.s32 %s7, 2
      // Predicated region
      $region33: #{generator_forward.58} parent=31 // pred_check
        %p191 = pneg %p62
      $region34: #{generator_forward.58} parent=31 // pred_check_branch
        %193 = sbr.rel (%p191) target = $region36
      $region35: #{generator_forward.58} parent=31 // pred_region
        %p194 = scmp.lt.s32.totalorder %s13, 1
        %s195 = scalar_select %p194, %s13, 1
        %s196 = smul.addr %s195, 4
        %s197 = smul.addr %s196, 8
        %s198 = scalar_lea.vmem %s1, %s197
      $region36: #{generator_forward.58} parent=31 // pred_fallthru
        _
    $region32: #{generator_forward.58} parent=5 // pred_fallthru
      _
  $region6: #{generator_forward.58} parent=0 // loop_footer
    %s11 = sadd.s32 1, %s7
  $region7: #{generator_forward.58} parent=0 // loop_footer_branch
    %6 = sbr.rel target = $region3
  $region8: #{generator_forward.58} parent=0 // loop_exit
    _

// kernel: generator_forward.62
$region0: #{generator_forward.62}
  #allocation0 [shape = 'u32[]', space=smem, size = 0x4, offset = 0x4, fixed_abs, tag = 'smem constant byte address 0x4 - core index']
  #allocation1 [shape = 'u32[144,128]{1,0:T(1,128)}', space=vmem, size = 0x12000, scoped, tag = 'internal scratch']
  %s0 = inlined_call_operand.vmem [shape: f32[2,16,256], index: 0, kind: input, shape index: {}]
  %s1 = inlined_call_operand.vmem [shape: f32[2,16,256], index: 1, kind: input, shape index: {}]
  %s2 = inlined_call_operand.vmem [shape: f32[2,16,256], index: 2, kind: output, shape index: {}]
  %s3 = sld [smem:[#allocation0]]
  $region41: #{generator_forward.62} parent=0
    _
  %s5 = ssub.s32 1, %s3
  %s6 = scalar_select 0, %s5, %s3
  loop: start=0, step=1, limit=4
  $region2: #{generator_forward.62} parent=0 // loop_pre_header
    _
  $region3: #{generator_forward.62} parent=0 // loop_header
    %s8 = sphi 0, %s12
    %p9 = scmp.ge.s32.totalorder %s8, 4
    %s18 = sphi 0, %s20
    %s21 = sphi 0, %s18
    %s22 = sphi 0, %s21
    %s38 = sphi 0, %s22
    %s44 = sphi 0, %s46
    %s47 = sphi 0, %s44
    %s48 = sphi 0, %s47
    %s64 = sphi 0, %s48
    %s70 = sphi 0, %s72
    %s73 = sphi 0, %s70
    %s74 = sphi 0, %s73
    %s90 = sphi 0, %s74
  $region4: #{generator_forward.62} parent=0 // loop_header_branch
    %11 = sbr.rel (%p9) target = $region8
  $region5: #{generator_forward.62} parent=0 // loop_body
    %s13 = ssub.s32 %s8, 1
    %s14 = ssub.s32 %s8, 2
    %s15 = sadd.s32 %s8, 1
    %s16 = ssub.s32 %s8, %s15
    %p17 = scmp.eq.s32.totalorder %s16, 0
    %s19 = sadd.s32 %s18, 1
    %s20 = scalar_select %p17, %s18, %s19
    %p23 = pneg %p17
    %p24 = scmp.eq.s32.totalorder %s8, 1
    %p25 = por %p23, %p24
    %p26 = scmp.ne.s32.totalorder %s18, %s21
    %p27 = scmp.eq.s32.totalorder %s8, 0
    %p28 = por %p26, %p27
    %p29 = scmp.ne.s32.totalorder %s18, %s21
    %p30 = scmp.eq.s32.totalorder %s13, 1
    %p31 = por %p29, %p30
    %p32 = scmp.ne.s32.totalorder %s21, %s22
    %p33 = scmp.eq.s32.totalorder %s13, 0
    %p34 = por %p32, %p33
    %p35 = scmp.ne.s32.totalorder %s21, %s22
    %p36 = scmp.eq.s32.totalorder %s14, 1
    %p37 = por %p35, %p36
    %p39 = scmp.ne.s32.totalorder %s22, %s38
    %p40 = scmp.eq.s32.totalorder %s14, 0
    %p41 = por %p39, %p40
    %s42 = ssub.s32 %s8, %s15
    %p43 = scmp.eq.s32.totalorder %s42, 0
    %s45 = sadd.s32 %s44, 1
    %s46 = scalar_select %p43, %s44, %s45
    %p49 = pneg %p43
    %p50 = scmp.eq.s32.totalorder %s8, 1
    %p51 = por %p49, %p50
    %p52 = scmp.ne.s32.totalorder %s44, %s47
    %p53 = scmp.eq.s32.totalorder %s8, 0
    %p54 = por %p52, %p53
    %p55 = scmp.ne.s32.totalorder %s44, %s47
    %p56 = scmp.eq.s32.totalorder %s13, 1
    %p57 = por %p55, %p56
    %p58 = scmp.ne.s32.totalorder %s47, %s48
    %p59 = scmp.eq.s32.totalorder %s13, 0
    %p60 = por %p58, %p59
    %p61 = scmp.ne.s32.totalorder %s47, %s48
    %p62 = scmp.eq.s32.totalorder %s14, 1
    %p63 = por %p61, %p62
    %p65 = scmp.ne.s32.totalorder %s48, %s64
    %p66 = scmp.eq.s32.totalorder %s14, 0
    %p67 = por %p65, %p66
    %s68 = ssub.s32 %s8, %s15
    %p69 = scmp.eq.s32.totalorder %s68, 0
    %s71 = sadd.s32 %s70, 1
    %s72 = scalar_select %p69, %s70, %s71
    %p75 = pneg %p69
    %p76 = scmp.eq.s32.totalorder %s8, 1
    %p77 = por %p75, %p76
    %p78 = scmp.ne.s32.totalorder %s70, %s73
    %p79 = scmp.eq.s32.totalorder %s8, 0
    %p80 = por %p78, %p79
    %p81 = scmp.ne.s32.totalorder %s70, %s73
    %p82 = scmp.eq.s32.totalorder %s13, 1
    %p83 = por %p81, %p82
    %p84 = scmp.ne.s32.totalorder %s73, %s74
    %p85 = scmp.eq.s32.totalorder %s13, 0
    %p86 = por %p84, %p85
    %p87 = scmp.ne.s32.totalorder %s73, %s74
    %p88 = scmp.eq.s32.totalorder %s14, 1
    %p89 = por %p87, %p88
    %p91 = scmp.ne.s32.totalorder %s74, %s90
    %p92 = scmp.eq.s32.totalorder %s14, 0
    %p93 = por %p91, %p92
    %p94 = scmp.le.s32.totalorder 1, %s8
    %p95 = scmp.lt.s32.totalorder %s8, 3
    %p96 = pnand %p94, %p95
    %p97 = pneg %p96
    // Predicated region
    $region9: #{generator_forward.62} parent=5 // pred_check
      _
    $region10: #{generator_forward.62} parent=5 // pred_check_branch
      %99 = sbr.rel (%p96) target = $region12
    $region11: #{generator_forward.62} parent=5 // pred_region
      %s100 = ssub.s32 %s8, 1
    $region12: #{generator_forward.62} parent=5 // pred_fallthru
      _
    %p101 = scmp.lt.s32.totalorder %s8, 2
    // Predicated region
    $region13: #{generator_forward.62} parent=5 // pred_check
      %p102 = pneg %p101
    $region14: #{generator_forward.62} parent=5 // pred_check_branch
      %104 = sbr.rel (%p102) target = $region16
    $region15: #{generator_forward.62} parent=5 // pred_region
      // Predicated region
      $region17: #{generator_forward.62} parent=15 // pred_check
        %p105 = pneg %p28
      $region18: #{generator_forward.62} parent=15 // pred_check_branch
        %107 = sbr.rel (%p105) target = $region20
      $region19: #{generator_forward.62} parent=15 // pred_region
        %p108 = scmp.lt.s32.totalorder %s8, 1
        %s109 = scalar_select %p108, %s8, 1
        %s110 = smul.addr %s109, 4
        %s111 = smul.addr %s110, 8
        %s112 = scalar_lea.vmem %s0, %s111
      $region20: #{generator_forward.62} parent=15 // pred_fallthru
        _
      // Predicated region
      $region21: #{generator_forward.62} parent=15 // pred_check
        %p113 = pneg %p54
      $region22: #{generator_forward.62} parent=15 // pred_check_branch
        %115 = sbr.rel (%p113) target = $region24
      $region23: #{generator_forward.62} parent=15 // pred_region
        %p116 = scmp.lt.s32.totalorder %s8, 1
        %s117 = scalar_select %p116, %s8, 1
        %s118 = smul.addr %s117, 4
        %s119 = smul.addr %s118, 8
        %s120 = scalar_lea.vmem %s1, %s119
      $region24: #{generator_forward.62} parent=15 // pred_fallthru
        _
    $region16: #{generator_forward.62} parent=5 // pred_fallthru
      _
    %p121 = scmp.le.s32.totalorder 1, %s8
    %p122 = scmp.lt.s32.totalorder %s8, 3
    %p123 = pnand %p121, %p122
    %p124 = pneg %p123
    // Predicated region
    $region25: #{generator_forward.62} parent=5 // pred_check
      _
    $region26: #{generator_forward.62} parent=5 // pred_check_branch
      %126 = sbr.rel (%p123) target = $region28
    $region27: #{generator_forward.62} parent=5 // pred_region
      %s127 = ssub.s32 %s8, 1
      %p128 = scmp.lt.s32.totalorder %s13, 1
      %s129 = scalar_select %p128, %s13, 1
      %s130 = smul.addr %s129, 4
      %s131 = smul.addr %s130, 8
      %s132 = scalar_lea.vmem %s0, %s131
      %p133 = pneg %p34
      %p134 = pneg %p31
      %p135 = scmp.lt.s32.totalorder %s13, 1
      %s136 = scalar_select %p135, %s13, 1
      %s137 = smul.addr %s136, 4
      %s138 = smul.addr %s137, 8
      %s139 = scalar_lea.vmem %s1, %s138
      %p140 = pneg %p60
      %p141 = pneg %p57
      %p142 = pneg %p86
      %p143 = pneg %p83
      %p144 = scmp.lt.s32.totalorder %s13, 1
      %s145 = scalar_select %p144, %s13, 1
      %s146 = smul.addr %s145, 4
      %s147 = smul.addr %s146, 8
      %s148 = scalar_lea.vmem %s2, %s147
      %p149 = scmp.lt.s32.totalorder %s13, 1
      %s150 = scalar_select %p149, %s13, 1
      %s151 = smul.addr %s150, 4
      %s152 = smul.addr %s151, 8
      %s153 = scalar_lea.vmem %s0, %s152
      %p154 = scmp.lt.s32.totalorder %s13, 1
      %s155 = scalar_select %p154, %s13, 1
      %s156 = smul.addr %s155, 4
      %s157 = smul.addr %s156, 8
      %s158 = scalar_lea.vmem %s1, %s157
      %p159 = scmp.lt.s32.totalorder %s13, 1
      %s160 = scalar_select %p159, %s13, 1
      %s161 = smul.addr %s160, 4
      %s162 = smul.addr %s161, 8
      %s163 = scalar_lea.vmem %s2, %s162
      %v164 = vld [vmem:[%s153] sm:$0xff]
      %v165 = vld [vmem:[%s153 + $0x8] sm:$0xff]
      %v166 = vld [vmem:[%s153 + $0x10] sm:$0xff]
      %v167 = vld [vmem:[%s153 + $0x18] sm:$0xff]
      %v168 = vadd.f32 %v164, %v166
      %v169 = vrot.slane %v168, 4
      %v170 = vadd.f32 %v168, %v169
      %v171 = vrot.slane %v170, 2
      %v172 = vadd.f32 %v170, %v171
      %v173 = vrot.slane %v172, 1
      %v174 = vadd.f32 %v172, %v173
      %v175 = vadd.f32 %v165, %v167
      %v176 = vrot.slane %v175, 4
      %v177 = vadd.f32 %v175, %v176
      %v178 = vrot.slane %v177, 2
      %v179 = vadd.f32 %v177, %v178
      %v180 = vrot.slane %v179, 1
      %v181 = vadd.f32 %v179, %v180
      %v182 = vrcp.pop 16.0
      %v183 = vmul.f32 %v174, %v182
      %v184 = vmul.f32 %v181, %v182
      %v185 = vsub.f32 %v164, %v183
      %v186 = vsub.f32 %v165, %v184
      %v187 = vsub.f32 %v166, %v183
      %v188 = vsub.f32 %v167, %v184
      %v189 = vmul.f32 %v185, %v185
      %v190 = vmul.f32 %v186, %v186
      %v191 = vmul.f32 %v187, %v187
      %v192 = vmul.f32 %v188, %v188
      %v193 = vadd.f32 %v189, %v191
      %v194 = vrot.slane %v193, 4
      %v195 = vadd.f32 %v193, %v194
      %v196 = vrot.slane %v195, 2
      %v197 = vadd.f32 %v195, %v196
      %v198 = vrot.slane %v197, 1
      %v199 = vadd.f32 %v197, %v198
      %v200 = vadd.f32 %v190, %v192
      %v201 = vrot.slane %v200, 4
      %v202 = vadd.f32 %v200, %v201
      %v203 = vrot.slane %v202, 2
      %v204 = vadd.f32 %v202, %v203
      %v205 = vrot.slane %v204, 1
      %v206 = vadd.f32 %v204, %v205
      %v207 = vmul.f32 %v199, %v182
      %v208 = vmul.f32 %v206, %v182
      %v209 = vadd.f32 %v207, 1e-05
      %v210 = vadd.f32 %v208, 1e-05
      %v211 = vrsqrt.pop %v209
      %v212 = vrsqrt.pop %v210
      %v213 = vmul.f32 %v185, %v211
      %v214 = vmul.f32 %v186, %v212
      %v215 = vmul.f32 %v187, %v211
      %v216 = vmul.f32 %v188, %v212
      %v217 = vld [vmem:[%s158] sm:$0xff]
      %v218 = vld [vmem:[%s158 + $0x8] sm:$0xff]
      %v219 = vld [vmem:[%s158 + $0x10] sm:$0xff]
      %v220 = vld [vmem:[%s158 + $0x18] sm:$0xff]
      %v221 = vadd.f32 %v217, %v213
      %v222 = vadd.f32 %v218, %v214
      %v223 = vadd.f32 %v219, %v215
      %v224 = vadd.f32 %v220, %v216
      %225 = vst [vmem:[%s163] sm:$0xff] %v221
      %226 = vst [vmem:[%s163 + $0x8] sm:$0xff] %v222
      %227 = vst [vmem:[%s163 + $0x10] sm:$0xff] %v223
      %228 = vst [vmem:[%s163 + $0x18] sm:$0xff] %v224
      %p229 = scmp.lt.s32.totalorder %s13, 1
      %s230 = scalar_select %p229, %s13, 1
      %s231 = smul.addr %s230, 4
      %s232 = smul.addr %s231, 8
      %s233 = scalar_lea.vmem %s2, %s232
      // Predicated region
      $region29: #{generator_forward.62} parent=27 // pred_check
        %p234 = pneg %p83
      $region30: #{generator_forward.62} parent=27 // pred_check_branch
        %236 = sbr.rel (%p234) target = $region32
      $region31: #{generator_forward.62} parent=27 // pred_region
        _
      $region32: #{generator_forward.62} parent=27 // pred_fallthru
        _
    $region28: #{generator_forward.62} parent=5 // pred_fallthru
      _
    %p237 = scmp.le.s32.totalorder 2, %s8
    // Predicated region
    $region33: #{generator_forward.62} parent=5 // pred_check
      %p238 = pneg %p237
    $region34: #{generator_forward.62} parent=5 // pred_check_branch
      %240 = sbr.rel (%p238) target = $region36
    $region35: #{generator_forward.62} parent=5 // pred_region
      %s241 = ssub.s32 %s8, 2
      // Predicated region
      $region37: #{generator_forward.62} parent=35 // pred_check
        %p242 = pneg %p89
      $region38: #{generator_forward.62} parent=35 // pred_check_branch
        %244 = sbr.rel (%p242) target = $region40
      $region39: #{generator_forward.62} parent=35 // pred_region
        %p245 = scmp.lt.s32.totalorder %s14, 1
        %s246 = scalar_select %p245, %s14, 1
        %s247 = smul.addr %s246, 4
        %s248 = smul.addr %s247, 8
        %s249 = scalar_lea.vmem %s2, %s248
      $region40: #{generator_forward.62} parent=35 // pred_fallthru
        _
    $region36: #{generator_forward.62} parent=5 // pred_fallthru
      _
  $region6: #{generator_forward.62} parent=0 // loop_footer
    %s12 = sadd.s32 1, %s8
  $region7: #{generator_forward.62} parent=0 // loop_footer_branch
    %7 = sbr.rel target = $region3
  $region8: #{generator_forward.62} parent=0 // loop_exit
    _

// kernel: generator_forward.59
$region0: #{generator_forward.59}
  #allocation0 [shape = 'u32[]', space=smem, size = 0x4, offset = 0x4, fixed_abs, tag = 'smem constant byte address 0x4 - core index']
  #allocation1 [shape = 'u32[144,128]{1,0:T(1,128)}', space=vmem, size = 0x12000, scoped, tag = 'internal scratch']
  #allocation2 [shape = 'f32[32,256]{1,0:T(8,128)}', space=vmem, size = 0x8000, scoped, tag = 'scratch operand']
  %s0 = inlined_call_operand.vmem [shape: bf16[32,2304], index: 0, kind: input, shape index: {}]
  %s1 = inlined_call_operand.vmem [shape: bf16[2304,256], index: 1, kind: input, shape index: {}]
  %s2 = inlined_call_operand.vmem [shape: f32[1,256], index: 2, kind: input, shape index: {}]
  %s3 = inlined_call_operand.vmem [shape: f32[32,256], index: 3, kind: output, shape index: {}]
  %s4 = sld [smem:[#allocation0]]
  $region91: #{generator_forward.59} parent=0
    _
  %s6 = ssub.s32 1, %s4
  %s7 = scalar_select 0, %s6, %s4
  $region1: #{generator_forward.59} parent=0
    #allocation3 [shape = 'u8[32768]{0}', space=vmem, size = 0x8000, scoped, tag = 'input window, operand 0']
    loop: start=0, step=1, limit=11
    $region2: #{generator_forward.59} parent=1 // loop_pre_header
      _
    $region3: #{generator_forward.59} parent=1 // loop_header
      %s9 = sphi 0, %s13
      %p10 = scmp.ge.s32.totalorder %s9, 11
      %s16 = sphi 0, %s35
      %s17 = sphi 0, %s31
      %s18 = sphi 0, %s27
      %s19 = sphi 0, %s16
      %s20 = sphi 0, %s17
      %s21 = sphi 0, %s18
      %s22 = sphi 0, %s19
      %s23 = sphi 0, %s20
      %s24 = sphi 0, %s21
      %s40 = sphi 0, %s42
      %s43 = sphi 0, %s40
      %s44 = sphi 0, %s43
      %s60 = sphi 0, %s44
      %s68 = sphi 0, %s70
      %s71 = sphi 0, %s68
      %s72 = sphi 0, %s71
      %s88 = sphi 0, %s72
      %s94 = sphi 0, %s96
      %s97 = sphi 0, %s94
      %s98 = sphi 0, %s97
      %s114 = sphi 0, %s98
      %s122 = sphi 0, %s124
      %s125 = sphi 0, %s122
      %s126 = sphi 0, %s125
      %s142 = sphi 0, %s126
    $region4: #{generator_forward.59} parent=1 // loop_header_branch
      %12 = sbr.rel (%p10) target = $region8
    $region5: #{generator_forward.59} parent=1 // loop_body
      %s14 = ssub.s32 %s9, 1
      %s15 = ssub.s32 %s9, 2
      %s25 = sadd.s32 1, %s18
      %p26 = scmp.ge.s32.totalorder %s25, 9
      %s27 = scalar_select %p26, 0, %s25
      %s28 = sadd.s32 1, %s17
      %s29 = scalar_select %p26, %s28, %s17
      %p30 = scmp.ge.s32.totalorder %s29, 1
      %s31 = scalar_select %p30, 0, %s29
      %s32 = sadd.s32 1, %s16
      %s33 = scalar_select %p30, %s32, %s16
      %p34 = scmp.ge.s32.totalorder %s33, 1
      %s35 = scalar_select %p34, 0, %s33
      %s36 = ssub.s32 %s16, %s35
      %s37 = ssub.s32 %s18, %s27
      %s38 = sor.u32 %s36, %s37
      %p39 = scmp.eq.s32.totalorder %s38, 0
      %s41 = sadd.s32 %s40, 1
      %s42 = scalar_select %p39, %s40, %s41
      %p45 = pneg %p39
      %p46 = scmp.eq.s32.totalorder %s9, 8
      %p47 = por %p45, %p46
      %p48 = scmp.ne.s32.totalorder %s40, %s43
      %p49 = scmp.eq.s32.totalorder %s9, 0
      %p50 = por %p48, %p49
      %p51 = scmp.ne.s32.totalorder %s40, %s43
      %p52 = scmp.eq.s32.totalorder %s14, 8
      %p53 = por %p51, %p52
      %p54 = scmp.ne.s32.totalorder %s43, %s44
      %p55 = scmp.eq.s32.totalorder %s14, 0
      %p56 = por %p54, %p55
      %p57 = scmp.ne.s32.totalorder %s43, %s44
      %p58 = scmp.eq.s32.totalorder %s15, 8
      %p59 = por %p57, %p58
      %p61 = scmp.ne.s32.totalorder %s44, %s60
      %p62 = scmp.eq.s32.totalorder %s15, 0
      %p63 = por %p61, %p62
      %s64 = ssub.s32 %s18, %s27
      %s65 = ssub.s32 %s17, %s31
      %s66 = sor.u32 %s64, %s65
      %p67 = scmp.eq.s32.totalorder %s66, 0
      %s69 = sadd.s32 %s68, 1
      %s70 = scalar_select %p67, %s68, %s69
      %p73 = pneg %p67
      %p74 = scmp.eq.s32.totalorder %s9, 8
      %p75 = por %p73, %p74
      %p76 = scmp.ne.s32.totalorder %s68, %s71
      %p77 = scmp.eq.s32.totalorder %s9, 0
      %p78 = por %p76, %p77
      %p79 = scmp.ne.s32.totalorder %s68, %s71
      %p80 = scmp.eq.s32.totalorder %s14, 8
      %p81 = por %p79, %p80
      %p82 = scmp.ne.s32.totalorder %s71, %s72
      %p83 = scmp.eq.s32.totalorder %s14, 0
      %p84 = por %p82, %p83
      %p85 = scmp.ne.s32.totalorder %s71, %s72
      %p86 = scmp.eq.s32.totalorder %s15, 8
      %p87 = por %p85, %p86
      %p89 = scmp.ne.s32.totalorder %s72, %s88
      %p90 = scmp.eq.s32.totalorder %s15, 0
      %p91 = por %p89, %p90
      %s92 = ssub.s32 %s17, %s31
      %p93 = scmp.eq.s32.totalorder %s92, 0
      %s95 = sadd.s32 %s94, 1
      %s96 = scalar_select %p93, %s94, %s95
      %p99 = pneg %p93
      %p100 = scmp.eq.s32.totalorder %s9, 8
      %p101 = por %p99, %p100
      %p102 = scmp.ne.s32.totalorder %s94, %s97
      %p103 = scmp.eq.s32.totalorder %s9, 0
      %p104 = por %p102, %p103
      %p105 = scmp.ne.s32.totalorder %s94, %s97
      %p106 = scmp.eq.s32.totalorder %s14, 8
      %p107 = por %p105, %p106
      %p108 = scmp.ne.s32.totalorder %s97, %s98
      %p109 = scmp.eq.s32.totalorder %s14, 0
      %p110 = por %p108, %p109
      %p111 = scmp.ne.s32.totalorder %s97, %s98
      %p112 = scmp.eq.s32.totalorder %s15, 8
      %p113 = por %p111, %p112
      %p115 = scmp.ne.s32.totalorder %s98, %s114
      %p116 = scmp.eq.s32.totalorder %s15, 0
      %p117 = por %p115, %p116
      %s118 = ssub.s32 %s16, %s35
      %s119 = ssub.s32 %s17, %s31
      %s120 = sor.u32 %s118, %s119
      %p121 = scmp.eq.s32.totalorder %s120, 0
      %s123 = sadd.s32 %s122, 1
      %s124 = scalar_select %p121, %s122, %s123
      %p127 = pneg %p121
      %p128 = scmp.eq.s32.totalorder %s9, 8
      %p129 = por %p127, %p128
      %p130 = scmp.ne.s32.totalorder %s122, %s125
      %p131 = scmp.eq.s32.totalorder %s9, 0
      %p132 = por %p130, %p131
      %p133 = scmp.ne.s32.totalorder %s122, %s125
      %p134 = scmp.eq.s32.totalorder %s14, 8
      %p135 = por %p133, %p134
      %p136 = scmp.ne.s32.totalorder %s125, %s126
      %p137 = scmp.eq.s32.totalorder %s14, 0
      %p138 = por %p136, %p137
      %p139 = scmp.ne.s32.totalorder %s125, %s126
      %p140 = scmp.eq.s32.totalorder %s15, 8
      %p141 = por %p139, %p140
      %p143 = scmp.ne.s32.totalorder %s126, %s142
      %p144 = scmp.eq.s32.totalorder %s15, 0
      %p145 = por %p143, %p144
      %p146 = scmp.le.s32.totalorder 1, %s9
      %p147 = scmp.lt.s32.totalorder %s9, 10
      %p148 = pnand %p146, %p147
      %p149 = pneg %p148
      // Predicated region
      $region9: #{generator_forward.59} parent=5 // pred_check
        _
      $region10: #{generator_forward.59} parent=5 // pred_check_branch
        %151 = sbr.rel (%p148) target = $region12
      $region11: #{generator_forward.59} parent=5 // pred_region
        %s152 = ssub.s32 %s9, 1
        // Predicated region
        $region13: #{generator_forward.59} parent=11 // pred_check
          %p153 = pneg %p110
        $region14: #{generator_forward.59} parent=11 // pred_check_branch
          %155 = sbr.rel (%p153) target = $region16
        $region15: #{generator_forward.59} parent=11 // pred_region
          %s156 = smul.u32 2, %s20
          %p157 = scmp.lt.s32.totalorder %s156, 1
          %s158 = scalar_select %p157, %s156, 1
          %s159 = scalar_lea.vmem %s2, %s158
          %s160 = smul.u32 2, %s20
        $region16: #{generator_forward.59} parent=11 // pred_fallthru
          _
      $region12: #{generator_forward.59} parent=5 // pred_fallthru
        _
      %p161 = scmp.lt.s32.totalorder %s9, 9
      // Predicated region
      $region17: #{generator_forward.59} parent=5 // pred_check
        %p162 = pneg %p161
      $region18: #{generator_forward.59} parent=5 // pred_check_branch
        %164 = sbr.rel (%p162) target = $region20
      $region19: #{generator_forward.59} parent=5 // pred_region
        // Predicated region
        $region21: #{generator_forward.59} parent=19 // pred_check
          %p165 = pneg %p50
        $region22: #{generator_forward.59} parent=19 // pred_check_branch
          %167 = sbr.rel (%p165) target = $region24
        $region23: #{generator_forward.59} parent=19 // pred_region
          %s168 = sand.u32 %s40, 1
          %s169 = sand.u32 %s40, 1
          %s170 = smul.addr %s169, 32
          %s171 = scalar_lea.vmem [#allocation3], %s170
          %s172 = smul.u32 4, %s16
          %s173 = smul.u32 2, %s18
          %s174 = smul.addr %s172, 18
          %s175 = sadd.s32 %s173, %s174
          %s176 = smul.addr %s175, 4
          %s177 = scalar_lea.vmem %s0, %s176
          // Predicated region
          $region25: #{generator_forward.59} parent=23 // pred_check
            _
          $region26: #{generator_forward.59} parent=23 // pred_check_branch
            %179 = sbr.rel (0) target = $region28
          $region27: #{generator_forward.59} parent=23 // pred_region
            // Predicated region
            $region29: #{generator_forward.59} parent=27 // pred_check
              _
            $region30: #{generator_forward.59} parent=27 // pred_check_branch
              %181 = sbr.rel (0) target = $region32
            $region31: #{generator_forward.59} parent=27 // pred_region
              // Predicated region
              $region44: #{generator_forward.59} parent=31 // pred_check
                _
              $region45: #{generator_forward.59} parent=31 // pred_check_branch
                %202 = sbr.rel (0) target = $region47
              $region46: #{generator_forward.59} parent=31 // pred_region
                loop: start=0, step=1, limit=1
                $region48: #{generator_forward.59} parent=46 // loop_pre_header
                  _
                $region49: #{generator_forward.59} parent=46 // loop_header
                  %s204 = sphi 0, %s208
                  %p205 = scmp.ge.s32.totalorder %s204, 1
                  %s209 = sphi %s177, %s177
                  %s210 = sphi %s171, %s171
                $region50: #{generator_forward.59} parent=46 // loop_header_branch
                  %207 = sbr.rel (%p205) target = $region54
                $region51: #{generator_forward.59} parent=46 // loop_body
                  %v211 = vld [vmem:[%s209] sm:$0xff]
                  %212 = vst [vmem:[%s210] sm:$0xff] %v211
                  %v213 = vld [vmem:[%s209 + $0x48] sm:$0xff]
                  %214 = vst [vmem:[%s210 + $0x8] sm:$0xff] %v213
                  %v215 = vld [vmem:[%s209 + $0x90] sm:$0xff]
                  %216 = vst [vmem:[%s210 + $0x10] sm:$0xff] %v215
                  %v217 = vld [vmem:[%s209 + $0xd8] sm:$0xff]
                  %218 = vst [vmem:[%s210 + $0x18] sm:$0xff] %v217
                $region52: #{generator_forward.59} parent=46 // loop_footer
                  %s208 = sadd.s32 1, %s204
                $region53: #{generator_forward.59} parent=46 // loop_footer_branch
                  %203 = sbr.rel target = $region49
                $region54: #{generator_forward.59} parent=46 // loop_exit
                  _
              $region47: #{generator_forward.59} parent=31 // pred_fallthru
                _
              // Predicated region
              $region55: #{generator_forward.59} parent=31 // pred_check
                _
              $region56: #{generator_forward.59} parent=31 // pred_check_branch
                %220 = sbr.rel target = $region58
              $region57: #{generator_forward.59} parent=31 // pred_region
                _
              $region58: #{generator_forward.59} parent=31 // pred_fallthru
                _
            $region32: #{generator_forward.59} parent=27 // pred_fallthru
              _
            // Predicated region
            $region33: #{generator_forward.59} parent=27 // pred_check
              _
            $region34: #{generator_forward.59} parent=27 // pred_check_branch
              %183 = sbr.rel target = $region36
            $region35: #{generator_forward.59} parent=27 // pred_region
              loop: start=0, step=1, limit=1
              $region37: #{generator_forward.59} parent=35 // loop_pre_header
                _
              $region38: #{generator_forward.59} parent=35 // loop_header
                %s186 = sphi 0, %s190
                %p187 = scmp.ge.s32.totalorder %s186, 1
                %s191 = sphi %s177, %s177
                %s192 = sphi %s171, %s171
              $region39: #{generator_forward.59} parent=35 // loop_header_branch
                %189 = sbr.rel (%p187) target = $region43
              $region40: #{generator_forward.59} parent=35 // loop_body
                %v193 = vld [vmem:[%s191] sm:$0xff]
                %194 = vst [vmem:[%s192] sm:$0xff] %v193
                %v195 = vld [vmem:[%s191 + $0x48] sm:$0xff]
                %196 = vst [vmem:[%s192 + $0x8] sm:$0xff] %v195
                %v197 = vld [vmem:[%s191 + $0x90] sm:$0xff]
                %198 = vst [vmem:[%s192 + $0x10] sm:$0xff] %v197
                %v199 = vld [vmem:[%s191 + $0xd8] sm:$0xff]
                %200 = vst [vmem:[%s192 + $0x18] sm:$0xff] %v199
              $region41: #{generator_forward.59} parent=35 // loop_footer
                %s190 = sadd.s32 1, %s186
              $region42: #{generator_forward.59} parent=35 // loop_footer_branch
                %185 = sbr.rel target = $region38
              $region43: #{generator_forward.59} parent=35 // loop_exit
                _
            $region36: #{generator_forward.59} parent=27 // pred_fallthru
              _
          $region28: #{generator_forward.59} parent=23 // pred_fallthru
            _
          %221 = vnop
        $region24: #{generator_forward.59} parent=19 // pred_fallthru
          _
        // Predicated region
        $region59: #{generator_forward.59} parent=19 // pred_check
          %p222 = pneg %p78
        $region60: #{generator_forward.59} parent=19 // pred_check_branch
          %224 = sbr.rel (%p222) target = $region62
        $region61: #{generator_forward.59} parent=19 // pred_region
          %s225 = smul.u32 32, %s18
          %s226 = smul.u32 2, %s17
          %p227 = scmp.lt.s32.totalorder %s225, 287
          %s228 = scalar_select %p227, %s225, 287
          %p229 = scmp.lt.s32.totalorder %s226, 1
          %s230 = scalar_select %p229, %s226, 1
          %s231 = smul.addr %s228, 2
          %s232 = sadd.s32 %s230, %s231
          %s233 = smul.addr %s232, 4
          %s234 = scalar_lea.vmem %s1, %s233
          %s235 = smul.u32 32, %s18
          %s236 = smul.u32 2, %s17
        $region62: #{generator_forward.59} parent=19 // pred_fallthru
          _
      $region20: #{generator_forward.59} parent=5 // pred_fallthru
        _
      %p237 = scmp.le.s32.totalorder 1, %s9
      %p238 = scmp.lt.s32.totalorder %s9, 10
      %p239 = pnand %p237, %p238
      %p240 = pneg %p239
      // Predicated region
      $region63: #{generator_forward.59} parent=5 // pred_check
        _
      $region64: #{generator_forward.59} parent=5 // pred_check_branch
        %242 = sbr.rel (%p239) target = $region66
      $region65: #{generator_forward.59} parent=5 // pred_region
        %s243 = ssub.s32 %s9, 1
        %s244 = sand.u32 %s43, 1
        %s245 = sand.u32 %s43, 1
        %s246 = smul.addr %s245, 32
        %s247 = scalar_lea.vmem [#allocation3], %s246
        // Predicated region
        $region67: #{generator_forward.59} parent=65 // pred_check
          %p248 = pneg %p56
        $region68: #{generator_forward.59} parent=65 // pred_check_branch
          %250 = sbr.rel (%p248) target = $region70
        $region69: #{generator_forward.59} parent=65 // pred_region
          _
        $region70: #{generator_forward.59} parent=65 // pred_fallthru
          _
        %s251 = sand.u32 %s43, 1
        %s252 = sand.u32 %s43, 1
        %s253 = smul.addr %s252, 32
        %s254 = scalar_lea.vmem [#allocation3], %s253
        %p255 = pneg %p56
        %p256 = pneg %p53
        %s257 = smul.u32 32, %s21
        %s258 = smul.u32 2, %s20
        %p259 = scmp.lt.s32.totalorder %s257, 287
        %s260 = scalar_select %p259, %s257, 287
        %p261 = scmp.lt.s32.totalorder %s258, 1
        %s262 = scalar_select %p261, %s258, 1
        %s263 = smul.addr %s260, 2
        %s264 = sadd.s32 %s262, %s263
        %s265 = smul.addr %s264, 4
        %s266 = scalar_lea.vmem %s1, %s265
        %p267 = pneg %p84
        %p268 = pneg %p81
        %s269 = smul.u32 2, %s20
        %p270 = scmp.lt.s32.totalorder %s269, 1
        %s271 = scalar_select %p270, %s269, 1
        %s272 = scalar_lea.vmem %s2, %s271
        %p273 = pneg %p110
        %p274 = pneg %p107
        %p275 = pneg %p138
        %p276 = pneg %p135
        %s277 = smul.u32 4, %s19
        %s278 = smul.u32 2, %s20
        %p279 = scmp.lt.s32.totalorder %s277, 3
        %s280 = scalar_select %p279, %s277, 3
        %p281 = scmp.lt.s32.totalorder %s278, 1
        %s282 = scalar_select %p281, %s278, 1
        %s283 = smul.addr %s280, 2
        %s284 = sadd.s32 %s282, %s283
        %s285 = smul.addr %s284, 8
        %s286 = scalar_lea.vmem %s3, %s285
        %s287 = smul.u32 4, %s19
        %s288 = smul.u32 2, %s21
        %s289 = smul.u32 32, %s21
        %s290 = smul.u32 2, %s20
        %p291 = scmp.lt.s32.totalorder %s289, 287
        %s292 = scalar_select %p291, %s289, 287
        %p293 = scmp.lt.s32.totalorder %s290, 1
        %s294 = scalar_select %p293, %s290, 1
        %s295 = smul.addr %s292, 2
        %s296 = sadd.s32 %s294, %s295
        %s297 = smul.addr %s296, 4
        %s298 = scalar_lea.vmem %s1, %s297
        %s299 = smul.u32 32, %s21
        %s300 = smul.u32 2, %s20
        %s301 = smul.u32 2, %s20
        %p302 = scmp.lt.s32.totalorder %s301, 1
        %s303 = scalar_select %p302, %s301, 1
        %s304 = scalar_lea.vmem %s2, %s303
        %s305 = smul.u32 2, %s20
        %s306 = smul.u32 4, %s19
        %s307 = smul.u32 2, %s20
        %p308 = scmp.lt.s32.totalorder %s306, 3
        %s309 = scalar_select %p308, %s306, 3
        %p310 = scmp.lt.s32.totalorder %s307, 1
        %s311 = scalar_select %p310, %s307, 1
        %s312 = smul.addr %s309, 2
        %s313 = sadd.s32 %s311, %s312
        %s314 = smul.addr %s313, 8
        %s315 = scalar_lea.vmem %s3, %s314
        %s316 = smul.u32 4, %s19
        %s317 = smul.u32 2, %s20
        %p318 = scmp.eq.s32.totalorder %s21, 0
        // Predicated region
        $region71: #{generator_forward.59} parent=65 // pred_check
          %p319 = pneg %p318
        $region72: #{generator_forward.59} parent=65 // pred_check_branch
          %321 = sbr.rel (%p319) target = $region74
        $region73: #{generator_forward.59} parent=65 // pred_region
          %322 = vst [vmem:[#allocation2] sm:$0xff] 0.0
          %323 = vst [vmem:[#allocation2 + $0x8] sm:$0xff] 0.0
          %324 = vst [vmem:[#allocation2 + $0x10] sm:$0xff] 0.0
          %325 = vst [vmem:[#allocation2 + $0x18] sm:$0xff] 0.0
          %326 = vst [vmem:[#allocation2 + $0x20] sm:$0xff] 0.0
          %327 = vst [vmem:[#allocation2 + $0x28] sm:$0xff] 0.0
          %328 = vst [vmem:[#allocation2 + $0x30] sm:$0xff] 0.0
          %329 = vst [vmem:[#allocation2 + $0x38] sm:$0xff] 0.0
        $region74: #{generator_forward.59} parent=65 // pred_fallthru
          _
        %v330 = vld [vmem:[#allocation2] sm:$0xff]
        %v331 = vld [vmem:[#allocation2 + $0x8] sm:$0xff]
        %v332 = vld [vmem:[#allocation2 + $0x10] sm:$0xff]
        %v333 = vld [vmem:[#allocation2 + $0x18] sm:$0xff]
        %v334 = vld [vmem:[#allocation2 + $0x20] sm:$0xff]
        %v335 = vld [vmem:[#allocation2 + $0x28] sm:$0xff]
        %v336 = vld [vmem:[#allocation2 + $0x30] sm:$0xff]
        %v337 = vld [vmem:[#allocation2 + $0x38] sm:$0xff]
        %v338 = vld [vmem:[%s247] sm:$0xff]
        %v339 = vld [vmem:[%s247 + $0x8] sm:$0xff]
        %v340 = vld [vmem:[%s247 + $0x10] sm:$0xff]
        %v341 = vld [vmem:[%s247 + $0x18] sm:$0xff]
        %v342 = vld [vmem:[%s298] sm:$0xff]
        %v343 = vld [vmem:[%s298 + $0x8] sm:$0xff]
        %v344 = vld [vmem:[%s298 + $0x10] sm:$0xff]
        %v345 = vld [vmem:[%s298 + $0x18] sm:$0xff]
        %v346 = vld [vmem:[%s298 + $0x20] sm:$0xff]
        %v347 = vld [vmem:[%s298 + $0x28] sm:$0xff]
        %v348 = vld [vmem:[%s298 + $0x30] sm:$0xff]
        %v349 = vld [vmem:[%s298 + $0x38] sm:$0xff]
        %v350 = vld [vmem:[%s298 + $0x40] sm:$0xff]
        %v351 = vld [vmem:[%s298 + $0x48] sm:$0xff]
        %v352 = vld [vmem:[%s298 + $0x50] sm:$0xff]
        %v353 = vld [vmem:[%s298 + $0x58] sm:$0xff]
        %v354 = vld [vmem:[%s298 + $0x60] sm:$0xff]
        %v355 = vld [vmem:[%s298 + $0x68] sm:$0xff]
        %v356 = vld [vmem:[%s298 + $0x70] sm:$0xff]
        %v357 = vld [vmem:[%s298 + $0x78] sm:$0xff]
        %v358 = vld [vmem:[%s298 + $0x80] sm:$0xff]
        %v359 = vld [vmem:[%s298 + $0x88] sm:$0xff]
        %v360 = vld [vmem:[%s298 + $0x90] sm:$0xff]
        %v361 = vld [vmem:[%s298 + $0x98] sm:$0xff]
        %v362 = vld [vmem:[%s298 + $0xa0] sm:$0xff]
        %v363 = vld [vmem:[%s298 + $0xa8] sm:$0xff]
        %v364 = vld [vmem:[%s298 + $0xb0] sm:$0xff]
        %v365 = vld [vmem:[%s298 + $0xb8] sm:$0xff]
        %v366 = vld [vmem:[%s298 + $0xc0] sm:$0xff]
        %v367 = vld [vmem:[%s298 + $0xc8] sm:$0xff]
        %v368 = vld [vmem:[%s298 + $0xd0] sm:$0xff]
        %v369 = vld [vmem:[%s298 + $0xd8] sm:$0xff]
        %v370 = vld [vmem:[%s298 + $0xe0] sm:$0xff]
        %v371 = vld [vmem:[%s298 + $0xe8] sm:$0xff]
        %v372 = vld [vmem:[%s298 + $0xf0] sm:$0xff]
        %v373 = vld [vmem:[%s298 + $0xf8] sm:$0xff]
        %v378 = vunpack.c.l.b16 %v338
        %v379 = vunpack.c.h.b16 %v338
        %v380 = vunpack.c.l.b16 %v339
        %v381 = vunpack.c.h.b16 %v339
        %v382 = vunpack.c.l.b16 %v340
        %v383 = vunpack.c.h.b16 %v340
        %v384 = vunpack.c.l.b16 %v341
        %v385 = vunpack.c.h.b16 %v341
        %v386 = vpack.c.b16 %v380, %v378
        %v387 = vpack.c.b16 %v381, %v379
        %v388 = vpack.c.b16 %v384, %v382
        %v389 = vpack.c.b16 %v385, %v383
        %v426 = vunpack.c.l.b16 %v342
        %v427 = vunpack.c.h.b16 %v342
        %v428 = vunpack.c.l.b16 %v343
        %v429 = vunpack.c.h.b16 %v343
        %v430 = vunpack.c.l.b16 %v344
        %v431 = vunpack.c.h.b16 %v344
        %v432 = vunpack.c.l.b16 %v345
        %v433 = vunpack.c.h.b16 %v345
        %v434 = vunpack.c.l.b16 %v346
        %v435 = vunpack.c.h.b16 %v346
        %v436 = vunpack.c.l.b16 %v347
        %v437 = vunpack.c.h.b16 %v347
        %v438 = vunpack.c.l.b16 %v348
        %v439 = vunpack.c.h.b16 %v348
        %v440 = vunpack.c.l.b16 %v349
        %v441 = vunpack.c.h.b16 %v349
        %v442 = vunpack.c.l.b16 %v350
        %v443 = vunpack.c.h.b16 %v350
        %v444 = vunpack.c.l.b16 %v351
        %v445 = vunpack.c.h.b16 %v351
        %v446 = vunpack.c.l.b16 %v352
        %v447 = vunpack.c.h.b16 %v352
        %v448 = vunpack.c.l.b16 %v353
        %v449 = vunpack.c.h.b16 %v353
        %v450 = vunpack.c.l.b16 %v354
        %v451 = vunpack.c.h.b16 %v354
        %v452 = vunpack.c.l.b16 %v355
        %v453 = vunpack.c.h.b16 %v355
        %v454 = vunpack.c.l.b16 %v356
        %v455 = vunpack.c.h.b16 %v356
        %v456 = vunpack.c.l.b16 %v357
        %v457 = vunpack.c.h.b16 %v357
        %v458 = vunpack.c.l.b16 %v358
        %v459 = vunpack.c.h.b16 %v358
        %v460 = vunpack.c.l.b16 %v359
        %v461 = vunpack.c.h.b16 %v359
        %v462 = vunpack.c.l.b16 %v360
        %v463 = vunpack.c.h.b16 %v360
        %v464 = vunpack.c.l.b16 %v361
        %v465 = vunpack.c.h.b16 %v361
        %v466 = vunpack.c.l.b16 %v362
        %v467 = vunpack.c.h.b16 %v362
        %v468 = vunpack.c.l.b16 %v363
        %v469 = vunpack.c.h.b16 %v363
        %v470 = vunpack.c.l.b16 %v364
        %v471 = vunpack.c.h.b16 %v364
        %v472 = vunpack.c.l.b16 %v365
        %v473 = vunpack.c.h.b16 %v365
        %v474 = vunpack.c.l.b16 %v366
        %v475 = vunpack.c.h.b16 %v366
        %v476 = vunpack.c.l.b16 %v367
        %v477 = vunpack.c.h.b16 %v367
        %v478 = vunpack.c.l.b16 %v368
        %v479 = vunpack.c.h.b16 %v368
        %v480 = vunpack.c.l.b16 %v369
        %v481 = vunpack.c.h.b16 %v369
        %v482 = vunpack.c.l.b16 %v370
        %v483 = vunpack.c.h.b16 %v370
        %v484 = vunpack.c.l.b16 %v371
        %v485 = vunpack.c.h.b16 %v371
        %v486 = vunpack.c.l.b16 %v372
        %v487 = vunpack.c.h.b16 %v372
        %v488 = vunpack.c.l.b16 %v373
        %v489 = vunpack.c.h.b16 %v373
        %v490 = vpack.c.b16 %v428, %v426
        %v491 = vpack.c.b16 %v429, %v427
        %v492 = vpack.c.b16 %v432, %v430
        %v493 = vpack.c.b16 %v433, %v431
        %v494 = vpack.c.b16 %v436, %v434
        %v495 = vpack.c.b16 %v437, %v435
        %v496 = vpack.c.b16 %v440, %v438
        %v497 = vpack.c.b16 %v441, %v439
        %v498 = vpack.c.b16 %v444, %v442
        %v499 = vpack.c.b16 %v445, %v443
        %v500 = vpack.c.b16 %v448, %v446
        %v501 = vpack.c.b16 %v449, %v447
        %v502 = vpack.c.b16 %v452, %v450
        %v503 = vpack.c.b16 %v453, %v451
        %v504 = vpack.c.b16 %v456, %v454
        %v505 = vpack.c.b16 %v457, %v455
        %v506 = vpack.c.b16 %v460, %v458
        %v507 = vpack.c.b16 %v461, %v459
        %v508 = vpack.c.b16 %v464, %v462
        %v509 = vpack.c.b16 %v465, %v463
        %v510 = vpack.c.b16 %v468, %v466
        %v511 = vpack.c.b16 %v469, %v467
        %v512 = vpack.c.b16 %v472, %v470
        %v513 = vpack.c.b16 %v473, %v471
        %v514 = vpack.c.b16 %v476, %v474
        %v515 = vpack.c.b16 %v477, %v475
        %v516 = vpack.c.b16 %v480, %v478
        %v517 = vpack.c.b16 %v481, %v479
        %v518 = vpack.c.b16 %v484, %v482
        %v519 = vpack.c.b16 %v485, %v483
        %v520 = vpack.c.b16 %v488, %v486
        %v521 = vpack.c.b16 %v489, %v487
        %554 = vmatprep.subr.bf16.mxu0 %v491
        %555 = vmatpush1.bf16.msra.mxu0 %v490
        %556 = vmatprep.subr.bf16.mxu0 %v493
        %557 = vmatpush1.bf16.msra.mxu0 %v492
        %558 = vmatprep.subr.bf16.mxu0 %v495
        %559 = vmatpush1.bf16.msra.mxu0 %v494
        %560 = vmatprep.subr.bf16.mxu0 %v497
        %561 = vmatpush1.bf16.msra.mxu0 %v496
        %562 = vmatprep.subr.bf16.mxu0 %v499
        %563 = vmatpush1.bf16.msra.mxu0 %v498
        %564 = vmatprep.subr.bf16.mxu0 %v501
        %565 = vmatpush1.bf16.msra.mxu0 %v500
        %566 = vmatprep.subr.bf16.mxu0 %v503
        %567 = vmatpush1.bf16.msra.mxu0 %v502
        %568 = vmatprep.subr.bf16.mxu0 %v505
        %569 = vmatpush1.bf16.msra.mxu0 %v504
        %570 = vmatprep.subr.bf16.mxu0 %v507
        %571 = vmatpush1.bf16.msra.mxu0 %v506
        %572 = vmatprep.subr.bf16.mxu0 %v509
        %573 = vmatpush1.bf16.msra.mxu0 %v508
        %574 = vmatprep.subr.bf16.mxu0 %v511
        %575 = vmatpush1.bf16.msra.mxu0 %v510
        %576 = vmatprep.subr.bf16.mxu0 %v513
        %577 = vmatpush1.bf16.msra.mxu0 %v512
        %578 = vmatprep.subr.bf16.mxu0 %v515
        %579 = vmatpush1.bf16.msra.mxu0 %v514
        %580 = vmatprep.subr.bf16.mxu0 %v517
        %581 = vmatpush1.bf16.msra.mxu0 %v516
        %582 = vmatprep.subr.bf16.mxu0 %v519
        %583 = vmatpush1.bf16.msra.mxu0 %v518
        %584 = vmatprep.subr.bf16.mxu0 %v521
        %585 = vmatpush1.bf16.msra.mxu0 %v520
        %586 = vmatprep.mubr.bf16.mxu0 %v387
        %587 = vmatmul.mubr.bf16.gmra.mrb[0].mxu0 %v386
        %v588 = vpop.f32.mrb[0].mxu0
        %v589 = vadd.f32 0.0, %v588
        %v590 = vpop.f32.mrb[0].mxu0
        %v591 = vadd.f32 0.0, %v590
        %v592 = vpop.f32.mrb[0].mxu0
        %v593 = vadd.f32 0.0, %v592
        %v594 = vpop.f32.mrb[0].mxu0
        %v595 = vadd.f32 0.0, %v594
        %596 = vmatprep.mubr.bf16.mxu0 %v389
        %597 = vmatmul.mubr.bf16.gmra.mrb[0].mxu0 %v388
        %v598 = vpop.f32.mrb[0].mxu0
        %v599 = vadd.f32 0.0, %v598
        %v600 = vpop.f32.mrb[0].mxu0
        %v601 = vadd.f32 0.0, %v600
        %v602 = vpop.f32.mrb[0].mxu0
        %v603 = vadd.f32 0.0, %v602
        %v604 = vpop.f32.mrb[0].mxu0
        %v605 = vadd.f32 0.0, %v604
        %606 = vdwg.mxu0
        %v607 = vadd.f32 %v330, %v589
        %v608 = vadd.f32 %v331, %v591
        %v609 = vadd.f32 %v332, %v593
        %v610 = vadd.f32 %v333, %v595
        %v611 = vadd.f32 %v334, %v599
        %v612 = vadd.f32 %v335, %v601
        %v613 = vadd.f32 %v336, %v603
        %v614 = vadd.f32 %v337, %v605
        %615 = vst [vmem:[#allocation2] sm:$0xff] %v607
        %616 = vst [vmem:[#allocation2 + $0x8] sm:$0xff] %v608
        %617 = vst [vmem:[#allocation2 + $0x10] sm:$0xff] %v609
        %618 = vst [vmem:[#allocation2 + $0x18] sm:$0xff] %v610
        %619 = vst [vmem:[#allocation2 + $0x20] sm:$0xff] %v611
        %620 = vst [vmem:[#allocation2 + $0x28] sm:$0xff] %v612
        %621 = vst [vmem:[#allocation2 + $0x30] sm:$0xff] %v613
        %622 = vst [vmem:[#allocation2 + $0x38] sm:$0xff] %v614
        %p623 = scmp.eq.s32.totalorder %s21, 8
        // Predicated region
        $region75: #{generator_forward.59} parent=65 // pred_check
          %p624 = pneg %p623
        $region76: #{generator_forward.59} parent=65 // pred_check_branch
          %626 = sbr.rel (%p624) target = $region78
        $region77: #{generator_forward.59} parent=65 // pred_region
          %v627 = vld [vmem:[#allocation2] sm:$0xff]
          %v628 = vld [vmem:[#allocation2 + $0x8] sm:$0xff]
          %v629 = vld [vmem:[#allocation2 + $0x10] sm:$0xff]
          %v630 = vld [vmem:[#allocation2 + $0x18] sm:$0xff]
          %v631 = vld [vmem:[#allocation2 + $0x20] sm:$0xff]
          %v632 = vld [vmem:[#allocation2 + $0x28] sm:$0xff]
          %v633 = vld [vmem:[#allocation2 + $0x30] sm:$0xff]
          %v634 = vld [vmem:[#allocation2 + $0x38] sm:$0xff]
          %v635 = vld [vmem:[%s304] sm:$0x3]
          %v637 = vlaneseq
          %v638 = vshrl.u32 %v637, 7
          %v639 = vsub.s32 0, %v638
          %v640 = vrot.slane %v635, %v639
          %v641 = vlaneseq
          %v642 = vshrl.u32 %v641, 7
          %v643 = vsub.s32 1, %v642
          %v644 = vrot.slane %v635, %v643
          %v647 = vadd.f32 %v627, %v640
          %v648 = vadd.f32 %v628, %v644
          %v649 = vadd.f32 %v629, %v640
          %v650 = vadd.f32 %v630, %v644
          %v651 = vadd.f32 %v631, %v640
          %v652 = vadd.f32 %v632, %v644
          %v653 = vadd.f32 %v633, %v640
          %v654 = vadd.f32 %v634, %v644
          %655 = vst [vmem:[%s315] sm:$0xff] %v647
          %656 = vst [vmem:[%s315 + $0x8] sm:$0xff] %v648
          %657 = vst [vmem:[%s315 + $0x10] sm:$0xff] %v649
          %658 = vst [vmem:[%s315 + $0x18] sm:$0xff] %v650
          %659 = vst [vmem:[%s315 + $0x20] sm:$0xff] %v651
          %660 = vst [vmem:[%s315 + $0x28] sm:$0xff] %v652
          %661 = vst [vmem:[%s315 + $0x30] sm:$0xff] %v653
          %662 = vst [vmem:[%s315 + $0x38] sm:$0xff] %v654
        $region78: #{generator_forward.59} parent=65 // pred_fallthru
          _
        %s663 = smul.u32 4, %s19
        %s664 = smul.u32 2, %s20
        %p665 = scmp.lt.s32.totalorder %s663, 3
        %s666 = scalar_select %p665, %s663, 3
        %p667 = scmp.lt.s32.totalorder %s664, 1
        %s668 = scalar_select %p667, %s664, 1
        %s669 = smul.addr %s666, 2
        %s670 = sadd.s32 %s668, %s669
        %s671 = smul.addr %s670, 8
        %s672 = scalar_lea.vmem %s3, %s671
        // Predicated region
        $region79: #{generator_forward.59} parent=65 // pred_check
          %p673 = pneg %p135
        $region80: #{generator_forward.59} parent=65 // pred_check_branch
          %675 = sbr.rel (%p673) target = $region82
        $region81: #{generator_forward.59} parent=65 // pred_region
          %s676 = smul.u32 4, %s19
          %s677 = smul.u32 2, %s20
        $region82: #{generator_forward.59} parent=65 // pred_fallthru
          _
        // Predicated region
        $region83: #{generator_forward.59} parent=65 // pred_check
          %p678 = pneg %p135
        $region84: #{generator_forward.59} parent=65 // pred_check_branch
          %680 = sbr.rel (%p678) target = $region86
        $region85: #{generator_forward.59} parent=65 // pred_region
          %s681 = smul.u32 4, %s19
          %s682 = smul.u32 2, %s20
          %p683 = scmp.lt.s32.totalorder %s681, 3
          %s684 = scalar_select %p683, %s681, 3
          %p685 = scmp.lt.s32.totalorder %s682, 1
          %s686 = scalar_select %p685, %s682, 1
          %s687 = smul.addr %s684, 2
          %s688 = sadd.s32 %s686, %s687
          %s689 = smul.addr %s688, 8
          %s690 = scalar_lea.vmem %s3, %s689
        $region86: #{generator_forward.59} parent=65 // pred_fallthru
          _
      $region66: #{generator_forward.59} parent=5 // pred_fallthru
        _
      %p691 = scmp.le.s32.totalorder 2, %s9
      // Predicated region
      $region87: #{generator_forward.59} parent=5 // pred_check
        %p692 = pneg %p691
      $region88: #{generator_forward.59} parent=5 // pred_check_branch
        %694 = sbr.rel (%p692) target = $region90
      $region89: #{generator_forward.59} parent=5 // pred_region
        %s695 = ssub.s32 %s9, 2
      $region90: #{generator_forward.59} parent=5 // pred_fallthru
        _
    $region6: #{generator_forward.59} parent=1 // loop_footer
      %s13 = sadd.s32 1, %s9
    $region7: #{generator_forward.59} parent=1 // loop_footer_branch
      %8 = sbr.rel target = $region3
    $region8: #{generator_forward.59} parent=1 // loop_exit
      _

// kernel: generator_forward.95
$region0: #{generator_forward.95}
  #allocation0 [shape = 'u32[]', space=smem, size = 0x4, offset = 0x4, fixed_abs, tag = 'smem constant byte address 0x4 - core index']
  #allocation1 [shape = 'u32[144,128]{1,0:T(1,128)}', space=vmem, size = 0x12000, scoped, tag = 'internal scratch']
  #allocation2 [shape = 'f32[32,128]{1,0:T(8,128)}', space=vmem, size = 0x4000, scoped, tag = 'scratch operand']
  %s0 = inlined_call_operand.vmem [shape: bf16[32,256], index: 0, kind: input, shape index: {}]
  %s1 = inlined_call_operand.vmem [shape: bf16[256,128], index: 1, kind: input, shape index: {}]
  %s2 = inlined_call_operand.vmem [shape: f32[1,128], index: 2, kind: input, shape index: {}]
  %s3 = inlined_call_operand.vmem [shape: f32[32,128], index: 3, kind: output, shape index: {}]
  %s4 = sld [smem:[#allocation0]]
  $region30: #{generator_forward.95} parent=0
    _
  %s6 = ssub.s32 1, %s4
  %s7 = scalar_select 0, %s6, %s4
  // Predicated region
  $region2: #{generator_forward.95} parent=0 // pred_check
    _
  $region3: #{generator_forward.95} parent=0 // pred_check_branch
    %9 = sbr.rel (0) target = $region5
  $region4: #{generator_forward.95} parent=0 // pred_region
    _
  $region5: #{generator_forward.95} parent=0 // pred_fallthru
    _
  // Predicated region
  $region6: #{generator_forward.95} parent=0 // pred_check
    _
  $region7: #{generator_forward.95} parent=0 // pred_check_branch
    %11 = sbr.rel (0) target = $region9
  $region8: #{generator_forward.95} parent=0 // pred_region
    _
  $region9: #{generator_forward.95} parent=0 // pred_fallthru
    _
  // Predicated region
  $region10: #{generator_forward.95} parent=0 // pred_check
    _
  $region11: #{generator_forward.95} parent=0 // pred_check_branch
    %13 = sbr.rel (0) target = $region13
  $region12: #{generator_forward.95} parent=0 // pred_region
    _
  $region13: #{generator_forward.95} parent=0 // pred_fallthru
    _
  %p15 = scmp.eq.s32.totalorder 0, 0
  // Predicated region
  $region14: #{generator_forward.95} parent=0 // pred_check
    %p16 = pneg %p15
  $region15: #{generator_forward.95} parent=0 // pred_check_branch
    %18 = sbr.rel (%p16) target = $region17
  $region16: #{generator_forward.95} parent=0 // pred_region
    %19 = vst [vmem:[#allocation2] sm:$0xff] 0.0
    %20 = vst [vmem:[#allocation2 + $0x8] sm:$0xff] 0.0
    %21 = vst [vmem:[#allocation2 + $0x10] sm:$0xff] 0.0
    %22 = vst [vmem:[#allocation2 + $0x18] sm:$0xff] 0.0
  $region17: #{generator_forward.95} parent=0 // pred_fallthru
    _
  %v23 = vld [vmem:[#allocation2] sm:$0xff]
  %v24 = vld [vmem:[#allocation2 + $0x8] sm:$0xff]
  %v25 = vld [vmem:[#allocation2 + $0x10] sm:$0xff]
  %v26 = vld [vmem:[#allocation2 + $0x18] sm:$0xff]
  %v27 = vld [vmem:[%s0] sm:$0xff]
  %v28 = vld [vmem:[%s0 + $0x8] sm:$0xff]
  %v29 = vld [vmem:[%s0 + $0x10] sm:$0xff]
  %v30 = vld [vmem:[%s0 + $0x18] sm:$0xff]
  %v31 = vld [vmem:[%s1] sm:$0xf]
  %v32 = vld [vmem:[%s1 + $0x4] sm:$0xf]
  %v33 = vld [vmem:[%s1 + $0x8] sm:$0xf]
  %v34 = vld [vmem:[%s1 + $0xc] sm:$0xf]
  %v35 = vld [vmem:[%s1 + $0x10] sm:$0xf]
  %v36 = vld [vmem:[%s1 + $0x14] sm:$0xf]
  %v37 = vld [vmem:[%s1 + $0x18] sm:$0xf]
  %v38 = vld [vmem:[%s1 + $0x1c] sm:$0xf]
  %v39 = vld [vmem:[%s1 + $0x20] sm:$0xf]
  %v40 = vld [vmem:[%s1 + $0x24] sm:$0xf]
  %v41 = vld [vmem:[%s1 + $0x28] sm:$0xf]
  %v42 = vld [vmem:[%s1 + $0x2c] sm:$0xf]
  %v43 = vld [vmem:[%s1 + $0x30] sm:$0xf]
  %v44 = vld [vmem:[%s1 + $0x34] sm:$0xf]
  %v45 = vld [vmem:[%s1 + $0x38] sm:$0xf]
  %v46 = vld [vmem:[%s1 + $0x3c] sm:$0xf]
  %v47 = vld [vmem:[%s1 + $0x40] sm:$0xf]
  %v48 = vld [vmem:[%s1 + $0x44] sm:$0xf]
  %v49 = vld [vmem:[%s1 + $0x48] sm:$0xf]
  %v50 = vld [vmem:[%s1 + $0x4c] sm:$0xf]
  %v51 = vld [vmem:[%s1 + $0x50] sm:$0xf]
  %v52 = vld [vmem:[%s1 + $0x54] sm:$0xf]
  %v53 = vld [vmem:[%s1 + $0x58] sm:$0xf]
  %v54 = vld [vmem:[%s1 + $0x5c] sm:$0xf]
  %v55 = vld [vmem:[%s1 + $0x60] sm:$0xf]
  %v56 = vld [vmem:[%s1 + $0x64] sm:$0xf]
  %v57 = vld [vmem:[%s1 + $0x68] sm:$0xf]
  %v58 = vld [vmem:[%s1 + $0x6c] sm:$0xf]
  %v59 = vld [vmem:[%s1 + $0x70] sm:$0xf]
  %v60 = vld [vmem:[%s1 + $0x74] sm:$0xf]
  %v61 = vld [vmem:[%s1 + $0x78] sm:$0xf]
  %v62 = vld [vmem:[%s1 + $0x7c] sm:$0xf]
  %v67 = vunpack.c.l.b16 %v27
  %v68 = vunpack.c.h.b16 %v27
  %v69 = vunpack.c.l.b16 %v28
  %v70 = vunpack.c.h.b16 %v28
  %v71 = vunpack.c.l.b16 %v29
  %v72 = vunpack.c.h.b16 %v29
  %v73 = vunpack.c.l.b16 %v30
  %v74 = vunpack.c.h.b16 %v30
  %v75 = vpack.c.b16 %v69, %v67
  %v76 = vpack.c.b16 %v70, %v68
  %v77 = vpack.c.b16 %v73, %v71
  %v78 = vpack.c.b16 %v74, %v72
  %v115 = vunpack.c.l.b16 %v31
  %v116 = vunpack.c.l.b16 %v32
  %v117 = vunpack.c.l.b16 %v33
  %v118 = vunpack.c.l.b16 %v34
  %v119 = vunpack.c.l.b16 %v35
  %v120 = vunpack.c.l.b16 %v36
  %v121 = vunpack.c.l.b16 %v37
  %v122 = vunpack.c.l.b16 %v38
  %v123 = vunpack.c.l.b16 %v39
  %v124 = vunpack.c.l.b16 %v40
  %v125 = vunpack.c.l.b16 %v41
  %v126 = vunpack.c.l.b16 %v42
  %v127 = vunpack.c.l.b16 %v43
  %v128 = vunpack.c.l.b16 %v44
  %v129 = vunpack.c.l.b16 %v45
  %v130 = vunpack.c.l.b16 %v46
  %v131 = vunpack.c.l.b16 %v47
  %v132 = vunpack.c.l.b16 %v48
  %v133 = vunpack.c.l.b16 %v49
  %v134 = vunpack.c.l.b16 %v50
  %v135 = vunpack.c.l.b16 %v51
  %v136 = vunpack.c.l.b16 %v52
  %v137 = vunpack.c.l.b16 %v53
  %v138 = vunpack.c.l.b16 %v54
  %v139 = vunpack.c.l.b16 %v55
  %v140 = vunpack.c.l.b16 %v56
  %v141 = vunpack.c.l.b16 %v57
  %v142 = vunpack.c.l.b16 %v58
  %v143 = vunpack.c.l.b16 %v59
  %v144 = vunpack.c.l.b16 %v60
  %v145 = vunpack.c.l.b16 %v61
  %v146 = vunpack.c.l.b16 %v62
  %v147 = vpack.c.b16 %v116, %v115
  %v148 = vpack.c.b16 %v118, %v117
  %v149 = vpack.c.b16 %v120, %v119
  %v150 = vpack.c.b16 %v122, %v121
  %v151 = vpack.c.b16 %v124, %v123
  %v152 = vpack.c.b16 %v126, %v125
  %v153 = vpack.c.b16 %v128, %v127
  %v154 = vpack.c.b16 %v130, %v129
  %v155 = vpack.c.b16 %v132, %v131
  %v156 = vpack.c.b16 %v134, %v133
  %v157 = vpack.c.b16 %v136, %v135
  %v158 = vpack.c.b16 %v138, %v137
  %v159 = vpack.c.b16 %v140, %v139
  %v160 = vpack.c.b16 %v142, %v141
  %v161 = vpack.c.b16 %v144, %v143
  %v162 = vpack.c.b16 %v146, %v145
  %179 = vmatprep.subr.bf16.mxu0 0
  %180 = vmatpush1.bf16.msra.mxu0 %v147
  %181 = vmatprep.subr.bf16.mxu0 0
  %182 = vmatpush1.bf16.msra.mxu0 %v148
  %183 = vmatprep.subr.bf16.mxu0 0
  %184 = vmatpush1.bf16.msra.mxu0 %v149
  %185 = vmatprep.subr.bf16.mxu0 0
  %186 = vmatpush1.bf16.msra.mxu0 %v150
  %187 = vmatprep.subr.bf16.mxu0 0
  %188 = vmatpush1.bf16.msra.mxu0 %v151
  %189 = vmatprep.subr.bf16.mxu0 0
  %190 = vmatpush1.bf16.msra.mxu0 %v152
  %191 = vmatprep.subr.bf16.mxu0 0
  %192 = vmatpush1.bf16.msra.mxu0 %v153
  %193 = vmatprep.subr.bf16.mxu0 0
  %194 = vmatpush1.bf16.msra.mxu0 %v154
  %195 = vmatprep.subr.bf16.mxu0 0
  %196 = vmatpush1.bf16.msra.mxu0 %v155
  %197 = vmatprep.subr.bf16.mxu0 0
  %198 = vmatpush1.bf16.msra.mxu0 %v156
  %199 = vmatprep.subr.bf16.mxu0 0
  %200 = vmatpush1.bf16.msra.mxu0 %v157
  %201 = vmatprep.subr.bf16.mxu0 0
  %202 = vmatpush1.bf16.msra.mxu0 %v158
  %203 = vmatprep.subr.bf16.mxu0 0
  %204 = vmatpush1.bf16.msra.mxu0 %v159
  %205 = vmatprep.subr.bf16.mxu0 0
  %206 = vmatpush1.bf16.msra.mxu0 %v160
  %207 = vmatprep.subr.bf16.mxu0 0
  %208 = vmatpush1.bf16.msra.mxu0 %v161
  %209 = vmatprep.subr.bf16.mxu0 0
  %210 = vmatpush1.bf16.msra.mxu0 %v162
  %211 = vmatprep.mubr.bf16.mxu0 %v76
  %212 = vmatmul.mubr.bf16.gmra.mrb[0].mxu0 %v75
  %v213 = vpop.f32.mrb[0].mxu0
  %v214 = vadd.f32 0.0, %v213
  %v215 = vpop.f32.mrb[0].mxu0
  %v216 = vpop.f32.mrb[0].mxu0
  %v217 = vadd.f32 0.0, %v216
  %v218 = vpop.f32.mrb[0].mxu0
  %219 = vmatprep.mubr.bf16.mxu0 %v78
  %220 = vmatmul.mubr.bf16.gmra.mrb[0].mxu0 %v77
  %v221 = vpop.f32.mrb[0].mxu0
  %v222 = vadd.f32 0.0, %v221
  %v223 = vpop.f32.mrb[0].mxu0
  %v224 = vpop.f32.mrb[0].mxu0
  %v225 = vadd.f32 0.0, %v224
  %v226 = vpop.f32.mrb[0].mxu0
  %227 = vdwg.mxu0
  %v228 = vadd.f32 %v23, %v214
  %v229 = vadd.f32 %v24, %v217
  %v230 = vadd.f32 %v25, %v222
  %v231 = vadd.f32 %v26, %v225
  %232 = vst [vmem:[#allocation2] sm:$0xff] %v228
  %233 = vst [vmem:[#allocation2 + $0x8] sm:$0xff] %v229
  %234 = vst [vmem:[#allocation2 + $0x10] sm:$0xff] %v230
  %235 = vst [vmem:[#allocation2 + $0x18] sm:$0xff] %v231
  // Predicated region
  $region18: #{generator_forward.95} parent=0 // pred_check
    %p236 = pneg %p15
  $region19: #{generator_forward.95} parent=0 // pred_check_branch
    %238 = sbr.rel (%p236) target = $region21
  $region20: #{generator_forward.95} parent=0 // pred_region
    %v239 = vld [vmem:[#allocation2] sm:$0xff]
    %v240 = vld [vmem:[#allocation2 + $0x8] sm:$0xff]
    %v241 = vld [vmem:[#allocation2 + $0x10] sm:$0xff]
    %v242 = vld [vmem:[#allocation2 + $0x18] sm:$0xff]
    %v243 = vld [vmem:[%s2] sm:$0x1]
    %v245 = vlaneseq
    %v246 = vshrl.u32 %v245, 7
    %v247 = vsub.s32 0, %v246
    %v248 = vrot.slane %v243, %v247
    %v250 = vadd.f32 %v239, %v248
    %v251 = vadd.f32 %v240, %v248
    %v252 = vadd.f32 %v241, %v248
    %v253 = vadd.f32 %v242, %v248
    %254 = vst [vmem:[%s3] sm:$0xff] %v250
    %255 = vst [vmem:[%s3 + $0x8] sm:$0xff] %v251
    %256 = vst [vmem:[%s3 + $0x10] sm:$0xff] %v252
    %257 = vst [vmem:[%s3 + $0x18] sm:$0xff] %v253
  $region21: #{generator_forward.95} parent=0 // pred_fallthru
    _
  // Predicated region
  $region22: #{generator_forward.95} parent=0 // pred_check
    _
  $region23: #{generator_forward.95} parent=0 // pred_check_branch
    %259 = sbr.rel (0) target = $region25
  $region24: #{generator_forward.95} parent=0 // pred_region
    _
  $region25: #{generator_forward.95} parent=0 // pred_fallthru
    _
  // Predicated region
  $region26: #{generator_forward.95} parent=0 // pred_check
    _
  $region27: #{generator_forward.95} parent=0 // pred_check_branch
    %261 = sbr.rel (0) target = $region29
  $region28: #{generator_forward.95} parent=0 // pred_region
    _
  $region29: #{generator_forward.95} parent=0 // pred_fallthru
    _

// kernel: generator_forward.96
$region0: #{generator_forward.96}
  #allocation0 [shape = 'u32[]', space=smem, size = 0x4, offset = 0x4, fixed_abs, tag = 'smem constant byte address 0x4 - core index']
  #allocation1 [shape = 'u32[144,128]{1,0:T(1,128)}', space=vmem, size = 0x12000, scoped, tag = 'internal scratch']
  #allocation2 [shape = 'f32[32,128]{1,0:T(8,128)}', space=vmem, size = 0x4000, scoped, tag = 'scratch operand']
  %s0 = inlined_call_operand.vmem [shape: bf16[32,512], index: 0, kind: input, shape index: {}]
  %s1 = inlined_call_operand.vmem [shape: bf16[512,128], index: 1, kind: input, shape index: {}]
  %s2 = inlined_call_operand.vmem [shape: f32[1,128], index: 2, kind: input, shape index: {}]
  %s3 = inlined_call_operand.vmem [shape: f32[32,128], index: 3, kind: output, shape index: {}]
  %s4 = sld [smem:[#allocation0]]
  $region30: #{generator_forward.96} parent=0
    _
  %s6 = ssub.s32 1, %s4
  %s7 = scalar_select 0, %s6, %s4
  // Predicated region
  $region2: #{generator_forward.96} parent=0 // pred_check
    _
  $region3: #{generator_forward.96} parent=0 // pred_check_branch
    %9 = sbr.rel (0) target = $region5
  $region4: #{generator_forward.96} parent=0 // pred_region
    _
  $region5: #{generator_forward.96} parent=0 // pred_fallthru
    _
  // Predicated region
  $region6: #{generator_forward.96} parent=0 // pred_check
    _
  $region7: #{generator_forward.96} parent=0 // pred_check_branch
    %11 = sbr.rel (0) target = $region9
  $region8: #{generator_forward.96} parent=0 // pred_region
    _
  $region9: #{generator_forward.96} parent=0 // pred_fallthru
    _
  // Predicated region
  $region10: #{generator_forward.96} parent=0 // pred_check
    _
  $region11: #{generator_forward.96} parent=0 // pred_check_branch
    %13 = sbr.rel (0) target = $region13
  $region12: #{generator_forward.96} parent=0 // pred_region
    _
  $region13: #{generator_forward.96} parent=0 // pred_fallthru
    _
  %p15 = scmp.eq.s32.totalorder 0, 0
  // Predicated region
  $region14: #{generator_forward.96} parent=0 // pred_check
    %p16 = pneg %p15
  $region15: #{generator_forward.96} parent=0 // pred_check_branch
    %18 = sbr.rel (%p16) target = $region17
  $region16: #{generator_forward.96} parent=0 // pred_region
    %19 = vst [vmem:[#allocation2] sm:$0xff] 0.0
    %20 = vst [vmem:[#allocation2 + $0x8] sm:$0xff] 0.0
    %21 = vst [vmem:[#allocation2 + $0x10] sm:$0xff] 0.0
    %22 = vst [vmem:[#allocation2 + $0x18] sm:$0xff] 0.0
  $region17: #{generator_forward.96} parent=0 // pred_fallthru
    _
  %v23 = vld [vmem:[#allocation2] sm:$0xff]
  %v24 = vld [vmem:[#allocation2 + $0x8] sm:$0xff]
  %v25 = vld [vmem:[#allocation2 + $0x10] sm:$0xff]
  %v26 = vld [vmem:[#allocation2 + $0x18] sm:$0xff]
  %v27 = vld [vmem:[%s0] sm:$0xff]
  %v28 = vld [vmem:[%s0 + $0x8] sm:$0xff]
  %v29 = vld [vmem:[%s0 + $0x10] sm:$0xff]
  %v30 = vld [vmem:[%s0 + $0x18] sm:$0xff]
  %v31 = vld [vmem:[%s0 + $0x20] sm:$0xff]
  %v32 = vld [vmem:[%s0 + $0x28] sm:$0xff]
  %v33 = vld [vmem:[%s0 + $0x30] sm:$0xff]
  %v34 = vld [vmem:[%s0 + $0x38] sm:$0xff]
  %v35 = vld [vmem:[%s1] sm:$0xf]
  %v36 = vld [vmem:[%s1 + $0x4] sm:$0xf]
  %v37 = vld [vmem:[%s1 + $0x8] sm:$0xf]
  %v38 = vld [vmem:[%s1 + $0xc] sm:$0xf]
  %v39 = vld [vmem:[%s1 + $0x10] sm:$0xf]
  %v40 = vld [vmem:[%s1 + $0x14] sm:$0xf]
  %v41 = vld [vmem:[%s1 + $0x18] sm:$0xf]
  %v42 = vld [vmem:[%s1 + $0x1c] sm:$0xf]
  %v43 = vld [vmem:[%s1 + $0x20] sm:$0xf]
  %v44 = vld [vmem:[%s1 + $0x24] sm:$0xf]
  %v45 = vld [vmem:[%s1 + $0x28] sm:$0xf]
  %v46 = vld [vmem:[%s1 + $0x2c] sm:$0xf]
  %v47 = vld [vmem:[%s1 + $0x30] sm:$0xf]
  %v48 = vld [vmem:[%s1 + $0x34] sm:$0xf]
  %v49 = vld [vmem:[%s1 + $0x38] sm:$0xf]
  %v50 = vld [vmem:[%s1 + $0x3c] sm:$0xf]
  %v51 = vld [vmem:[%s1 + $0x40] sm:$0xf]
  %v52 = vld [vmem:[%s1 + $0x44] sm:$0xf]
  %v53 = vld [vmem:[%s1 + $0x48] sm:$0xf]
  %v54 = vld [vmem:[%s1 + $0x4c] sm:$0xf]
  %v55 = vld [vmem:[%s1 + $0x50] sm:$0xf]
  %v56 = vld [vmem:[%s1 + $0x54] sm:$0xf]
  %v57 = vld [vmem:[%s1 + $0x58] sm:$0xf]
  %v58 = vld [vmem:[%s1 + $0x5c] sm:$0xf]
  %v59 = vld [vmem:[%s1 + $0x60] sm:$0xf]
  %v60 = vld [vmem:[%s1 + $0x64] sm:$0xf]
  %v61 = vld [vmem:[%s1 + $0x68] sm:$0xf]
  %v62 = vld [vmem:[%s1 + $0x6c] sm:$0xf]
  %v63 = vld [vmem:[%s1 + $0x70] sm:$0xf]
  %v64 = vld [vmem:[%s1 + $0x74] sm:$0xf]
  %v65 = vld [vmem:[%s1 + $0x78] sm:$0xf]
  %v66 = vld [vmem:[%s1 + $0x7c] sm:$0xf]
  %v67 = vld [vmem:[%s1 + $0x80] sm:$0xf]
  %v68 = vld [vmem:[%s1 + $0x84] sm:$0xf]
  %v69 = vld [vmem:[%s1 + $0x88] sm:$0xf]
  %v70 = vld [vmem:[%s1 + $0x8c] sm:$0xf]
  %v71 = vld [vmem:[%s1 + $0x90] sm:$0xf]
  %v72 = vld [vmem:[%s1 + $0x94] sm:$0xf]
  %v73 = vld [vmem:[%s1 + $0x98] sm:$0xf]
  %v74 = vld [vmem:[%s1 + $0x9c] sm:$0xf]
  %v75 = vld [vmem:[%s1 + $0xa0] sm:$0xf]
  %v76 = vld [vmem:[%s1 + $0xa4] sm:$0xf]
  %v77 = vld [vmem:[%s1 + $0xa8] sm:$0xf]
  %v78 = vld [vmem:[%s1 + $0xac] sm:$0xf]
  %v79 = vld [vmem:[%s1 + $0xb0] sm:$0xf]
  %v80 = vld [vmem:[%s1 + $0xb4] sm:$0xf]
  %v81 = vld [vmem:[%s1 + $0xb8] sm:$0xf]
  %v82 = vld [vmem:[%s1 + $0xbc] sm:$0xf]
  %v83 = vld [vmem:[%s1 + $0xc0] sm:$0xf]
  %v84 = vld [vmem:[%s1 + $0xc4] sm:$0xf]
  %v85 = vld [vmem:[%s1 + $0xc8] sm:$0xf]
  %v86 = vld [vmem:[%s1 + $0xcc] sm:$0xf]
  %v87 = vld [vmem:[%s1 + $0xd0] sm:$0xf]
  %v88 = vld [vmem:[%s1 + $0xd4] sm:$0xf]
  %v89 = vld [vmem:[%s1 + $0xd8] sm:$0xf]
  %v90 = vld [vmem:[%s1 + $0xdc] sm:$0xf]
  %v91 = vld [vmem:[%s1 + $0xe0] sm:$0xf]
  %v92 = vld [vmem:[%s1 + $0xe4] sm:$0xf]
  %v93 = vld [vmem:[%s1 + $0xe8] sm:$0xf]
  %v94 = vld [vmem:[%s1 + $0xec] sm:$0xf]
  %v95 = vld [vmem:[%s1 + $0xf0] sm:$0xf]
  %v96 = vld [vmem:[%s1 + $0xf4] sm:$0xf]
  %v97 = vld [vmem:[%s1 + $0xf8] sm:$0xf]
  %v98 = vld [vmem:[%s1 + $0xfc] sm:$0xf]
  %v107 = vunpack.c.l.b16 %v27
  %v108 = vunpack.c.h.b16 %v27
  %v109 = vunpack.c.l.b16 %v28
  %v110 = vunpack.c.h.b16 %v28
  %v111 = vunpack.c.l.b16 %v29
  %v112 = vunpack.c.h.b16 %v29
  %v113 = vunpack.c.l.b16 %v30
  %v114 = vunpack.c.h.b16 %v30
  %v115 = vunpack.c.l.b16 %v31
  %v116 = vunpack.c.h.b16 %v31
  %v117 = vunpack.c.l.b16 %v32
  %v118 = vunpack.c.h.b16 %v32
  %v119 = vunpack.c.l.b16 %v33
  %v120 = vunpack.c.h.b16 %v33
  %v121 = vunpack.c.l.b16 %v34
  %v122 = vunpack.c.h.b16 %v34
  %v123 = vpack.c.b16 %v111, %v107
  %v124 = vpack.c.b16 %v112, %v108
  %v125 = vpack.c.b16 %v113, %v109
  %v126 = vpack.c.b16 %v114, %v110
  %v127 = vpack.c.b16 %v119, %v115
  %v128 = vpack.c.b16 %v120, %v116
  %v129 = vpack.c.b16 %v121, %v117
  %v130 = vpack.c.b16 %v122, %v118
  %v203 = vunpack.c.l.b16 %v35
  %v204 = vunpack.c.l.b16 %v36
  %v205 = vunpack.c.l.b16 %v37
  %v206 = vunpack.c.l.b16 %v38
  %v207 = vunpack.c.l.b16 %v39
  %v208 = vunpack.c.l.b16 %v40
  %v209 = vunpack.c.l.b16 %v41
  %v210 = vunpack.c.l.b16 %v42
  %v211 = vunpack.c.l.b16 %v43
  %v212 = vunpack.c.l.b16 %v44
  %v213 = vunpack.c.l.b16 %v45
  %v214 = vunpack.c.l.b16 %v46
  %v215 = vunpack.c.l.b16 %v47
  %v216 = vunpack.c.l.b16 %v48
  %v217 = vunpack.c.l.b16 %v49
  %v218 = vunpack.c.l.b16 %v50
  %v219 = vunpack.c.l.b16 %v51
  %v220 = vunpack.c.l.b16 %v52
  %v221 = vunpack.c.l.b16 %v53
  %v222 = vunpack.c.l.b16 %v54
  %v223 = vunpack.c.l.b16 %v55
  %v224 = vunpack.c.l.b16 %v56
  %v225 = vunpack.c.l.b16 %v57
  %v226 = vunpack.c.l.b16 %v58
  %v227 = vunpack.c.l.b16 %v59
  %v228 = vunpack.c.l.b16 %v60
  %v229 = vunpack.c.l.b16 %v61
  %v230 = vunpack.c.l.b16 %v62
  %v231 = vunpack.c.l.b16 %v63
  %v232 = vunpack.c.l.b16 %v64
  %v233 = vunpack.c.l.b16 %v65
  %v234 = vunpack.c.l.b16 %v66
  %v235 = vunpack.c.l.b16 %v67
  %v236 = vunpack.c.l.b16 %v68
  %v237 = vunpack.c.l.b16 %v69
  %v238 = vunpack.c.l.b16 %v70
  %v239 = vunpack.c.l.b16 %v71
  %v240 = vunpack.c.l.b16 %v72
  %v241 = vunpack.c.l.b16 %v73
  %v242 = vunpack.c.l.b16 %v74
  %v243 = vunpack.c.l.b16 %v75
  %v244 = vunpack.c.l.b16 %v76
  %v245 = vunpack.c.l.b16 %v77
  %v246 = vunpack.c.l.b16 %v78
  %v247 = vunpack.c.l.b16 %v79
  %v248 = vunpack.c.l.b16 %v80
  %v249 = vunpack.c.l.b16 %v81
  %v250 = vunpack.c.l.b16 %v82
  %v251 = vunpack.c.l.b16 %v83
  %v252 = vunpack.c.l.b16 %v84
  %v253 = vunpack.c.l.b16 %v85
  %v254 = vunpack.c.l.b16 %v86
  %v255 = vunpack.c.l.b16 %v87
  %v256 = vunpack.c.l.b16 %v88
  %v257 = vunpack.c.l.b16 %v89
  %v258 = vunpack.c.l.b16 %v90
  %v259 = vunpack.c.l.b16 %v91
  %v260 = vunpack.c.l.b16 %v92
  %v261 = vunpack.c.l.b16 %v93
  %v262 = vunpack.c.l.b16 %v94
  %v263 = vunpack.c.l.b16 %v95
  %v264 = vunpack.c.l.b16 %v96
  %v265 = vunpack.c.l.b16 %v97
  %v266 = vunpack.c.l.b16 %v98
  %v267 = vpack.c.b16 %v204, %v203
  %v268 = vpack.c.b16 %v206, %v205
  %v269 = vpack.c.b16 %v208, %v207
  %v270 = vpack.c.b16 %v210, %v209
  %v271 = vpack.c.b16 %v212, %v211
  %v272 = vpack.c.b16 %v214, %v213
  %v273 = vpack.c.b16 %v216, %v215
  %v274 = vpack.c.b16 %v218, %v217
  %v275 = vpack.c.b16 %v220, %v219
  %v276 = vpack.c.b16 %v222, %v221
  %v277 = vpack.c.b16 %v224, %v223
  %v278 = vpack.c.b16 %v226, %v225
  %v279 = vpack.c.b16 %v228, %v227
  %v280 = vpack.c.b16 %v230, %v229
  %v281 = vpack.c.b16 %v232, %v231
  %v282 = vpack.c.b16 %v234, %v233
  %v283 = vpack.c.b16 %v236, %v235
  %v284 = vpack.c.b16 %v238, %v237
  %v285 = vpack.c.b16 %v240, %v239
  %v286 = vpack.c.b16 %v242, %v241
  %v287 = vpack.c.b16 %v244, %v243
  %v288 = vpack.c.b16 %v246, %v245
  %v289 = vpack.c.b16 %v248, %v247
  %v290 = vpack.c.b16 %v250, %v249
  %v291 = vpack.c.b16 %v252, %v251
  %v292 = vpack.c.b16 %v254, %v253
  %v293 = vpack.c.b16 %v256, %v255
  %v294 = vpack.c.b16 %v258, %v257
  %v295 = vpack.c.b16 %v260, %v259
  %v296 = vpack.c.b16 %v262, %v261
  %v297 = vpack.c.b16 %v264, %v263
  %v298 = vpack.c.b16 %v266, %v265
  %331 = vmatprep.subr.bf16.mxu0 0
  %332 = vmatpush1.bf16.msra.mxu0 %v267
  %333 = vmatprep.subr.bf16.mxu0 0
  %334 = vmatpush1.bf16.msra.mxu0 %v268
  %335 = vmatprep.subr.bf16.mxu0 0
  %336 = vmatpush1.bf16.msra.mxu0 %v269
  %337 = vmatprep.subr.bf16.mxu0 0
  %338 = vmatpush1.bf16.msra.mxu0 %v270
  %339 = vmatprep.subr.bf16.mxu0 0
  %340 = vmatpush1.bf16.msra.mxu0 %v271
  %341 = vmatprep.subr.bf16.mxu0 0
  %342 = vmatpush1.bf16.msra.mxu0 %v272
  %343 = vmatprep.subr.bf16.mxu0 0
  %344 = vmatpush1.bf16.msra.mxu0 %v273
  %345 = vmatprep.subr.bf16.mxu0 0
  %346 = vmatpush1.bf16.msra.mxu0 %v274
  %347 = vmatprep.subr.bf16.mxu0 0
  %348 = vmatpush1.bf16.msra.mxu0 %v275
  %349 = vmatprep.subr.bf16.mxu0 0
  %350 = vmatpush1.bf16.msra.mxu0 %v276
  %351 = vmatprep.subr.bf16.mxu0 0
  %352 = vmatpush1.bf16.msra.mxu0 %v277
  %353 = vmatprep.subr.bf16.mxu0 0
  %354 = vmatpush1.bf16.msra.mxu0 %v278
  %355 = vmatprep.subr.bf16.mxu0 0
  %356 = vmatpush1.bf16.msra.mxu0 %v279
  %357 = vmatprep.subr.bf16.mxu0 0
  %358 = vmatpush1.bf16.msra.mxu0 %v280
  %359 = vmatprep.subr.bf16.mxu0 0
  %360 = vmatpush1.bf16.msra.mxu0 %v281
  %361 = vmatprep.subr.bf16.mxu0 0
  %362 = vmatpush1.bf16.msra.mxu0 %v282
  %363 = vmatprep.mubr.bf16.mxu0 %v124
  %364 = vmatmul.mubr.bf16.gmra.mrb[0].mxu0 %v123
  %v365 = vpop.f32.mrb[0].mxu0
  %v366 = vadd.f32 0.0, %v365
  %v367 = vpop.f32.mrb[0].mxu0
  %v368 = vpop.f32.mrb[0].mxu0
  %v369 = vadd.f32 0.0, %v368
  %v370 = vpop.f32.mrb[0].mxu0
  %371 = vmatprep.mubr.bf16.mxu0 %v128
  %372 = vmatmul.mubr.bf16.gmra.mrb[0].mxu0 %v127
  %v373 = vpop.f32.mrb[0].mxu0
  %v374 = vadd.f32 0.0, %v373
  %v375 = vpop.f32.mrb[0].mxu0
  %v376 = vpop.f32.mrb[0].mxu0
  %v377 = vadd.f32 0.0, %v376
  %v378 = vpop.f32.mrb[0].mxu0
  %379 = vdwg.mxu0
  %380 = vmatprep.subr.bf16.mxu0 0
  %381 = vmatpush1.bf16.msra.mxu0 %v283
  %382 = vmatprep.subr.bf16.mxu0 0
  %383 = vmatpush1.bf16.msra.mxu0 %v284
  %384 = vmatprep.subr.bf16.mxu0 0
  %385 = vmatpush1.bf16.msra.mxu0 %v285
  %386 = vmatprep.subr.bf16.mxu0 0
  %387 = vmatpush1.bf16.msra.mxu0 %v286
  %388 = vmatprep.subr.bf16.mxu0 0
  %389 = vmatpush1.bf16.msra.mxu0 %v287
  %390 = vmatprep.subr.bf16.mxu0 0
  %391 = vmatpush1.bf16.msra.mxu0 %v288
  %392 = vmatprep.subr.bf16.mxu0 0
  %393 = vmatpush1.bf16.msra.mxu0 %v289
  %394 = vmatprep.subr.bf16.mxu0 0
  %395 = vmatpush1.bf16.msra.mxu0 %v290
  %396 = vmatprep.subr.bf16.mxu0 0
  %397 = vmatpush1.bf16.msra.mxu0 %v291
  %398 = vmatprep.subr.bf16.mxu0 0
  %399 = vmatpush1.bf16.msra.mxu0 %v292
  %400 = vmatprep.subr.bf16.mxu0 0
  %401 = vmatpush1.bf16.msra.mxu0 %v293
  %402 = vmatprep.subr.bf16.mxu0 0
  %403 = vmatpush1.bf16.msra.mxu0 %v294
  %404 = vmatprep.subr.bf16.mxu0 0
  %405 = vmatpush1.bf16.msra.mxu0 %v295
  %406 = vmatprep.subr.bf16.mxu0 0
  %407 = vmatpush1.bf16.msra.mxu0 %v296
  %408 = vmatprep.subr.bf16.mxu0 0
  %409 = vmatpush1.bf16.msra.mxu0 %v297
  %410 = vmatprep.subr.bf16.mxu0 0
  %411 = vmatpush1.bf16.msra.mxu0 %v298
  %412 = vmatprep.mubr.bf16.mxu0 %v126
  %413 = vmatmul.mubr.bf16.gmra.mrb[0].mxu0 %v125
  %v414 = vpop.f32.mrb[0].mxu0
  %v415 = vadd.f32 %v366, %v414
  %v416 = vpop.f32.mrb[0].mxu0
  %v417 = vpop.f32.mrb[0].mxu0
  %v418 = vadd.f32 %v369, %v417
  %v419 = vpop.f32.mrb[0].mxu0
  %420 = vmatprep.mubr.bf16.mxu0 %v130
  %421 = vmatmul.mubr.bf16.gmra.mrb[0].mxu0 %v129
  %v422 = vpop.f32.mrb[0].mxu0
  %v423 = vadd.f32 %v374, %v422
  %v424 = vpop.f32.mrb[0].mxu0
  %v425 = vpop.f32.mrb[0].mxu0
  %v426 = vadd.f32 %v377, %v425
  %v427 = vpop.f32.mrb[0].mxu0
  %428 = vdwg.mxu0
  %v429 = vadd.f32 %v23, %v415
  %v430 = vadd.f32 %v24, %v418
  %v431 = vadd.f32 %v25, %v423
  %v432 = vadd.f32 %v26, %v426
  %433 = vst [vmem:[#allocation2] sm:$0xff] %v429
  %434 = vst [vmem:[#allocation2 + $0x8] sm:$0xff] %v430
  %435 = vst [vmem:[#allocation2 + $0x10] sm:$0xff] %v431
  %436 = vst [vmem:[#allocation2 + $0x18] sm:$0xff] %v432
  // Predicated region
  $region18: #{generator_forward.96} parent=0 // pred_check
    %p437 = pneg %p15
  $region19: #{generator_forward.96} parent=0 // pred_check_branch
    %439 = sbr.rel (%p437) target = $region21
  $region20: #{generator_forward.96} parent=0 // pred_region
    %v440 = vld [vmem:[#allocation2] sm:$0xff]
    %v441 = vld [vmem:[#allocation2 + $0x8] sm:$0xff]
    %v442 = vld [vmem:[#allocation2 + $0x10] sm:$0xff]
    %v443 = vld [vmem:[#allocation2 + $0x18] sm:$0xff]
    %v444 = vld [vmem:[%s2] sm:$0x1]
    %v446 = vlaneseq
    %v447 = vshrl.u32 %v446, 7
    %v448 = vsub.s32 0, %v447
    %v449 = vrot.slane %v444, %v448
    %v451 = vadd.f32 %v440, %v449
    %v452 = vadd.f32 %v441, %v449
    %v453 = vadd.f32 %v442, %v449
    %v454 = vadd.f32 %v443, %v449
    %455 = vst [vmem:[%s3] sm:$0xff] %v451
    %456 = vst [vmem:[%s3 + $0x8] sm:$0xff] %v452
    %457 = vst [vmem:[%s3 + $0x10] sm:$0xff] %v453
    %458 = vst [vmem:[%s3 + $0x18] sm:$0xff] %v454
  $region21: #{generator_forward.96} parent=0 // pred_fallthru
    _
  // Predicated region
  $region22: #{generator_forward.96} parent=0 // pred_check
    _
  $region23: #{generator_forward.96} parent=0 // pred_check_branch
    %460 = sbr.rel (0) target = $region25
  $region24: #{generator_forward.96} parent=0 // pred_region
    _
  $region25: #{generator_forward.96} parent=0 // pred_fallthru
    _
  // Predicated region
  $region26: #{generator_forward.96} parent=0 // pred_check
    _
  $region27: #{generator_forward.96} parent=0 // pred_check_branch
    %462 = sbr.rel (0) target = $region29
  $region28: #{generator_forward.96} parent=0 // pred_region
    _
  $region29: #{generator_forward.96} parent=0 // pred_fallthru
    _

// kernel: generator_forward.98
$region0: #{generator_forward.98}
  #allocation0 [shape = 'u32[]', space=smem, size = 0x4, offset = 0x4, fixed_abs, tag = 'smem constant byte address 0x4 - core index']
  #allocation1 [shape = 'u32[144,128]{1,0:T(1,128)}', space=vmem, size = 0x12000, scoped, tag = 'internal scratch']
  #allocation2 [shape = 'f32[32,128]{1,0:T(8,128)}', space=vmem, size = 0x4000, scoped, tag = 'scratch operand']
  %s0 = inlined_call_operand.vmem [shape: bf16[32,1024], index: 0, kind: input, shape index: {}]
  %s1 = inlined_call_operand.vmem [shape: bf16[1024,128], index: 1, kind: input, shape index: {}]
  %s2 = inlined_call_operand.vmem [shape: f32[1,128], index: 2, kind: input, shape index: {}]
  %s3 = inlined_call_operand.vmem [shape: f32[32,128], index: 3, kind: output, shape index: {}]
  %s4 = sld [smem:[#allocation0]]
  $region76: #{generator_forward.98} parent=0
    _
  %s6 = ssub.s32 1, %s4
  %s7 = scalar_select 0, %s6, %s4
  $region1: #{generator_forward.98} parent=0
    #allocation3 [shape = 'u8[65536]{0}', space=vmem, size = 0x10000, scoped, tag = 'input window, operand 0']
    loop: start=0, step=1, limit=4
    $region2: #{generator_forward.98} parent=1 // loop_pre_header
      _
    $region3: #{generator_forward.98} parent=1 // loop_header
      %s9 = sphi 0, %s13
      %p10 = scmp.ge.s32.totalorder %s9, 4
      %s16 = sphi 0, %s35
      %s17 = sphi 0, %s31
      %s18 = sphi 0, %s27
      %s19 = sphi 0, %s16
      %s20 = sphi 0, %s17
      %s21 = sphi 0, %s18
      %s22 = sphi 0, %s19
      %s23 = sphi 0, %s20
      %s24 = sphi 0, %s21
      %s40 = sphi 0, %s42
      %s43 = sphi 0, %s40
      %s44 = sphi 0, %s43
      %s60 = sphi 0, %s44
      %s68 = sphi 0, %s70
      %s71 = sphi 0, %s68
      %s72 = sphi 0, %s71
      %s88 = sphi 0, %s72
      %s94 = sphi 0, %s96
      %s97 = sphi 0, %s94
      %s98 = sphi 0, %s97
      %s114 = sphi 0, %s98
      %s122 = sphi 0, %s124
      %s125 = sphi 0, %s122
      %s126 = sphi 0, %s125
      %s142 = sphi 0, %s126
    $region4: #{generator_forward.98} parent=1 // loop_header_branch
      %12 = sbr.rel (%p10) target = $region8
    $region5: #{generator_forward.98} parent=1 // loop_body
      %s14 = ssub.s32 %s9, 1
      %s15 = ssub.s32 %s9, 2
      %s25 = sadd.s32 1, %s18
      %p26 = scmp.ge.s32.totalorder %s25, 2
      %s27 = scalar_select %p26, 0, %s25
      %s28 = sadd.s32 1, %s17
      %s29 = scalar_select %p26, %s28, %s17
      %p30 = scmp.ge.s32.totalorder %s29, 1
      %s31 = scalar_select %p30, 0, %s29
      %s32 = sadd.s32 1, %s16
      %s33 = scalar_select %p30, %s32, %s16
      %p34 = scmp.ge.s32.totalorder %s33, 1
      %s35 = scalar_select %p34, 0, %s33
      %s36 = ssub.s32 %s16, %s35
      %s37 = ssub.s32 %s18, %s27
      %s38 = sor.u32 %s36, %s37
      %p39 = scmp.eq.s32.totalorder %s38, 0
      %s41 = sadd.s32 %s40, 1
      %s42 = scalar_select %p39, %s40, %s41
      %p45 = pneg %p39
      %p46 = scmp.eq.s32.totalorder %s9, 1
      %p47 = por %p45, %p46
      %p48 = scmp.ne.s32.totalorder %s40, %s43
      %p49 = scmp.eq.s32.totalorder %s9, 0
      %p50 = por %p48, %p49
      %p51 = scmp.ne.s32.totalorder %s40, %s43
      %p52 = scmp.eq.s32.totalorder %s14, 1
      %p53 = por %p51, %p52
      %p54 = scmp.ne.s32.totalorder %s43, %s44
      %p55 = scmp.eq.s32.totalorder %s14, 0
      %p56 = por %p54, %p55
      %p57 = scmp.ne.s32.totalorder %s43, %s44
      %p58 = scmp.eq.s32.totalorder %s15, 1
      %p59 = por %p57, %p58
      %p61 = scmp.ne.s32.totalorder %s44, %s60
      %p62 = scmp.eq.s32.totalorder %s15, 0
      %p63 = por %p61, %p62
      %s64 = ssub.s32 %s18, %s27
      %s65 = ssub.s32 %s17, %s31
      %s66 = sor.u32 %s64, %s65
      %p67 = scmp.eq.s32.totalorder %s66, 0
      %s69 = sadd.s32 %s68, 1
      %s70 = scalar_select %p67, %s68, %s69
      %p73 = pneg %p67
      %p74 = scmp.eq.s32.totalorder %s9, 1
      %p75 = por %p73, %p74
      %p76 = scmp.ne.s32.totalorder %s68, %s71
      %p77 = scmp.eq.s32.totalorder %s9, 0
      %p78 = por %p76, %p77
      %p79 = scmp.ne.s32.totalorder %s68, %s71
      %p80 = scmp.eq.s32.totalorder %s14, 1
      %p81 = por %p79, %p80
      %p82 = scmp.ne.s32.totalorder %s71, %s72
      %p83 = scmp.eq.s32.totalorder %s14, 0
      %p84 = por %p82, %p83
      %p85 = scmp.ne.s32.totalorder %s71, %s72
      %p86 = scmp.eq.s32.totalorder %s15, 1
      %p87 = por %p85, %p86
      %p89 = scmp.ne.s32.totalorder %s72, %s88
      %p90 = scmp.eq.s32.totalorder %s15, 0
      %p91 = por %p89, %p90
      %s92 = ssub.s32 %s17, %s31
      %p93 = scmp.eq.s32.totalorder %s92, 0
      %s95 = sadd.s32 %s94, 1
      %s96 = scalar_select %p93, %s94, %s95
      %p99 = pneg %p93
      %p100 = scmp.eq.s32.totalorder %s9, 1
      %p101 = por %p99, %p100
      %p102 = scmp.ne.s32.totalorder %s94, %s97
      %p103 = scmp.eq.s32.totalorder %s9, 0
      %p104 = por %p102, %p103
      %p105 = scmp.ne.s32.totalorder %s94, %s97
      %p106 = scmp.eq.s32.totalorder %s14, 1
      %p107 = por %p105, %p106
      %p108 = scmp.ne.s32.totalorder %s97, %s98
      %p109 = scmp.eq.s32.totalorder %s14, 0
      %p110 = por %p108, %p109
      %p111 = scmp.ne.s32.totalorder %s97, %s98
      %p112 = scmp.eq.s32.totalorder %s15, 1
      %p113 = por %p111, %p112
      %p115 = scmp.ne.s32.totalorder %s98, %s114
      %p116 = scmp.eq.s32.totalorder %s15, 0
      %p117 = por %p115, %p116
      %s118 = ssub.s32 %s16, %s35
      %s119 = ssub.s32 %s17, %s31
      %s120 = sor.u32 %s118, %s119
      %p121 = scmp.eq.s32.totalorder %s120, 0
      %s123 = sadd.s32 %s122, 1
      %s124 = scalar_select %p121, %s122, %s123
      %p127 = pneg %p121
      %p128 = scmp.eq.s32.totalorder %s9, 1
      %p129 = por %p127, %p128
      %p130 = scmp.ne.s32.totalorder %s122, %s125
      %p131 = scmp.eq.s32.totalorder %s9, 0
      %p132 = por %p130, %p131
      %p133 = scmp.ne.s32.totalorder %s122, %s125
      %p134 = scmp.eq.s32.totalorder %s14, 1
      %p135 = por %p133, %p134
      %p136 = scmp.ne.s32.totalorder %s125, %s126
      %p137 = scmp.eq.s32.totalorder %s14, 0
      %p138 = por %p136, %p137
      %p139 = scmp.ne.s32.totalorder %s125, %s126
      %p140 = scmp.eq.s32.totalorder %s15, 1
      %p141 = por %p139, %p140
      %p143 = scmp.ne.s32.totalorder %s126, %s142
      %p144 = scmp.eq.s32.totalorder %s15, 0
      %p145 = por %p143, %p144
      %p146 = scmp.le.s32.totalorder 1, %s9
      %p147 = scmp.lt.s32.totalorder %s9, 3
      %p148 = pnand %p146, %p147
      %p149 = pneg %p148
      // Predicated region
      $region9: #{generator_forward.98} parent=5 // pred_check
        _
      $region10: #{generator_forward.98} parent=5 // pred_check_branch
        %151 = sbr.rel (%p148) target = $region12
      $region11: #{generator_forward.98} parent=5 // pred_region
        %s152 = ssub.s32 %s9, 1
        // Predicated region
        $region13: #{generator_forward.98} parent=11 // pred_check
          %p153 = pneg %p110
        $region14: #{generator_forward.98} parent=11 // pred_check_branch
          %155 = sbr.rel (%p153) target = $region16
        $region15: #{generator_forward.98} parent=11 // pred_region
          %p156 = scmp.lt.s32.totalorder %s20, 0
          %s157 = scalar_select %p156, %s20, 0
          %s158 = scalar_lea.vmem %s2, %s157
        $region16: #{generator_forward.98} parent=11 // pred_fallthru
          _
      $region12: #{generator_forward.98} parent=5 // pred_fallthru
        _
      %p159 = scmp.lt.s32.totalorder %s9, 2
      // Predicated region
      $region17: #{generator_forward.98} parent=5 // pred_check
        %p160 = pneg %p159
      $region18: #{generator_forward.98} parent=5 // pred_check_branch
        %162 = sbr.rel (%p160) target = $region20
      $region19: #{generator_forward.98} parent=5 // pred_region
        // Predicated region
        $region21: #{generator_forward.98} parent=19 // pred_check
          %p163 = pneg %p50
        $region22: #{generator_forward.98} parent=19 // pred_check_branch
          %165 = sbr.rel (%p163) target = $region24
        $region23: #{generator_forward.98} parent=19 // pred_region
          %s166 = sand.u32 %s40, 1
          %s167 = sand.u32 %s40, 1
          %s168 = smul.addr %s167, 64
          %s169 = scalar_lea.vmem [#allocation3], %s168
          %s170 = smul.u32 4, %s16
          %s171 = smul.u32 4, %s18
          %s172 = smul.addr %s170, 8
          %s173 = sadd.s32 %s171, %s172
          %s174 = smul.addr %s173, 4
          %s175 = scalar_lea.vmem %s0, %s174
          // Predicated region
          $region25: #{generator_forward.98} parent=23 // pred_check
            _
          $region26: #{generator_forward.98} parent=23 // pred_check_branch
            %177 = sbr.rel (0) target = $region28
          $region27: #{generator_forward.98} parent=23 // pred_region
            // Predicated region
            $region29: #{generator_forward.98} parent=27 // pred_check
              _
            $region30: #{generator_forward.98} parent=27 // pred_check_branch
              %179 = sbr.rel (0) target = $region32
            $region31: #{generator_forward.98} parent=27 // pred_region
              loop: start=0, step=1, limit=1
              $region33: #{generator_forward.98} parent=31 // loop_pre_header
                _
              $region34: #{generator_forward.98} parent=31 // loop_header
                %s181 = sphi 0, %s185
                %p182 = scmp.ge.s32.totalorder %s181, 1
                %s186 = sphi %s175, %s175
                %s187 = sphi %s169, %s169
              $region35: #{generator_forward.98} parent=31 // loop_header_branch
                %184 = sbr.rel (%p182) target = $region39
              $region36: #{generator_forward.98} parent=31 // loop_body
                %v188 = vld [vmem:[%s186] sm:$0xff]
                %189 = vst [vmem:[%s187] sm:$0xff] %v188
                %v190 = vld [vmem:[%s186 + $0x8] sm:$0xff]
                %191 = vst [vmem:[%s187 + $0x8] sm:$0xff] %v190
                %v192 = vld [vmem:[%s186 + $0x20] sm:$0xff]
                %193 = vst [vmem:[%s187 + $0x10] sm:$0xff] %v192
                %v194 = vld [vmem:[%s186 + $0x28] sm:$0xff]
                %195 = vst [vmem:[%s187 + $0x18] sm:$0xff] %v194
                %v196 = vld [vmem:[%s186 + $0x40] sm:$0xff]
                %197 = vst [vmem:[%s187 + $0x20] sm:$0xff] %v196
                %v198 = vld [vmem:[%s186 + $0x48] sm:$0xff]
                %199 = vst [vmem:[%s187 + $0x28] sm:$0xff] %v198
                %v200 = vld [vmem:[%s186 + $0x60] sm:$0xff]
                %201 = vst [vmem:[%s187 + $0x30] sm:$0xff] %v200
                %v202 = vld [vmem:[%s186 + $0x68] sm:$0xff]
                %203 = vst [vmem:[%s187 + $0x38] sm:$0xff] %v202
              $region37: #{generator_forward.98} parent=31 // loop_footer
                %s185 = sadd.s32 1, %s181
              $region38: #{generator_forward.98} parent=31 // loop_footer_branch
                %180 = sbr.rel target = $region34
              $region39: #{generator_forward.98} parent=31 // loop_exit
                _
            $region32: #{generator_forward.98} parent=27 // pred_fallthru
              _
            // Predicated region
            $region40: #{generator_forward.98} parent=27 // pred_check
              _
            $region41: #{generator_forward.98} parent=27 // pred_check_branch
              %205 = sbr.rel target = $region43
            $region42: #{generator_forward.98} parent=27 // pred_region
              _
            $region43: #{generator_forward.98} parent=27 // pred_fallthru
              _
          $region28: #{generator_forward.98} parent=23 // pred_fallthru
            _
          %206 = vnop
        $region24: #{generator_forward.98} parent=19 // pred_fallthru
          _
        // Predicated region
        $region44: #{generator_forward.98} parent=19 // pred_check
          %p207 = pneg %p78
        $region45: #{generator_forward.98} parent=19 // pred_check_branch
          %209 = sbr.rel (%p207) target = $region47
        $region46: #{generator_forward.98} parent=19 // pred_region
          %s210 = smul.u32 64, %s18
          %p211 = scmp.lt.s32.totalorder %s210, 127
          %s212 = scalar_select %p211, %s210, 127
          %p213 = scmp.lt.s32.totalorder %s17, 0
          %s214 = scalar_select %p213, %s17, 0
          %s215 = sadd.s32 %s214, %s212
          %s216 = smul.addr %s215, 4
          %s217 = scalar_lea.vmem %s1, %s216
          %s218 = smul.u32 64, %s18
        $region47: #{generator_forward.98} parent=19 // pred_fallthru
          _
      $region20: #{generator_forward.98} parent=5 // pred_fallthru
        _
      %p219 = scmp.le.s32.totalorder 1, %s9
      %p220 = scmp.lt.s32.totalorder %s9, 3
      %p221 = pnand %p219, %p220
      %p222 = pneg %p221
      // Predicated region
      $region48: #{generator_forward.98} parent=5 // pred_check
        _
      $region49: #{generator_forward.98} parent=5 // pred_check_branch
        %224 = sbr.rel (%p221) target = $region51
      $region50: #{generator_forward.98} parent=5 // pred_region
        %s225 = ssub.s32 %s9, 1
        %s226 = sand.u32 %s43, 1
        %s227 = sand.u32 %s43, 1
        %s228 = smul.addr %s227, 64
        %s229 = scalar_lea.vmem [#allocation3], %s228
        // Predicated region
        $region52: #{generator_forward.98} parent=50 // pred_check
          %p230 = pneg %p56
        $region53: #{generator_forward.98} parent=50 // pred_check_branch
          %232 = sbr.rel (%p230) target = $region55
        $region54: #{generator_forward.98} parent=50 // pred_region
          _
        $region55: #{generator_forward.98} parent=50 // pred_fallthru
          _
        %s233 = sand.u32 %s43, 1
        %s234 = sand.u32 %s43, 1
        %s235 = smul.addr %s234, 64
        %s236 = scalar_lea.vmem [#allocation3], %s235
        %p237 = pneg %p56
        %p238 = pneg %p53
        %s239 = smul.u32 64, %s21
        %p240 = scmp.lt.s32.totalorder %s239, 127
        %s241 = scalar_select %p240, %s239, 127
        %p242 = scmp.lt.s32.totalorder %s20, 0
        %s243 = scalar_select %p242, %s20, 0
        %s244 = sadd.s32 %s243, %s241
        %s245 = smul.addr %s244, 4
        %s246 = scalar_lea.vmem %s1, %s245
        %p247 = pneg %p84
        %p248 = pneg %p81
        %p249 = scmp.lt.s32.totalorder %s20, 0
        %s250 = scalar_select %p249, %s20, 0
        %s251 = scalar_lea.vmem %s2, %s250
        %p252 = pneg %p110
        %p253 = pneg %p107
        %p254 = pneg %p138
        %p255 = pneg %p135
        %s256 = smul.u32 4, %s19
        %p257 = scmp.lt.s32.totalorder %s256, 3
        %s258 = scalar_select %p257, %s256, 3
        %p259 = scmp.lt.s32.totalorder %s20, 0
        %s260 = scalar_select %p259, %s20, 0
        %s261 = sadd.s32 %s260, %s258
        %s262 = smul.addr %s261, 8
        %s263 = scalar_lea.vmem %s3, %s262
        %s264 = smul.u32 4, %s19
        %s265 = smul.u32 4, %s21
        %s266 = smul.u32 64, %s21
        %p267 = scmp.lt.s32.totalorder %s266, 127
        %s268 = scalar_select %p267, %s266, 127
        %p269 = scmp.lt.s32.totalorder %s20, 0
        %s270 = scalar_select %p269, %s20, 0
        %s271 = sadd.s32 %s270, %s268
        %s272 = smul.addr %s271, 4
        %s273 = scalar_lea.vmem %s1, %s272
        %s274 = smul.u32 64, %s21
        %p275 = scmp.lt.s32.totalorder %s20, 0
        %s276 = scalar_select %p275, %s20, 0
        %s277 = scalar_lea.vmem %s2, %s276
        %s278 = smul.u32 4, %s19
        %p279 = scmp.lt.s32.totalorder %s278, 3
        %s280 = scalar_select %p279, %s278, 3
        %p281 = scmp.lt.s32.totalorder %s20, 0
        %s282 = scalar_select %p281, %s20, 0
        %s283 = sadd.s32 %s282, %s280
        %s284 = smul.addr %s283, 8
        %s285 = scalar_lea.vmem %s3, %s284
        %s286 = smul.u32 4, %s19
        %p288 = scmp.eq.s32.totalorder %s21, 0
        // Predicated region
        $region56: #{generator_forward.98} parent=50 // pred_check
          %p289 = pneg %p288
        $region57: #{generator_forward.98} parent=50 // pred_check_branch
          %291 = sbr.rel (%p289) target = $region59
        $region58: #{generator_forward.98} parent=50 // pred_region
          %292 = vst [vmem:[#allocation2] sm:$0xff] 0.0
          %293 = vst [vmem:[#allocation2 + $0x8] sm:$0xff] 0.0
          %294 = vst [vmem:[#allocation2 + $0x10] sm:$0xff] 0.0
          %295 = vst [vmem:[#allocation2 + $0x18] sm:$0xff] 0.0
        $region59: #{generator_forward.98} parent=50 // pred_fallthru
          _
        %v296 = vld [vmem:[#allocation2] sm:$0xff]
        %v297 = vld [vmem:[#allocation2 + $0x8] sm:$0xff]
        %v298 = vld [vmem:[#allocation2 + $0x10] sm:$0xff]
        %v299 = vld [vmem:[#allocation2 + $0x18] sm:$0xff]
        %v300 = vld [vmem:[%s229] sm:$0xff]
        %v301 = vld [vmem:[%s229 + $0x8] sm:$0xff]
        %v302 = vld [vmem:[%s229 + $0x10] sm:$0xff]
        %v303 = vld [vmem:[%s229 + $0x18] sm:$0xff]
        %v304 = vld [vmem:[%s229 + $0x20] sm:$0xff]
        %v305 = vld [vmem:[%s229 + $0x28] sm:$0xff]
        %v306 = vld [vmem:[%s229 + $0x30] sm:$0xff]
        %v307 = vld [vmem:[%s229 + $0x38] sm:$0xff]
        %v308 = vld [vmem:[%s273] sm:$0xf]
        %v309 = vld [vmem:[%s273 + $0x4] sm:$0xf]
        %v310 = vld [vmem:[%s273 + $0x8] sm:$0xf]
        %v311 = vld [vmem:[%s273 + $0xc] sm:$0xf]
        %v312 = vld [vmem:[%s273 + $0x10] sm:$0xf]
        %v313 = vld [vmem:[%s273 + $0x14] sm:$0xf]
        %v314 = vld [vmem:[%s273 + $0x18] sm:$0xf]
        %v315 = vld [vmem:[%s273 + $0x1c] sm:$0xf]
        %v316 = vld [vmem:[%s273 + $0x20] sm:$0xf]
        %v317 = vld [vmem:[%s273 + $0x24] sm:$0xf]
        %v318 = vld [vmem:[%s273 + $0x28] sm:$0xf]
        %v319 = vld [vmem:[%s273 + $0x2c] sm:$0xf]
        %v320 = vld [vmem:[%s273 + $0x30] sm:$0xf]
        %v321 = vld [vmem:[%s273 + $0x34] sm:$0xf]
        %v322 = vld [vmem:[%s273 + $0x38] sm:$0xf]
        %v323 = vld [vmem:[%s273 + $0x3c] sm:$0xf]
        %v324 = vld [vmem:[%s273 + $0x40] sm:$0xf]
        %v325 = vld [vmem:[%s273 + $0x44] sm:$0xf]
        %v326 = vld [vmem:[%s273 + $0x48] sm:$0xf]
        %v327 = vld [vmem:[%s273 + $0x4c] sm:$0xf]
        %v328 = vld [vmem:[%s273 + $0x50] sm:$0xf]
        %v329 = vld [vmem:[%s273 + $0x54] sm:$0xf]
        %v330 = vld [vmem:[%s273 + $0x58] sm:$0xf]
        %v331 = vld [vmem:[%s273 + $0x5c] sm:$0xf]
        %v332 = vld [vmem:[%s273 + $0x60] sm:$0xf]
        %v333 = vld [vmem:[%s273 + $0x64] sm:$0xf]
        %v334 = vld [vmem:[%s273 + $0x68] sm:$0xf]
        %v335 = vld [vmem:[%s273 + $0x6c] sm:$0xf]
        %v336 = vld [vmem:[%s273 + $0x70] sm:$0xf]
        %v337 = vld [vmem:[%s273 + $0x74] sm:$0xf]
        %v338 = vld [vmem:[%s273 + $0x78] sm:$0xf]
        %v339 = vld [vmem:[%s273 + $0x7c] sm:$0xf]
        %v340 = vld [vmem:[%s273 + $0x80] sm:$0xf]
        %v341 = vld [vmem:[%s273 + $0x84] sm:$0xf]
        %v342 = vld [vmem:[%s273 + $0x88] sm:$0xf]
        %v343 = vld [vmem:[%s273 + $0x8c] sm:$0xf]
        %v344 = vld [vmem:[%s273 + $0x90] sm:$0xf]
        %v345 = vld [vmem:[%s273 + $0x94] sm:$0xf]
        %v346 = vld [vmem:[%s273 + $0x98] sm:$0xf]
        %v347 = vld [vmem:[%s273 + $0x9c] sm:$0xf]
        %v348 = vld [vmem:[%s273 + $0xa0] sm:$0xf]
        %v349 = vld [vmem:[%s273 + $0xa4] sm:$0xf]
        %v350 = vld [vmem:[%s273 + $0xa8] sm:$0xf]
        %v351 = vld [vmem:[%s273 + $0xac] sm:$0xf]
        %v352 = vld [vmem:[%s273 + $0xb0] sm:$0xf]
        %v353 = vld [vmem:[%s273 + $0xb4] sm:$0xf]
        %v354 = vld [vmem:[%s273 + $0xb8] sm:$0xf]
        %v355 = vld [vmem:[%s273 + $0xbc] sm:$0xf]
        %v356 = vld [vmem:[%s273 + $0xc0] sm:$0xf]
        %v357 = vld [vmem:[%s273 + $0xc4] sm:$0xf]
        %v358 = vld [vmem:[%s273 + $0xc8] sm:$0xf]
        %v359 = vld [vmem:[%s273 + $0xcc] sm:$0xf]
        %v360 = vld [vmem:[%s273 + $0xd0] sm:$0xf]
        %v361 = vld [vmem:[%s273 + $0xd4] sm:$0xf]
        %v362 = vld [vmem:[%s273 + $0xd8] sm:$0xf]
        %v363 = vld [vmem:[%s273 + $0xdc] sm:$0xf]
        %v364 = vld [vmem:[%s273 + $0xe0] sm:$0xf]
        %v365 = vld [vmem:[%s273 + $0xe4] sm:$0xf]
        %v366 = vld [vmem:[%s273 + $0xe8] sm:$0xf]
        %v367 = vld [vmem:[%s273 + $0xec] sm:$0xf]
        %v368 = vld [vmem:[%s273 + $0xf0] sm:$0xf]
        %v369 = vld [vmem:[%s273 + $0xf4] sm:$0xf]
        %v370 = vld [vmem:[%s273 + $0xf8] sm:$0xf]
        %v371 = vld [vmem:[%s273 + $0xfc] sm:$0xf]
        %v380 = vunpack.c.l.b16 %v300
        %v381 = vunpack.c.h.b16 %v300
        %v382 = vunpack.c.l.b16 %v301
        %v383 = vunpack.c.h.b16 %v301
        %v384 = vunpack.c.l.b16 %v302
        %v385 = vunpack.c.h.b16 %v302
        %v386 = vunpack.c.l.b16 %v303
        %v387 = vunpack.c.h.b16 %v303
        %v388 = vunpack.c.l.b16 %v304
        %v389 = vunpack.c.h.b16 %v304
        %v390 = vunpack.c.l.b16 %v305
        %v391 = vunpack.c.h.b16 %v305
        %v392 = vunpack.c.l.b16 %v306
        %v393 = vunpack.c.h.b16 %v306
        %v394 = vunpack.c.l.b16 %v307
        %v395 = vunpack.c.h.b16 %v307
        %v396 = vpack.c.b16 %v384, %v380
        %v397 = vpack.c.b16 %v385, %v381
        %v398 = vpack.c.b16 %v386, %v382
        %v399 = vpack.c.b16 %v387, %v383
        %v400 = vpack.c.b16 %v392, %v388
        %v401 = vpack.c.b16 %v393, %v389
        %v402 = vpack.c.b16 %v394, %v390
        %v403 = vpack.c.b16 %v395, %v391
        %v476 = vunpack.c.l.b16 %v308
        %v477 = vunpack.c.l.b16 %v309
        %v478 = vunpack.c.l.b16 %v310
        %v479 = vunpack.c.l.b16 %v311
        %v480 = vunpack.c.l.b16 %v312
        %v481 = vunpack.c.l.b16 %v313
        %v482 = vunpack.c.l.b16 %v314
        %v483 = vunpack.c.l.b16 %v315
        %v484 = vunpack.c.l.b16 %v316
        %v485 = vunpack.c.l.b16 %v317
        %v486 = vunpack.c.l.b16 %v318
        %v487 = vunpack.c.l.b16 %v319
        %v488 = vunpack.c.l.b16 %v320
        %v489 = vunpack.c.l.b16 %v321
        %v490 = vunpack.c.l.b16 %v322
        %v491 = vunpack.c.l.b16 %v323
        %v492 = vunpack.c.l.b16 %v324
        %v493 = vunpack.c.l.b16 %v325
        %v494 = vunpack.c.l.b16 %v326
        %v495 = vunpack.c.l.b16 %v327
        %v496 = vunpack.c.l.b16 %v328
        %v497 = vunpack.c.l.b16 %v329
        %v498 = vunpack.c.l.b16 %v330
        %v499 = vunpack.c.l.b16 %v331
        %v500 = vunpack.c.l.b16 %v332
        %v501 = vunpack.c.l.b16 %v333
        %v502 = vunpack.c.l.b16 %v334
        %v503 = vunpack.c.l.b16 %v335
        %v504 = vunpack.c.l.b16 %v336
        %v505 = vunpack.c.l.b16 %v337
        %v506 = vunpack.c.l.b16 %v338
        %v507 = vunpack.c.l.b16 %v339
        %v508 = vunpack.c.l.b16 %v340
        %v509 = vunpack.c.l.b16 %v341
        %v510 = vunpack.c.l.b16 %v342
        %v511 = vunpack.c.l.b16 %v343
        %v512 = vunpack.c.l.b16 %v344
        %v513 = vunpack.c.l.b16 %v345
        %v514 = vunpack.c.l.b16 %v346
        %v515 = vunpack.c.l.b16 %v347
        %v516 = vunpack.c.l.b16 %v348
        %v517 = vunpack.c.l.b16 %v349
        %v518 = vunpack.c.l.b16 %v350
        %v519 = vunpack.c.l.b16 %v351
        %v520 = vunpack.c.l.b16 %v352
        %v521 = vunpack.c.l.b16 %v353
        %v522 = vunpack.c.l.b16 %v354
        %v523 = vunpack.c.l.b16 %v355
        %v524 = vunpack.c.l.b16 %v356
        %v525 = vunpack.c.l.b16 %v357
        %v526 = vunpack.c.l.b16 %v358
        %v527 = vunpack.c.l.b16 %v359
        %v528 = vunpack.c.l.b16 %v360
        %v529 = vunpack.c.l.b16 %v361
        %v530 = vunpack.c.l.b16 %v362
        %v531 = vunpack.c.l.b16 %v363
        %v532 = vunpack.c.l.b16 %v364
        %v533 = vunpack.c.l.b16 %v365
        %v534 = vunpack.c.l.b16 %v366
        %v535 = vunpack.c.l.b16 %v367
        %v536 = vunpack.c.l.b16 %v368
        %v537 = vunpack.c.l.b16 %v369
        %v538 = vunpack.c.l.b16 %v370
        %v539 = vunpack.c.l.b16 %v371
        %v540 = vpack.c.b16 %v477, %v476
        %v541 = vpack.c.b16 %v479, %v478
        %v542 = vpack.c.b16 %v481, %v480
        %v543 = vpack.c.b16 %v483, %v482
        %v544 = vpack.c.b16 %v485, %v484
        %v545 = vpack.c.b16 %v487, %v486
        %v546 = vpack.c.b16 %v489, %v488
        %v547 = vpack.c.b16 %v491, %v490
        %v548 = vpack.c.b16 %v493, %v492
        %v549 = vpack.c.b16 %v495, %v494
        %v550 = vpack.c.b16 %v497, %v496
        %v551 = vpack.c.b16 %v499, %v498
        %v552 = vpack.c.b16 %v501, %v500
        %v553 = vpack.c.b16 %v503, %v502
        %v554 = vpack.c.b16 %v505, %v504
        %v555 = vpack.c.b16 %v507, %v506
        %v556 = vpack.c.b16 %v509, %v508
        %v557 = vpack.c.b16 %v511, %v510
        %v558 = vpack.c.b16 %v513, %v512
        %v559 = vpack.c.b16 %v515, %v514
        %v560 = vpack.c.b16 %v517, %v516
        %v561 = vpack.c.b16 %v519, %v518
        %v562 = vpack.c.b16 %v521, %v520
        %v563 = vpack.c.b16 %v523, %v522
        %v564 = vpack.c.b16 %v525, %v524
        %v565 = vpack.c.b16 %v527, %v526
        %v566 = vpack.c.b16 %v529, %v528
        %v567 = vpack.c.b16 %v531, %v530
        %v568 = vpack.c.b16 %v533, %v532
        %v569 = vpack.c.b16 %v535, %v534
        %v570 = vpack.c.b16 %v537, %v536
        %v571 = vpack.c.b16 %v539, %v538
        %604 = vmatprep.subr.bf16.mxu0 0
        %605 = vmatpush1.bf16.msra.mxu0 %v540
        %606 = vmatprep.subr.bf16.mxu0 0
        %607 = vmatpush1.bf16.msra.mxu0 %v541
        %608 = vmatprep.subr.bf16.mxu0 0
        %609 = vmatpush1.bf16.msra.mxu0 %v542
        %610 = vmatprep.subr.bf16.mxu0 0
        %611 = vmatpush1.bf16.msra.mxu0 %v543
        %612 = vmatprep.subr.bf16.mxu0 0
        %613 = vmatpush1.bf16.msra.mxu0 %v544
        %614 = vmatprep.subr.bf16.mxu0 0
        %615 = vmatpush1.bf16.msra.mxu0 %v545
        %616 = vmatprep.subr.bf16.mxu0 0
        %617 = vmatpush1.bf16.msra.mxu0 %v546
        %618 = vmatprep.subr.bf16.mxu0 0
        %619 = vmatpush1.bf16.msra.mxu0 %v547
        %620 = vmatprep.subr.bf16.mxu0 0
        %621 = vmatpush1.bf16.msra.mxu0 %v548
        %622 = vmatprep.subr.bf16.mxu0 0
        %623 = vmatpush1.bf16.msra.mxu0 %v549
        %624 = vmatprep.subr.bf16.mxu0 0
        %625 = vmatpush1.bf16.msra.mxu0 %v550
        %626 = vmatprep.subr.bf16.mxu0 0
        %627 = vmatpush1.bf16.msra.mxu0 %v551
        %628 = vmatprep.subr.bf16.mxu0 0
        %629 = vmatpush1.bf16.msra.mxu0 %v552
        %630 = vmatprep.subr.bf16.mxu0 0
        %631 = vmatpush1.bf16.msra.mxu0 %v553
        %632 = vmatprep.subr.bf16.mxu0 0
        %633 = vmatpush1.bf16.msra.mxu0 %v554
        %634 = vmatprep.subr.bf16.mxu0 0
        %635 = vmatpush1.bf16.msra.mxu0 %v555
        %636 = vmatprep.mubr.bf16.mxu0 %v397
        %637 = vmatmul.mubr.bf16.gmra.mrb[0].mxu0 %v396
        %v638 = vpop.f32.mrb[0].mxu0
        %v639 = vadd.f32 0.0, %v638
        %v640 = vpop.f32.mrb[0].mxu0
        %v641 = vpop.f32.mrb[0].mxu0
        %v642 = vadd.f32 0.0, %v641
        %v643 = vpop.f32.mrb[0].mxu0
        %644 = vmatprep.mubr.bf16.mxu0 %v401
        %645 = vmatmul.mubr.bf16.gmra.mrb[0].mxu0 %v400
        %v646 = vpop.f32.mrb[0].mxu0
        %v647 = vadd.f32 0.0, %v646
        %v648 = vpop.f32.mrb[0].mxu0
        %v649 = vpop.f32.mrb[0].mxu0
        %v650 = vadd.f32 0.0, %v649
        %v651 = vpop.f32.mrb[0].mxu0
        %652 = vdwg.mxu0
        %653 = vmatprep.subr.bf16.mxu0 0
        %654 = vmatpush1.bf16.msra.mxu0 %v556
        %655 = vmatprep.subr.bf16.mxu0 0
        %656 = vmatpush1.bf16.msra.mxu0 %v557
        %657 = vmatprep.subr.bf16.mxu0 0
        %658 = vmatpush1.bf16.msra.mxu0 %v558
        %659 = vmatprep.subr.bf16.mxu0 0
        %660 = vmatpush1.bf16.msra.mxu0 %v559
        %661 = vmatprep.subr.bf16.mxu0 0
        %662 = vmatpush1.bf16.msra.mxu0 %v560
        %663 = vmatprep.subr.bf16.mxu0 0
        %664 = vmatpush1.bf16.msra.mxu0 %v561
        %665 = vmatprep.subr.bf16.mxu0 0
        %666 = vmatpush1.bf16.msra.mxu0 %v562
        %667 = vmatprep.subr.bf16.mxu0 0
        %668 = vmatpush1.bf16.msra.mxu0 %v563
        %669 = vmatprep.subr.bf16.mxu0 0
        %670 = vmatpush1.bf16.msra.mxu0 %v564
        %671 = vmatprep.subr.bf16.mxu0 0
        %672 = vmatpush1.bf16.msra.mxu0 %v565
        %673 = vmatprep.subr.bf16.mxu0 0
        %674 = vmatpush1.bf16.msra.mxu0 %v566
        %675 = vmatprep.subr.bf16.mxu0 0
        %676 = vmatpush1.bf16.msra.mxu0 %v567
        %677 = vmatprep.subr.bf16.mxu0 0
        %678 = vmatpush1.bf16.msra.mxu0 %v568
        %679 = vmatprep.subr.bf16.mxu0 0
        %680 = vmatpush1.bf16.msra.mxu0 %v569
        %681 = vmatprep.subr.bf16.mxu0 0
        %682 = vmatpush1.bf16.msra.mxu0 %v570
        %683 = vmatprep.subr.bf16.mxu0 0
        %684 = vmatpush1.bf16.msra.mxu0 %v571
        %685 = vmatprep.mubr.bf16.mxu0 %v399
        %686 = vmatmul.mubr.bf16.gmra.mrb[0].mxu0 %v398
        %v687 = vpop.f32.mrb[0].mxu0
        %v688 = vadd.f32 %v639, %v687
        %v689 = vpop.f32.mrb[0].mxu0
        %v690 = vpop.f32.mrb[0].mxu0
        %v691 = vadd.f32 %v642, %v690
        %v692 = vpop.f32.mrb[0].mxu0
        %693 = vmatprep.mubr.bf16.mxu0 %v403
        %694 = vmatmul.mubr.bf16.gmra.mrb[0].mxu0 %v402
        %v695 = vpop.f32.mrb[0].mxu0
        %v696 = vadd.f32 %v647, %v695
        %v697 = vpop.f32.mrb[0].mxu0
        %v698 = vpop.f32.mrb[0].mxu0
        %v699 = vadd.f32 %v650, %v698
        %v700 = vpop.f32.mrb[0].mxu0
        %701 = vdwg.mxu0
        %v702 = vadd.f32 %v296, %v688
        %v703 = vadd.f32 %v297, %v691
        %v704 = vadd.f32 %v298, %v696
        %v705 = vadd.f32 %v299, %v699
        %706 = vst [vmem:[#allocation2] sm:$0xff] %v702
        %707 = vst [vmem:[#allocation2 + $0x8] sm:$0xff] %v703
        %708 = vst [vmem:[#allocation2 + $0x10] sm:$0xff] %v704
        %709 = vst [vmem:[#allocation2 + $0x18] sm:$0xff] %v705
        %p710 = scmp.eq.s32.totalorder %s21, 1
        // Predicated region
        $region60: #{generator_forward.98} parent=50 // pred_check
          %p711 = pneg %p710
        $region61: #{generator_forward.98} parent=50 // pred_check_branch
          %713 = sbr.rel (%p711) target = $region63
        $region62: #{generator_forward.98} parent=50 // pred_region
          %v714 = vld [vmem:[#allocation2] sm:$0xff]
          %v715 = vld [vmem:[#allocation2 + $0x8] sm:$0xff]
          %v716 = vld [vmem:[#allocation2 + $0x10] sm:$0xff]
          %v717 = vld [vmem:[#allocation2 + $0x18] sm:$0xff]
          %v718 = vld [vmem:[%s277] sm:$0x1]
          %v720 = vlaneseq
          %v721 = vshrl.u32 %v720, 7
          %v722 = vsub.s32 0, %v721
          %v723 = vrot.slane %v718, %v722
          %v725 = vadd.f32 %v714, %v723
          %v726 = vadd.f32 %v715, %v723
          %v727 = vadd.f32 %v716, %v723
          %v728 = vadd.f32 %v717, %v723
          %729 = vst [vmem:[%s285] sm:$0xff] %v725
          %730 = vst [vmem:[%s285 + $0x8] sm:$0xff] %v726
          %731 = vst [vmem:[%s285 + $0x10] sm:$0xff] %v727
          %732 = vst [vmem:[%s285 + $0x18] sm:$0xff] %v728
        $region63: #{generator_forward.98} parent=50 // pred_fallthru
          _
        %s733 = smul.u32 4, %s19
        %p734 = scmp.lt.s32.totalorder %s733, 3
        %s735 = scalar_select %p734, %s733, 3
        %p736 = scmp.lt.s32.totalorder %s20, 0
        %s737 = scalar_select %p736, %s20, 0
        %s738 = sadd.s32 %s737, %s735
        %s739 = smul.addr %s738, 8
        %s740 = scalar_lea.vmem %s3, %s739
        // Predicated region
        $region64: #{generator_forward.98} parent=50 // pred_check
          %p741 = pneg %p135
        $region65: #{generator_forward.98} parent=50 // pred_check_branch
          %743 = sbr.rel (%p741) target = $region67
        $region66: #{generator_forward.98} parent=50 // pred_region
          %s744 = smul.u32 4, %s19
        $region67: #{generator_forward.98} parent=50 // pred_fallthru
          _
        // Predicated region
        $region68: #{generator_forward.98} parent=50 // pred_check
          %p745 = pneg %p135
        $region69: #{generator_forward.98} parent=50 // pred_check_branch
          %747 = sbr.rel (%p745) target = $region71
        $region70: #{generator_forward.98} parent=50 // pred_region
          %s748 = smul.u32 4, %s19
          %p749 = scmp.lt.s32.totalorder %s748, 3
          %s750 = scalar_select %p749, %s748, 3
          %p751 = scmp.lt.s32.totalorder %s20, 0
          %s752 = scalar_select %p751, %s20, 0
          %s753 = sadd.s32 %s752, %s750
          %s754 = smul.addr %s753, 8
          %s755 = scalar_lea.vmem %s3, %s754
        $region71: #{generator_forward.98} parent=50 // pred_fallthru
          _
      $region51: #{generator_forward.98} parent=5 // pred_fallthru
        _
      %p756 = scmp.le.s32.totalorder 2, %s9
      // Predicated region
      $region72: #{generator_forward.98} parent=5 // pred_check
        %p757 = pneg %p756
      $region73: #{generator_forward.98} parent=5 // pred_check_branch
        %759 = sbr.rel (%p757) target = $region75
      $region74: #{generator_forward.98} parent=5 // pred_region
        %s760 = ssub.s32 %s9, 2
      $region75: #{generator_forward.98} parent=5 // pred_fallthru
        _
    $region6: #{generator_forward.98} parent=1 // loop_footer
      %s13 = sadd.s32 1, %s9
    $region7: #{generator_forward.98} parent=1 // loop_footer_branch
      %8 = sbr.rel target = $region3
    $region8: #{generator_forward.98} parent=1 // loop_exit
      _

// kernel: generator_forward.101
$region0: #{generator_forward.101}
  #allocation0 [shape = 'u32[]', space=smem, size = 0x4, offset = 0x4, fixed_abs, tag = 'smem constant byte address 0x4 - core index']
  #allocation1 [shape = 'u32[144,128]{1,0:T(1,128)}', space=vmem, size = 0x12000, scoped, tag = 'internal scratch']
  #allocation2 [shape = 'f32[128,128]{1,0:T(8,128)}', space=vmem, size = 0x10000, scoped, tag = 'scratch operand']
  %s0 = inlined_call_operand.vmem [shape: bf16[128,256], index: 0, kind: input, shape index: {}]
  %s1 = inlined_call_operand.vmem [shape: bf16[256,128], index: 1, kind: input, shape index: {}]
  %s2 = inlined_call_operand.vmem [shape: f32[1,128], index: 2, kind: input, shape index: {}]
  %s3 = inlined_call_operand.vmem [shape: f32[128,128], index: 3, kind: output, shape index: {}]
  %s4 = sld [smem:[#allocation0]]
  $region30: #{generator_forward.101} parent=0
    _
  %s6 = ssub.s32 1, %s4
  %s7 = scalar_select 0, %s6, %s4
  // Predicated region
  $region2: #{generator_forward.101} parent=0 // pred_check
    _
  $region3: #{generator_forward.101} parent=0 // pred_check_branch
    %9 = sbr.rel (0) target = $region5
  $region4: #{generator_forward.101} parent=0 // pred_region
    _
  $region5: #{generator_forward.101} parent=0 // pred_fallthru
    _
  // Predicated region
  $region6: #{generator_forward.101} parent=0 // pred_check
    _
  $region7: #{generator_forward.101} parent=0 // pred_check_branch
    %11 = sbr.rel (0) target = $region9
  $region8: #{generator_forward.101} parent=0 // pred_region
    _
  $region9: #{generator_forward.101} parent=0 // pred_fallthru
    _
  // Predicated region
  $region10: #{generator_forward.101} parent=0 // pred_check
    _
  $region11: #{generator_forward.101} parent=0 // pred_check_branch
    %13 = sbr.rel (0) target = $region13
  $region12: #{generator_forward.101} parent=0 // pred_region
    _
  $region13: #{generator_forward.101} parent=0 // pred_fallthru
    _
  %p15 = scmp.eq.s32.totalorder 0, 0
  // Predicated region
  $region14: #{generator_forward.101} parent=0 // pred_check
    %p16 = pneg %p15
  $region15: #{generator_forward.101} parent=0 // pred_check_branch
    %18 = sbr.rel (%p16) target = $region17
  $region16: #{generator_forward.101} parent=0 // pred_region
    %19 = vst [vmem:[#allocation2] sm:$0xff] 0.0
    %20 = vst [vmem:[#allocation2 + $0x8] sm:$0xff] 0.0
    %21 = vst [vmem:[#allocation2 + $0x10] sm:$0xff] 0.0
    %22 = vst [vmem:[#allocation2 + $0x18] sm:$0xff] 0.0
    %23 = vst [vmem:[#allocation2 + $0x20] sm:$0xff] 0.0
    %24 = vst [vmem:[#allocation2 + $0x28] sm:$0xff] 0.0
    %25 = vst [vmem:[#allocation2 + $0x30] sm:$0xff] 0.0
    %26 = vst [vmem:[#allocation2 + $0x38] sm:$0xff] 0.0
    %27 = vst [vmem:[#allocation2 + $0x40] sm:$0xff] 0.0
    %28 = vst [vmem:[#allocation2 + $0x48] sm:$0xff] 0.0
    %29 = vst [vmem:[#allocation2 + $0x50] sm:$0xff] 0.0
    %30 = vst [vmem:[#allocation2 + $0x58] sm:$0xff] 0.0
    %31 = vst [vmem:[#allocation2 + $0x60] sm:$0xff] 0.0
    %32 = vst [vmem:[#allocation2 + $0x68] sm:$0xff] 0.0
    %33 = vst [vmem:[#allocation2 + $0x70] sm:$0xff] 0.0
    %34 = vst [vmem:[#allocation2 + $0x78] sm:$0xff] 0.0
  $region17: #{generator_forward.101} parent=0 // pred_fallthru
    _
  %v35 = vld [vmem:[#allocation2] sm:$0xff]
  %v36 = vld [vmem:[#allocation2 + $0x8] sm:$0xff]
  %v37 = vld [vmem:[#allocation2 + $0x10] sm:$0xff]
  %v38 = vld [vmem:[#allocation2 + $0x18] sm:$0xff]
  %v39 = vld [vmem:[#allocation2 + $0x20] sm:$0xff]
  %v40 = vld [vmem:[#allocation2 + $0x28] sm:$0xff]
  %v41 = vld [vmem:[#allocation2 + $0x30] sm:$0xff]
  %v42 = vld [vmem:[#allocation2 + $0x38] sm:$0xff]
  %v43 = vld [vmem:[#allocation2 + $0x40] sm:$0xff]
  %v44 = vld [vmem:[#allocation2 + $0x48] sm:$0xff]
  %v45 = vld [vmem:[#allocation2 + $0x50] sm:$0xff]
  %v46 = vld [vmem:[#allocation2 + $0x58] sm:$0xff]
  %v47 = vld [vmem:[#allocation2 + $0x60] sm:$0xff]
  %v48 = vld [vmem:[#allocation2 + $0x68] sm:$0xff]
  %v49 = vld [vmem:[#allocation2 + $0x70] sm:$0xff]
  %v50 = vld [vmem:[#allocation2 + $0x78] sm:$0xff]
  %v51 = vld [vmem:[%s0] sm:$0xff]
  %v52 = vld [vmem:[%s0 + $0x8] sm:$0xff]
  %v53 = vld [vmem:[%s0 + $0x10] sm:$0xff]
  %v54 = vld [vmem:[%s0 + $0x18] sm:$0xff]
  %v55 = vld [vmem:[%s0 + $0x20] sm:$0xff]
  %v56 = vld [vmem:[%s0 + $0x28] sm:$0xff]
  %v57 = vld [vmem:[%s0 + $0x30] sm:$0xff]
  %v58 = vld [vmem:[%s0 + $0x38] sm:$0xff]
  %v59 = vld [vmem:[%s0 + $0x40] sm:$0xff]
  %v60 = vld [vmem:[%s0 + $0x48] sm:$0xff]
  %v61 = vld [vmem:[%s0 + $0x50] sm:$0xff]
  %v62 = vld [vmem:[%s0 + $0x58] sm:$0xff]
  %v63 = vld [vmem:[%s0 + $0x60] sm:$0xff]
  %v64 = vld [vmem:[%s0 + $0x68] sm:$0xff]
  %v65 = vld [vmem:[%s0 + $0x70] sm:$0xff]
  %v66 = vld [vmem:[%s0 + $0x78] sm:$0xff]
  %v67 = vld [vmem:[%s1] sm:$0xf]
  %v68 = vld [vmem:[%s1 + $0x4] sm:$0xf]
  %v69 = vld [vmem:[%s1 + $0x8] sm:$0xf]
  %v70 = vld [vmem:[%s1 + $0xc] sm:$0xf]
  %v71 = vld [vmem:[%s1 + $0x10] sm:$0xf]
  %v72 = vld [vmem:[%s1 + $0x14] sm:$0xf]
  %v73 = vld [vmem:[%s1 + $0x18] sm:$0xf]
  %v74 = vld [vmem:[%s1 + $0x1c] sm:$0xf]
  %v75 = vld [vmem:[%s1 + $0x20] sm:$0xf]
  %v76 = vld [vmem:[%s1 + $0x24] sm:$0xf]
  %v77 = vld [vmem:[%s1 + $0x28] sm:$0xf]
  %v78 = vld [vmem:[%s1 + $0x2c] sm:$0xf]
  %v79 = vld [vmem:[%s1 + $0x30] sm:$0xf]
  %v80 = vld [vmem:[%s1 + $0x34] sm:$0xf]
  %v81 = vld [vmem:[%s1 + $0x38] sm:$0xf]
  %v82 = vld [vmem:[%s1 + $0x3c] sm:$0xf]
  %v83 = vld [vmem:[%s1 + $0x40] sm:$0xf]
  %v84 = vld [vmem:[%s1 + $0x44] sm:$0xf]
  %v85 = vld [vmem:[%s1 + $0x48] sm:$0xf]
  %v86 = vld [vmem:[%s1 + $0x4c] sm:$0xf]
  %v87 = vld [vmem:[%s1 + $0x50] sm:$0xf]
  %v88 = vld [vmem:[%s1 + $0x54] sm:$0xf]
  %v89 = vld [vmem:[%s1 + $0x58] sm:$0xf]
  %v90 = vld [vmem:[%s1 + $0x5c] sm:$0xf]
  %v91 = vld [vmem:[%s1 + $0x60] sm:$0xf]
  %v92 = vld [vmem:[%s1 + $0x64] sm:$0xf]
  %v93 = vld [vmem:[%s1 + $0x68] sm:$0xf]
  %v94 = vld [vmem:[%s1 + $0x6c] sm:$0xf]
  %v95 = vld [vmem:[%s1 + $0x70] sm:$0xf]
  %v96 = vld [vmem:[%s1 + $0x74] sm:$0xf]
  %v97 = vld [vmem:[%s1 + $0x78] sm:$0xf]
  %v98 = vld [vmem:[%s1 + $0x7c] sm:$0xf]
  %v115 = vunpack.c.l.b16 %v51
  %v116 = vunpack.c.h.b16 %v51
  %v117 = vunpack.c.l.b16 %v52
  %v118 = vunpack.c.h.b16 %v52
  %v119 = vunpack.c.l.b16 %v53
  %v120 = vunpack.c.h.b16 %v53
  %v121 = vunpack.c.l.b16 %v54
  %v122 = vunpack.c.h.b16 %v54
  %v123 = vunpack.c.l.b16 %v55
  %v124 = vunpack.c.h.b16 %v55
  %v125 = vunpack.c.l.b16 %v56
  %v126 = vunpack.c.h.b16 %v56
  %v127 = vunpack.c.l.b16 %v57
  %v128 = vunpack.c.h.b16 %v57
  %v129 = vunpack.c.l.b16 %v58
  %v130 = vunpack.c.h.b16 %v58
  %v131 = vunpack.c.l.b16 %v59
  %v132 = vunpack.c.h.b16 %v59
  %v133 = vunpack.c.l.b16 %v60
  %v134 = vunpack.c.h.b16 %v60
  %v135 = vunpack.c.l.b16 %v61
  %v136 = vunpack.c.h.b16 %v61
  %v137 = vunpack.c.l.b16 %v62
  %v138 = vunpack.c.h.b16 %v62
  %v139 = vunpack.c.l.b16 %v63
  %v140 = vunpack.c.h.b16 %v63
  %v141 = vunpack.c.l.b16 %v64
  %v142 = vunpack.c.h.b16 %v64
  %v143 = vunpack.c.l.b16 %v65
  %v144 = vunpack.c.h.b16 %v65
  %v145 = vunpack.c.l.b16 %v66
  %v146 = vunpack.c.h.b16 %v66
  %v147 = vpack.c.b16 %v117, %v115
  %v148 = vpack.c.b16 %v118, %v116
  %v149 = vpack.c.b16 %v121, %v119
  %v150 = vpack.c.b16 %v122, %v120
  %v151 = vpack.c.b16 %v125, %v123
  %v152 = vpack.c.b16 %v126, %v124
  %v153 = vpack.c.b16 %v129, %v127
  %v154 = vpack.c.b16 %v130, %v128
  %v155 = vpack.c.b16 %v133, %v131
  %v156 = vpack.c.b16 %v134, %v132
  %v157 = vpack.c.b16 %v137, %v135
  %v158 = vpack.c.b16 %v138, %v136
  %v159 = vpack.c.b16 %v141, %v139
  %v160 = vpack.c.b16 %v142, %v140
  %v161 = vpack.c.b16 %v145, %v143
  %v162 = vpack.c.b16 %v146, %v144
  %v211 = vunpack.c.l.b16 %v67
  %v212 = vunpack.c.l.b16 %v68
  %v213 = vunpack.c.l.b16 %v69
  %v214 = vunpack.c.l.b16 %v70
  %v215 = vunpack.c.l.b16 %v71
  %v216 = vunpack.c.l.b16 %v72
  %v217 = vunpack.c.l.b16 %v73
  %v218 = vunpack.c.l.b16 %v74
  %v219 = vunpack.c.l.b16 %v75
  %v220 = vunpack.c.l.b16 %v76
  %v221 = vunpack.c.l.b16 %v77
  %v222 = vunpack.c.l.b16 %v78
  %v223 = vunpack.c.l.b16 %v79
  %v224 = vunpack.c.l.b16 %v80
  %v225 = vunpack.c.l.b16 %v81
  %v226 = vunpack.c.l.b16 %v82
  %v227 = vunpack.c.l.b16 %v83
  %v228 = vunpack.c.l.b16 %v84
  %v229 = vunpack.c.l.b16 %v85
  %v230 = vunpack.c.l.b16 %v86
  %v231 = vunpack.c.l.b16 %v87
  %v232 = vunpack.c.l.b16 %v88
  %v233 = vunpack.c.l.b16 %v89
  %v234 = vunpack.c.l.b16 %v90
  %v235 = vunpack.c.l.b16 %v91
  %v236 = vunpack.c.l.b16 %v92
  %v237 = vunpack.c.l.b16 %v93
  %v238 = vunpack.c.l.b16 %v94
  %v239 = vunpack.c.l.b16 %v95
  %v240 = vunpack.c.l.b16 %v96
  %v241 = vunpack.c.l.b16 %v97
  %v242 = vunpack.c.l.b16 %v98
  %v243 = vpack.c.b16 %v212, %v211
  %v244 = vpack.c.b16 %v214, %v213
  %v245 = vpack.c.b16 %v216, %v215
  %v246 = vpack.c.b16 %v218, %v217
  %v247 = vpack.c.b16 %v220, %v219
  %v248 = vpack.c.b16 %v222, %v221
  %v249 = vpack.c.b16 %v224, %v223
  %v250 = vpack.c.b16 %v226, %v225
  %v251 = vpack.c.b16 %v228, %v227
  %v252 = vpack.c.b16 %v230, %v229
  %v253 = vpack.c.b16 %v232, %v231
  %v254 = vpack.c.b16 %v234, %v233
  %v255 = vpack.c.b16 %v236, %v235
  %v256 = vpack.c.b16 %v238, %v237
  %v257 = vpack.c.b16 %v240, %v239
  %v258 = vpack.c.b16 %v242, %v241
  %275 = vmatprep.subr.bf16.mxu0 0
  %276 = vmatpush1.bf16.msra.mxu0 %v243
  %277 = vmatprep.subr.bf16.mxu0 0
  %278 = vmatpush1.bf16.msra.mxu0 %v244
  %279 = vmatprep.subr.bf16.mxu0 0
  %280 = vmatpush1.bf16.msra.mxu0 %v245
  %281 = vmatprep.subr.bf16.mxu0 0
  %282 = vmatpush1.bf16.msra.mxu0 %v246
  %283 = vmatprep.subr.bf16.mxu0 0
  %284 = vmatpush1.bf16.msra.mxu0 %v247
  %285 = vmatprep.subr.bf16.mxu0 0
  %286 = vmatpush1.bf16.msra.mxu0 %v248
  %287 = vmatprep.subr.bf16.mxu0 0
  %288 = vmatpush1.bf16.msra.mxu0 %v249
  %289 = vmatprep.subr.bf16.mxu0 0
  %290 = vmatpush1.bf16.msra.mxu0 %v250
  %291 = vmatprep.subr.bf16.mxu0 0
  %292 = vmatpush1.bf16.msra.mxu0 %v251
  %293 = vmatprep.subr.bf16.mxu0 0
  %294 = vmatpush1.bf16.msra.mxu0 %v252
  %295 = vmatprep.subr.bf16.mxu0 0
  %296 = vmatpush1.bf16.msra.mxu0 %v253
  %297 = vmatprep.subr.bf16.mxu0 0
  %298 = vmatpush1.bf16.msra.mxu0 %v254
  %299 = vmatprep.subr.bf16.mxu0 0
  %300 = vmatpush1.bf16.msra.mxu0 %v255
  %301 = vmatprep.subr.bf16.mxu0 0
  %302 = vmatpush1.bf16.msra.mxu0 %v256
  %303 = vmatprep.subr.bf16.mxu0 0
  %304 = vmatpush1.bf16.msra.mxu0 %v257
  %305 = vmatprep.subr.bf16.mxu0 0
  %306 = vmatpush1.bf16.msra.mxu0 %v258
  %307 = vmatprep.mubr.bf16.mxu0 %v148
  %308 = vmatmul.mubr.bf16.gmra.mrb[0].mxu0 %v147
  %v309 = vpop.f32.mrb[0].mxu0
  %v310 = vadd.f32 0.0, %v309
  %v311 = vpop.f32.mrb[0].mxu0
  %v312 = vpop.f32.mrb[0].mxu0
  %v313 = vadd.f32 0.0, %v312
  %v314 = vpop.f32.mrb[0].mxu0
  %315 = vmatprep.mubr.bf16.mxu0 %v150
  %316 = vmatmul.mubr.bf16.gmra.mrb[0].mxu0 %v149
  %v317 = vpop.f32.mrb[0].mxu0
  %v318 = vadd.f32 0.0, %v317
  %v319 = vpop.f32.mrb[0].mxu0
  %v320 = vpop.f32.mrb[0].mxu0
  %v321 = vadd.f32 0.0, %v320
  %v322 = vpop.f32.mrb[0].mxu0
  %323 = vmatprep.mubr.bf16.mxu0 %v152
  %324 = vmatmul.mubr.bf16.gmra.mrb[0].mxu0 %v151
  %v325 = vpop.f32.mrb[0].mxu0
  %v326 = vadd.f32 0.0, %v325
  %v327 = vpop.f32.mrb[0].mxu0
  %v328 = vpop.f32.mrb[0].mxu0
  %v329 = vadd.f32 0.0, %v328
  %v330 = vpop.f32.mrb[0].mxu0
  %331 = vmatprep.mubr.bf16.mxu0 %v154
  %332 = vmatmul.mubr.bf16.gmra.mrb[0].mxu0 %v153
  %v333 = vpop.f32.mrb[0].mxu0
  %v334 = vadd.f32 0.0, %v333
  %v335 = vpop.f32.mrb[0].mxu0
  %v336 = vpop.f32.mrb[0].mxu0
  %v337 = vadd.f32 0.0, %v336
  %v338 = vpop.f32.mrb[0].mxu0
  %339 = vmatprep.mubr.bf16.mxu0 %v156
  %340 = vmatmul.mubr.bf16.gmra.mrb[0].mxu0 %v155
  %v341 = vpop.f32.mrb[0].mxu0
  %v342 = vadd.f32 0.0, %v341
  %v343 = vpop.f32.mrb[0].mxu0
  %v344 = vpop.f32.mrb[0].mxu0
  %v345 = vadd.f32 0.0, %v344
  %v346 = vpop.f32.mrb[0].mxu0
  %347 = vmatprep.mubr.bf16.mxu0 %v158
  %348 = vmatmul.mubr.bf16.gmra.mrb[0].mxu0 %v157
  %v349 = vpop.f32.mrb[0].mxu0
  %v350 = vadd.f32 0.0, %v349
  %v351 = vpop.f32.mrb[0].mxu0
  %v352 = vpop.f32.mrb[0].mxu0
  %v353 = vadd.f32 0.0, %v352
  %v354 = vpop.f32.mrb[0].mxu0
  %355 = vmatprep.mubr.bf16.mxu0 %v160
  %356 = vmatmul.mubr.bf16.gmra.mrb[0].mxu0 %v159
  %v357 = vpop.f32.mrb[0].mxu0
  %v358 = vadd.f32 0.0, %v357
  %v359 = vpop.f32.mrb[0].mxu0
  %v360 = vpop.f32.mrb[0].mxu0
  %v361 = vadd.f32 0.0, %v360
  %v362 = vpop.f32.mrb[0].mxu0
  %363 = vmatprep.mubr.bf16.mxu0 %v162
  %364 = vmatmul.mubr.bf16.gmra.mrb[0].mxu0 %v161
  %v365 = vpop.f32.mrb[0].mxu0
  %v366 = vadd.f32 0.0, %v365
  %v367 = vpop.f32.mrb[0].mxu0
  %v368 = vpop.f32.mrb[0].mxu0
  %v369 = vadd.f32 0.0, %v368
  %v370 = vpop.f32.mrb[0].mxu0
  %371 = vdwg.mxu0
  %v372 = vadd.f32 %v35, %v310
  %v373 = vadd.f32 %v36, %v313
  %v374 = vadd.f32 %v37, %v318
  %v375 = vadd.f32 %v38, %v321
  %v376 = vadd.f32 %v39, %v326
  %v377 = vadd.f32 %v40, %v329
  %v378 = vadd.f32 %v41, %v334
  %v379 = vadd.f32 %v42, %v337
  %v380 = vadd.f32 %v43, %v342
  %v381 = vadd.f32 %v44, %v345
  %v382 = vadd.f32 %v45, %v350
  %v383 = vadd.f32 %v46, %v353
  %v384 = vadd.f32 %v47, %v358
  %v385 = vadd.f32 %v48, %v361
  %v386 = vadd.f32 %v49, %v366
  %v387 = vadd.f32 %v50, %v369
  %388 = vst [vmem:[#allocation2] sm:$0xff] %v372
  %389 = vst [vmem:[#allocation2 + $0x8] sm:$0xff] %v373
  %390 = vst [vmem:[#allocation2 + $0x10] sm:$0xff] %v374
  %391 = vst [vmem:[#allocation2 + $0x18] sm:$0xff] %v375
  %392 = vst [vmem:[#allocation2 + $0x20] sm:$0xff] %v376
  %393 = vst [vmem:[#allocation2 + $0x28] sm:$0xff] %v377
  %394 = vst [vmem:[#allocation2 + $0x30] sm:$0xff] %v378
  %395 = vst [vmem:[#allocation2 + $0x38] sm:$0xff] %v379
  %396 = vst [vmem:[#allocation2 + $0x40] sm:$0xff] %v380
  %397 = vst [vmem:[#allocation2 + $0x48] sm:$0xff] %v381
  %398 = vst [vmem:[#allocation2 + $0x50] sm:$0xff] %v382
  %399 = vst [vmem:[#allocation2 + $0x58] sm:$0xff] %v383
  %400 = vst [vmem:[#allocation2 + $0x60] sm:$0xff] %v384
  %401 = vst [vmem:[#allocation2 + $0x68] sm:$0xff] %v385
  %402 = vst [vmem:[#allocation2 + $0x70] sm:$0xff] %v386
  %403 = vst [vmem:[#allocation2 + $0x78] sm:$0xff] %v387
  // Predicated region
  $region18: #{generator_forward.101} parent=0 // pred_check
    %p404 = pneg %p15
  $region19: #{generator_forward.101} parent=0 // pred_check_branch
    %406 = sbr.rel (%p404) target = $region21
  $region20: #{generator_forward.101} parent=0 // pred_region
    %v407 = vld [vmem:[#allocation2] sm:$0xff]
    %v408 = vld [vmem:[#allocation2 + $0x8] sm:$0xff]
    %v409 = vld [vmem:[#allocation2 + $0x10] sm:$0xff]
    %v410 = vld [vmem:[#allocation2 + $0x18] sm:$0xff]
    %v411 = vld [vmem:[#allocation2 + $0x20] sm:$0xff]
    %v412 = vld [vmem:[#allocation2 + $0x28] sm:$0xff]
    %v413 = vld [vmem:[#allocation2 + $0x30] sm:$0xff]
    %v414 = vld [vmem:[#allocation2 + $0x38] sm:$0xff]
    %v415 = vld [vmem:[#allocation2 + $0x40] sm:$0xff]
    %v416 = vld [vmem:[#allocation2 + $0x48] sm:$0xff]
    %v417 = vld [vmem:[#allocation2 + $0x50] sm:$0xff]
    %v418 = vld [vmem:[#allocation2 + $0x58] sm:$0xff]
    %v419 = vld [vmem:[#allocation2 + $0x60] sm:$0xff]
    %v420 = vld [vmem:[#allocation2 + $0x68] sm:$0xff]
    %v421 = vld [vmem:[#allocation2 + $0x70] sm:$0xff]
    %v422 = vld [vmem:[#allocation2 + $0x78] sm:$0xff]
    %v423 = vld [vmem:[%s2] sm:$0x1]
    %v425 = vlaneseq
    %v426 = vshrl.u32 %v425, 7
    %v427 = vsub.s32 0, %v426
    %v428 = vrot.slane %v423, %v427
    %v430 = vadd.f32 %v407, %v428
    %v431 = vadd.f32 %v408, %v428
    %v432 = vadd.f32 %v409, %v428
    %v433 = vadd.f32 %v410, %v428
    %v434 = vadd.f32 %v411, %v428
    %v435 = vadd.f32 %v412, %v428
    %v436 = vadd.f32 %v413, %v428
    %v437 = vadd.f32 %v414, %v428
    %v438 = vadd.f32 %v415, %v428
    %v439 = vadd.f32 %v416, %v428
    %v440 = vadd.f32 %v417, %v428
    %v441 = vadd.f32 %v418, %v428
    %v442 = vadd.f32 %v419, %v428
    %v443 = vadd.f32 %v420, %v428
    %v444 = vadd.f32 %v421, %v428
    %v445 = vadd.f32 %v422, %v428
    %446 = vst [vmem:[%s3] sm:$0xff] %v430
    %447 = vst [vmem:[%s3 + $0x8] sm:$0xff] %v431
    %448 = vst [vmem:[%s3 + $0x10] sm:$0xff] %v432
    %449 = vst [vmem:[%s3 + $0x18] sm:$0xff] %v433
    %450 = vst [vmem:[%s3 + $0x20] sm:$0xff] %v434
    %451 = vst [vmem:[%s3 + $0x28] sm:$0xff] %v435
    %452 = vst [vmem:[%s3 + $0x30] sm:$0xff] %v436
    %453 = vst [vmem:[%s3 + $0x38] sm:$0xff] %v437
    %454 = vst [vmem:[%s3 + $0x40] sm:$0xff] %v438
    %455 = vst [vmem:[%s3 + $0x48] sm:$0xff] %v439
    %456 = vst [vmem:[%s3 + $0x50] sm:$0xff] %v440
    %457 = vst [vmem:[%s3 + $0x58] sm:$0xff] %v441
    %458 = vst [vmem:[%s3 + $0x60] sm:$0xff] %v442
    %459 = vst [vmem:[%s3 + $0x68] sm:$0xff] %v443
    %460 = vst [vmem:[%s3 + $0x70] sm:$0xff] %v444
    %461 = vst [vmem:[%s3 + $0x78] sm:$0xff] %v445
  $region21: #{generator_forward.101} parent=0 // pred_fallthru
    _
  // Predicated region
  $region22: #{generator_forward.101} parent=0 // pred_check
    _
  $region23: #{generator_forward.101} parent=0 // pred_check_branch
    %463 = sbr.rel (0) target = $region25
  $region24: #{generator_forward.101} parent=0 // pred_region
    _
  $region25: #{generator_forward.101} parent=0 // pred_fallthru
    _
  // Predicated region
  $region26: #{generator_forward.101} parent=0 // pred_check
    _
  $region27: #{generator_forward.101} parent=0 // pred_check_branch
    %465 = sbr.rel (0) target = $region29
  $region28: #{generator_forward.101} parent=0 // pred_region
    _
  $region29: #{generator_forward.101} parent=0 // pred_fallthru
    _

// kernel: generator_forward.100
$region0: #{generator_forward.100}
  #allocation0 [shape = 'u32[]', space=smem, size = 0x4, offset = 0x4, fixed_abs, tag = 'smem constant byte address 0x4 - core index']
  #allocation1 [shape = 'u32[144,128]{1,0:T(1,128)}', space=vmem, size = 0x12000, scoped, tag = 'internal scratch']
  #allocation2 [shape = 'f32[128,128]{1,0:T(8,128)}', space=vmem, size = 0x10000, scoped, tag = 'scratch operand']
  %s0 = inlined_call_operand.vmem [shape: bf16[128,128], index: 0, kind: input, shape index: {}]
  %s1 = inlined_call_operand.vmem [shape: bf16[128,128], index: 1, kind: input, shape index: {}]
  %s2 = inlined_call_operand.vmem [shape: f32[1,128], index: 2, kind: input, shape index: {}]
  %s3 = inlined_call_operand.vmem [shape: f32[128,128], index: 3, kind: output, shape index: {}]
  %s4 = sld [smem:[#allocation0]]
  $region30: #{generator_forward.100} parent=0
    _
  %s6 = ssub.s32 1, %s4
  %s7 = scalar_select 0, %s6, %s4
  // Predicated region
  $region2: #{generator_forward.100} parent=0 // pred_check
    _
  $region3: #{generator_forward.100} parent=0 // pred_check_branch
    %9 = sbr.rel (0) target = $region5
  $region4: #{generator_forward.100} parent=0 // pred_region
    _
  $region5: #{generator_forward.100} parent=0 // pred_fallthru
    _
  // Predicated region
  $region6: #{generator_forward.100} parent=0 // pred_check
    _
  $region7: #{generator_forward.100} parent=0 // pred_check_branch
    %11 = sbr.rel (0) target = $region9
  $region8: #{generator_forward.100} parent=0 // pred_region
    _
  $region9: #{generator_forward.100} parent=0 // pred_fallthru
    _
  // Predicated region
  $region10: #{generator_forward.100} parent=0 // pred_check
    _
  $region11: #{generator_forward.100} parent=0 // pred_check_branch
    %13 = sbr.rel (0) target = $region13
  $region12: #{generator_forward.100} parent=0 // pred_region
    _
  $region13: #{generator_forward.100} parent=0 // pred_fallthru
    _
  %p15 = scmp.eq.s32.totalorder 0, 0
  // Predicated region
  $region14: #{generator_forward.100} parent=0 // pred_check
    %p16 = pneg %p15
  $region15: #{generator_forward.100} parent=0 // pred_check_branch
    %18 = sbr.rel (%p16) target = $region17
  $region16: #{generator_forward.100} parent=0 // pred_region
    %19 = vst [vmem:[#allocation2] sm:$0xff] 0.0
    %20 = vst [vmem:[#allocation2 + $0x8] sm:$0xff] 0.0
    %21 = vst [vmem:[#allocation2 + $0x10] sm:$0xff] 0.0
    %22 = vst [vmem:[#allocation2 + $0x18] sm:$0xff] 0.0
    %23 = vst [vmem:[#allocation2 + $0x20] sm:$0xff] 0.0
    %24 = vst [vmem:[#allocation2 + $0x28] sm:$0xff] 0.0
    %25 = vst [vmem:[#allocation2 + $0x30] sm:$0xff] 0.0
    %26 = vst [vmem:[#allocation2 + $0x38] sm:$0xff] 0.0
    %27 = vst [vmem:[#allocation2 + $0x40] sm:$0xff] 0.0
    %28 = vst [vmem:[#allocation2 + $0x48] sm:$0xff] 0.0
    %29 = vst [vmem:[#allocation2 + $0x50] sm:$0xff] 0.0
    %30 = vst [vmem:[#allocation2 + $0x58] sm:$0xff] 0.0
    %31 = vst [vmem:[#allocation2 + $0x60] sm:$0xff] 0.0
    %32 = vst [vmem:[#allocation2 + $0x68] sm:$0xff] 0.0
    %33 = vst [vmem:[#allocation2 + $0x70] sm:$0xff] 0.0
    %34 = vst [vmem:[#allocation2 + $0x78] sm:$0xff] 0.0
  $region17: #{generator_forward.100} parent=0 // pred_fallthru
    _
  %v35 = vld [vmem:[#allocation2] sm:$0xff]
  %v36 = vld [vmem:[#allocation2 + $0x8] sm:$0xff]
  %v37 = vld [vmem:[#allocation2 + $0x10] sm:$0xff]
  %v38 = vld [vmem:[#allocation2 + $0x18] sm:$0xff]
  %v39 = vld [vmem:[#allocation2 + $0x20] sm:$0xff]
  %v40 = vld [vmem:[#allocation2 + $0x28] sm:$0xff]
  %v41 = vld [vmem:[#allocation2 + $0x30] sm:$0xff]
  %v42 = vld [vmem:[#allocation2 + $0x38] sm:$0xff]
  %v43 = vld [vmem:[#allocation2 + $0x40] sm:$0xff]
  %v44 = vld [vmem:[#allocation2 + $0x48] sm:$0xff]
  %v45 = vld [vmem:[#allocation2 + $0x50] sm:$0xff]
  %v46 = vld [vmem:[#allocation2 + $0x58] sm:$0xff]
  %v47 = vld [vmem:[#allocation2 + $0x60] sm:$0xff]
  %v48 = vld [vmem:[#allocation2 + $0x68] sm:$0xff]
  %v49 = vld [vmem:[#allocation2 + $0x70] sm:$0xff]
  %v50 = vld [vmem:[#allocation2 + $0x78] sm:$0xff]
  %v51 = vld [vmem:[%s0] sm:$0xf]
  %v52 = vld [vmem:[%s0 + $0x4] sm:$0xf]
  %v53 = vld [vmem:[%s0 + $0x8] sm:$0xf]
  %v54 = vld [vmem:[%s0 + $0xc] sm:$0xf]
  %v55 = vld [vmem:[%s0 + $0x10] sm:$0xf]
  %v56 = vld [vmem:[%s0 + $0x14] sm:$0xf]
  %v57 = vld [vmem:[%s0 + $0x18] sm:$0xf]
  %v58 = vld [vmem:[%s0 + $0x1c] sm:$0xf]
  %v59 = vld [vmem:[%s0 + $0x20] sm:$0xf]
  %v60 = vld [vmem:[%s0 + $0x24] sm:$0xf]
  %v61 = vld [vmem:[%s0 + $0x28] sm:$0xf]
  %v62 = vld [vmem:[%s0 + $0x2c] sm:$0xf]
  %v63 = vld [vmem:[%s0 + $0x30] sm:$0xf]
  %v64 = vld [vmem:[%s0 + $0x34] sm:$0xf]
  %v65 = vld [vmem:[%s0 + $0x38] sm:$0xf]
  %v66 = vld [vmem:[%s0 + $0x3c] sm:$0xf]
  %v67 = vld [vmem:[%s1] sm:$0xf]
  %v68 = vld [vmem:[%s1 + $0x4] sm:$0xf]
  %v69 = vld [vmem:[%s1 + $0x8] sm:$0xf]
  %v70 = vld [vmem:[%s1 + $0xc] sm:$0xf]
  %v71 = vld [vmem:[%s1 + $0x10] sm:$0xf]
  %v72 = vld [vmem:[%s1 + $0x14] sm:$0xf]
  %v73 = vld [vmem:[%s1 + $0x18] sm:$0xf]
  %v74 = vld [vmem:[%s1 + $0x1c] sm:$0xf]
  %v75 = vld [vmem:[%s1 + $0x20] sm:$0xf]
  %v76 = vld [vmem:[%s1 + $0x24] sm:$0xf]
  %v77 = vld [vmem:[%s1 + $0x28] sm:$0xf]
  %v78 = vld [vmem:[%s1 + $0x2c] sm:$0xf]
  %v79 = vld [vmem:[%s1 + $0x30] sm:$0xf]
  %v80 = vld [vmem:[%s1 + $0x34] sm:$0xf]
  %v81 = vld [vmem:[%s1 + $0x38] sm:$0xf]
  %v82 = vld [vmem:[%s1 + $0x3c] sm:$0xf]
  %v99 = vunpack.c.l.b16 %v51
  %v100 = vunpack.c.l.b16 %v52
  %v101 = vunpack.c.l.b16 %v53
  %v102 = vunpack.c.l.b16 %v54
  %v103 = vunpack.c.l.b16 %v55
  %v104 = vunpack.c.l.b16 %v56
  %v105 = vunpack.c.l.b16 %v57
  %v106 = vunpack.c.l.b16 %v58
  %v107 = vunpack.c.l.b16 %v59
  %v108 = vunpack.c.l.b16 %v60
  %v109 = vunpack.c.l.b16 %v61
  %v110 = vunpack.c.l.b16 %v62
  %v111 = vunpack.c.l.b16 %v63
  %v112 = vunpack.c.l.b16 %v64
  %v113 = vunpack.c.l.b16 %v65
  %v114 = vunpack.c.l.b16 %v66
  %v115 = vpack.c.b16 %v100, %v99
  %v116 = vpack.c.b16 %v102, %v101
  %v117 = vpack.c.b16 %v104, %v103
  %v118 = vpack.c.b16 %v106, %v105
  %v119 = vpack.c.b16 %v108, %v107
  %v120 = vpack.c.b16 %v110, %v109
  %v121 = vpack.c.b16 %v112, %v111
  %v122 = vpack.c.b16 %v114, %v113
  %v147 = vunpack.c.l.b16 %v67
  %v148 = vunpack.c.l.b16 %v68
  %v149 = vunpack.c.l.b16 %v69
  %v150 = vunpack.c.l.b16 %v70
  %v151 = vunpack.c.l.b16 %v71
  %v152 = vunpack.c.l.b16 %v72
  %v153 = vunpack.c.l.b16 %v73
  %v154 = vunpack.c.l.b16 %v74
  %v155 = vunpack.c.l.b16 %v75
  %v156 = vunpack.c.l.b16 %v76
  %v157 = vunpack.c.l.b16 %v77
  %v158 = vunpack.c.l.b16 %v78
  %v159 = vunpack.c.l.b16 %v79
  %v160 = vunpack.c.l.b16 %v80
  %v161 = vunpack.c.l.b16 %v81
  %v162 = vunpack.c.l.b16 %v82
  %v163 = vpack.c.b16 %v148, %v147
  %v164 = vpack.c.b16 %v150, %v149
  %v165 = vpack.c.b16 %v152, %v151
  %v166 = vpack.c.b16 %v154, %v153
  %v167 = vpack.c.b16 %v156, %v155
  %v168 = vpack.c.b16 %v158, %v157
  %v169 = vpack.c.b16 %v160, %v159
  %v170 = vpack.c.b16 %v162, %v161
  %179 = vmatprep.subr.bf16.mxu0 0
  %180 = vmatpush1.bf16.msra.mxu0 %v163
  %181 = vmatprep.subr.bf16.mxu0 0
  %182 = vmatpush1.bf16.msra.mxu0 %v164
  %183 = vmatprep.subr.bf16.mxu0 0
  %184 = vmatpush1.bf16.msra.mxu0 %v165
  %185 = vmatprep.subr.bf16.mxu0 0
  %186 = vmatpush1.bf16.msra.mxu0 %v166
  %187 = vmatprep.subr.bf16.mxu0 0
  %188 = vmatpush1.bf16.msra.mxu0 %v167
  %189 = vmatprep.subr.bf16.mxu0 0
  %190 = vmatpush1.bf16.msra.mxu0 %v168
  %191 = vmatprep.subr.bf16.mxu0 0
  %192 = vmatpush1.bf16.msra.mxu0 %v169
  %193 = vmatprep.subr.bf16.mxu0 0
  %194 = vmatpush1.bf16.msra.mxu0 %v170
  %195 = vmatprep.subr.bf16.mxu0 0
  %196 = vmatpush1.bf16.msra.mxu0 0
  %197 = vmatprep.subr.bf16.mxu0 0
  %198 = vmatpush1.bf16.msra.mxu0 0
  %199 = vmatprep.subr.bf16.mxu0 0
  %200 = vmatpush1.bf16.msra.mxu0 0
  %201 = vmatprep.subr.bf16.mxu0 0
  %202 = vmatpush1.bf16.msra.mxu0 0
  %203 = vmatprep.subr.bf16.mxu0 0
  %204 = vmatpush1.bf16.msra.mxu0 0
  %205 = vmatprep.subr.bf16.mxu0 0
  %206 = vmatpush1.bf16.msra.mxu0 0
  %207 = vmatprep.subr.bf16.mxu0 0
  %208 = vmatpush1.bf16.msra.mxu0 0
  %209 = vmatprep.subr.bf16.mxu0 0
  %210 = vmatpush1.bf16.msra.mxu0 0
  %211 = vmatprep.mubr.bf16.mxu0 0
  %212 = vmatmul.mubr.bf16.gmra.mrb[0].mxu0 %v115
  %v213 = vpop.f32.mrb[0].mxu0
  %v214 = vadd.f32 0.0, %v213
  %v215 = vpop.f32.mrb[0].mxu0
  %v216 = vpop.f32.mrb[0].mxu0
  %v217 = vadd.f32 0.0, %v216
  %v218 = vpop.f32.mrb[0].mxu0
  %219 = vmatprep.mubr.bf16.mxu0 0
  %220 = vmatmul.mubr.bf16.gmra.mrb[0].mxu0 %v116
  %v221 = vpop.f32.mrb[0].mxu0
  %v222 = vadd.f32 0.0, %v221
  %v223 = vpop.f32.mrb[0].mxu0
  %v224 = vpop.f32.mrb[0].mxu0
  %v225 = vadd.f32 0.0, %v224
  %v226 = vpop.f32.mrb[0].mxu0
  %227 = vmatprep.mubr.bf16.mxu0 0
  %228 = vmatmul.mubr.bf16.gmra.mrb[0].mxu0 %v117
  %v229 = vpop.f32.mrb[0].mxu0
  %v230 = vadd.f32 0.0, %v229
  %v231 = vpop.f32.mrb[0].mxu0
  %v232 = vpop.f32.mrb[0].mxu0
  %v233 = vadd.f32 0.0, %v232
  %v234 = vpop.f32.mrb[0].mxu0
  %235 = vmatprep.mubr.bf16.mxu0 0
  %236 = vmatmul.mubr.bf16.gmra.mrb[0].mxu0 %v118
  %v237 = vpop.f32.mrb[0].mxu0
  %v238 = vadd.f32 0.0, %v237
  %v239 = vpop.f32.mrb[0].mxu0
  %v240 = vpop.f32.mrb[0].mxu0
  %v241 = vadd.f32 0.0, %v240
  %v242 = vpop.f32.mrb[0].mxu0
  %243 = vmatprep.mubr.bf16.mxu0 0
  %244 = vmatmul.mubr.bf16.gmra.mrb[0].mxu0 %v119
  %v245 = vpop.f32.mrb[0].mxu0
  %v246 = vadd.f32 0.0, %v245
  %v247 = vpop.f32.mrb[0].mxu0
  %v248 = vpop.f32.mrb[0].mxu0
  %v249 = vadd.f32 0.0, %v248
  %v250 = vpop.f32.mrb[0].mxu0
  %251 = vmatprep.mubr.bf16.mxu0 0
  %252 = vmatmul.mubr.bf16.gmra.mrb[0].mxu0 %v120
  %v253 = vpop.f32.mrb[0].mxu0
  %v254 = vadd.f32 0.0, %v253
  %v255 = vpop.f32.mrb[0].mxu0
  %v256 = vpop.f32.mrb[0].mxu0
  %v257 = vadd.f32 0.0, %v256
  %v258 = vpop.f32.mrb[0].mxu0
  %259 = vmatprep.mubr.bf16.mxu0 0
  %260 = vmatmul.mubr.bf16.gmra.mrb[0].mxu0 %v121
  %v261 = vpop.f32.mrb[0].mxu0
  %v262 = vadd.f32 0.0, %v261
  %v263 = vpop.f32.mrb[0].mxu0
  %v264 = vpop.f32.mrb[0].mxu0
  %v265 = vadd.f32 0.0, %v264
  %v266 = vpop.f32.mrb[0].mxu0
  %267 = vmatprep.mubr.bf16.mxu0 0
  %268 = vmatmul.mubr.bf16.gmra.mrb[0].mxu0 %v122
  %v269 = vpop.f32.mrb[0].mxu0
  %v270 = vadd.f32 0.0, %v269
  %v271 = vpop.f32.mrb[0].mxu0
  %v272 = vpop.f32.mrb[0].mxu0
  %v273 = vadd.f32 0.0, %v272
  %v274 = vpop.f32.mrb[0].mxu0
  %275 = vdwg.mxu0
  %v276 = vadd.f32 %v35, %v214
  %v277 = vadd.f32 %v36, %v217
  %v278 = vadd.f32 %v37, %v222
  %v279 = vadd.f32 %v38, %v225
  %v280 = vadd.f32 %v39, %v230
  %v281 = vadd.f32 %v40, %v233
  %v282 = vadd.f32 %v41, %v238
  %v283 = vadd.f32 %v42, %v241
  %v284 = vadd.f32 %v43, %v246
  %v285 = vadd.f32 %v44, %v249
  %v286 = vadd.f32 %v45, %v254
  %v287 = vadd.f32 %v46, %v257
  %v288 = vadd.f32 %v47, %v262
  %v289 = vadd.f32 %v48, %v265
  %v290 = vadd.f32 %v49, %v270
  %v291 = vadd.f32 %v50, %v273
  %292 = vst [vmem:[#allocation2] sm:$0xff] %v276
  %293 = vst [vmem:[#allocation2 + $0x8] sm:$0xff] %v277
  %294 = vst [vmem:[#allocation2 + $0x10] sm:$0xff] %v278
  %295 = vst [vmem:[#allocation2 + $0x18] sm:$0xff] %v279
  %296 = vst [vmem:[#allocation2 + $0x20] sm:$0xff] %v280
  %297 = vst [vmem:[#allocation2 + $0x28] sm:$0xff] %v281
  %298 = vst [vmem:[#allocation2 + $0x30] sm:$0xff] %v282
  %299 = vst [vmem:[#allocation2 + $0x38] sm:$0xff] %v283
  %300 = vst [vmem:[#allocation2 + $0x40] sm:$0xff] %v284
  %301 = vst [vmem:[#allocation2 + $0x48] sm:$0xff] %v285
  %302 = vst [vmem:[#allocation2 + $0x50] sm:$0xff] %v286
  %303 = vst [vmem:[#allocation2 + $0x58] sm:$0xff] %v287
  %304 = vst [vmem:[#allocation2 + $0x60] sm:$0xff] %v288
  %305 = vst [vmem:[#allocation2 + $0x68] sm:$0xff] %v289
  %306 = vst [vmem:[#allocation2 + $0x70] sm:$0xff] %v290
  %307 = vst [vmem:[#allocation2 + $0x78] sm:$0xff] %v291
  // Predicated region
  $region18: #{generator_forward.100} parent=0 // pred_check
    %p308 = pneg %p15
  $region19: #{generator_forward.100} parent=0 // pred_check_branch
    %310 = sbr.rel (%p308) target = $region21
  $region20: #{generator_forward.100} parent=0 // pred_region
    %v311 = vld [vmem:[#allocation2] sm:$0xff]
    %v312 = vld [vmem:[#allocation2 + $0x8] sm:$0xff]
    %v313 = vld [vmem:[#allocation2 + $0x10] sm:$0xff]
    %v314 = vld [vmem:[#allocation2 + $0x18] sm:$0xff]
    %v315 = vld [vmem:[#allocation2 + $0x20] sm:$0xff]
    %v316 = vld [vmem:[#allocation2 + $0x28] sm:$0xff]
    %v317 = vld [vmem:[#allocation2 + $0x30] sm:$0xff]
    %v318 = vld [vmem:[#allocation2 + $0x38] sm:$0xff]
    %v319 = vld [vmem:[#allocation2 + $0x40] sm:$0xff]
    %v320 = vld [vmem:[#allocation2 + $0x48] sm:$0xff]
    %v321 = vld [vmem:[#allocation2 + $0x50] sm:$0xff]
    %v322 = vld [vmem:[#allocation2 + $0x58] sm:$0xff]
    %v323 = vld [vmem:[#allocation2 + $0x60] sm:$0xff]
    %v324 = vld [vmem:[#allocation2 + $0x68] sm:$0xff]
    %v325 = vld [vmem:[#allocation2 + $0x70] sm:$0xff]
    %v326 = vld [vmem:[#allocation2 + $0x78] sm:$0xff]
    %v327 = vld [vmem:[%s2] sm:$0x1]
    %v329 = vlaneseq
    %v330 = vshrl.u32 %v329, 7
    %v331 = vsub.s32 0, %v330
    %v332 = vrot.slane %v327, %v331
    %v334 = vadd.f32 %v311, %v332
    %v335 = vadd.f32 %v312, %v332
    %v336 = vadd.f32 %v313, %v332
    %v337 = vadd.f32 %v314, %v332
    %v338 = vadd.f32 %v315, %v332
    %v339 = vadd.f32 %v316, %v332
    %v340 = vadd.f32 %v317, %v332
    %v341 = vadd.f32 %v318, %v332
    %v342 = vadd.f32 %v319, %v332
    %v343 = vadd.f32 %v320, %v332
    %v344 = vadd.f32 %v321, %v332
    %v345 = vadd.f32 %v322, %v332
    %v346 = vadd.f32 %v323, %v332
    %v347 = vadd.f32 %v324, %v332
    %v348 = vadd.f32 %v325, %v332
    %v349 = vadd.f32 %v326, %v332
    %350 = vst [vmem:[%s3] sm:$0xff] %v334
    %351 = vst [vmem:[%s3 + $0x8] sm:$0xff] %v335
    %352 = vst [vmem:[%s3 + $0x10] sm:$0xff] %v336
    %353 = vst [vmem:[%s3 + $0x18] sm:$0xff] %v337
    %354 = vst [vmem:[%s3 + $0x20] sm:$0xff] %v338
    %355 = vst [vmem:[%s3 + $0x28] sm:$0xff] %v339
    %356 = vst [vmem:[%s3 + $0x30] sm:$0xff] %v340
    %357 = vst [vmem:[%s3 + $0x38] sm:$0xff] %v341
    %358 = vst [vmem:[%s3 + $0x40] sm:$0xff] %v342
    %359 = vst [vmem:[%s3 + $0x48] sm:$0xff] %v343
    %360 = vst [vmem:[%s3 + $0x50] sm:$0xff] %v344
    %361 = vst [vmem:[%s3 + $0x58] sm:$0xff] %v345
    %362 = vst [vmem:[%s3 + $0x60] sm:$0xff] %v346
    %363 = vst [vmem:[%s3 + $0x68] sm:$0xff] %v347
    %364 = vst [vmem:[%s3 + $0x70] sm:$0xff] %v348
    %365 = vst [vmem:[%s3 + $0x78] sm:$0xff] %v349
  $region21: #{generator_forward.100} parent=0 // pred_fallthru
    _
  // Predicated region
  $region22: #{generator_forward.100} parent=0 // pred_check
    _
  $region23: #{generator_forward.100} parent=0 // pred_check_branch
    %367 = sbr.rel (0) target = $region25
  $region24: #{generator_forward.100} parent=0 // pred_region
    _
  $region25: #{generator_forward.100} parent=0 // pred_fallthru
    _
  // Predicated region
  $region26: #{generator_forward.100} parent=0 // pred_check
    _
  $region27: #{generator_forward.100} parent=0 // pred_check_branch
    %369 = sbr.rel (0) target = $region29
  $region28: #{generator_forward.100} parent=0 // pred_region
    _
  $region29: #{generator_forward.100} parent=0 // pred_fallthru
    _

// kernel: generator_forward.103
$region0: #{generator_forward.103}
  #allocation0 [shape = 'u32[]', space=smem, size = 0x4, offset = 0x4, fixed_abs, tag = 'smem constant byte address 0x4 - core index']
  #allocation1 [shape = 'u32[144,128]{1,0:T(1,128)}', space=vmem, size = 0x12000, scoped, tag = 'internal scratch']
  #allocation2 [shape = 'f32[128,128]{1,0:T(8,128)}', space=vmem, size = 0x10000, scoped, tag = 'scratch operand']
  %s0 = inlined_call_operand.vmem [shape: bf16[128,512], index: 0, kind: input, shape index: {}]
  %s1 = inlined_call_operand.vmem [shape: bf16[512,128], index: 1, kind: input, shape index: {}]
  %s2 = inlined_call_operand.vmem [shape: f32[1,128], index: 2, kind: input, shape index: {}]
  %s3 = inlined_call_operand.vmem [shape: f32[128,128], index: 3, kind: output, shape index: {}]
  %s4 = sld [smem:[#allocation0]]
  $region30: #{generator_forward.103} parent=0
    _
  %s6 = ssub.s32 1, %s4
  %s7 = scalar_select 0, %s6, %s4
  // Predicated region
  $region2: #{generator_forward.103} parent=0 // pred_check
    _
  $region3: #{generator_forward.103} parent=0 // pred_check_branch
    %9 = sbr.rel (0) target = $region5
  $region4: #{generator_forward.103} parent=0 // pred_region
    _
  $region5: #{generator_forward.103} parent=0 // pred_fallthru
    _
  // Predicated region
  $region6: #{generator_forward.103} parent=0 // pred_check
    _
  $region7: #{generator_forward.103} parent=0 // pred_check_branch
    %11 = sbr.rel (0) target = $region9
  $region8: #{generator_forward.103} parent=0 // pred_region
    _
  $region9: #{generator_forward.103} parent=0 // pred_fallthru
    _
  // Predicated region
  $region10: #{generator_forward.103} parent=0 // pred_check
    _
  $region11: #{generator_forward.103} parent=0 // pred_check_branch
    %13 = sbr.rel (0) target = $region13
  $region12: #{generator_forward.103} parent=0 // pred_region
    _
  $region13: #{generator_forward.103} parent=0 // pred_fallthru
    _
  %p15 = scmp.eq.s32.totalorder 0, 0
  // Predicated region
  $region14: #{generator_forward.103} parent=0 // pred_check
    %p16 = pneg %p15
  $region15: #{generator_forward.103} parent=0 // pred_check_branch
    %18 = sbr.rel (%p16) target = $region17
  $region16: #{generator_forward.103} parent=0 // pred_region
    %19 = vst [vmem:[#allocation2] sm:$0xff] 0.0
    %20 = vst [vmem:[#allocation2 + $0x8] sm:$0xff] 0.0
    %21 = vst [vmem:[#allocation2 + $0x10] sm:$0xff] 0.0
    %22 = vst [vmem:[#allocation2 + $0x18] sm:$0xff] 0.0
    %23 = vst [vmem:[#allocation2 + $0x20] sm:$0xff] 0.0
    %24 = vst [vmem:[#allocation2 + $0x28] sm:$0xff] 0.0
    %25 = vst [vmem:[#allocation2 + $0x30] sm:$0xff] 0.0
    %26 = vst [vmem:[#allocation2 + $0x38] sm:$0xff] 0.0
    %27 = vst [vmem:[#allocation2 + $0x40] sm:$0xff] 0.0
    %28 = vst [vmem:[#allocation2 + $0x48] sm:$0xff] 0.0
    %29 = vst [vmem:[#allocation2 + $0x50] sm:$0xff] 0.0
    %30 = vst [vmem:[#allocation2 + $0x58] sm:$0xff] 0.0
    %31 = vst [vmem:[#allocation2 + $0x60] sm:$0xff] 0.0
    %32 = vst [vmem:[#allocation2 + $0x68] sm:$0xff] 0.0
    %33 = vst [vmem:[#allocation2 + $0x70] sm:$0xff] 0.0
    %34 = vst [vmem:[#allocation2 + $0x78] sm:$0xff] 0.0
  $region17: #{generator_forward.103} parent=0 // pred_fallthru
    _
  %v35 = vld [vmem:[#allocation2] sm:$0xff]
  %v36 = vld [vmem:[#allocation2 + $0x8] sm:$0xff]
  %v37 = vld [vmem:[#allocation2 + $0x10] sm:$0xff]
  %v38 = vld [vmem:[#allocation2 + $0x18] sm:$0xff]
  %v39 = vld [vmem:[#allocation2 + $0x20] sm:$0xff]
  %v40 = vld [vmem:[#allocation2 + $0x28] sm:$0xff]
  %v41 = vld [vmem:[#allocation2 + $0x30] sm:$0xff]
  %v42 = vld [vmem:[#allocation2 + $0x38] sm:$0xff]
  %v43 = vld [vmem:[#allocation2 + $0x40] sm:$0xff]
  %v44 = vld [vmem:[#allocation2 + $0x48] sm:$0xff]
  %v45 = vld [vmem:[#allocation2 + $0x50] sm:$0xff]
  %v46 = vld [vmem:[#allocation2 + $0x58] sm:$0xff]
  %v47 = vld [vmem:[#allocation2 + $0x60] sm:$0xff]
  %v48 = vld [vmem:[#allocation2 + $0x68] sm:$0xff]
  %v49 = vld [vmem:[#allocation2 + $0x70] sm:$0xff]
  %v50 = vld [vmem:[#allocation2 + $0x78] sm:$0xff]
  %v51 = vld [vmem:[%s0] sm:$0xff]
  %v52 = vld [vmem:[%s0 + $0x8] sm:$0xff]
  %v53 = vld [vmem:[%s0 + $0x10] sm:$0xff]
  %v54 = vld [vmem:[%s0 + $0x18] sm:$0xff]
  %v55 = vld [vmem:[%s0 + $0x20] sm:$0xff]
  %v56 = vld [vmem:[%s0 + $0x28] sm:$0xff]
  %v57 = vld [vmem:[%s0 + $0x30] sm:$0xff]
  %v58 = vld [vmem:[%s0 + $0x38] sm:$0xff]
  %v59 = vld [vmem:[%s0 + $0x40] sm:$0xff]
  %v60 = vld [vmem:[%s0 + $0x48] sm:$0xff]
  %v61 = vld [vmem:[%s0 + $0x50] sm:$0xff]
  %v62 = vld [vmem:[%s0 + $0x58] sm:$0xff]
  %v63 = vld [vmem:[%s0 + $0x60] sm:$0xff]
  %v64 = vld [vmem:[%s0 + $0x68] sm:$0xff]
  %v65 = vld [vmem:[%s0 + $0x70] sm:$0xff]
  %v66 = vld [vmem:[%s0 + $0x78] sm:$0xff]
  %v67 = vld [vmem:[%s0 + $0x80] sm:$0xff]
  %v68 = vld [vmem:[%s0 + $0x88] sm:$0xff]
  %v69 = vld [vmem:[%s0 + $0x90] sm:$0xff]
  %v70 = vld [vmem:[%s0 + $0x98] sm:$0xff]
  %v71 = vld [vmem:[%s0 + $0xa0] sm:$0xff]
  %v72 = vld [vmem:[%s0 + $0xa8] sm:$0xff]
  %v73 = vld [vmem:[%s0 + $0xb0] sm:$0xff]
  %v74 = vld [vmem:[%s0 + $0xb8] sm:$0xff]
  %v75 = vld [vmem:[%s0 + $0xc0] sm:$0xff]
  %v76 = vld [vmem:[%s0 + $0xc8] sm:$0xff]
  %v77 = vld [vmem:[%s0 + $0xd0] sm:$0xff]
  %v78 = vld [vmem:[%s0 + $0xd8] sm:$0xff]
  %v79 = vld [vmem:[%s0 + $0xe0] sm:$0xff]
  %v80 = vld [vmem:[%s0 + $0xe8] sm:$0xff]
  %v81 = vld [vmem:[%s0 + $0xf0] sm:$0xff]
  %v82 = vld [vmem:[%s0 + $0xf8] sm:$0xff]
  %v83 = vld [vmem:[%s1] sm:$0xf]
  %v84 = vld [vmem:[%s1 + $0x4] sm:$0xf]
  %v85 = vld [vmem:[%s1 + $0x8] sm:$0xf]
  %v86 = vld [vmem:[%s1 + $0xc] sm:$0xf]
  %v87 = vld [vmem:[%s1 + $0x10] sm:$0xf]
  %v88 = vld [vmem:[%s1 + $0x14] sm:$0xf]
  %v89 = vld [vmem:[%s1 + $0x18] sm:$0xf]
  %v90 = vld [vmem:[%s1 + $0x1c] sm:$0xf]
  %v91 = vld [vmem:[%s1 + $0x20] sm:$0xf]
  %v92 = vld [vmem:[%s1 + $0x24] sm:$0xf]
  %v93 = vld [vmem:[%s1 + $0x28] sm:$0xf]
  %v94 = vld [vmem:[%s1 + $0x2c] sm:$0xf]
  %v95 = vld [vmem:[%s1 + $0x30] sm:$0xf]
  %v96 = vld [vmem:[%s1 + $0x34] sm:$0xf]
  %v97 = vld [vmem:[%s1 + $0x38] sm:$0xf]
  %v98 = vld [vmem:[%s1 + $0x3c] sm:$0xf]
  %v99 = vld [vmem:[%s1 + $0x40] sm:$0xf]
  %v100 = vld [vmem:[%s1 + $0x44] sm:$0xf]
  %v101 = vld [vmem:[%s1 + $0x48] sm:$0xf]
  %v102 = vld [vmem:[%s1 + $0x4c] sm:$0xf]
  %v103 = vld [vmem:[%s1 + $0x50] sm:$0xf]
  %v104 = vld [vmem:[%s1 + $0x54] sm:$0xf]
  %v105 = vld [vmem:[%s1 + $0x58] sm:$0xf]
  %v106 = vld [vmem:[%s1 + $0x5c] sm:$0xf]
  %v107 = vld [vmem:[%s1 + $0x60] sm:$0xf]
  %v108 = vld [vmem:[%s1 + $0x64] sm:$0xf]
  %v109 = vld [vmem:[%s1 + $0x68] sm:$0xf]
  %v110 = vld [vmem:[%s1 + $0x6c] sm:$0xf]
  %v111 = vld [vmem:[%s1 + $0x70] sm:$0xf]
  %v112 = vld [vmem:[%s1 + $0x74] sm:$0xf]
  %v113 = vld [vmem:[%s1 + $0x78] sm:$0xf]
  %v114 = vld [vmem:[%s1 + $0x7c] sm:$0xf]
  %v115 = vld [vmem:[%s1 + $0x80] sm:$0xf]
  %v116 = vld [vmem:[%s1 + $0x84] sm:$0xf]
  %v117 = vld [vmem:[%s1 + $0x88] sm:$0xf]
  %v118 = vld [vmem:[%s1 + $0x8c] sm:$0xf]
  %v119 = vld [vmem:[%s1 + $0x90] sm:$0xf]
  %v120 = vld [vmem:[%s1 + $0x94] sm:$0xf]
  %v121 = vld [vmem:[%s1 + $0x98] sm:$0xf]
  %v122 = vld [vmem:[%s1 + $0x9c] sm:$0xf]
  %v123 = vld [vmem:[%s1 + $0xa0] sm:$0xf]
  %v124 = vld [vmem:[%s1 + $0xa4] sm:$0xf]
  %v125 = vld [vmem:[%s1 + $0xa8] sm:$0xf]
  %v126 = vld [vmem:[%s1 + $0xac] sm:$0xf]
  %v127 = vld [vmem:[%s1 + $0xb0] sm:$0xf]
  %v128 = vld [vmem:[%s1 + $0xb4] sm:$0xf]
  %v129 = vld [vmem:[%s1 + $0xb8] sm:$0xf]
  %v130 = vld [vmem:[%s1 + $0xbc] sm:$0xf]
  %v131 = vld [vmem:[%s1 + $0xc0] sm:$0xf]
  %v132 = vld [vmem:[%s1 + $0xc4] sm:$0xf]
  %v133 = vld [vmem:[%s1 + $0xc8] sm:$0xf]
  %v134 = vld [vmem:[%s1 + $0xcc] sm:$0xf]
  %v135 = vld [vmem:[%s1 + $0xd0] sm:$0xf]
  %v136 = vld [vmem:[%s1 + $0xd4] sm:$0xf]
  %v137 = vld [vmem:[%s1 + $0xd8] sm:$0xf]
  %v138 = vld [vmem:[%s1 + $0xdc] sm:$0xf]
  %v139 = vld [vmem:[%s1 + $0xe0] sm:$0xf]
  %v140 = vld [vmem:[%s1 + $0xe4] sm:$0xf]
  %v141 = vld [vmem:[%s1 + $0xe8] sm:$0xf]
  %v142 = vld [vmem:[%s1 + $0xec] sm:$0xf]
  %v143 = vld [vmem:[%s1 + $0xf0] sm:$0xf]
  %v144 = vld [vmem:[%s1 + $0xf4] sm:$0xf]
  %v145 = vld [vmem:[%s1 + $0xf8] sm:$0xf]
  %v146 = vld [vmem:[%s1 + $0xfc] sm:$0xf]
  %v179 = vunpack.c.l.b16 %v51
  %v180 = vunpack.c.h.b16 %v51
  %v181 = vunpack.c.l.b16 %v52
  %v182 = vunpack.c.h.b16 %v52
  %v183 = vunpack.c.l.b16 %v53
  %v184 = vunpack.c.h.b16 %v53
  %v185 = vunpack.c.l.b16 %v54
  %v186 = vunpack.c.h.b16 %v54
  %v187 = vunpack.c.l.b16 %v55
  %v188 = vunpack.c.h.b16 %v55
  %v189 = vunpack.c.l.b16 %v56
  %v190 = vunpack.c.h.b16 %v56
  %v191 = vunpack.c.l.b16 %v57
  %v192 = vunpack.c.h.b16 %v57
  %v193 = vunpack.c.l.b16 %v58
  %v194 = vunpack.c.h.b16 %v58
  %v195 = vunpack.c.l.b16 %v59
  %v196 = vunpack.c.h.b16 %v59
  %v197 = vunpack.c.l.b16 %v60
  %v198 = vunpack.c.h.b16 %v60
  %v199 = vunpack.c.l.b16 %v61
  %v200 = vunpack.c.h.b16 %v61
  %v201 = vunpack.c.l.b16 %v62
  %v202 = vunpack.c.h.b16 %v62
  %v203 = vunpack.c.l.b16 %v63
  %v204 = vunpack.c.h.b16 %v63
  %v205 = vunpack.c.l.b16 %v64
  %v206 = vunpack.c.h.b16 %v64
  %v207 = vunpack.c.l.b16 %v65
  %v208 = vunpack.c.h.b16 %v65
  %v209 = vunpack.c.l.b16 %v66
  %v210 = vunpack.c.h.b16 %v66
  %v211 = vunpack.c.l.b16 %v67
  %v212 = vunpack.c.h.b16 %v67
  %v213 = vunpack.c.l.b16 %v68
  %v214 = vunpack.c.h.b16 %v68
  %v215 = vunpack.c.l.b16 %v69
  %v216 = vunpack.c.h.b16 %v69
  %v217 = vunpack.c.l.b16 %v70
  %v218 = vunpack.c.h.b16 %v70
  %v219 = vunpack.c.l.b16 %v71
  %v220 = vunpack.c.h.b16 %v71
  %v221 = vunpack.c.l.b16 %v72
  %v222 = vunpack.c.h.b16 %v72
  %v223 = vunpack.c.l.b16 %v73
  %v224 = vunpack.c.h.b16 %v73
  %v225 = vunpack.c.l.b16 %v74
  %v226 = vunpack.c.h.b16 %v74
  %v227 = vunpack.c.l.b16 %v75
  %v228 = vunpack.c.h.b16 %v75
  %v229 = vunpack.c.l.b16 %v76
  %v230 = vunpack.c.h.b16 %v76
  %v231 = vunpack.c.l.b16 %v77
  %v232 = vunpack.c.h.b16 %v77
  %v233 = vunpack.c.l.b16 %v78
  %v234 = vunpack.c.h.b16 %v78
  %v235 = vunpack.c.l.b16 %v79
  %v236 = vunpack.c.h.b16 %v79
  %v237 = vunpack.c.l.b16 %v80
  %v238 = vunpack.c.h.b16 %v80
  %v239 = vunpack.c.l.b16 %v81
  %v240 = vunpack.c.h.b16 %v81
  %v241 = vunpack.c.l.b16 %v82
  %v242 = vunpack.c.h.b16 %v82
  %v243 = vpack.c.b16 %v183, %v179
  %v244 = vpack.c.b16 %v184, %v180
  %v245 = vpack.c.b16 %v185, %v181
  %v246 = vpack.c.b16 %v186, %v182
  %v247 = vpack.c.b16 %v191, %v187
  %v248 = vpack.c.b16 %v192, %v188
  %v249 = vpack.c.b16 %v193, %v189
  %v250 = vpack.c.b16 %v194, %v190
  %v251 = vpack.c.b16 %v199, %v195
  %v252 = vpack.c.b16 %v200, %v196
  %v253 = vpack.c.b16 %v201, %v197
  %v254 = vpack.c.b16 %v202, %v198
  %v255 = vpack.c.b16 %v207, %v203
  %v256 = vpack.c.b16 %v208, %v204
  %v257 = vpack.c.b16 %v209, %v205
  %v258 = vpack.c.b16 %v210, %v206
  %v259 = vpack.c.b16 %v215, %v211
  %v260 = vpack.c.b16 %v216, %v212
  %v261 = vpack.c.b16 %v217, %v213
  %v262 = vpack.c.b16 %v218, %v214
  %v263 = vpack.c.b16 %v223, %v219
  %v264 = vpack.c.b16 %v224, %v220
  %v265 = vpack.c.b16 %v225, %v221
  %v266 = vpack.c.b16 %v226, %v222
  %v267 = vpack.c.b16 %v231, %v227
  %v268 = vpack.c.b16 %v232, %v228
  %v269 = vpack.c.b16 %v233, %v229
  %v270 = vpack.c.b16 %v234, %v230
  %v271 = vpack.c.b16 %v239, %v235
  %v272 = vpack.c.b16 %v240, %v236
  %v273 = vpack.c.b16 %v241, %v237
  %v274 = vpack.c.b16 %v242, %v238
  %v371 = vunpack.c.l.b16 %v83
  %v372 = vunpack.c.l.b16 %v84
  %v373 = vunpack.c.l.b16 %v85
  %v374 = vunpack.c.l.b16 %v86
  %v375 = vunpack.c.l.b16 %v87
  %v376 = vunpack.c.l.b16 %v88
  %v377 = vunpack.c.l.b16 %v89
  %v378 = vunpack.c.l.b16 %v90
  %v379 = vunpack.c.l.b16 %v91
  %v380 = vunpack.c.l.b16 %v92
  %v381 = vunpack.c.l.b16 %v93
  %v382 = vunpack.c.l.b16 %v94
  %v383 = vunpack.c.l.b16 %v95
  %v384 = vunpack.c.l.b16 %v96
  %v385 = vunpack.c.l.b16 %v97
  %v386 = vunpack.c.l.b16 %v98
  %v387 = vunpack.c.l.b16 %v99
  %v388 = vunpack.c.l.b16 %v100
  %v389 = vunpack.c.l.b16 %v101
  %v390 = vunpack.c.l.b16 %v102
  %v391 = vunpack.c.l.b16 %v103
  %v392 = vunpack.c.l.b16 %v104
  %v393 = vunpack.c.l.b16 %v105
  %v394 = vunpack.c.l.b16 %v106
  %v395 = vunpack.c.l.b16 %v107
  %v396 = vunpack.c.l.b16 %v108
  %v397 = vunpack.c.l.b16 %v109
  %v398 = vunpack.c.l.b16 %v110
  %v399 = vunpack.c.l.b16 %v111
  %v400 = vunpack.c.l.b16 %v112
  %v401 = vunpack.c.l.b16 %v113
  %v402 = vunpack.c.l.b16 %v114
  %v403 = vunpack.c.l.b16 %v115
  %v404 = vunpack.c.l.b16 %v116
  %v405 = vunpack.c.l.b16 %v117
  %v406 = vunpack.c.l.b16 %v118
  %v407 = vunpack.c.l.b16 %v119
  %v408 = vunpack.c.l.b16 %v120
  %v409 = vunpack.c.l.b16 %v121
  %v410 = vunpack.c.l.b16 %v122
  %v411 = vunpack.c.l.b16 %v123
  %v412 = vunpack.c.l.b16 %v124
  %v413 = vunpack.c.l.b16 %v125
  %v414 = vunpack.c.l.b16 %v126
  %v415 = vunpack.c.l.b16 %v127
  %v416 = vunpack.c.l.b16 %v128
  %v417 = vunpack.c.l.b16 %v129
  %v418 = vunpack.c.l.b16 %v130
  %v419 = vunpack.c.l.b16 %v131
  %v420 = vunpack.c.l.b16 %v132
  %v421 = vunpack.c.l.b16 %v133
  %v422 = vunpack.c.l.b16 %v134
  %v423 = vunpack.c.l.b16 %v135
  %v424 = vunpack.c.l.b16 %v136
  %v425 = vunpack.c.l.b16 %v137
  %v426 = vunpack.c.l.b16 %v138
  %v427 = vunpack.c.l.b16 %v139
  %v428 = vunpack.c.l.b16 %v140
  %v429 = vunpack.c.l.b16 %v141
  %v430 = vunpack.c.l.b16 %v142
  %v431 = vunpack.c.l.b16 %v143
  %v432 = vunpack.c.l.b16 %v144
  %v433 = vunpack.c.l.b16 %v145
  %v434 = vunpack.c.l.b16 %v146
  %v435 = vpack.c.b16 %v372, %v371
  %v436 = vpack.c.b16 %v374, %v373
  %v437 = vpack.c.b16 %v376, %v375
  %v438 = vpack.c.b16 %v378, %v377
  %v439 = vpack.c.b16 %v380, %v379
  %v440 = vpack.c.b16 %v382, %v381
  %v441 = vpack.c.b16 %v384, %v383
  %v442 = vpack.c.b16 %v386, %v385
  %v443 = vpack.c.b16 %v388, %v387
  %v444 = vpack.c.b16 %v390, %v389
  %v445 = vpack.c.b16 %v392, %v391
  %v446 = vpack.c.b16 %v394, %v393
  %v447 = vpack.c.b16 %v396, %v395
  %v448 = vpack.c.b16 %v398, %v397
  %v449 = vpack.c.b16 %v400, %v399
  %v450 = vpack.c.b16 %v402, %v401
  %v451 = vpack.c.b16 %v404, %v403
  %v452 = vpack.c.b16 %v406, %v405
  %v453 = vpack.c.b16 %v408, %v407
  %v454 = vpack.c.b16 %v410, %v409
  %v455 = vpack.c.b16 %v412, %v411
  %v456 = vpack.c.b16 %v414, %v413
  %v457 = vpack.c.b16 %v416, %v415
  %v458 = vpack.c.b16 %v418, %v417
  %v459 = vpack.c.b16 %v420, %v419
  %v460 = vpack.c.b16 %v422, %v421
  %v461 = vpack.c.b16 %v424, %v423
  %v462 = vpack.c.b16 %v426, %v425
  %v463 = vpack.c.b16 %v428, %v427
  %v464 = vpack.c.b16 %v430, %v429
  %v465 = vpack.c.b16 %v432, %v431
  %v466 = vpack.c.b16 %v434, %v433
  %499 = vmatprep.subr.bf16.mxu0 0
  %500 = vmatpush1.bf16.msra.mxu0 %v435
  %501 = vmatprep.subr.bf16.mxu0 0
  %502 = vmatpush1.bf16.msra.mxu0 %v436
  %503 = vmatprep.subr.bf16.mxu0 0
  %504 = vmatpush1.bf16.msra.mxu0 %v437
  %505 = vmatprep.subr.bf16.mxu0 0
  %506 = vmatpush1.bf16.msra.mxu0 %v438
  %507 = vmatprep.subr.bf16.mxu0 0
  %508 = vmatpush1.bf16.msra.mxu0 %v439
  %509 = vmatprep.subr.bf16.mxu0 0
  %510 = vmatpush1.bf16.msra.mxu0 %v440
  %511 = vmatprep.subr.bf16.mxu0 0
  %512 = vmatpush1.bf16.msra.mxu0 %v441
  %513 = vmatprep.subr.bf16.mxu0 0
  %514 = vmatpush1.bf16.msra.mxu0 %v442
  %515 = vmatprep.subr.bf16.mxu0 0
  %516 = vmatpush1.bf16.msra.mxu0 %v443
  %517 = vmatprep.subr.bf16.mxu0 0
  %518 = vmatpush1.bf16.msra.mxu0 %v444
  %519 = vmatprep.subr.bf16.mxu0 0
  %520 = vmatpush1.bf16.msra.mxu0 %v445
  %521 = vmatprep.subr.bf16.mxu0 0
  %522 = vmatpush1.bf16.msra.mxu0 %v446
  %523 = vmatprep.subr.bf16.mxu0 0
  %524 = vmatpush1.bf16.msra.mxu0 %v447
  %525 = vmatprep.subr.bf16.mxu0 0
  %526 = vmatpush1.bf16.msra.mxu0 %v448
  %527 = vmatprep.subr.bf16.mxu0 0
  %528 = vmatpush1.bf16.msra.mxu0 %v449
  %529 = vmatprep.subr.bf16.mxu0 0
  %530 = vmatpush1.bf16.msra.mxu0 %v450
  %531 = vmatprep.mubr.bf16.mxu0 %v244
  %532 = vmatmul.mubr.bf16.gmra.mrb[0].mxu0 %v243
  %v533 = vpop.f32.mrb[0].mxu0
  %v534 = vadd.f32 0.0, %v533
  %v535 = vpop.f32.mrb[0].mxu0
  %v536 = vpop.f32.mrb[0].mxu0
  %v537 = vadd.f32 0.0, %v536
  %v538 = vpop.f32.mrb[0].mxu0
  %539 = vmatprep.mubr.bf16.mxu0 %v248
  %540 = vmatmul.mubr.bf16.gmra.mrb[0].mxu0 %v247
  %v541 = vpop.f32.mrb[0].mxu0
  %v542 = vadd.f32 0.0, %v541
  %v543 = vpop.f32.mrb[0].mxu0
  %v544 = vpop.f32.mrb[0].mxu0
  %v545 = vadd.f32 0.0, %v544
  %v546 = vpop.f32.mrb[0].mxu0
  %547 = vmatprep.mubr.bf16.mxu0 %v252
  %548 = vmatmul.mubr.bf16.gmra.mrb[0].mxu0 %v251
  %v549 = vpop.f32.mrb[0].mxu0
  %v550 = vadd.f32 0.0, %v549
  %v551 = vpop.f32.mrb[0].mxu0
  %v552 = vpop.f32.mrb[0].mxu0
  %v553 = vadd.f32 0.0, %v552
  %v554 = vpop.f32.mrb[0].mxu0
  %555 = vmatprep.mubr.bf16.mxu0 %v256
  %556 = vmatmul.mubr.bf16.gmra.mrb[0].mxu0 %v255
  %v557 = vpop.f32.mrb[0].mxu0
  %v558 = vadd.f32 0.0, %v557
  %v559 = vpop.f32.mrb[0].mxu0
  %v560 = vpop.f32.mrb[0].mxu0
  %v561 = vadd.f32 0.0, %v560
  %v562 = vpop.f32.mrb[0].mxu0
  %563 = vmatprep.mubr.bf16.mxu0 %v260
  %564 = vmatmul.mubr.bf16.gmra.mrb[0].mxu0 %v259
  %v565 = vpop.f32.mrb[0].mxu0
  %v566 = vadd.f32 0.0, %v565
  %v567 = vpop.f32.mrb[0].mxu0
  %v568 = vpop.f32.mrb[0].mxu0
  %v569 = vadd.f32 0.0, %v568
  %v570 = vpop.f32.mrb[0].mxu0
  %571 = vmatprep.mubr.bf16.mxu0 %v264
  %572 = vmatmul.mubr.bf16.gmra.mrb[0].mxu0 %v263
  %v573 = vpop.f32.mrb[0].mxu0
  %v574 = vadd.f32 0.0, %v573
  %v575 = vpop.f32.mrb[0].mxu0
  %v576 = vpop.f32.mrb[0].mxu0
  %v577 = vadd.f32 0.0, %v576
  %v578 = vpop.f32.mrb[0].mxu0
  %579 = vmatprep.mubr.bf16.mxu0 %v268
  %580 = vmatmul.mubr.bf16.gmra.mrb[0].mxu0 %v267
  %v581 = vpop.f32.mrb[0].mxu0
  %v582 = vadd.f32 0.0, %v581
  %v583 = vpop.f32.mrb[0].mxu0
  %v584 = vpop.f32.mrb[0].mxu0
  %v585 = vadd.f32 0.0, %v584
  %v586 = vpop.f32.mrb[0].mxu0
  %587 = vmatprep.mubr.bf16.mxu0 %v272
  %588 = vmatmul.mubr.bf16.gmra.mrb[0].mxu0 %v271
  %v589 = vpop.f32.mrb[0].mxu0
  %v590 = vadd.f32 0.0, %v589
  %v591 = vpop.f32.mrb[0].mxu0
  %v592 = vpop.f32.mrb[0].mxu0
  %v593 = vadd.f32 0.0, %v592
  %v594 = vpop.f32.mrb[0].mxu0
  %595 = vdwg.mxu0
  %596 = vmatprep.subr.bf16.mxu0 0
  %597 = vmatpush1.bf16.msra.mxu0 %v451
  %598 = vmatprep.subr.bf16.mxu0 0
  %599 = vmatpush1.bf16.msra.mxu0 %v452
  %600 = vmatprep.subr.bf16.mxu0 0
  %601 = vmatpush1.bf16.msra.mxu0 %v453
  %602 = vmatprep.subr.bf16.mxu0 0
  %603 = vmatpush1.bf16.msra.mxu0 %v454
  %604 = vmatprep.subr.bf16.mxu0 0
  %605 = vmatpush1.bf16.msra.mxu0 %v455
  %606 = vmatprep.subr.bf16.mxu0 0
  %607 = vmatpush1.bf16.msra.mxu0 %v456
  %608 = vmatprep.subr.bf16.mxu0 0
  %609 = vmatpush1.bf16.msra.mxu0 %v457
  %610 = vmatprep.subr.bf16.mxu0 0
  %611 = vmatpush1.bf16.msra.mxu0 %v458
  %612 = vmatprep.subr.bf16.mxu0 0
  %613 = vmatpush1.bf16.msra.mxu0 %v459
  %614 = vmatprep.subr.bf16.mxu0 0
  %615 = vmatpush1.bf16.msra.mxu0 %v460
  %616 = vmatprep.subr.bf16.mxu0 0
  %617 = vmatpush1.bf16.msra.mxu0 %v461
  %618 = vmatprep.subr.bf16.mxu0 0
  %619 = vmatpush1.bf16.msra.mxu0 %v462
  %620 = vmatprep.subr.bf16.mxu0 0
  %621 = vmatpush1.bf16.msra.mxu0 %v463
  %622 = vmatprep.subr.bf16.mxu0 0
  %623 = vmatpush1.bf16.msra.mxu0 %v464
  %624 = vmatprep.subr.bf16.mxu0 0
  %625 = vmatpush1.bf16.msra.mxu0 %v465
  %626 = vmatprep.subr.bf16.mxu0 0
  %627 = vmatpush1.bf16.msra.mxu0 %v466
  %628 = vmatprep.mubr.bf16.mxu0 %v246
  %629 = vmatmul.mubr.bf16.gmra.mrb[0].mxu0 %v245
  %v630 = vpop.f32.mrb[0].mxu0
  %v631 = vadd.f32 %v534, %v630
  %v632 = vpop.f32.mrb[0].mxu0
  %v633 = vpop.f32.mrb[0].mxu0
  %v634 = vadd.f32 %v537, %v633
  %v635 = vpop.f32.mrb[0].mxu0
  %636 = vmatprep.mubr.bf16.mxu0 %v250
  %637 = vmatmul.mubr.bf16.gmra.mrb[0].mxu0 %v249
  %v638 = vpop.f32.mrb[0].mxu0
  %v639 = vadd.f32 %v542, %v638
  %v640 = vpop.f32.mrb[0].mxu0
  %v641 = vpop.f32.mrb[0].mxu0
  %v642 = vadd.f32 %v545, %v641
  %v643 = vpop.f32.mrb[0].mxu0
  %644 = vmatprep.mubr.bf16.mxu0 %v254
  %645 = vmatmul.mubr.bf16.gmra.mrb[0].mxu0 %v253
  %v646 = vpop.f32.mrb[0].mxu0
  %v647 = vadd.f32 %v550, %v646
  %v648 = vpop.f32.mrb[0].mxu0
  %v649 = vpop.f32.mrb[0].mxu0
  %v650 = vadd.f32 %v553, %v649
  %v651 = vpop.f32.mrb[0].mxu0
  %652 = vmatprep.mubr.bf16.mxu0 %v258
  %653 = vmatmul.mubr.bf16.gmra.mrb[0].mxu0 %v257
  %v654 = vpop.f32.mrb[0].mxu0
  %v655 = vadd.f32 %v558, %v654
  %v656 = vpop.f32.mrb[0].mxu0
  %v657 = vpop.f32.mrb[0].mxu0
  %v658 = vadd.f32 %v561, %v657
  %v659 = vpop.f32.mrb[0].mxu0
  %660 = vmatprep.mubr.bf16.mxu0 %v262
  %661 = vmatmul.mubr.bf16.gmra.mrb[0].mxu0 %v261
  %v662 = vpop.f32.mrb[0].mxu0
  %v663 = vadd.f32 %v566, %v662
  %v664 = vpop.f32.mrb[0].mxu0
  %v665 = vpop.f32.mrb[0].mxu0
  %v666 = vadd.f32 %v569, %v665
  %v667 = vpop.f32.mrb[0].mxu0
  %668 = vmatprep.mubr.bf16.mxu0 %v266
  %669 = vmatmul.mubr.bf16.gmra.mrb[0].mxu0 %v265
  %v670 = vpop.f32.mrb[0].mxu0
  %v671 = vadd.f32 %v574, %v670
  %v672 = vpop.f32.mrb[0].mxu0
  %v673 = vpop.f32.mrb[0].mxu0
  %v674 = vadd.f32 %v577, %v673
  %v675 = vpop.f32.mrb[0].mxu0
  %676 = vmatprep.mubr.bf16.mxu0 %v270
  %677 = vmatmul.mubr.bf16.gmra.mrb[0].mxu0 %v269
  %v678 = vpop.f32.mrb[0].mxu0
  %v679 = vadd.f32 %v582, %v678
  %v680 = vpop.f32.mrb[0].mxu0
  %v681 = vpop.f32.mrb[0].mxu0
  %v682 = vadd.f32 %v585, %v681
  %v683 = vpop.f32.mrb[0].mxu0
  %684 = vmatprep.mubr.bf16.mxu0 %v274
  %685 = vmatmul.mubr.bf16.gmra.mrb[0].mxu0 %v273
  %v686 = vpop.f32.mrb[0].mxu0
  %v687 = vadd.f32 %v590, %v686
  %v688 = vpop.f32.mrb[0].mxu0
  %v689 = vpop.f32.mrb[0].mxu0
  %v690 = vadd.f32 %v593, %v689
  %v691 = vpop.f32.mrb[0].mxu0
  %692 = vdwg.mxu0
  %v693 = vadd.f32 %v35, %v631
  %v694 = vadd.f32 %v36, %v634
  %v695 = vadd.f32 %v37, %v639
  %v696 = vadd.f32 %v38, %v642
  %v697 = vadd.f32 %v39, %v647
  %v698 = vadd.f32 %v40, %v650
  %v699 = vadd.f32 %v41, %v655
  %v700 = vadd.f32 %v42, %v658
  %v701 = vadd.f32 %v43, %v663
  %v702 = vadd.f32 %v44, %v666
  %v703 = vadd.f32 %v45, %v671
  %v704 = vadd.f32 %v46, %v674
  %v705 = vadd.f32 %v47, %v679
  %v706 = vadd.f32 %v48, %v682
  %v707 = vadd.f32 %v49, %v687
  %v708 = vadd.f32 %v50, %v690
  %709 = vst [vmem:[#allocation2] sm:$0xff] %v693
  %710 = vst [vmem:[#allocation2 + $0x8] sm:$0xff] %v694
  %711 = vst [vmem:[#allocation2 + $0x10] sm:$0xff] %v695
  %712 = vst [vmem:[#allocation2 + $0x18] sm:$0xff] %v696
  %713 = vst [vmem:[#allocation2 + $0x20] sm:$0xff] %v697
  %714 = vst [vmem:[#allocation2 + $0x28] sm:$0xff] %v698
  %715 = vst [vmem:[#allocation2 + $0x30] sm:$0xff] %v699
  %716 = vst [vmem:[#allocation2 + $0x38] sm:$0xff] %v700
  %717 = vst [vmem:[#allocation2 + $0x40] sm:$0xff] %v701
  %718 = vst [vmem:[#allocation2 + $0x48] sm:$0xff] %v702
  %719 = vst [vmem:[#allocation2 + $0x50] sm:$0xff] %v703
  %720 = vst [vmem:[#allocation2 + $0x58] sm:$0xff] %v704
  %721 = vst [vmem:[#allocation2 + $0x60] sm:$0xff] %v705
  %722 = vst [vmem:[#allocation2 + $0x68] sm:$0xff] %v706
  %723 = vst [vmem:[#allocation2 + $0x70] sm:$0xff] %v707
  %724 = vst [vmem:[#allocation2 + $0x78] sm:$0xff] %v708
  // Predicated region
  $region18: #{generator_forward.103} parent=0 // pred_check
    %p725 = pneg %p15
  $region19: #{generator_forward.103} parent=0 // pred_check_branch
    %727 = sbr.rel (%p725) target = $region21
  $region20: #{generator_forward.103} parent=0 // pred_region
    %v728 = vld [vmem:[#allocation2] sm:$0xff]
    %v729 = vld [vmem:[#allocation2 + $0x8] sm:$0xff]
    %v730 = vld [vmem:[#allocation2 + $0x10] sm:$0xff]
    %v731 = vld [vmem:[#allocation2 + $0x18] sm:$0xff]
    %v732 = vld [vmem:[#allocation2 + $0x20] sm:$0xff]
    %v733 = vld [vmem:[#allocation2 + $0x28] sm:$0xff]
    %v734 = vld [vmem:[#allocation2 + $0x30] sm:$0xff]
    %v735 = vld [vmem:[#allocation2 + $0x38] sm:$0xff]
    %v736 = vld [vmem:[#allocation2 + $0x40] sm:$0xff]
    %v737 = vld [vmem:[#allocation2 + $0x48] sm:$0xff]
    %v738 = vld [vmem:[#allocation2 + $0x50] sm:$0xff]
    %v739 = vld [vmem:[#allocation2 + $0x58] sm:$0xff]
    %v740 = vld [vmem:[#allocation2 + $0x60] sm:$0xff]
    %v741 = vld [vmem:[#allocation2 + $0x68] sm:$0xff]
    %v742 = vld [vmem:[#allocation2 + $0x70] sm:$0xff]
    %v743 = vld [vmem:[#allocation2 + $0x78] sm:$0xff]
    %v744 = vld [vmem:[%s2] sm:$0x1]
    %v746 = vlaneseq
    %v747 = vshrl.u32 %v746, 7
    %v748 = vsub.s32 0, %v747
    %v749 = vrot.slane %v744, %v748
    %v751 = vadd.f32 %v728, %v749
    %v752 = vadd.f32 %v729, %v749
    %v753 = vadd.f32 %v730, %v749
    %v754 = vadd.f32 %v731, %v749
    %v755 = vadd.f32 %v732, %v749
    %v756 = vadd.f32 %v733, %v749
    %v757 = vadd.f32 %v734, %v749
    %v758 = vadd.f32 %v735, %v749
    %v759 = vadd.f32 %v736, %v749
    %v760 = vadd.f32 %v737, %v749
    %v761 = vadd.f32 %v738, %v749
    %v762 = vadd.f32 %v739, %v749
    %v763 = vadd.f32 %v740, %v749
    %v764 = vadd.f32 %v741, %v749
    %v765 = vadd.f32 %v742, %v749
    %v766 = vadd.f32 %v743, %v749
    %767 = vst [vmem:[%s3] sm:$0xff] %v751
    %768 = vst [vmem:[%s3 + $0x8] sm:$0xff] %v752
    %769 = vst [vmem:[%s3 + $0x10] sm:$0xff] %v753
    %770 = vst [vmem:[%s3 + $0x18] sm:$0xff] %v754
    %771 = vst [vmem:[%s3 + $0x20] sm:$0xff] %v755
    %772 = vst [vmem:[%s3 + $0x28] sm:$0xff] %v756
    %773 = vst [vmem:[%s3 + $0x30] sm:$0xff] %v757
    %774 = vst [vmem:[%s3 + $0x38] sm:$0xff] %v758
    %775 = vst [vmem:[%s3 + $0x40] sm:$0xff] %v759
    %776 = vst [vmem:[%s3 + $0x48] sm:$0xff] %v760
    %777 = vst [vmem:[%s3 + $0x50] sm:$0xff] %v761
    %778 = vst [vmem:[%s3 + $0x58] sm:$0xff] %v762
    %779 = vst [vmem:[%s3 + $0x60] sm:$0xff] %v763
    %780 = vst [vmem:[%s3 + $0x68] sm:$0xff] %v764
    %781 = vst [vmem:[%s3 + $0x70] sm:$0xff] %v765
    %782 = vst [vmem:[%s3 + $0x78] sm:$0xff] %v766
  $region21: #{generator_forward.103} parent=0 // pred_fallthru
    _
  // Predicated region
  $region22: #{generator_forward.103} parent=0 // pred_check
    _
  $region23: #{generator_forward.103} parent=0 // pred_check_branch
    %784 = sbr.rel (0) target = $region25
  $region24: #{generator_forward.103} parent=0 // pred_region
    _
  $region25: #{generator_forward.103} parent=0 // pred_fallthru
    _
  // Predicated region
  $region26: #{generator_forward.103} parent=0 // pred_check
    _
  $region27: #{generator_forward.103} parent=0 // pred_check_branch
    %786 = sbr.rel (0) target = $region29
  $region28: #{generator_forward.103} parent=0 // pred_region
    _
  $region29: #{generator_forward.103} parent=0 // pred_fallthru
    _

// kernel: generator_forward.105
$region0: #{generator_forward.105}
  #allocation0 [shape = 'u32[]', space=smem, size = 0x4, offset = 0x4, fixed_abs, tag = 'smem constant byte address 0x4 - core index']
  #allocation1 [shape = 'u32[144,128]{1,0:T(1,128)}', space=vmem, size = 0x12000, scoped, tag = 'internal scratch']
  #allocation2 [shape = 'f32[512,128]{1,0:T(8,128)}', space=vmem, size = 0x40000, scoped, tag = 'scratch operand']
  %s0 = inlined_call_operand.vmem [shape: bf16[512,3200], index: 0, kind: input, shape index: {}]
  %s1 = inlined_call_operand.vmem [shape: bf16[3200,128], index: 1, kind: input, shape index: {}]
  %s2 = inlined_call_operand.vmem [shape: f32[1,128], index: 2, kind: input, shape index: {}]
  %s3 = inlined_call_operand.vmem [shape: f32[512,128], index: 3, kind: output, shape index: {}]
  %s4 = sld [smem:[#allocation0]]
  $region94: #{generator_forward.105} parent=0
    _
  %s6 = ssub.s32 1, %s4
  %s7 = scalar_select 0, %s6, %s4
  $region1: #{generator_forward.105} parent=0
    #allocation3 [shape = 'u8[262144]{0}', space=vmem, size = 0x40000, scoped, tag = 'input window, operand 0']
    loop: start=0, step=1, limit=27
    $region2: #{generator_forward.105} parent=1 // loop_pre_header
      _
    $region3: #{generator_forward.105} parent=1 // loop_header
      %s9 = sphi 0, %s13
      %p10 = scmp.ge.s32.totalorder %s9, 27
      %s16 = sphi 0, %s35
      %s17 = sphi 0, %s31
      %s18 = sphi 0, %s27
      %s19 = sphi 0, %s16
      %s20 = sphi 0, %s17
      %s21 = sphi 0, %s18
      %s22 = sphi 0, %s19
      %s23 = sphi 0, %s20
      %s24 = sphi 0, %s21
      %s40 = sphi 0, %s42
      %s43 = sphi 0, %s40
      %s44 = sphi 0, %s43
      %s60 = sphi 0, %s44
      %s68 = sphi 0, %s70
      %s71 = sphi 0, %s68
      %s72 = sphi 0, %s71
      %s88 = sphi 0, %s72
      %s94 = sphi 0, %s96
      %s97 = sphi 0, %s94
      %s98 = sphi 0, %s97
      %s114 = sphi 0, %s98
      %s122 = sphi 0, %s124
      %s125 = sphi 0, %s122
      %s126 = sphi 0, %s125
      %s142 = sphi 0, %s126
    $region4: #{generator_forward.105} parent=1 // loop_header_branch
      %12 = sbr.rel (%p10) target = $region8
    $region5: #{generator_forward.105} parent=1 // loop_body
      %s14 = ssub.s32 %s9, 1
      %s15 = ssub.s32 %s9, 2
      %s25 = sadd.s32 1, %s18
      %p26 = scmp.ge.s32.totalorder %s25, 25
      %s27 = scalar_select %p26, 0, %s25
      %s28 = sadd.s32 1, %s17
      %s29 = scalar_select %p26, %s28, %s17
      %p30 = scmp.ge.s32.totalorder %s29, 1
      %s31 = scalar_select %p30, 0, %s29
      %s32 = sadd.s32 1, %s16
      %s33 = scalar_select %p30, %s32, %s16
      %p34 = scmp.ge.s32.totalorder %s33, 1
      %s35 = scalar_select %p34, 0, %s33
      %s36 = ssub.s32 %s16, %s35
      %s37 = ssub.s32 %s18, %s27
      %s38 = sor.u32 %s36, %s37
      %p39 = scmp.eq.s32.totalorder %s38, 0
      %s41 = sadd.s32 %s40, 1
      %s42 = scalar_select %p39, %s40, %s41
      %p45 = pneg %p39
      %p46 = scmp.eq.s32.totalorder %s9, 24
      %p47 = por %p45, %p46
      %p48 = scmp.ne.s32.totalorder %s40, %s43
      %p49 = scmp.eq.s32.totalorder %s9, 0
      %p50 = por %p48, %p49
      %p51 = scmp.ne.s32.totalorder %s40, %s43
      %p52 = scmp.eq.s32.totalorder %s14, 24
      %p53 = por %p51, %p52
      %p54 = scmp.ne.s32.totalorder %s43, %s44
      %p55 = scmp.eq.s32.totalorder %s14, 0
      %p56 = por %p54, %p55
      %p57 = scmp.ne.s32.totalorder %s43, %s44
      %p58 = scmp.eq.s32.totalorder %s15, 24
      %p59 = por %p57, %p58
      %p61 = scmp.ne.s32.totalorder %s44, %s60
      %p62 = scmp.eq.s32.totalorder %s15, 0
      %p63 = por %p61, %p62
      %s64 = ssub.s32 %s18, %s27
      %s65 = ssub.s32 %s17, %s31
      %s66 = sor.u32 %s64, %s65
      %p67 = scmp.eq.s32.totalorder %s66, 0
      %s69 = sadd.s32 %s68, 1
      %s70 = scalar_select %p67, %s68, %s69
      %p73 = pneg %p67
      %p74 = scmp.eq.s32.totalorder %s9, 24
      %p75 = por %p73, %p74
      %p76 = scmp.ne.s32.totalorder %s68, %s71
      %p77 = scmp.eq.s32.totalorder %s9, 0
      %p78 = por %p76, %p77
      %p79 = scmp.ne.s32.totalorder %s68, %s71
      %p80 = scmp.eq.s32.totalorder %s14, 24
      %p81 = por %p79, %p80
      %p82 = scmp.ne.s32.totalorder %s71, %s72
      %p83 = scmp.eq.s32.totalorder %s14, 0
      %p84 = por %p82, %p83
      %p85 = scmp.ne.s32.totalorder %s71, %s72
      %p86 = scmp.eq.s32.totalorder %s15, 24
      %p87 = por %p85, %p86
      %p89 = scmp.ne.s32.totalorder %s72, %s88
      %p90 = scmp.eq.s32.totalorder %s15, 0
      %p91 = por %p89, %p90
      %s92 = ssub.s32 %s17, %s31
      %p93 = scmp.eq.s32.totalorder %s92, 0
      %s95 = sadd.s32 %s94, 1
      %s96 = scalar_select %p93, %s94, %s95
      %p99 = pneg %p93
      %p100 = scmp.eq.s32.totalorder %s9, 24
      %p101 = por %p99, %p100
      %p102 = scmp.ne.s32.totalorder %s94, %s97
      %p103 = scmp.eq.s32.totalorder %s9, 0
      %p104 = por %p102, %p103
      %p105 = scmp.ne.s32.totalorder %s94, %s97
      %p106 = scmp.eq.s32.totalorder %s14, 24
      %p107 = por %p105, %p106
      %p108 = scmp.ne.s32.totalorder %s97, %s98
      %p109 = scmp.eq.s32.totalorder %s14, 0
      %p110 = por %p108, %p109
      %p111 = scmp.ne.s32.totalorder %s97, %s98
      %p112 = scmp.eq.s32.totalorder %s15, 24
      %p113 = por %p111, %p112
      %p115 = scmp.ne.s32.totalorder %s98, %s114
      %p116 = scmp.eq.s32.totalorder %s15, 0
      %p117 = por %p115, %p116
      %s118 = ssub.s32 %s16, %s35
      %s119 = ssub.s32 %s17, %s31
      %s120 = sor.u32 %s118, %s119
      %p121 = scmp.eq.s32.totalorder %s120, 0
      %s123 = sadd.s32 %s122, 1
      %s124 = scalar_select %p121, %s122, %s123
      %p127 = pneg %p121
      %p128 = scmp.eq.s32.totalorder %s9, 24
      %p129 = por %p127, %p128
      %p130 = scmp.ne.s32.totalorder %s122, %s125
      %p131 = scmp.eq.s32.totalorder %s9, 0
      %p132 = por %p130, %p131
      %p133 = scmp.ne.s32.totalorder %s122, %s125
      %p134 = scmp.eq.s32.totalorder %s14, 24
      %p135 = por %p133, %p134
      %p136 = scmp.ne.s32.totalorder %s125, %s126
      %p137 = scmp.eq.s32.totalorder %s14, 0
      %p138 = por %p136, %p137
      %p139 = scmp.ne.s32.totalorder %s125, %s126
      %p140 = scmp.eq.s32.totalorder %s15, 24
      %p141 = por %p139, %p140
      %p143 = scmp.ne.s32.totalorder %s126, %s142
      %p144 = scmp.eq.s32.totalorder %s15, 0
      %p145 = por %p143, %p144
      %p146 = scmp.le.s32.totalorder 1, %s9
      %p147 = scmp.lt.s32.totalorder %s9, 26
      %p148 = pnand %p146, %p147
      %p149 = pneg %p148
      // Predicated region
      $region9: #{generator_forward.105} parent=5 // pred_check
        _
      $region10: #{generator_forward.105} parent=5 // pred_check_branch
        %151 = sbr.rel (%p148) target = $region12
      $region11: #{generator_forward.105} parent=5 // pred_region
        %s152 = ssub.s32 %s9, 1
        // Predicated region
        $region13: #{generator_forward.105} parent=11 // pred_check
          %p153 = pneg %p110
        $region14: #{generator_forward.105} parent=11 // pred_check_branch
          %155 = sbr.rel (%p153) target = $region16
        $region15: #{generator_forward.105} parent=11 // pred_region
          %p156 = scmp.lt.s32.totalorder %s20, 0
          %s157 = scalar_select %p156, %s20, 0
          %s158 = scalar_lea.vmem %s2, %s157
        $region16: #{generator_forward.105} parent=11 // pred_fallthru
          _
      $region12: #{generator_forward.105} parent=5 // pred_fallthru
        _
      %p159 = scmp.lt.s32.totalorder %s9, 25
      // Predicated region
      $region17: #{generator_forward.105} parent=5 // pred_check
        %p160 = pneg %p159
      $region18: #{generator_forward.105} parent=5 // pred_check_branch
        %162 = sbr.rel (%p160) target = $region20
      $region19: #{generator_forward.105} parent=5 // pred_region
        // Predicated region
        $region21: #{generator_forward.105} parent=19 // pred_check
          %p163 = pneg %p50
        $region22: #{generator_forward.105} parent=19 // pred_check_branch
          %165 = sbr.rel (%p163) target = $region24
        $region23: #{generator_forward.105} parent=19 // pred_region
          %s166 = sand.u32 %s40, 1
          %s167 = sand.u32 %s40, 1
          %s168 = smul.addr %s167, 256
          %s169 = scalar_lea.vmem [#allocation3], %s168
          %s170 = smul.u32 64, %s16
          %s171 = smul.addr %s170, 25
          %s172 = sadd.s32 %s18, %s171
          %s173 = smul.addr %s172, 4
          %s174 = scalar_lea.vmem %s0, %s173
          // Predicated region
          $region25: #{generator_forward.105} parent=23 // pred_check
            _
          $region26: #{generator_forward.105} parent=23 // pred_check_branch
            %176 = sbr.rel (0) target = $region28
          $region27: #{generator_forward.105} parent=23 // pred_region
            // Predicated region
            $region29: #{generator_forward.105} parent=27 // pred_check
              _
            $region30: #{generator_forward.105} parent=27 // pred_check_branch
              %178 = sbr.rel target = $region32
            $region31: #{generator_forward.105} parent=27 // pred_region
              // Predicated region
              $region44: #{generator_forward.105} parent=31 // pred_check
                _
              $region45: #{generator_forward.105} parent=31 // pred_check_branch
                %319 = sbr.rel (0) target = $region47
              $region46: #{generator_forward.105} parent=31 // pred_region
                loop: start=0, step=1, limit=1
                $region48: #{generator_forward.105} parent=46 // loop_pre_header
                  _
                $region49: #{generator_forward.105} parent=46 // loop_header
                  %s321 = sphi 0, %s325
                  %p322 = scmp.ge.s32.totalorder %s321, 1
                  %s326 = sphi %s174, %s174
                  %s327 = sphi %s169, %s169
                $region50: #{generator_forward.105} parent=46 // loop_header_branch
                  %324 = sbr.rel (%p322) target = $region54
                $region51: #{generator_forward.105} parent=46 // loop_body
                  _
                $region52: #{generator_forward.105} parent=46 // loop_footer
                  %s325 = sadd.s32 1, %s321
                $region53: #{generator_forward.105} parent=46 // loop_footer_branch
                  %320 = sbr.rel target = $region49
                $region54: #{generator_forward.105} parent=46 // loop_exit
                  _
                loop: start=0, step=1, limit=1
                $region55: #{generator_forward.105} parent=46 // loop_pre_header
                  _
                $region56: #{generator_forward.105} parent=46 // loop_header
                  %s330 = sphi 0, %s334
                  %p331 = scmp.ge.s32.totalorder %s330, 1
                  %s335 = sphi %s174, %s174
                  %s336 = sphi %s169, %s169
                $region57: #{generator_forward.105} parent=46 // loop_header_branch
                  %333 = sbr.rel (%p331) target = $region61
                $region58: #{generator_forward.105} parent=46 // loop_body
                  %v337 = vld [vmem:[%s335] sm:$0xf]
                  %338 = vst [vmem:[%s336] sm:$0xf] %v337
                  %v339 = vld [vmem:[%s335 + $0x64] sm:$0xf]
                  %340 = vst [vmem:[%s336 + $0x4] sm:$0xf] %v339
                  %v341 = vld [vmem:[%s335 + $0xc8] sm:$0xf]
                  %342 = vst [vmem:[%s336 + $0x8] sm:$0xf] %v341
                  %v343 = vld [vmem:[%s335 + $0x12c] sm:$0xf]
                  %344 = vst [vmem:[%s336 + $0xc] sm:$0xf] %v343
                  %v345 = vld [vmem:[%s335 + $0x190] sm:$0xf]
                  %346 = vst [vmem:[%s336 + $0x10] sm:$0xf] %v345
                  %v347 = vld [vmem:[%s335 + $0x1f4] sm:$0xf]
                  %348 = vst [vmem:[%s336 + $0x14] sm:$0xf] %v347
                  %v349 = vld [vmem:[%s335 + $0x258] sm:$0xf]
                  %350 = vst [vmem:[%s336 + $0x18] sm:$0xf] %v349
                  %v351 = vld [vmem:[%s335 + $0x2bc] sm:$0xf]
                  %352 = vst [vmem:[%s336 + $0x1c] sm:$0xf] %v351
                  %v353 = vld [vmem:[%s335 + $0x320] sm:$0xf]
                  %354 = vst [vmem:[%s336 + $0x20] sm:$0xf] %v353
                  %v355 = vld [vmem:[%s335 + $0x384] sm:$0xf]
                  %356 = vst [vmem:[%s336 + $0x24] sm:$0xf] %v355
                  %v357 = vld [vmem:[%s335 + $0x3e8] sm:$0xf]
                  %358 = vst [vmem:[%s336 + $0x28] sm:$0xf] %v357
                  %v359 = vld [vmem:[%s335 + $0x44c] sm:$0xf]
                  %360 = vst [vmem:[%s336 + $0x2c] sm:$0xf] %v359
                  %v361 = vld [vmem:[%s335 + $0x4b0] sm:$0xf]
                  %362 = vst [vmem:[%s336 + $0x30] sm:$0xf] %v361
                  %v363 = vld [vmem:[%s335 + $0x514] sm:$0xf]
                  %364 = vst [vmem:[%s336 + $0x34] sm:$0xf] %v363
                  %v365 = vld [vmem:[%s335 + $0x578] sm:$0xf]
                  %366 = vst [vmem:[%s336 + $0x38] sm:$0xf] %v365
                  %v367 = vld [vmem:[%s335 + $0x5dc] sm:$0xf]
                  %368 = vst [vmem:[%s336 + $0x3c] sm:$0xf] %v367
                  %v369 = vld [vmem:[%s335 + $0x640] sm:$0xf]
                  %370 = vst [vmem:[%s336 + $0x40] sm:$0xf] %v369
                  %v371 = vld [vmem:[%s335 + $0x6a4] sm:$0xf]
                  %372 = vst [vmem:[%s336 + $0x44] sm:$0xf] %v371
                  %v373 = vld [vmem:[%s335 + $0x708] sm:$0xf]
                  %374 = vst [vmem:[%s336 + $0x48] sm:$0xf] %v373
                  %v375 = vld [vmem:[%s335 + $0x76c] sm:$0xf]
                  %376 = vst [vmem:[%s336 + $0x4c] sm:$0xf] %v375
                  %v377 = vld [vmem:[%s335 + $0x7d0] sm:$0xf]
                  %378 = vst [vmem:[%s336 + $0x50] sm:$0xf] %v377
                  %v379 = vld [vmem:[%s335 + $0x834] sm:$0xf]
                  %380 = vst [vmem:[%s336 + $0x54] sm:$0xf] %v379
                  %v381 = vld [vmem:[%s335 + $0x898] sm:$0xf]
                  %382 = vst [vmem:[%s336 + $0x58] sm:$0xf] %v381
                  %v383 = vld [vmem:[%s335 + $0x8fc] sm:$0xf]
                  %384 = vst [vmem:[%s336 + $0x5c] sm:$0xf] %v383
                  %v385 = vld [vmem:[%s335 + $0x960] sm:$0xf]
                  %386 = vst [vmem:[%s336 + $0x60] sm:$0xf] %v385
                  %v387 = vld [vmem:[%s335 + $0x9c4] sm:$0xf]
                  %388 = vst [vmem:[%s336 + $0x64] sm:$0xf] %v387
                  %v389 = vld [vmem:[%s335 + $0xa28] sm:$0xf]
                  %390 = vst [vmem:[%s336 + $0x68] sm:$0xf] %v389
                  %v391 = vld [vmem:[%s335 + $0xa8c] sm:$0xf]
                  %392 = vst [vmem:[%s336 + $0x6c] sm:$0xf] %v391
                  %v393 = vld [vmem:[%s335 + $0xaf0] sm:$0xf]
                  %394 = vst [vmem:[%s336 + $0x70] sm:$0xf] %v393
                  %v395 = vld [vmem:[%s335 + $0xb54] sm:$0xf]
                  %396 = vst [vmem:[%s336 + $0x74] sm:$0xf] %v395
                  %v397 = vld [vmem:[%s335 + $0xbb8] sm:$0xf]
                  %398 = vst [vmem:[%s336 + $0x78] sm:$0xf] %v397
                  %v399 = vld [vmem:[%s335 + $0xc1c] sm:$0xf]
                  %400 = vst [vmem:[%s336 + $0x7c] sm:$0xf] %v399
                  %v401 = vld [vmem:[%s335 + $0xc80] sm:$0xf]
                  %402 = vst [vmem:[%s336 + $0x80] sm:$0xf] %v401
                  %v403 = vld [vmem:[%s335 + $0xce4] sm:$0xf]
                  %404 = vst [vmem:[%s336 + $0x84] sm:$0xf] %v403
                  %v405 = vld [vmem:[%s335 + $0xd48] sm:$0xf]
                  %406 = vst [vmem:[%s336 + $0x88] sm:$0xf] %v405
                  %v407 = vld [vmem:[%s335 + $0xdac] sm:$0xf]
                  %408 = vst [vmem:[%s336 + $0x8c] sm:$0xf] %v407
                  %v409 = vld [vmem:[%s335 + $0xe10] sm:$0xf]
                  %410 = vst [vmem:[%s336 + $0x90] sm:$0xf] %v409
                  %v411 = vld [vmem:[%s335 + $0xe74] sm:$0xf]
                  %412 = vst [vmem:[%s336 + $0x94] sm:$0xf] %v411
                  %v413 = vld [vmem:[%s335 + $0xed8] sm:$0xf]
                  %414 = vst [vmem:[%s336 + $0x98] sm:$0xf] %v413
                  %v415 = vld [vmem:[%s335 + $0xf3c] sm:$0xf]
                  %416 = vst [vmem:[%s336 + $0x9c] sm:$0xf] %v415
                  %v417 = vld [vmem:[%s335 + $0xfa0] sm:$0xf]
                  %418 = vst [vmem:[%s336 + $0xa0] sm:$0xf] %v417
                  %v419 = vld [vmem:[%s335 + $0x1004] sm:$0xf]
                  %420 = vst [vmem:[%s336 + $0xa4] sm:$0xf] %v419
                  %v421 = vld [vmem:[%s335 + $0x1068] sm:$0xf]
                  %422 = vst [vmem:[%s336 + $0xa8] sm:$0xf] %v421
                  %v423 = vld [vmem:[%s335 + $0x10cc] sm:$0xf]
                  %424 = vst [vmem:[%s336 + $0xac] sm:$0xf] %v423
                  %v425 = vld [vmem:[%s335 + $0x1130] sm:$0xf]
                  %426 = vst [vmem:[%s336 + $0xb0] sm:$0xf] %v425
                  %v427 = vld [vmem:[%s335 + $0x1194] sm:$0xf]
                  %428 = vst [vmem:[%s336 + $0xb4] sm:$0xf] %v427
                  %v429 = vld [vmem:[%s335 + $0x11f8] sm:$0xf]
                  %430 = vst [vmem:[%s336 + $0xb8] sm:$0xf] %v429
                  %v431 = vld [vmem:[%s335 + $0x125c] sm:$0xf]
                  %432 = vst [vmem:[%s336 + $0xbc] sm:$0xf] %v431
                  %v433 = vld [vmem:[%s335 + $0x12c0] sm:$0xf]
                  %434 = vst [vmem:[%s336 + $0xc0] sm:$0xf] %v433
                  %v435 = vld [vmem:[%s335 + $0x1324] sm:$0xf]
                  %436 = vst [vmem:[%s336 + $0xc4] sm:$0xf] %v435
                  %v437 = vld [vmem:[%s335 + $0x1388] sm:$0xf]
                  %438 = vst [vmem:[%s336 + $0xc8] sm:$0xf] %v437
                  %v439 = vld [vmem:[%s335 + $0x13ec] sm:$0xf]
                  %440 = vst [vmem:[%s336 + $0xcc] sm:$0xf] %v439
                  %v441 = vld [vmem:[%s335 + $0x1450] sm:$0xf]
                  %442 = vst [vmem:[%s336 + $0xd0] sm:$0xf] %v441
                  %v443 = vld [vmem:[%s335 + $0x14b4] sm:$0xf]
                  %444 = vst [vmem:[%s336 + $0xd4] sm:$0xf] %v443
                  %v445 = vld [vmem:[%s335 + $0x1518] sm:$0xf]
                  %446 = vst [vmem:[%s336 + $0xd8] sm:$0xf] %v445
                  %v447 = vld [vmem:[%s335 + $0x157c] sm:$0xf]
                  %448 = vst [vmem:[%s336 + $0xdc] sm:$0xf] %v447
                  %v449 = vld [vmem:[%s335 + $0x15e0] sm:$0xf]
                  %450 = vst [vmem:[%s336 + $0xe0] sm:$0xf] %v449
                  %v451 = vld [vmem:[%s335 + $0x1644] sm:$0xf]
                  %452 = vst [vmem:[%s336 + $0xe4] sm:$0xf] %v451
                  %v453 = vld [vmem:[%s335 + $0x16a8] sm:$0xf]
                  %454 = vst [vmem:[%s336 + $0xe8] sm:$0xf] %v453
                  %v455 = vld [vmem:[%s335 + $0x170c] sm:$0xf]
                  %456 = vst [vmem:[%s336 + $0xec] sm:$0xf] %v455
                  %v457 = vld [vmem:[%s335 + $0x1770] sm:$0xf]
                  %458 = vst [vmem:[%s336 + $0xf0] sm:$0xf] %v457
                  %v459 = vld [vmem:[%s335 + $0x17d4] sm:$0xf]
                  %460 = vst [vmem:[%s336 + $0xf4] sm:$0xf] %v459
                  %v461 = vld [vmem:[%s335 + $0x1838] sm:$0xf]
                  %462 = vst [vmem:[%s336 + $0xf8] sm:$0xf] %v461
                  %v463 = vld [vmem:[%s335 + $0x189c] sm:$0xf]
                  %464 = vst [vmem:[%s336 + $0xfc] sm:$0xf] %v463
                $region59: #{generator_forward.105} parent=46 // loop_footer
                  %s334 = sadd.s32 1, %s330
                $region60: #{generator_forward.105} parent=46 // loop_footer_branch
                  %329 = sbr.rel target = $region56
                $region61: #{generator_forward.105} parent=46 // loop_exit
                  _
              $region47: #{generator_forward.105} parent=31 // pred_fallthru
                _
            $region32: #{generator_forward.105} parent=27 // pred_fallthru
              _
            // Predicated region
            $region33: #{generator_forward.105} parent=27 // pred_check
              _
            $region34: #{generator_forward.105} parent=27 // pred_check_branch
              %180 = sbr.rel (0) target = $region36
            $region35: #{generator_forward.105} parent=27 // pred_region
              loop: start=0, step=1, limit=1
              $region37: #{generator_forward.105} parent=35 // loop_pre_header
                _
              $region38: #{generator_forward.105} parent=35 // loop_header
                %s183 = sphi 0, %s187
                %p184 = scmp.ge.s32.totalorder %s183, 1
                %s188 = sphi %s174, %s174
                %s189 = sphi %s169, %s169
              $region39: #{generator_forward.105} parent=35 // loop_header_branch
                %186 = sbr.rel (%p184) target = $region43
              $region40: #{generator_forward.105} parent=35 // loop_body
                %v190 = vld [vmem:[%s188] sm:$0xf]
                %191 = vst [vmem:[%s189] sm:$0xf] %v190
                %v192 = vld [vmem:[%s188 + $0x64] sm:$0xf]
                %193 = vst [vmem:[%s189 + $0x4] sm:$0xf] %v192
                %v194 = vld [vmem:[%s188 + $0xc8] sm:$0xf]
                %195 = vst [vmem:[%s189 + $0x8] sm:$0xf] %v194
                %v196 = vld [vmem:[%s188 + $0x12c] sm:$0xf]
                %197 = vst [vmem:[%s189 + $0xc] sm:$0xf] %v196
                %v198 = vld [vmem:[%s188 + $0x190] sm:$0xf]
                %199 = vst [vmem:[%s189 + $0x10] sm:$0xf] %v198
                %v200 = vld [vmem:[%s188 + $0x1f4] sm:$0xf]
                %201 = vst [vmem:[%s189 + $0x14] sm:$0xf] %v200
                %v202 = vld [vmem:[%s188 + $0x258] sm:$0xf]
                %203 = vst [vmem:[%s189 + $0x18] sm:$0xf] %v202
                %v204 = vld [vmem:[%s188 + $0x2bc] sm:$0xf]
                %205 = vst [vmem:[%s189 + $0x1c] sm:$0xf] %v204
                %v206 = vld [vmem:[%s188 + $0x320] sm:$0xf]
                %207 = vst [vmem:[%s189 + $0x20] sm:$0xf] %v206
                %v208 = vld [vmem:[%s188 + $0x384] sm:$0xf]
                %209 = vst [vmem:[%s189 + $0x24] sm:$0xf] %v208
                %v210 = vld [vmem:[%s188 + $0x3e8] sm:$0xf]
                %211 = vst [vmem:[%s189 + $0x28] sm:$0xf] %v210
                %v212 = vld [vmem:[%s188 + $0x44c] sm:$0xf]
                %213 = vst [vmem:[%s189 + $0x2c] sm:$0xf] %v212
                %v214 = vld [vmem:[%s188 + $0x4b0] sm:$0xf]
                %215 = vst [vmem:[%s189 + $0x30] sm:$0xf] %v214
                %v216 = vld [vmem:[%s188 + $0x514] sm:$0xf]
                %217 = vst [vmem:[%s189 + $0x34] sm:$0xf] %v216
                %v218 = vld [vmem:[%s188 + $0x578] sm:$0xf]
                %219 = vst [vmem:[%s189 + $0x38] sm:$0xf] %v218
                %v220 = vld [vmem:[%s188 + $0x5dc] sm:$0xf]
                %221 = vst [vmem:[%s189 + $0x3c] sm:$0xf] %v220
                %v222 = vld [vmem:[%s188 + $0x640] sm:$0xf]
                %223 = vst [vmem:[%s189 + $0x40] sm:$0xf] %v222
                %v224 = vld [vmem:[%s188 + $0x6a4] sm:$0xf]
                %225 = vst [vmem:[%s189 + $0x44] sm:$0xf] %v224
                %v226 = vld [vmem:[%s188 + $0x708] sm:$0xf]
                %227 = vst [vmem:[%s189 + $0x48] sm:$0xf] %v226
                %v228 = vld [vmem:[%s188 + $0x76c] sm:$0xf]
                %229 = vst [vmem:[%s189 + $0x4c] sm:$0xf] %v228
                %v230 = vld [vmem:[%s188 + $0x7d0] sm:$0xf]
                %231 = vst [vmem:[%s189 + $0x50] sm:$0xf] %v230
                %v232 = vld [vmem:[%s188 + $0x834] sm:$0xf]
                %233 = vst [vmem:[%s189 + $0x54] sm:$0xf] %v232
                %v234 = vld [vmem:[%s188 + $0x898] sm:$0xf]
                %235 = vst [vmem:[%s189 + $0x58] sm:$0xf] %v234
                %v236 = vld [vmem:[%s188 + $0x8fc] sm:$0xf]
                %237 = vst [vmem:[%s189 + $0x5c] sm:$0xf] %v236
                %v238 = vld [vmem:[%s188 + $0x960] sm:$0xf]
                %239 = vst [vmem:[%s189 + $0x60] sm:$0xf] %v238
                %v240 = vld [vmem:[%s188 + $0x9c4] sm:$0xf]
                %241 = vst [vmem:[%s189 + $0x64] sm:$0xf] %v240
                %v242 = vld [vmem:[%s188 + $0xa28] sm:$0xf]
                %243 = vst [vmem:[%s189 + $0x68] sm:$0xf] %v242
                %v244 = vld [vmem:[%s188 + $0xa8c] sm:$0xf]
                %245 = vst [vmem:[%s189 + $0x6c] sm:$0xf] %v244
                %v246 = vld [vmem:[%s188 + $0xaf0] sm:$0xf]
                %247 = vst [vmem:[%s189 + $0x70] sm:$0xf] %v246
                %v248 = vld [vmem:[%s188 + $0xb54] sm:$0xf]
                %249 = vst [vmem:[%s189 + $0x74] sm:$0xf] %v248
                %v250 = vld [vmem:[%s188 + $0xbb8] sm:$0xf]
                %251 = vst [vmem:[%s189 + $0x78] sm:$0xf] %v250
                %v252 = vld [vmem:[%s188 + $0xc1c] sm:$0xf]
                %253 = vst [vmem:[%s189 + $0x7c] sm:$0xf] %v252
                %v254 = vld [vmem:[%s188 + $0xc80] sm:$0xf]
                %255 = vst [vmem:[%s189 + $0x80] sm:$0xf] %v254
                %v256 = vld [vmem:[%s188 + $0xce4] sm:$0xf]
                %257 = vst [vmem:[%s189 + $0x84] sm:$0xf] %v256
                %v258 = vld [vmem:[%s188 + $0xd48] sm:$0xf]
                %259 = vst [vmem:[%s189 + $0x88] sm:$0xf] %v258
                %v260 = vld [vmem:[%s188 + $0xdac] sm:$0xf]
                %261 = vst [vmem:[%s189 + $0x8c] sm:$0xf] %v260
                %v262 = vld [vmem:[%s188 + $0xe10] sm:$0xf]
                %263 = vst [vmem:[%s189 + $0x90] sm:$0xf] %v262
                %v264 = vld [vmem:[%s188 + $0xe74] sm:$0xf]
                %265 = vst [vmem:[%s189 + $0x94] sm:$0xf] %v264
                %v266 = vld [vmem:[%s188 + $0xed8] sm:$0xf]
                %267 = vst [vmem:[%s189 + $0x98] sm:$0xf] %v266
                %v268 = vld [vmem:[%s188 + $0xf3c] sm:$0xf]
                %269 = vst [vmem:[%s189 + $0x9c] sm:$0xf] %v268
                %v270 = vld [vmem:[%s188 + $0xfa0] sm:$0xf]
                %271 = vst [vmem:[%s189 + $0xa0] sm:$0xf] %v270
                %v272 = vld [vmem:[%s188 + $0x1004] sm:$0xf]
                %273 = vst [vmem:[%s189 + $0xa4] sm:$0xf] %v272
                %v274 = vld [vmem:[%s188 + $0x1068] sm:$0xf]
                %275 = vst [vmem:[%s189 + $0xa8] sm:$0xf] %v274
                %v276 = vld [vmem:[%s188 + $0x10cc] sm:$0xf]
                %277 = vst [vmem:[%s189 + $0xac] sm:$0xf] %v276
                %v278 = vld [vmem:[%s188 + $0x1130] sm:$0xf]
                %279 = vst [vmem:[%s189 + $0xb0] sm:$0xf] %v278
                %v280 = vld [vmem:[%s188 + $0x1194] sm:$0xf]
                %281 = vst [vmem:[%s189 + $0xb4] sm:$0xf] %v280
                %v282 = vld [vmem:[%s188 + $0x11f8] sm:$0xf]
                %283 = vst [vmem:[%s189 + $0xb8] sm:$0xf] %v282
                %v284 = vld [vmem:[%s188 + $0x125c] sm:$0xf]
                %285 = vst [vmem:[%s189 + $0xbc] sm:$0xf] %v284
                %v286 = vld [vmem:[%s188 + $0x12c0] sm:$0xf]
                %287 = vst [vmem:[%s189 + $0xc0] sm:$0xf] %v286
                %v288 = vld [vmem:[%s188 + $0x1324] sm:$0xf]
                %289 = vst [vmem:[%s189 + $0xc4] sm:$0xf] %v288
                %v290 = vld [vmem:[%s188 + $0x1388] sm:$0xf]
                %291 = vst [vmem:[%s189 + $0xc8] sm:$0xf] %v290
                %v292 = vld [vmem:[%s188 + $0x13ec] sm:$0xf]
                %293 = vst [vmem:[%s189 + $0xcc] sm:$0xf] %v292
                %v294 = vld [vmem:[%s188 + $0x1450] sm:$0xf]
                %295 = vst [vmem:[%s189 + $0xd0] sm:$0xf] %v294
                %v296 = vld [vmem:[%s188 + $0x14b4] sm:$0xf]
                %297 = vst [vmem:[%s189 + $0xd4] sm:$0xf] %v296
                %v298 = vld [vmem:[%s188 + $0x1518] sm:$0xf]
                %299 = vst [vmem:[%s189 + $0xd8] sm:$0xf] %v298
                %v300 = vld [vmem:[%s188 + $0x157c] sm:$0xf]
                %301 = vst [vmem:[%s189 + $0xdc] sm:$0xf] %v300
                %v302 = vld [vmem:[%s188 + $0x15e0] sm:$0xf]
                %303 = vst [vmem:[%s189 + $0xe0] sm:$0xf] %v302
                %v304 = vld [vmem:[%s188 + $0x1644] sm:$0xf]
                %305 = vst [vmem:[%s189 + $0xe4] sm:$0xf] %v304
                %v306 = vld [vmem:[%s188 + $0x16a8] sm:$0xf]
                %307 = vst [vmem:[%s189 + $0xe8] sm:$0xf] %v306
                %v308 = vld [vmem:[%s188 + $0x170c] sm:$0xf]
                %309 = vst [vmem:[%s189 + $0xec] sm:$0xf] %v308
                %v310 = vld [vmem:[%s188 + $0x1770] sm:$0xf]
                %311 = vst [vmem:[%s189 + $0xf0] sm:$0xf] %v310
                %v312 = vld [vmem:[%s188 + $0x17d4] sm:$0xf]
                %313 = vst [vmem:[%s189 + $0xf4] sm:$0xf] %v312
                %v314 = vld [vmem:[%s188 + $0x1838] sm:$0xf]
                %315 = vst [vmem:[%s189 + $0xf8] sm:$0xf] %v314
                %v316 = vld [vmem:[%s188 + $0x189c] sm:$0xf]
                %317 = vst [vmem:[%s189 + $0xfc] sm:$0xf] %v316
              $region41: #{generator_forward.105} parent=35 // loop_footer
                %s187 = sadd.s32 1, %s183
              $region42: #{generator_forward.105} parent=35 // loop_footer_branch
                %182 = sbr.rel target = $region38
              $region43: #{generator_forward.105} parent=35 // loop_exit
                _
            $region36: #{generator_forward.105} parent=27 // pred_fallthru
              _
          $region28: #{generator_forward.105} parent=23 // pred_fallthru
            _
          %465 = vnop
        $region24: #{generator_forward.105} parent=19 // pred_fallthru
          _
        // Predicated region
        $region62: #{generator_forward.105} parent=19 // pred_check
          %p466 = pneg %p78
        $region63: #{generator_forward.105} parent=19 // pred_check_branch
          %468 = sbr.rel (%p466) target = $region65
        $region64: #{generator_forward.105} parent=19 // pred_region
          %s469 = smul.u32 16, %s18
          %p470 = scmp.lt.s32.totalorder %s469, 399
          %s471 = scalar_select %p470, %s469, 399
          %p472 = scmp.lt.s32.totalorder %s17, 0
          %s473 = scalar_select %p472, %s17, 0
          %s474 = sadd.s32 %s473, %s471
          %s475 = smul.addr %s474, 4
          %s476 = scalar_lea.vmem %s1, %s475
          %s477 = smul.u32 16, %s18
        $region65: #{generator_forward.105} parent=19 // pred_fallthru
          _
      $region20: #{generator_forward.105} parent=5 // pred_fallthru
        _
      %p478 = scmp.le.s32.totalorder 1, %s9
      %p479 = scmp.lt.s32.totalorder %s9, 26
      %p480 = pnand %p478, %p479
      %p481 = pneg %p480
      // Predicated region
      $region66: #{generator_forward.105} parent=5 // pred_check
        _
      $region67: #{generator_forward.105} parent=5 // pred_check_branch
        %483 = sbr.rel (%p480) target = $region69
      $region68: #{generator_forward.105} parent=5 // pred_region
        %s484 = ssub.s32 %s9, 1
        %s485 = sand.u32 %s43, 1
        %s486 = sand.u32 %s43, 1
        %s487 = smul.addr %s486, 256
        %s488 = scalar_lea.vmem [#allocation3], %s487
        // Predicated region
        $region70: #{generator_forward.105} parent=68 // pred_check
          %p489 = pneg %p56
        $region71: #{generator_forward.105} parent=68 // pred_check_branch
          %491 = sbr.rel (%p489) target = $region73
        $region72: #{generator_forward.105} parent=68 // pred_region
          _
        $region73: #{generator_forward.105} parent=68 // pred_fallthru
          _
        %s492 = sand.u32 %s43, 1
        %s493 = sand.u32 %s43, 1
        %s494 = smul.addr %s493, 256
        %s495 = scalar_lea.vmem [#allocation3], %s494
        %p496 = pneg %p56
        %p497 = pneg %p53
        %s498 = smul.u32 16, %s21
        %p499 = scmp.lt.s32.totalorder %s498, 399
        %s500 = scalar_select %p499, %s498, 399
        %p501 = scmp.lt.s32.totalorder %s20, 0
        %s502 = scalar_select %p501, %s20, 0
        %s503 = sadd.s32 %s502, %s500
        %s504 = smul.addr %s503, 4
        %s505 = scalar_lea.vmem %s1, %s504
        %p506 = pneg %p84
        %p507 = pneg %p81
        %p508 = scmp.lt.s32.totalorder %s20, 0
        %s509 = scalar_select %p508, %s20, 0
        %s510 = scalar_lea.vmem %s2, %s509
        %p511 = pneg %p110
        %p512 = pneg %p107
        %p513 = pneg %p138
        %p514 = pneg %p135
        %s515 = smul.u32 64, %s19
        %p516 = scmp.lt.s32.totalorder %s515, 63
        %s517 = scalar_select %p516, %s515, 63
        %p518 = scmp.lt.s32.totalorder %s20, 0
        %s519 = scalar_select %p518, %s20, 0
        %s520 = sadd.s32 %s519, %s517
        %s521 = smul.addr %s520, 8
        %s522 = scalar_lea.vmem %s3, %s521
        %s523 = smul.u32 64, %s19
        %s524 = smul.u32 16, %s21
        %p525 = scmp.lt.s32.totalorder %s524, 399
        %s526 = scalar_select %p525, %s524, 399
        %p527 = scmp.lt.s32.totalorder %s20, 0
        %s528 = scalar_select %p527, %s20, 0
        %s529 = sadd.s32 %s528, %s526
        %s530 = smul.addr %s529, 4
        %s531 = scalar_lea.vmem %s1, %s530
        %s532 = smul.u32 16, %s21
        %p533 = scmp.lt.s32.totalorder %s20, 0
        %s534 = scalar_select %p533, %s20, 0
        %s535 = scalar_lea.vmem %s2, %s534
        %s536 = smul.u32 64, %s19
        %p537 = scmp.lt.s32.totalorder %s536, 63
        %s538 = scalar_select %p537, %s536, 63
        %p539 = scmp.lt.s32.totalorder %s20, 0
        %s540 = scalar_select %p539, %s20, 0
        %s541 = sadd.s32 %s540, %s538
        %s542 = smul.addr %s541, 8
        %s543 = scalar_lea.vmem %s3, %s542
        %s544 = smul.u32 64, %s19
        %p546 = scmp.eq.s32.totalorder %s21, 0
        // Predicated region
        $region74: #{generator_forward.105} parent=68 // pred_check
          %p547 = pneg %p546
        $region75: #{generator_forward.105} parent=68 // pred_check_branch
          %549 = sbr.rel (%p547) target = $region77
        $region76: #{generator_forward.105} parent=68 // pred_region
          %550 = vst [vmem:[#allocation2] sm:$0xff] 0.0
          %551 = vst [vmem:[#allocation2 + $0x8] sm:$0xff] 0.0
          %552 = vst [vmem:[#allocation2 + $0x10] sm:$0xff] 0.0
          %553 = vst [vmem:[#allocation2 + $0x18] sm:$0xff] 0.0
          %554 = vst [vmem:[#allocation2 + $0x20] sm:$0xff] 0.0
          %555 = vst [vmem:[#allocation2 + $0x28] sm:$0xff] 0.0
          %556 = vst [vmem:[#allocation2 + $0x30] sm:$0xff] 0.0
          %557 = vst [vmem:[#allocation2 + $0x38] sm:$0xff] 0.0
          %558 = vst [vmem:[#allocation2 + $0x40] sm:$0xff] 0.0
          %559 = vst [vmem:[#allocation2 + $0x48] sm:$0xff] 0.0
          %560 = vst [vmem:[#allocation2 + $0x50] sm:$0xff] 0.0
          %561 = vst [vmem:[#allocation2 + $0x58] sm:$0xff] 0.0
          %562 = vst [vmem:[#allocation2 + $0x60] sm:$0xff] 0.0
          %563 = vst [vmem:[#allocation2 + $0x68] sm:$0xff] 0.0
          %564 = vst [vmem:[#allocation2 + $0x70] sm:$0xff] 0.0
          %565 = vst [vmem:[#allocation2 + $0x78] sm:$0xff] 0.0
          %566 = vst [vmem:[#allocation2 + $0x80] sm:$0xff] 0.0
          %567 = vst [vmem:[#allocation2 + $0x88] sm:$0xff] 0.0
          %568 = vst [vmem:[#allocation2 + $0x90] sm:$0xff] 0.0
          %569 = vst [vmem:[#allocation2 + $0x98] sm:$0xff] 0.0
          %570 = vst [vmem:[#allocation2 + $0xa0] sm:$0xff] 0.0
          %571 = vst [vmem:[#allocation2 + $0xa8] sm:$0xff] 0.0
          %572 = vst [vmem:[#allocation2 + $0xb0] sm:$0xff] 0.0
          %573 = vst [vmem:[#allocation2 + $0xb8] sm:$0xff] 0.0
          %574 = vst [vmem:[#allocation2 + $0xc0] sm:$0xff] 0.0
          %575 = vst [vmem:[#allocation2 + $0xc8] sm:$0xff] 0.0
          %576 = vst [vmem:[#allocation2 + $0xd0] sm:$0xff] 0.0
          %577 = vst [vmem:[#allocation2 + $0xd8] sm:$0xff] 0.0
          %578 = vst [vmem:[#allocation2 + $0xe0] sm:$0xff] 0.0
          %579 = vst [vmem:[#allocation2 + $0xe8] sm:$0xff] 0.0
          %580 = vst [vmem:[#allocation2 + $0xf0] sm:$0xff] 0.0
          %581 = vst [vmem:[#allocation2 + $0xf8] sm:$0xff] 0.0
          %582 = vst [vmem:[#allocation2 + $0x100] sm:$0xff] 0.0
          %583 = vst [vmem:[#allocation2 + $0x108] sm:$0xff] 0.0
          %584 = vst [vmem:[#allocation2 + $0x110] sm:$0xff] 0.0
          %585 = vst [vmem:[#allocation2 + $0x118] sm:$0xff] 0.0
          %586 = vst [vmem:[#allocation2 + $0x120] sm:$0xff] 0.0
          %587 = vst [vmem:[#allocation2 + $0x128] sm:$0xff] 0.0
          %588 = vst [vmem:[#allocation2 + $0x130] sm:$0xff] 0.0
          %589 = vst [vmem:[#allocation2 + $0x138] sm:$0xff] 0.0
          %590 = vst [vmem:[#allocation2 + $0x140] sm:$0xff] 0.0
          %591 = vst [vmem:[#allocation2 + $0x148] sm:$0xff] 0.0
          %592 = vst [vmem:[#allocation2 + $0x150] sm:$0xff] 0.0
          %593 = vst [vmem:[#allocation2 + $0x158] sm:$0xff] 0.0
          %594 = vst [vmem:[#allocation2 + $0x160] sm:$0xff] 0.0
          %595 = vst [vmem:[#allocation2 + $0x168] sm:$0xff] 0.0
          %596 = vst [vmem:[#allocation2 + $0x170] sm:$0xff] 0.0
          %597 = vst [vmem:[#allocation2 + $0x178] sm:$0xff] 0.0
          %598 = vst [vmem:[#allocation2 + $0x180] sm:$0xff] 0.0
          %599 = vst [vmem:[#allocation2 + $0x188] sm:$0xff] 0.0
          %600 = vst [vmem:[#allocation2 + $0x190] sm:$0xff] 0.0
          %601 = vst [vmem:[#allocation2 + $0x198] sm:$0xff] 0.0
          %602 = vst [vmem:[#allocation2 + $0x1a0] sm:$0xff] 0.0
          %603 = vst [vmem:[#allocation2 + $0x1a8] sm:$0xff] 0.0
          %604 = vst [vmem:[#allocation2 + $0x1b0] sm:$0xff] 0.0
          %605 = vst [vmem:[#allocation2 + $0x1b8] sm:$0xff] 0.0
          %606 = vst [vmem:[#allocation2 + $0x1c0] sm:$0xff] 0.0
          %607 = vst [vmem:[#allocation2 + $0x1c8] sm:$0xff] 0.0
          %608 = vst [vmem:[#allocation2 + $0x1d0] sm:$0xff] 0.0
          %609 = vst [vmem:[#allocation2 + $0x1d8] sm:$0xff] 0.0
          %610 = vst [vmem:[#allocation2 + $0x1e0] sm:$0xff] 0.0
          %611 = vst [vmem:[#allocation2 + $0x1e8] sm:$0xff] 0.0
          %612 = vst [vmem:[#allocation2 + $0x1f0] sm:$0xff] 0.0
          %613 = vst [vmem:[#allocation2 + $0x1f8] sm:$0xff] 0.0
        $region77: #{generator_forward.105} parent=68 // pred_fallthru
          _
        %v614 = vld [vmem:[#allocation2] sm:$0xff]
        %v615 = vld [vmem:[#allocation2 + $0x8] sm:$0xff]
        %v616 = vld [vmem:[#allocation2 + $0x10] sm:$0xff]
        %v617 = vld [vmem:[#allocation2 + $0x18] sm:$0xff]
        %v618 = vld [vmem:[#allocation2 + $0x20] sm:$0xff]
        %v619 = vld [vmem:[#allocation2 + $0x28] sm:$0xff]
        %v620 = vld [vmem:[#allocation2 + $0x30] sm:$0xff]
        %v621 = vld [vmem:[#allocation2 + $0x38] sm:$0xff]
        %v622 = vld [vmem:[#allocation2 + $0x40] sm:$0xff]
        %v623 = vld [vmem:[#allocation2 + $0x48] sm:$0xff]
        %v624 = vld [vmem:[#allocation2 + $0x50] sm:$0xff]
        %v625 = vld [vmem:[#allocation2 + $0x58] sm:$0xff]
        %v626 = vld [vmem:[#allocation2 + $0x60] sm:$0xff]
        %v627 = vld [vmem:[#allocation2 + $0x68] sm:$0xff]
        %v628 = vld [vmem:[#allocation2 + $0x70] sm:$0xff]
        %v629 = vld [vmem:[#allocation2 + $0x78] sm:$0xff]
        %v630 = vld [vmem:[#allocation2 + $0x80] sm:$0xff]
        %v631 = vld [vmem:[#allocation2 + $0x88] sm:$0xff]
        %v632 = vld [vmem:[#allocation2 + $0x90] sm:$0xff]
        %v633 = vld [vmem:[#allocation2 + $0x98] sm:$0xff]
        %v634 = vld [vmem:[#allocation2 + $0xa0] sm:$0xff]
        %v635 = vld [vmem:[#allocation2 + $0xa8] sm:$0xff]
        %v636 = vld [vmem:[#allocation2 + $0xb0] sm:$0xff]
        %v637 = vld [vmem:[#allocation2 + $0xb8] sm:$0xff]
        %v638 = vld [vmem:[#allocation2 + $0xc0] sm:$0xff]
        %v639 = vld [vmem:[#allocation2 + $0xc8] sm:$0xff]
        %v640 = vld [vmem:[#allocation2 + $0xd0] sm:$0xff]
        %v641 = vld [vmem:[#allocation2 + $0xd8] sm:$0xff]
        %v642 = vld [vmem:[#allocation2 + $0xe0] sm:$0xff]
        %v643 = vld [vmem:[#allocation2 + $0xe8] sm:$0xff]
        %v644 = vld [vmem:[#allocation2 + $0xf0] sm:$0xff]
        %v645 = vld [vmem:[#allocation2 + $0xf8] sm:$0xff]
        %v646 = vld [vmem:[#allocation2 + $0x100] sm:$0xff]
        %v647 = vld [vmem:[#allocation2 + $0x108] sm:$0xff]
        %v648 = vld [vmem:[#allocation2 + $0x110] sm:$0xff]
        %v649 = vld [vmem:[#allocation2 + $0x118] sm:$0xff]
        %v650 = vld [vmem:[#allocation2 + $0x120] sm:$0xff]
        %v651 = vld [vmem:[#allocation2 + $0x128] sm:$0xff]
        %v652 = vld [vmem:[#allocation2 + $0x130] sm:$0xff]
        %v653 = vld [vmem:[#allocation2 + $0x138] sm:$0xff]
        %v654 = vld [vmem:[#allocation2 + $0x140] sm:$0xff]
        %v655 = vld [vmem:[#allocation2 + $0x148] sm:$0xff]
        %v656 = vld [vmem:[#allocation2 + $0x150] sm:$0xff]
        %v657 = vld [vmem:[#allocation2 + $0x158] sm:$0xff]
        %v658 = vld [vmem:[#allocation2 + $0x160] sm:$0xff]
        %v659 = vld [vmem:[#allocation2 + $0x168] sm:$0xff]
        %v660 = vld [vmem:[#allocation2 + $0x170] sm:$0xff]
        %v661 = vld [vmem:[#allocation2 + $0x178] sm:$0xff]
        %v662 = vld [vmem:[#allocation2 + $0x180] sm:$0xff]
        %v663 = vld [vmem:[#allocation2 + $0x188] sm:$0xff]
        %v664 = vld [vmem:[#allocation2 + $0x190] sm:$0xff]
        %v665 = vld [vmem:[#allocation2 + $0x198] sm:$0xff]
        %v666 = vld [vmem:[#allocation2 + $0x1a0] sm:$0xff]
        %v667 = vld [vmem:[#allocation2 + $0x1a8] sm:$0xff]
        %v668 = vld [vmem:[#allocation2 + $0x1b0] sm:$0xff]
        %v669 = vld [vmem:[#allocation2 + $0x1b8] sm:$0xff]
        %v670 = vld [vmem:[#allocation2 + $0x1c0] sm:$0xff]
        %v671 = vld [vmem:[#allocation2 + $0x1c8] sm:$0xff]
        %v672 = vld [vmem:[#allocation2 + $0x1d0] sm:$0xff]
        %v673 = vld [vmem:[#allocation2 + $0x1d8] sm:$0xff]
        %v674 = vld [vmem:[#allocation2 + $0x1e0] sm:$0xff]
        %v675 = vld [vmem:[#allocation2 + $0x1e8] sm:$0xff]
        %v676 = vld [vmem:[#allocation2 + $0x1f0] sm:$0xff]
        %v677 = vld [vmem:[#allocation2 + $0x1f8] sm:$0xff]
        %v678 = vld [vmem:[%s488] sm:$0xf]
        %v679 = vld [vmem:[%s488 + $0x4] sm:$0xf]
        %v680 = vld [vmem:[%s488 + $0x8] sm:$0xf]
        %v681 = vld [vmem:[%s488 + $0xc] sm:$0xf]
        %v682 = vld [vmem:[%s488 + $0x10] sm:$0xf]
        %v683 = vld [vmem:[%s488 + $0x14] sm:$0xf]
        %v684 = vld [vmem:[%s488 + $0x18] sm:$0xf]
        %v685 = vld [vmem:[%s488 + $0x1c] sm:$0xf]
        %v686 = vld [vmem:[%s488 + $0x20] sm:$0xf]
        %v687 = vld [vmem:[%s488 + $0x24] sm:$0xf]
        %v688 = vld [vmem:[%s488 + $0x28] sm:$0xf]
        %v689 = vld [vmem:[%s488 + $0x2c] sm:$0xf]
        %v690 = vld [vmem:[%s488 + $0x30] sm:$0xf]
        %v691 = vld [vmem:[%s488 + $0x34] sm:$0xf]
        %v692 = vld [vmem:[%s488 + $0x38] sm:$0xf]
        %v693 = vld [vmem:[%s488 + $0x3c] sm:$0xf]
        %v694 = vld [vmem:[%s488 + $0x40] sm:$0xf]
        %v695 = vld [vmem:[%s488 + $0x44] sm:$0xf]
        %v696 = vld [vmem:[%s488 + $0x48] sm:$0xf]
        %v697 = vld [vmem:[%s488 + $0x4c] sm:$0xf]
        %v698 = vld [vmem:[%s488 + $0x50] sm:$0xf]
        %v699 = vld [vmem:[%s488 + $0x54] sm:$0xf]
        %v700 = vld [vmem:[%s488 + $0x58] sm:$0xf]
        %v701 = vld [vmem:[%s488 + $0x5c] sm:$0xf]
        %v702 = vld [vmem:[%s488 + $0x60] sm:$0xf]
        %v703 = vld [vmem:[%s488 + $0x64] sm:$0xf]
        %v704 = vld [vmem:[%s488 + $0x68] sm:$0xf]
        %v705 = vld [vmem:[%s488 + $0x6c] sm:$0xf]
        %v706 = vld [vmem:[%s488 + $0x70] sm:$0xf]
        %v707 = vld [vmem:[%s488 + $0x74] sm:$0xf]
        %v708 = vld [vmem:[%s488 + $0x78] sm:$0xf]
        %v709 = vld [vmem:[%s488 + $0x7c] sm:$0xf]
        %v710 = vld [vmem:[%s488 + $0x80] sm:$0xf]
        %v711 = vld [vmem:[%s488 + $0x84] sm:$0xf]
        %v712 = vld [vmem:[%s488 + $0x88] sm:$0xf]
        %v713 = vld [vmem:[%s488 + $0x8c] sm:$0xf]
        %v714 = vld [vmem:[%s488 + $0x90] sm:$0xf]
        %v715 = vld [vmem:[%s488 + $0x94] sm:$0xf]
        %v716 = vld [vmem:[%s488 + $0x98] sm:$0xf]
        %v717 = vld [vmem:[%s488 + $0x9c] sm:$0xf]
        %v718 = vld [vmem:[%s488 + $0xa0] sm:$0xf]
        %v719 = vld [vmem:[%s488 + $0xa4] sm:$0xf]
        %v720 = vld [vmem:[%s488 + $0xa8] sm:$0xf]
        %v721 = vld [vmem:[%s488 + $0xac] sm:$0xf]
        %v722 = vld [vmem:[%s488 + $0xb0] sm:$0xf]
        %v723 = vld [vmem:[%s488 + $0xb4] sm:$0xf]
        %v724 = vld [vmem:[%s488 + $0xb8] sm:$0xf]
        %v725 = vld [vmem:[%s488 + $0xbc] sm:$0xf]
        %v726 = vld [vmem:[%s488 + $0xc0] sm:$0xf]
        %v727 = vld [vmem:[%s488 + $0xc4] sm:$0xf]
        %v728 = vld [vmem:[%s488 + $0xc8] sm:$0xf]
        %v729 = vld [vmem:[%s488 + $0xcc] sm:$0xf]
        %v730 = vld [vmem:[%s488 + $0xd0] sm:$0xf]
        %v731 = vld [vmem:[%s488 + $0xd4] sm:$0xf]
        %v732 = vld [vmem:[%s488 + $0xd8] sm:$0xf]
        %v733 = vld [vmem:[%s488 + $0xdc] sm:$0xf]
        %v734 = vld [vmem:[%s488 + $0xe0] sm:$0xf]
        %v735 = vld [vmem:[%s488 + $0xe4] sm:$0xf]
        %v736 = vld [vmem:[%s488 + $0xe8] sm:$0xf]
        %v737 = vld [vmem:[%s488 + $0xec] sm:$0xf]
        %v738 = vld [vmem:[%s488 + $0xf0] sm:$0xf]
        %v739 = vld [vmem:[%s488 + $0xf4] sm:$0xf]
        %v740 = vld [vmem:[%s488 + $0xf8] sm:$0xf]
        %v741 = vld [vmem:[%s488 + $0xfc] sm:$0xf]
        %v742 = vld [vmem:[%s531] sm:$0xf]
        %v743 = vld [vmem:[%s531 + $0x4] sm:$0xf]
        %v744 = vld [vmem:[%s531 + $0x8] sm:$0xf]
        %v745 = vld [vmem:[%s531 + $0xc] sm:$0xf]
        %v746 = vld [vmem:[%s531 + $0x10] sm:$0xf]
        %v747 = vld [vmem:[%s531 + $0x14] sm:$0xf]
        %v748 = vld [vmem:[%s531 + $0x18] sm:$0xf]
        %v749 = vld [vmem:[%s531 + $0x1c] sm:$0xf]
        %v750 = vld [vmem:[%s531 + $0x20] sm:$0xf]
        %v751 = vld [vmem:[%s531 + $0x24] sm:$0xf]
        %v752 = vld [vmem:[%s531 + $0x28] sm:$0xf]
        %v753 = vld [vmem:[%s531 + $0x2c] sm:$0xf]
        %v754 = vld [vmem:[%s531 + $0x30] sm:$0xf]
        %v755 = vld [vmem:[%s531 + $0x34] sm:$0xf]
        %v756 = vld [vmem:[%s531 + $0x38] sm:$0xf]
        %v757 = vld [vmem:[%s531 + $0x3c] sm:$0xf]
        %v822 = vunpack.c.l.b16 %v678
        %v823 = vunpack.c.l.b16 %v679
        %v824 = vunpack.c.l.b16 %v680
        %v825 = vunpack.c.l.b16 %v681
        %v826 = vunpack.c.l.b16 %v682
        %v827 = vunpack.c.l.b16 %v683
        %v828 = vunpack.c.l.b16 %v684
        %v829 = vunpack.c.l.b16 %v685
        %v830 = vunpack.c.l.b16 %v686
        %v831 = vunpack.c.l.b16 %v687
        %v832 = vunpack.c.l.b16 %v688
        %v833 = vunpack.c.l.b16 %v689
        %v834 = vunpack.c.l.b16 %v690
        %v835 = vunpack.c.l.b16 %v691
        %v836 = vunpack.c.l.b16 %v692
        %v837 = vunpack.c.l.b16 %v693
        %v838 = vunpack.c.l.b16 %v694
        %v839 = vunpack.c.l.b16 %v695
        %v840 = vunpack.c.l.b16 %v696
        %v841 = vunpack.c.l.b16 %v697
        %v842 = vunpack.c.l.b16 %v698
        %v843 = vunpack.c.l.b16 %v699
        %v844 = vunpack.c.l.b16 %v700
        %v845 = vunpack.c.l.b16 %v701
        %v846 = vunpack.c.l.b16 %v702
        %v847 = vunpack.c.l.b16 %v703
        %v848 = vunpack.c.l.b16 %v704
        %v849 = vunpack.c.l.b16 %v705
        %v850 = vunpack.c.l.b16 %v706
        %v851 = vunpack.c.l.b16 %v707
        %v852 = vunpack.c.l.b16 %v708
        %v853 = vunpack.c.l.b16 %v709
        %v854 = vunpack.c.l.b16 %v710
        %v855 = vunpack.c.l.b16 %v711
        %v856 = vunpack.c.l.b16 %v712
        %v857 = vunpack.c.l.b16 %v713
        %v858 = vunpack.c.l.b16 %v714
        %v859 = vunpack.c.l.b16 %v715
        %v860 = vunpack.c.l.b16 %v716
        %v861 = vunpack.c.l.b16 %v717
        %v862 = vunpack.c.l.b16 %v718
        %v863 = vunpack.c.l.b16 %v719
        %v864 = vunpack.c.l.b16 %v720
        %v865 = vunpack.c.l.b16 %v721
        %v866 = vunpack.c.l.b16 %v722
        %v867 = vunpack.c.l.b16 %v723
        %v868 = vunpack.c.l.b16 %v724
        %v869 = vunpack.c.l.b16 %v725
        %v870 = vunpack.c.l.b16 %v726
        %v871 = vunpack.c.l.b16 %v727
        %v872 = vunpack.c.l.b16 %v728
        %v873 = vunpack.c.l.b16 %v729
        %v874 = vunpack.c.l.b16 %v730
        %v875 = vunpack.c.l.b16 %v731
        %v876 = vunpack.c.l.b16 %v732
        %v877 = vunpack.c.l.b16 %v733
        %v878 = vunpack.c.l.b16 %v734
        %v879 = vunpack.c.l.b16 %v735
        %v880 = vunpack.c.l.b16 %v736
        %v881 = vunpack.c.l.b16 %v737
        %v882 = vunpack.c.l.b16 %v738
        %v883 = vunpack.c.l.b16 %v739
        %v884 = vunpack.c.l.b16 %v740
        %v885 = vunpack.c.l.b16 %v741
        %v886 = vpack.c.b16 %v823, %v822
        %v887 = vpack.c.b16 %v825, %v824
        %v888 = vpack.c.b16 %v827, %v826
        %v889 = vpack.c.b16 %v829, %v828
        %v890 = vpack.c.b16 %v831, %v830
        %v891 = vpack.c.b16 %v833, %v832
        %v892 = vpack.c.b16 %v835, %v834
        %v893 = vpack.c.b16 %v837, %v836
        %v894 = vpack.c.b16 %v839, %v838
        %v895 = vpack.c.b16 %v841, %v840
        %v896 = vpack.c.b16 %v843, %v842
        %v897 = vpack.c.b16 %v845, %v844
        %v898 = vpack.c.b16 %v847, %v846
        %v899 = vpack.c.b16 %v849, %v848
        %v900 = vpack.c.b16 %v851, %v850
        %v901 = vpack.c.b16 %v853, %v852
        %v902 = vpack.c.b16 %v855, %v854
        %v903 = vpack.c.b16 %v857, %v856
        %v904 = vpack.c.b16 %v859, %v858
        %v905 = vpack.c.b16 %v861, %v860
        %v906 = vpack.c.b16 %v863, %v862
        %v907 = vpack.c.b16 %v865, %v864
        %v908 = vpack.c.b16 %v867, %v866
        %v909 = vpack.c.b16 %v869, %v868
        %v910 = vpack.c.b16 %v871, %v870
        %v911 = vpack.c.b16 %v873, %v872
        %v912 = vpack.c.b16 %v875, %v874
        %v913 = vpack.c.b16 %v877, %v876
        %v914 = vpack.c.b16 %v879, %v878
        %v915 = vpack.c.b16 %v881, %v880
        %v916 = vpack.c.b16 %v883, %v882
        %v917 = vpack.c.b16 %v885, %v884
        %v966 = vunpack.c.l.b16 %v742
        %v967 = vunpack.c.l.b16 %v743
        %v968 = vunpack.c.l.b16 %v744
        %v969 = vunpack.c.l.b16 %v745
        %v970 = vunpack.c.l.b16 %v746
        %v971 = vunpack.c.l.b16 %v747
        %v972 = vunpack.c.l.b16 %v748
        %v973 = vunpack.c.l.b16 %v749
        %v974 = vunpack.c.l.b16 %v750
        %v975 = vunpack.c.l.b16 %v751
        %v976 = vunpack.c.l.b16 %v752
        %v977 = vunpack.c.l.b16 %v753
        %v978 = vunpack.c.l.b16 %v754
        %v979 = vunpack.c.l.b16 %v755
        %v980 = vunpack.c.l.b16 %v756
        %v981 = vunpack.c.l.b16 %v757
        %v982 = vpack.c.b16 %v967, %v966
        %v983 = vpack.c.b16 %v969, %v968
        %v984 = vpack.c.b16 %v971, %v970
        %v985 = vpack.c.b16 %v973, %v972
        %v986 = vpack.c.b16 %v975, %v974
        %v987 = vpack.c.b16 %v977, %v976
        %v988 = vpack.c.b16 %v979, %v978
        %v989 = vpack.c.b16 %v981, %v980
        %998 = vmatprep.subr.bf16.mxu0 0
        %999 = vmatpush1.bf16.msra.mxu0 %v982
        %1000 = vmatprep.subr.bf16.mxu0 0
        %1001 = vmatpush1.bf16.msra.mxu0 %v983
        %1002 = vmatprep.subr.bf16.mxu0 0
        %1003 = vmatpush1.bf16.msra.mxu0 %v984
        %1004 = vmatprep.subr.bf16.mxu0 0
        %1005 = vmatpush1.bf16.msra.mxu0 %v985
        %1006 = vmatprep.subr.bf16.mxu0 0
        %1007 = vmatpush1.bf16.msra.mxu0 %v986
        %1008 = vmatprep.subr.bf16.mxu0 0
        %1009 = vmatpush1.bf16.msra.mxu0 %v987
        %1010 = vmatprep.subr.bf16.mxu0 0
        %1011 = vmatpush1.bf16.msra.mxu0 %v988
        %1012 = vmatprep.subr.bf16.mxu0 0
        %1013 = vmatpush1.bf16.msra.mxu0 %v989
        %1014 = vmatprep.subr.bf16.mxu0 0
        %1015 = vmatpush1.bf16.msra.mxu0 0
        %1016 = vmatprep.subr.bf16.mxu0 0
        %1017 = vmatpush1.bf16.msra.mxu0 0
        %1018 = vmatprep.subr.bf16.mxu0 0
        %1019 = vmatpush1.bf16.msra.mxu0 0
        %1020 = vmatprep.subr.bf16.mxu0 0
        %1021 = vmatpush1.bf16.msra.mxu0 0
        %1022 = vmatprep.subr.bf16.mxu0 0
        %1023 = vmatpush1.bf16.msra.mxu0 0
        %1024 = vmatprep.subr.bf16.mxu0 0
        %1025 = vmatpush1.bf16.msra.mxu0 0
        %1026 = vmatprep.subr.bf16.mxu0 0
        %1027 = vmatpush1.bf16.msra.mxu0 0
        %1028 = vmatprep.subr.bf16.mxu0 0
        %1029 = vmatpush1.bf16.msra.mxu0 0
        %1030 = vmatprep.mubr.bf16.mxu0 0
        %1031 = vmatmul.mubr.bf16.gmra.mrb[0].mxu0 %v886
        %v1032 = vpop.f32.mrb[0].mxu0
        %v1033 = vadd.f32 0.0, %v1032
        %v1034 = vpop.f32.mrb[0].mxu0
        %v1035 = vpop.f32.mrb[0].mxu0
        %v1036 = vadd.f32 0.0, %v1035
        %v1037 = vpop.f32.mrb[0].mxu0
        %1038 = vmatprep.mubr.bf16.mxu0 0
        %1039 = vmatmul.mubr.bf16.gmra.mrb[0].mxu0 %v887
        %v1040 = vpop.f32.mrb[0].mxu0
        %v1041 = vadd.f32 0.0, %v1040
        %v1042 = vpop.f32.mrb[0].mxu0
        %v1043 = vpop.f32.mrb[0].mxu0
        %v1044 = vadd.f32 0.0, %v1043
        %v1045 = vpop.f32.mrb[0].mxu0
        %1046 = vmatprep.mubr.bf16.mxu0 0
        %1047 = vmatmul.mubr.bf16.gmra.mrb[0].mxu0 %v888
        %v1048 = vpop.f32.mrb[0].mxu0
        %v1049 = vadd.f32 0.0, %v1048
        %v1050 = vpop.f32.mrb[0].mxu0
        %v1051 = vpop.f32.mrb[0].mxu0
        %v1052 = vadd.f32 0.0, %v1051
        %v1053 = vpop.f32.mrb[0].mxu0
        %1054 = vmatprep.mubr.bf16.mxu0 0
        %1055 = vmatmul.mubr.bf16.gmra.mrb[0].mxu0 %v889
        %v1056 = vpop.f32.mrb[0].mxu0
        %v1057 = vadd.f32 0.0, %v1056
        %v1058 = vpop.f32.mrb[0].mxu0
        %v1059 = vpop.f32.mrb[0].mxu0
        %v1060 = vadd.f32 0.0, %v1059
        %v1061 = vpop.f32.mrb[0].mxu0
        %1062 = vmatprep.mubr.bf16.mxu0 0
        %1063 = vmatmul.mubr.bf16.gmra.mrb[0].mxu0 %v890
        %v1064 = vpop.f32.mrb[0].mxu0
        %v1065 = vadd.f32 0.0, %v1064
        %v1066 = vpop.f32.mrb[0].mxu0
        %v1067 = vpop.f32.mrb[0].mxu0
        %v1068 = vadd.f32 0.0, %v1067
        %v1069 = vpop.f32.mrb[0].mxu0
        %1070 = vmatprep.mubr.bf16.mxu0 0
        %1071 = vmatmul.mubr.bf16.gmra.mrb[0].mxu0 %v891
        %v1072 = vpop.f32.mrb[0].mxu0
        %v1073 = vadd.f32 0.0, %v1072
        %v1074 = vpop.f32.mrb[0].mxu0
        %v1075 = vpop.f32.mrb[0].mxu0
        %v1076 = vadd.f32 0.0, %v1075
        %v1077 = vpop.f32.mrb[0].mxu0
        %1078 = vmatprep.mubr.bf16.mxu0 0
        %1079 = vmatmul.mubr.bf16.gmra.mrb[0].mxu0 %v892
        %v1080 = vpop.f32.mrb[0].mxu0
        %v1081 = vadd.f32 0.0, %v1080
        %v1082 = vpop.f32.mrb[0].mxu0
        %v1083 = vpop.f32.mrb[0].mxu0
        %v1084 = vadd.f32 0.0, %v1083
        %v1085 = vpop.f32.mrb[0].mxu0
        %1086 = vmatprep.mubr.bf16.mxu0 0
        %1087 = vmatmul.mubr.bf16.gmra.mrb[0].mxu0 %v893
        %v1088 = vpop.f32.mrb[0].mxu0
        %v1089 = vadd.f32 0.0, %v1088
        %v1090 = vpop.f32.mrb[0].mxu0
        %v1091 = vpop.f32.mrb[0].mxu0
        %v1092 = vadd.f32 0.0, %v1091
        %v1093 = vpop.f32.mrb[0].mxu0
        %1094 = vmatprep.mubr.bf16.mxu0 0
        %1095 = vmatmul.mubr.bf16.gmra.mrb[0].mxu0 %v894
        %v1096 = vpop.f32.mrb[0].mxu0
        %v1097 = vadd.f32 0.0, %v1096
        %v1098 = vpop.f32.mrb[0].mxu0
        %v1099 = vpop.f32.mrb[0].mxu0
        %v1100 = vadd.f32 0.0, %v1099
        %v1101 = vpop.f32.mrb[0].mxu0
        %1102 = vmatprep.mubr.bf16.mxu0 0
        %1103 = vmatmul.mubr.bf16.gmra.mrb[0].mxu0 %v895
        %v1104 = vpop.f32.mrb[0].mxu0
        %v1105 = vadd.f32 0.0, %v1104
        %v1106 = vpop.f32.mrb[0].mxu0
        %v1107 = vpop.f32.mrb[0].mxu0
        %v1108 = vadd.f32 0.0, %v1107
        %v1109 = vpop.f32.mrb[0].mxu0
        %1110 = vmatprep.mubr.bf16.mxu0 0
        %1111 = vmatmul.mubr.bf16.gmra.mrb[0].mxu0 %v896
        %v1112 = vpop.f32.mrb[0].mxu0
        %v1113 = vadd.f32 0.0, %v1112
        %v1114 = vpop.f32.mrb[0].mxu0
        %v1115 = vpop.f32.mrb[0].mxu0
        %v1116 = vadd.f32 0.0, %v1115
        %v1117 = vpop.f32.mrb[0].mxu0
        %1118 = vmatprep.mubr.bf16.mxu0 0
        %1119 = vmatmul.mubr.bf16.gmra.mrb[0].mxu0 %v897
        %v1120 = vpop.f32.mrb[0].mxu0
        %v1121 = vadd.f32 0.0, %v1120
        %v1122 = vpop.f32.mrb[0].mxu0
        %v1123 = vpop.f32.mrb[0].mxu0
        %v1124 = vadd.f32 0.0, %v1123
        %v1125 = vpop.f32.mrb[0].mxu0
        %1126 = vmatprep.mubr.bf16.mxu0 0
        %1127 = vmatmul.mubr.bf16.gmra.mrb[0].mxu0 %v898
        %v1128 = vpop.f32.mrb[0].mxu0
        %v1129 = vadd.f32 0.0, %v1128
        %v1130 = vpop.f32.mrb[0].mxu0
        %v1131 = vpop.f32.mrb[0].mxu0
        %v1132 = vadd.f32 0.0, %v1131
        %v1133 = vpop.f32.mrb[0].mxu0
        %1134 = vmatprep.mubr.bf16.mxu0 0
        %1135 = vmatmul.mubr.bf16.gmra.mrb[0].mxu0 %v899
        %v1136 = vpop.f32.mrb[0].mxu0
        %v1137 = vadd.f32 0.0, %v1136
        %v1138 = vpop.f32.mrb[0].mxu0
        %v1139 = vpop.f32.mrb[0].mxu0
        %v1140 = vadd.f32 0.0, %v1139
        %v1141 = vpop.f32.mrb[0].mxu0
        %1142 = vmatprep.mubr.bf16.mxu0 0
        %1143 = vmatmul.mubr.bf16.gmra.mrb[0].mxu0 %v900
        %v1144 = vpop.f32.mrb[0].mxu0
        %v1145 = vadd.f32 0.0, %v1144
        %v1146 = vpop.f32.mrb[0].mxu0
        %v1147 = vpop.f32.mrb[0].mxu0
        %v1148 = vadd.f32 0.0, %v1147
        %v1149 = vpop.f32.mrb[0].mxu0
        %1150 = vmatprep.mubr.bf16.mxu0 0
        %1151 = vmatmul.mubr.bf16.gmra.mrb[0].mxu0 %v901
        %v1152 = vpop.f32.mrb[0].mxu0
        %v1153 = vadd.f32 0.0, %v1152
        %v1154 = vpop.f32.mrb[0].mxu0
        %v1155 = vpop.f32.mrb[0].mxu0
        %v1156 = vadd.f32 0.0, %v1155
        %v1157 = vpop.f32.mrb[0].mxu0
        %1158 = vmatprep.mubr.bf16.mxu0 0
        %1159 = vmatmul.mubr.bf16.gmra.mrb[0].mxu0 %v902
        %v1160 = vpop.f32.mrb[0].mxu0
        %v1161 = vadd.f32 0.0, %v1160
        %v1162 = vpop.f32.mrb[0].mxu0
        %v1163 = vpop.f32.mrb[0].mxu0
        %v1164 = vadd.f32 0.0, %v1163
        %v1165 = vpop.f32.mrb[0].mxu0
        %1166 = vmatprep.mubr.bf16.mxu0 0
        %1167 = vmatmul.mubr.bf16.gmra.mrb[0].mxu0 %v903
        %v1168 = vpop.f32.mrb[0].mxu0
        %v1169 = vadd.f32 0.0, %v1168
        %v1170 = vpop.f32.mrb[0].mxu0
        %v1171 = vpop.f32.mrb[0].mxu0
        %v1172 = vadd.f32 0.0, %v1171
        %v1173 = vpop.f32.mrb[0].mxu0
        %1174 = vmatprep.mubr.bf16.mxu0 0
        %1175 = vmatmul.mubr.bf16.gmra.mrb[0].mxu0 %v904
        %v1176 = vpop.f32.mrb[0].mxu0
        %v1177 = vadd.f32 0.0, %v1176
        %v1178 = vpop.f32.mrb[0].mxu0
        %v1179 = vpop.f32.mrb[0].mxu0
        %v1180 = vadd.f32 0.0, %v1179
        %v1181 = vpop.f32.mrb[0].mxu0
        %1182 = vmatprep.mubr.bf16.mxu0 0
        %1183 = vmatmul.mubr.bf16.gmra.mrb[0].mxu0 %v905
        %v1184 = vpop.f32.mrb[0].mxu0
        %v1185 = vadd.f32 0.0, %v1184
        %v1186 = vpop.f32.mrb[0].mxu0
        %v1187 = vpop.f32.mrb[0].mxu0
        %v1188 = vadd.f32 0.0, %v1187
        %v1189 = vpop.f32.mrb[0].mxu0
        %1190 = vmatprep.mubr.bf16.mxu0 0
        %1191 = vmatmul.mubr.bf16.gmra.mrb[0].mxu0 %v906
        %v1192 = vpop.f32.mrb[0].mxu0
        %v1193 = vadd.f32 0.0, %v1192
        %v1194 = vpop.f32.mrb[0].mxu0
        %v1195 = vpop.f32.mrb[0].mxu0
        %v1196 = vadd.f32 0.0, %v1195
        %v1197 = vpop.f32.mrb[0].mxu0
        %1198 = vmatprep.mubr.bf16.mxu0 0
        %1199 = vmatmul.mubr.bf16.gmra.mrb[0].mxu0 %v907
        %v1200 = vpop.f32.mrb[0].mxu0
        %v1201 = vadd.f32 0.0, %v1200
        %v1202 = vpop.f32.mrb[0].mxu0
        %v1203 = vpop.f32.mrb[0].mxu0
        %v1204 = vadd.f32 0.0, %v1203
        %v1205 = vpop.f32.mrb[0].mxu0
        %1206 = vmatprep.mubr.bf16.mxu0 0
        %1207 = vmatmul.mubr.bf16.gmra.mrb[0].mxu0 %v908
        %v1208 = vpop.f32.mrb[0].mxu0
        %v1209 = vadd.f32 0.0, %v1208
        %v1210 = vpop.f32.mrb[0].mxu0
        %v1211 = vpop.f32.mrb[0].mxu0
        %v1212 = vadd.f32 0.0, %v1211
        %v1213 = vpop.f32.mrb[0].mxu0
        %1214 = vmatprep.mubr.bf16.mxu0 0
        %1215 = vmatmul.mubr.bf16.gmra.mrb[0].mxu0 %v909
        %v1216 = vpop.f32.mrb[0].mxu0
        %v1217 = vadd.f32 0.0, %v1216
        %v1218 = vpop.f32.mrb[0].mxu0
        %v1219 = vpop.f32.mrb[0].mxu0
        %v1220 = vadd.f32 0.0, %v1219
        %v1221 = vpop.f32.mrb[0].mxu0
        %1222 = vmatprep.mubr.bf16.mxu0 0
        %1223 = vmatmul.mubr.bf16.gmra.mrb[0].mxu0 %v910
        %v1224 = vpop.f32.mrb[0].mxu0
        %v1225 = vadd.f32 0.0, %v1224
        %v1226 = vpop.f32.mrb[0].mxu0
        %v1227 = vpop.f32.mrb[0].mxu0
        %v1228 = vadd.f32 0.0, %v1227
        %v1229 = vpop.f32.mrb[0].mxu0
        %1230 = vmatprep.mubr.bf16.mxu0 0
        %1231 = vmatmul.mubr.bf16.gmra.mrb[0].mxu0 %v911
        %v1232 = vpop.f32.mrb[0].mxu0
        %v1233 = vadd.f32 0.0, %v1232
        %v1234 = vpop.f32.mrb[0].mxu0
        %v1235 = vpop.f32.mrb[0].mxu0
        %v1236 = vadd.f32 0.0, %v1235
        %v1237 = vpop.f32.mrb[0].mxu0
        %1238 = vmatprep.mubr.bf16.mxu0 0
        %1239 = vmatmul.mubr.bf16.gmra.mrb[0].mxu0 %v912
        %v1240 = vpop.f32.mrb[0].mxu0
        %v1241 = vadd.f32 0.0, %v1240
        %v1242 = vpop.f32.mrb[0].mxu0
        %v1243 = vpop.f32.mrb[0].mxu0
        %v1244 = vadd.f32 0.0, %v1243
        %v1245 = vpop.f32.mrb[0].mxu0
        %1246 = vmatprep.mubr.bf16.mxu0 0
        %1247 = vmatmul.mubr.bf16.gmra.mrb[0].mxu0 %v913
        %v1248 = vpop.f32.mrb[0].mxu0
        %v1249 = vadd.f32 0.0, %v1248
        %v1250 = vpop.f32.mrb[0].mxu0
        %v1251 = vpop.f32.mrb[0].mxu0
        %v1252 = vadd.f32 0.0, %v1251
        %v1253 = vpop.f32.mrb[0].mxu0
        %1254 = vmatprep.mubr.bf16.mxu0 0
        %1255 = vmatmul.mubr.bf16.gmra.mrb[0].mxu0 %v914
        %v1256 = vpop.f32.mrb[0].mxu0
        %v1257 = vadd.f32 0.0, %v1256
        %v1258 = vpop.f32.mrb[0].mxu0
        %v1259 = vpop.f32.mrb[0].mxu0
        %v1260 = vadd.f32 0.0, %v1259
        %v1261 = vpop.f32.mrb[0].mxu0
        %1262 = vmatprep.mubr.bf16.mxu0 0
        %1263 = vmatmul.mubr.bf16.gmra.mrb[0].mxu0 %v915
        %v1264 = vpop.f32.mrb[0].mxu0
        %v1265 = vadd.f32 0.0, %v1264
        %v1266 = vpop.f32.mrb[0].mxu0
        %v1267 = vpop.f32.mrb[0].mxu0
        %v1268 = vadd.f32 0.0, %v1267
        %v1269 = vpop.f32.mrb[0].mxu0
        %1270 = vmatprep.mubr.bf16.mxu0 0
        %1271 = vmatmul.mubr.bf16.gmra.mrb[0].mxu0 %v916
        %v1272 = vpop.f32.mrb[0].mxu0
        %v1273 = vadd.f32 0.0, %v1272
        %v1274 = vpop.f32.mrb[0].mxu0
        %v1275 = vpop.f32.mrb[0].mxu0
        %v1276 = vadd.f32 0.0, %v1275
        %v1277 = vpop.f32.mrb[0].mxu0
        %1278 = vmatprep.mubr.bf16.mxu0 0
        %1279 = vmatmul.mubr.bf16.gmra.mrb[0].mxu0 %v917
        %v1280 = vpop.f32.mrb[0].mxu0
        %v1281 = vadd.f32 0.0, %v1280
        %v1282 = vpop.f32.mrb[0].mxu0
        %v1283 = vpop.f32.mrb[0].mxu0
        %v1284 = vadd.f32 0.0, %v1283
        %v1285 = vpop.f32.mrb[0].mxu0
        %1286 = vdwg.mxu0
        %v1287 = vadd.f32 %v614, %v1033
        %v1288 = vadd.f32 %v615, %v1036
        %v1289 = vadd.f32 %v616, %v1041
        %v1290 = vadd.f32 %v617, %v1044
        %v1291 = vadd.f32 %v618, %v1049
        %v1292 = vadd.f32 %v619, %v1052
        %v1293 = vadd.f32 %v620, %v1057
        %v1294 = vadd.f32 %v621, %v1060
        %v1295 = vadd.f32 %v622, %v1065
        %v1296 = vadd.f32 %v623, %v1068
        %v1297 = vadd.f32 %v624, %v1073
        %v1298 = vadd.f32 %v625, %v1076
        %v1299 = vadd.f32 %v626, %v1081
        %v1300 = vadd.f32 %v627, %v1084
        %v1301 = vadd.f32 %v628, %v1089
        %v1302 = vadd.f32 %v629, %v1092
        %v1303 = vadd.f32 %v630, %v1097
        %v1304 = vadd.f32 %v631, %v1100
        %v1305 = vadd.f32 %v632, %v1105
        %v1306 = vadd.f32 %v633, %v1108
        %v1307 = vadd.f32 %v634, %v1113
        %v1308 = vadd.f32 %v635, %v1116
        %v1309 = vadd.f32 %v636, %v1121
        %v1310 = vadd.f32 %v637, %v1124
        %v1311 = vadd.f32 %v638, %v1129
        %v1312 = vadd.f32 %v639, %v1132
        %v1313 = vadd.f32 %v640, %v1137
        %v1314 = vadd.f32 %v641, %v1140
        %v1315 = vadd.f32 %v642, %v1145
        %v1316 = vadd.f32 %v643, %v1148
        %v1317 = vadd.f32 %v644, %v1153
        %v1318 = vadd.f32 %v645, %v1156
        %v1319 = vadd.f32 %v646, %v1161
        %v1320 = vadd.f32 %v647, %v1164
        %v1321 = vadd.f32 %v648, %v1169
        %v1322 = vadd.f32 %v649, %v1172
        %v1323 = vadd.f32 %v650, %v1177
        %v1324 = vadd.f32 %v651, %v1180
        %v1325 = vadd.f32 %v652, %v1185
        %v1326 = vadd.f32 %v653, %v1188
        %v1327 = vadd.f32 %v654, %v1193
        %v1328 = vadd.f32 %v655, %v1196
        %v1329 = vadd.f32 %v656, %v1201
        %v1330 = vadd.f32 %v657, %v1204
        %v1331 = vadd.f32 %v658, %v1209
        %v1332 = vadd.f32 %v659, %v1212
        %v1333 = vadd.f32 %v660, %v1217
        %v1334 = vadd.f32 %v661, %v1220
        %v1335 = vadd.f32 %v662, %v1225
        %v1336 = vadd.f32 %v663, %v1228
        %v1337 = vadd.f32 %v664, %v1233
        %v1338 = vadd.f32 %v665, %v1236
        %v1339 = vadd.f32 %v666, %v1241
        %v1340 = vadd.f32 %v667, %v1244
        %v1341 = vadd.f32 %v668, %v1249
        %v1342 = vadd.f32 %v669, %v1252
        %v1343 = vadd.f32 %v670, %v1257
        %v1344 = vadd.f32 %v671, %v1260
        %v1345 = vadd.f32 %v672, %v1265
        %v1346 = vadd.f32 %v673, %v1268
        %v1347 = vadd.f32 %v674, %v1273
        %v1348 = vadd.f32 %v675, %v1276
        %v1349 = vadd.f32 %v676, %v1281
        %v1350 = vadd.f32 %v677, %v1284
        %1351 = vst [vmem:[#allocation2] sm:$0xff] %v1287
        %1352 = vst [vmem:[#allocation2 + $0x8] sm:$0xff] %v1288
        %1353 = vst [vmem:[#allocation2 + $0x10] sm:$0xff] %v1289
        %1354 = vst [vmem:[#allocation2 + $0x18] sm:$0xff] %v1290
        %1355 = vst [vmem:[#allocation2 + $0x20] sm:$0xff] %v1291
        %1356 = vst [vmem:[#allocation2 + $0x28] sm:$0xff] %v1292
        %1357 = vst [vmem:[#allocation2 + $0x30] sm:$0xff] %v1293
        %1358 = vst [vmem:[#allocation2 + $0x38] sm:$0xff] %v1294
        %1359 = vst [vmem:[#allocation2 + $0x40] sm:$0xff] %v1295
        %1360 = vst [vmem:[#allocation2 + $0x48] sm:$0xff] %v1296
        %1361 = vst [vmem:[#allocation2 + $0x50] sm:$0xff] %v1297
        %1362 = vst [vmem:[#allocation2 + $0x58] sm:$0xff] %v1298
        %1363 = vst [vmem:[#allocation2 + $0x60] sm:$0xff] %v1299
        %1364 = vst [vmem:[#allocation2 + $0x68] sm:$0xff] %v1300
        %1365 = vst [vmem:[#allocation2 + $0x70] sm:$0xff] %v1301
        %1366 = vst [vmem:[#allocation2 + $0x78] sm:$0xff] %v1302
        %1367 = vst [vmem:[#allocation2 + $0x80] sm:$0xff] %v1303
        %1368 = vst [vmem:[#allocation2 + $0x88] sm:$0xff] %v1304
        %1369 = vst [vmem:[#allocation2 + $0x90] sm:$0xff] %v1305
        %1370 = vst [vmem:[#allocation2 + $0x98] sm:$0xff] %v1306
        %1371 = vst [vmem:[#allocation2 + $0xa0] sm:$0xff] %v1307
        %1372 = vst [vmem:[#allocation2 + $0xa8] sm:$0xff] %v1308
        %1373 = vst [vmem:[#allocation2 + $0xb0] sm:$0xff] %v1309
        %1374 = vst [vmem:[#allocation2 + $0xb8] sm:$0xff] %v1310
        %1375 = vst [vmem:[#allocation2 + $0xc0] sm:$0xff] %v1311
        %1376 = vst [vmem:[#allocation2 + $0xc8] sm:$0xff] %v1312
        %1377 = vst [vmem:[#allocation2 + $0xd0] sm:$0xff] %v1313
        %1378 = vst [vmem:[#allocation2 + $0xd8] sm:$0xff] %v1314
        %1379 = vst [vmem:[#allocation2 + $0xe0] sm:$0xff] %v1315
        %1380 = vst [vmem:[#allocation2 + $0xe8] sm:$0xff] %v1316
        %1381 = vst [vmem:[#allocation2 + $0xf0] sm:$0xff] %v1317
        %1382 = vst [vmem:[#allocation2 + $0xf8] sm:$0xff] %v1318
        %1383 = vst [vmem:[#allocation2 + $0x100] sm:$0xff] %v1319
        %1384 = vst [vmem:[#allocation2 + $0x108] sm:$0xff] %v1320
        %1385 = vst [vmem:[#allocation2 + $0x110] sm:$0xff] %v1321
        %1386 = vst [vmem:[#allocation2 + $0x118] sm:$0xff] %v1322
        %1387 = vst [vmem:[#allocation2 + $0x120] sm:$0xff] %v1323
        %1388 = vst [vmem:[#allocation2 + $0x128] sm:$0xff] %v1324
        %1389 = vst [vmem:[#allocation2 + $0x130] sm:$0xff] %v1325
        %1390 = vst [vmem:[#allocation2 + $0x138] sm:$0xff] %v1326
        %1391 = vst [vmem:[#allocation2 + $0x140] sm:$0xff] %v1327
        %1392 = vst [vmem:[#allocation2 + $0x148] sm:$0xff] %v1328
        %1393 = vst [vmem:[#allocation2 + $0x150] sm:$0xff] %v1329
        %1394 = vst [vmem:[#allocation2 + $0x158] sm:$0xff] %v1330
        %1395 = vst [vmem:[#allocation2 + $0x160] sm:$0xff] %v1331
        %1396 = vst [vmem:[#allocation2 + $0x168] sm:$0xff] %v1332
        %1397 = vst [vmem:[#allocation2 + $0x170] sm:$0xff] %v1333
        %1398 = vst [vmem:[#allocation2 + $0x178] sm:$0xff] %v1334
        %1399 = vst [vmem:[#allocation2 + $0x180] sm:$0xff] %v1335
        %1400 = vst [vmem:[#allocation2 + $0x188] sm:$0xff] %v1336
        %1401 = vst [vmem:[#allocation2 + $0x190] sm:$0xff] %v1337
        %1402 = vst [vmem:[#allocation2 + $0x198] sm:$0xff] %v1338
        %1403 = vst [vmem:[#allocation2 + $0x1a0] sm:$0xff] %v1339
        %1404 = vst [vmem:[#allocation2 + $0x1a8] sm:$0xff] %v1340
        %1405 = vst [vmem:[#allocation2 + $0x1b0] sm:$0xff] %v1341
        %1406 = vst [vmem:[#allocation2 + $0x1b8] sm:$0xff] %v1342
        %1407 = vst [vmem:[#allocation2 + $0x1c0] sm:$0xff] %v1343
        %1408 = vst [vmem:[#allocation2 + $0x1c8] sm:$0xff] %v1344
        %1409 = vst [vmem:[#allocation2 + $0x1d0] sm:$0xff] %v1345
        %1410 = vst [vmem:[#allocation2 + $0x1d8] sm:$0xff] %v1346
        %1411 = vst [vmem:[#allocation2 + $0x1e0] sm:$0xff] %v1347
        %1412 = vst [vmem:[#allocation2 + $0x1e8] sm:$0xff] %v1348
        %1413 = vst [vmem:[#allocation2 + $0x1f0] sm:$0xff] %v1349
        %1414 = vst [vmem:[#allocation2 + $0x1f8] sm:$0xff] %v1350
        %p1415 = scmp.eq.s32.totalorder %s21, 24
        // Predicated region
        $region78: #{generator_forward.105} parent=68 // pred_check
          %p1416 = pneg %p1415
        $region79: #{generator_forward.105} parent=68 // pred_check_branch
          %1418 = sbr.rel (%p1416) target = $region81
        $region80: #{generator_forward.105} parent=68 // pred_region
          %v1419 = vld [vmem:[#allocation2] sm:$0xff]
          %v1420 = vld [vmem:[#allocation2 + $0x8] sm:$0xff]
          %v1421 = vld [vmem:[#allocation2 + $0x10] sm:$0xff]
          %v1422 = vld [vmem:[#allocation2 + $0x18] sm:$0xff]
          %v1423 = vld [vmem:[#allocation2 + $0x20] sm:$0xff]
          %v1424 = vld [vmem:[#allocation2 + $0x28] sm:$0xff]
          %v1425 = vld [vmem:[#allocation2 + $0x30] sm:$0xff]
          %v1426 = vld [vmem:[#allocation2 + $0x38] sm:$0xff]
          %v1427 = vld [vmem:[#allocation2 + $0x40] sm:$0xff]
          %v1428 = vld [vmem:[#allocation2 + $0x48] sm:$0xff]
          %v1429 = vld [vmem:[#allocation2 + $0x50] sm:$0xff]
          %v1430 = vld [vmem:[#allocation2 + $0x58] sm:$0xff]
          %v1431 = vld [vmem:[#allocation2 + $0x60] sm:$0xff]
          %v1432 = vld [vmem:[#allocation2 + $0x68] sm:$0xff]
          %v1433 = vld [vmem:[#allocation2 + $0x70] sm:$0xff]
          %v1434 = vld [vmem:[#allocation2 + $0x78] sm:$0xff]
          %v1435 = vld [vmem:[#allocation2 + $0x80] sm:$0xff]
          %v1436 = vld [vmem:[#allocation2 + $0x88] sm:$0xff]
          %v1437 = vld [vmem:[#allocation2 + $0x90] sm:$0xff]
          %v1438 = vld [vmem:[#allocation2 + $0x98] sm:$0xff]
          %v1439 = vld [vmem:[#allocation2 + $0xa0] sm:$0xff]
          %v1440 = vld [vmem:[#allocation2 + $0xa8] sm:$0xff]
          %v1441 = vld [vmem:[#allocation2 + $0xb0] sm:$0xff]
          %v1442 = vld [vmem:[#allocation2 + $0xb8] sm:$0xff]
          %v1443 = vld [vmem:[#allocation2 + $0xc0] sm:$0xff]
          %v1444 = vld [vmem:[#allocation2 + $0xc8] sm:$0xff]
          %v1445 = vld [vmem:[#allocation2 + $0xd0] sm:$0xff]
          %v1446 = vld [vmem:[#allocation2 + $0xd8] sm:$0xff]
          %v1447 = vld [vmem:[#allocation2 + $0xe0] sm:$0xff]
          %v1448 = vld [vmem:[#allocation2 + $0xe8] sm:$0xff]
          %v1449 = vld [vmem:[#allocation2 + $0xf0] sm:$0xff]
          %v1450 = vld [vmem:[#allocation2 + $0xf8] sm:$0xff]
          %v1451 = vld [vmem:[#allocation2 + $0x100] sm:$0xff]
          %v1452 = vld [vmem:[#allocation2 + $0x108] sm:$0xff]
          %v1453 = vld [vmem:[#allocation2 + $0x110] sm:$0xff]
          %v1454 = vld [vmem:[#allocation2 + $0x118] sm:$0xff]
          %v1455 = vld [vmem:[#allocation2 + $0x120] sm:$0xff]
          %v1456 = vld [vmem:[#allocation2 + $0x128] sm:$0xff]
          %v1457 = vld [vmem:[#allocation2 + $0x130] sm:$0xff]
          %v1458 = vld [vmem:[#allocation2 + $0x138] sm:$0xff]
          %v1459 = vld [vmem:[#allocation2 + $0x140] sm:$0xff]
          %v1460 = vld [vmem:[#allocation2 + $0x148] sm:$0xff]
          %v1461 = vld [vmem:[#allocation2 + $0x150] sm:$0xff]
          %v1462 = vld [vmem:[#allocation2 + $0x158] sm:$0xff]
          %v1463 = vld [vmem:[#allocation2 + $0x160] sm:$0xff]
          %v1464 = vld [vmem:[#allocation2 + $0x168] sm:$0xff]
          %v1465 = vld [vmem:[#allocation2 + $0x170] sm:$0xff]
          %v1466 = vld [vmem:[#allocation2 + $0x178] sm:$0xff]
          %v1467 = vld [vmem:[#allocation2 + $0x180] sm:$0xff]
          %v1468 = vld [vmem:[#allocation2 + $0x188] sm:$0xff]
          %v1469 = vld [vmem:[#allocation2 + $0x190] sm:$0xff]
          %v1470 = vld [vmem:[#allocation2 + $0x198] sm:$0xff]
          %v1471 = vld [vmem:[#allocation2 + $0x1a0] sm:$0xff]
          %v1472 = vld [vmem:[#allocation2 + $0x1a8] sm:$0xff]
          %v1473 = vld [vmem:[#allocation2 + $0x1b0] sm:$0xff]
          %v1474 = vld [vmem:[#allocation2 + $0x1b8] sm:$0xff]
          %v1475 = vld [vmem:[#allocation2 + $0x1c0] sm:$0xff]
          %v1476 = vld [vmem:[#allocation2 + $0x1c8] sm:$0xff]
          %v1477 = vld [vmem:[#allocation2 + $0x1d0] sm:$0xff]
          %v1478 = vld [vmem:[#allocation2 + $0x1d8] sm:$0xff]
          %v1479 = vld [vmem:[#allocation2 + $0x1e0] sm:$0xff]
          %v1480 = vld [vmem:[#allocation2 + $0x1e8] sm:$0xff]
          %v1481 = vld [vmem:[#allocation2 + $0x1f0] sm:$0xff]
          %v1482 = vld [vmem:[#allocation2 + $0x1f8] sm:$0xff]
          %v1483 = vld [vmem:[%s535] sm:$0x1]
          %v1485 = vlaneseq
          %v1486 = vshrl.u32 %v1485, 7
          %v1487 = vsub.s32 0, %v1486
          %v1488 = vrot.slane %v1483, %v1487
          %v1490 = vadd.f32 %v1419, %v1488
          %v1491 = vadd.f32 %v1420, %v1488
          %v1492 = vadd.f32 %v1421, %v1488
          %v1493 = vadd.f32 %v1422, %v1488
          %v1494 = vadd.f32 %v1423, %v1488
          %v1495 = vadd.f32 %v1424, %v1488
          %v1496 = vadd.f32 %v1425, %v1488
          %v1497 = vadd.f32 %v1426, %v1488
          %v1498 = vadd.f32 %v1427, %v1488
          %v1499 = vadd.f32 %v1428, %v1488
          %v1500 = vadd.f32 %v1429, %v1488
          %v1501 = vadd.f32 %v1430, %v1488
          %v1502 = vadd.f32 %v1431, %v1488
          %v1503 = vadd.f32 %v1432, %v1488
          %v1504 = vadd.f32 %v1433, %v1488
          %v1505 = vadd.f32 %v1434, %v1488
          %v1506 = vadd.f32 %v1435, %v1488
          %v1507 = vadd.f32 %v1436, %v1488
          %v1508 = vadd.f32 %v1437, %v1488
          %v1509 = vadd.f32 %v1438, %v1488
          %v1510 = vadd.f32 %v1439, %v1488
          %v1511 = vadd.f32 %v1440, %v1488
          %v1512 = vadd.f32 %v1441, %v1488
          %v1513 = vadd.f32 %v1442, %v1488
          %v1514 = vadd.f32 %v1443, %v1488
          %v1515 = vadd.f32 %v1444, %v1488
          %v1516 = vadd.f32 %v1445, %v1488
          %v1517 = vadd.f32 %v1446, %v1488
          %v1518 = vadd.f32 %v1447, %v1488
          %v1519 = vadd.f32 %v1448, %v1488
          %v1520 = vadd.f32 %v1449, %v1488
          %v1521 = vadd.f32 %v1450, %v1488
          %v1522 = vadd.f32 %v1451, %v1488
          %v1523 = vadd.f32 %v1452, %v1488
          %v1524 = vadd.f32 %v1453, %v1488
          %v1525 = vadd.f32 %v1454, %v1488
          %v1526 = vadd.f32 %v1455, %v1488
          %v1527 = vadd.f32 %v1456, %v1488
          %v1528 = vadd.f32 %v1457, %v1488
          %v1529 = vadd.f32 %v1458, %v1488
          %v1530 = vadd.f32 %v1459, %v1488
          %v1531 = vadd.f32 %v1460, %v1488
          %v1532 = vadd.f32 %v1461, %v1488
          %v1533 = vadd.f32 %v1462, %v1488
          %v1534 = vadd.f32 %v1463, %v1488
          %v1535 = vadd.f32 %v1464, %v1488
          %v1536 = vadd.f32 %v1465, %v1488
          %v1537 = vadd.f32 %v1466, %v1488
          %v1538 = vadd.f32 %v1467, %v1488
          %v1539 = vadd.f32 %v1468, %v1488
          %v1540 = vadd.f32 %v1469, %v1488
          %v1541 = vadd.f32 %v1470, %v1488
          %v1542 = vadd.f32 %v1471, %v1488
          %v1543 = vadd.f32 %v1472, %v1488
          %v1544 = vadd.f32 %v1473, %v1488
          %v1545 = vadd.f32 %v1474, %v1488
          %v1546 = vadd.f32 %v1475, %v1488
          %v1547 = vadd.f32 %v1476, %v1488
          %v1548 = vadd.f32 %v1477, %v1488
          %v1549 = vadd.f32 %v1478, %v1488
          %v1550 = vadd.f32 %v1479, %v1488
          %v1551 = vadd.f32 %v1480, %v1488
          %v1552 = vadd.f32 %v1481, %v1488
          %v1553 = vadd.f32 %v1482, %v1488
          %v1554 = vtanh.pop %v1490
          %v1555 = vtanh.pop %v1491
          %v1556 = vtanh.pop %v1492
          %v1557 = vtanh.pop %v1493
          %v1558 = vtanh.pop %v1494
          %v1559 = vtanh.pop %v1495
          %v1560 = vtanh.pop %v1496
          %v1561 = vtanh.pop %v1497
          %v1562 = vtanh.pop %v1498
          %v1563 = vtanh.pop %v1499
          %v1564 = vtanh.pop %v1500
          %v1565 = vtanh.pop %v1501
          %v1566 = vtanh.pop %v1502
          %v1567 = vtanh.pop %v1503
          %v1568 = vtanh.pop %v1504
          %v1569 = vtanh.pop %v1505
          %v1570 = vtanh.pop %v1506
          %v1571 = vtanh.pop %v1507
          %v1572 = vtanh.pop %v1508
          %v1573 = vtanh.pop %v1509
          %v1574 = vtanh.pop %v1510
          %v1575 = vtanh.pop %v1511
          %v1576 = vtanh.pop %v1512
          %v1577 = vtanh.pop %v1513
          %v1578 = vtanh.pop %v1514
          %v1579 = vtanh.pop %v1515
          %v1580 = vtanh.pop %v1516
          %v1581 = vtanh.pop %v1517
          %v1582 = vtanh.pop %v1518
          %v1583 = vtanh.pop %v1519
          %v1584 = vtanh.pop %v1520
          %v1585 = vtanh.pop %v1521
          %v1586 = vtanh.pop %v1522
          %v1587 = vtanh.pop %v1523
          %v1588 = vtanh.pop %v1524
          %v1589 = vtanh.pop %v1525
          %v1590 = vtanh.pop %v1526
          %v1591 = vtanh.pop %v1527
          %v1592 = vtanh.pop %v1528
          %v1593 = vtanh.pop %v1529
          %v1594 = vtanh.pop %v1530
          %v1595 = vtanh.pop %v1531
          %v1596 = vtanh.pop %v1532
          %v1597 = vtanh.pop %v1533
          %v1598 = vtanh.pop %v1534
          %v1599 = vtanh.pop %v1535
          %v1600 = vtanh.pop %v1536
          %v1601 = vtanh.pop %v1537
          %v1602 = vtanh.pop %v1538
          %v1603 = vtanh.pop %v1539
          %v1604 = vtanh.pop %v1540
          %v1605 = vtanh.pop %v1541
          %v1606 = vtanh.pop %v1542
          %v1607 = vtanh.pop %v1543
          %v1608 = vtanh.pop %v1544
          %v1609 = vtanh.pop %v1545
          %v1610 = vtanh.pop %v1546
          %v1611 = vtanh.pop %v1547
          %v1612 = vtanh.pop %v1548
          %v1613 = vtanh.pop %v1549
          %v1614 = vtanh.pop %v1550
          %v1615 = vtanh.pop %v1551
          %v1616 = vtanh.pop %v1552
          %v1617 = vtanh.pop %v1553
          %1618 = vst [vmem:[%s543] sm:$0xff] %v1554
          %1619 = vst [vmem:[%s543 + $0x8] sm:$0xff] %v1555
          %1620 = vst [vmem:[%s543 + $0x10] sm:$0xff] %v1556
          %1621 = vst [vmem:[%s543 + $0x18] sm:$0xff] %v1557
          %1622 = vst [vmem:[%s543 + $0x20] sm:$0xff] %v1558
          %1623 = vst [vmem:[%s543 + $0x28] sm:$0xff] %v1559
          %1624 = vst [vmem:[%s543 + $0x30] sm:$0xff] %v1560
          %1625 = vst [vmem:[%s543 + $0x38] sm:$0xff] %v1561
          %1626 = vst [vmem:[%s543 + $0x40] sm:$0xff] %v1562
          %1627 = vst [vmem:[%s543 + $0x48] sm:$0xff] %v1563
          %1628 = vst [vmem:[%s543 + $0x50] sm:$0xff] %v1564
          %1629 = vst [vmem:[%s543 + $0x58] sm:$0xff] %v1565
          %1630 = vst [vmem:[%s543 + $0x60] sm:$0xff] %v1566
          %1631 = vst [vmem:[%s543 + $0x68] sm:$0xff] %v1567
          %1632 = vst [vmem:[%s543 + $0x70] sm:$0xff] %v1568
          %1633 = vst [vmem:[%s543 + $0x78] sm:$0xff] %v1569
          %1634 = vst [vmem:[%s543 + $0x80] sm:$0xff] %v1570
          %1635 = vst [vmem:[%s543 + $0x88] sm:$0xff] %v1571
          %1636 = vst [vmem:[%s543 + $0x90] sm:$0xff] %v1572
          %1637 = vst [vmem:[%s543 + $0x98] sm:$0xff] %v1573
          %1638 = vst [vmem:[%s543 + $0xa0] sm:$0xff] %v1574
          %1639 = vst [vmem:[%s543 + $0xa8] sm:$0xff] %v1575
          %1640 = vst [vmem:[%s543 + $0xb0] sm:$0xff] %v1576
          %1641 = vst [vmem:[%s543 + $0xb8] sm:$0xff] %v1577
          %1642 = vst [vmem:[%s543 + $0xc0] sm:$0xff] %v1578
          %1643 = vst [vmem:[%s543 + $0xc8] sm:$0xff] %v1579
          %1644 = vst [vmem:[%s543 + $0xd0] sm:$0xff] %v1580
          %1645 = vst [vmem:[%s543 + $0xd8] sm:$0xff] %v1581
          %1646 = vst [vmem:[%s543 + $0xe0] sm:$0xff] %v1582
          %1647 = vst [vmem:[%s543 + $0xe8] sm:$0xff] %v1583
          %1648 = vst [vmem:[%s543 + $0xf0] sm:$0xff] %v1584
          %1649 = vst [vmem:[%s543 + $0xf8] sm:$0xff] %v1585
          %1650 = vst [vmem:[%s543 + $0x100] sm:$0xff] %v1586
          %1651 = vst [vmem:[%s543 + $0x108] sm:$0xff] %v1587
          %1652 = vst [vmem:[%s543 + $0x110] sm:$0xff] %v1588
          %1653 = vst [vmem:[%s543 + $0x118] sm:$0xff] %v1589
          %1654 = vst [vmem:[%s543 + $0x120] sm:$0xff] %v1590
          %1655 = vst [vmem:[%s543 + $0x128] sm:$0xff] %v1591
          %1656 = vst [vmem:[%s543 + $0x130] sm:$0xff] %v1592
          %1657 = vst [vmem:[%s543 + $0x138] sm:$0xff] %v1593
          %1658 = vst [vmem:[%s543 + $0x140] sm:$0xff] %v1594
          %1659 = vst [vmem:[%s543 + $0x148] sm:$0xff] %v1595
          %1660 = vst [vmem:[%s543 + $0x150] sm:$0xff] %v1596
          %1661 = vst [vmem:[%s543 + $0x158] sm:$0xff] %v1597
          %1662 = vst [vmem:[%s543 + $0x160] sm:$0xff] %v1598
          %1663 = vst [vmem:[%s543 + $0x168] sm:$0xff] %v1599
          %1664 = vst [vmem:[%s543 + $0x170] sm:$0xff] %v1600
          %1665 = vst [vmem:[%s543 + $0x178] sm:$0xff] %v1601
          %1666 = vst [vmem:[%s543 + $0x180] sm:$0xff] %v1602
          %1667 = vst [vmem:[%s543 + $0x188] sm:$0xff] %v1603
          %1668 = vst [vmem:[%s543 + $0x190] sm:$0xff] %v1604
          %1669 = vst [vmem:[%s543 + $0x198] sm:$0xff] %v1605
          %1670 = vst [vmem:[%s543 + $0x1a0] sm:$0xff] %v1606
          %1671 = vst [vmem:[%s543 + $0x1a8] sm:$0xff] %v1607
          %1672 = vst [vmem:[%s543 + $0x1b0] sm:$0xff] %v1608
          %1673 = vst [vmem:[%s543 + $0x1b8] sm:$0xff] %v1609
          %1674 = vst [vmem:[%s543 + $0x1c0] sm:$0xff] %v1610
          %1675 = vst [vmem:[%s543 + $0x1c8] sm:$0xff] %v1611
          %1676 = vst [vmem:[%s543 + $0x1d0] sm:$0xff] %v1612
          %1677 = vst [vmem:[%s543 + $0x1d8] sm:$0xff] %v1613
          %1678 = vst [vmem:[%s543 + $0x1e0] sm:$0xff] %v1614
          %1679 = vst [vmem:[%s543 + $0x1e8] sm:$0xff] %v1615
          %1680 = vst [vmem:[%s543 + $0x1f0] sm:$0xff] %v1616
          %1681 = vst [vmem:[%s543 + $0x1f8] sm:$0xff] %v1617
        $region81: #{generator_forward.105} parent=68 // pred_fallthru
          _
        %s1682 = smul.u32 64, %s19
        %p1683 = scmp.lt.s32.totalorder %s1682, 63
        %s1684 = scalar_select %p1683, %s1682, 63
        %p1685 = scmp.lt.s32.totalorder %s20, 0
        %s1686 = scalar_select %p1685, %s20, 0
        %s1687 = sadd.s32 %s1686, %s1684
        %s1688 = smul.addr %s1687, 8
        %s1689 = scalar_lea.vmem %s3, %s1688
        // Predicated region
        $region82: #{generator_forward.105} parent=68 // pred_check
          %p1690 = pneg %p135
        $region83: #{generator_forward.105} parent=68 // pred_check_branch
          %1692 = sbr.rel (%p1690) target = $region85
        $region84: #{generator_forward.105} parent=68 // pred_region
          %s1693 = smul.u32 64, %s19
        $region85: #{generator_forward.105} parent=68 // pred_fallthru
          _
        // Predicated region
        $region86: #{generator_forward.105} parent=68 // pred_check
          %p1694 = pneg %p135
        $region87: #{generator_forward.105} parent=68 // pred_check_branch
          %1696 = sbr.rel (%p1694) target = $region89
        $region88: #{generator_forward.105} parent=68 // pred_region
          %s1697 = smul.u32 64, %s19
          %p1698 = scmp.lt.s32.totalorder %s1697, 63
          %s1699 = scalar_select %p1698, %s1697, 63
          %p1700 = scmp.lt.s32.totalorder %s20, 0
          %s1701 = scalar_select %p1700, %s20, 0
          %s1702 = sadd.s32 %s1701, %s1699
          %s1703 = smul.addr %s1702, 8
          %s1704 = scalar_lea.vmem %s3, %s1703
        $region89: #{generator_forward.105} parent=68 // pred_fallthru
          _
      $region69: #{generator_forward.105} parent=5 // pred_fallthru
        _
      %p1705 = scmp.le.s32.totalorder 2, %s9
      // Predicated region
      $region90: #{generator_forward.105} parent=5 // pred_check
        %p1706 = pneg %p1705
      $region91: #{generator_forward.105} parent=5 // pred_check_branch
        %1708 = sbr.rel (%p1706) target = $region93
      $region92: #{generator_forward.105} parent=5 // pred_region
        %s1709 = ssub.s32 %s9, 2
      $region93: #{generator_forward.105} parent=5 // pred_fallthru
        _
    $region6: #{generator_forward.105} parent=1 // loop_footer
      %s13 = sadd.s32 1, %s9
    $region7: #{generator_forward.105} parent=1 // loop_footer_branch
      %8 = sbr.rel target = $region3
    $region8: #{generator_forward.105} parent=1 // loop_exit
      _

</llo_original>
